<compile_context>
chip_gen: v6e
topology: v6e:2x2x1
jax: 0.10.0
libtpu: 0.0.40
codegen_flags: <defaults>
</compile_context>

<pallas_src>
import functools
import math

import jax
import jax.numpy as jnp
from jax.experimental import pallas as pl
from jax.experimental.pallas import tpu as pltpu

_EPS = 1e-6
_LANE = 128          # d_model is zero-padded to this many lanes


# ----------------------------- in-kernel helpers ----------------------------

def _layernorm(a, alpha, beta, d_model):
    """LayerNorm exactly as the toy reference: (x-mean)/(std+eps), unbiased std.

    `a` has its last dim zero-padded from d_model to the lane width (padding is
    zero by construction); statistics are over the first d_model features only.
    """
    lane = jax.lax.broadcasted_iota(jnp.int32, a.shape, a.ndim - 1)
    fmask = (lane < d_model).astype(jnp.float32)
    mean = jnp.sum(a, axis=-1, keepdims=True) * (1.0 / d_model)
    diff = (a - mean) * fmask
    var = jnp.sum(diff * diff, axis=-1, keepdims=True) * (1.0 / (d_model - 1))
    inv = pl.reciprocal(jnp.sqrt(var) + _EPS, approx=True)   # EUP, not VPU divide
    return alpha * (diff * inv) + beta


def _attention(xq, xkv, mask_add, wq, bq, wkv, bkv, wo, bo, *, n_heads):
    """Multi-head attention with fused QKV / output-projection matmuls.

    xq: (Sq, DP) f32   xkv: (Skv, DP) f32   mask_add: (Sq, Skv) additive 0/-1e9
    wq: (DP, H*dk) bf16 (1/sqrt(dk) pre-folded)    bq: (1, H*dk) f32
    wkv: (DP, 2*H*dk) bf16                         bkv: (1, 2*H*dk) f32
    wo: (H*dk, DP) bf16                            bo: (1, DP) f32
    """
    hdk = wq.shape[-1]
    d_k = hdk // n_heads

    # fused projections: 2 lane-dense MXU pushes for Q and K|V
    q = jnp.dot(xq.astype(jnp.bfloat16), wq,
                preferred_element_type=jnp.float32) + bq          # (Sq, H*dk)
    kv = jnp.dot(xkv.astype(jnp.bfloat16), wkv,
                 preferred_element_type=jnp.float32) + bkv        # (Skv, 2*H*dk)
    k = kv[:, :hdk]
    v = kv[:, hdk:]

    # per-head scaled dot-product attention (dk=8 score matmuls are inherently
    # per-head; projections above are what feed the MXU real work)
    heads = []
    for h in range(n_heads):
        sl = slice(h * d_k, (h + 1) * d_k)
        s = jax.lax.dot_general(                                  # q_h @ k_h^T
            q[:, sl].astype(jnp.bfloat16), k[:, sl].astype(jnp.bfloat16),
            (((1,), (1,)), ((), ())), preferred_element_type=jnp.float32)
        s = s + mask_add                                          # hoisted additive mask
        s = s - jnp.max(s, axis=-1, keepdims=True)
        p = jnp.exp(s)
        denom = jnp.sum(p, axis=-1, keepdims=True)
        o = jnp.dot(p.astype(jnp.bfloat16), v[:, sl].astype(jnp.bfloat16),
                    preferred_element_type=jnp.float32)
        heads.append(o * pl.reciprocal(denom, approx=True))       # normalize after PV

    concat = jnp.concatenate(heads, axis=-1)                      # (Sq, H*dk)
    # "concat heads + out Linear" == one (Sq,H*dk)@(H*dk,DP) matmul
    return jnp.dot(concat.astype(jnp.bfloat16), wo,
                   preferred_element_type=jnp.float32) + bo       # (Sq, DP)


# ------------------------------- fused kernel --------------------------------

def _decoder_kernel(x_ref, enc_ref, trg_m_ref, src_m_ref,
                    wq_s_ref, bq_s_ref, wkv_s_ref, bkv_s_ref, wo_s_ref, bo_s_ref,
                    ln1a_ref, ln1b_ref,
                    wq_c_ref, bq_c_ref, wkv_c_ref, bkv_c_ref, wo_c_ref, bo_c_ref,
                    ln2a_ref, ln2b_ref,
                    w1_ref, b1_ref, w2_ref, b2_ref, ln3a_ref, ln3b_ref,
                    lnfa_ref, lnfb_ref,
                    o_ref, *, d_model, n_heads, n_layers):
    """Entire decoder stack for one batch element; x stays resident in VMEM."""
    x = x_ref[...]                       # (Sq, DP) f32, pad lanes are zero
    enc = enc_ref[...]                   # (Skv, DP) f32
    trg_m = trg_m_ref[...]               # (Sq, Sq) additive mask
    src_m = src_m_ref[...]               # (Sq, Skv) additive mask

    for l in range(n_layers):            # N is small & static -> unrolled
        # self-attention block:  a = mha1(x,x,x);  x = a + norm1(a)
        a = _attention(x, x, trg_m,
                       wq_s_ref[l], bq_s_ref[l], wkv_s_ref[l], bkv_s_ref[l],
                       wo_s_ref[l], bo_s_ref[l], n_heads=n_heads)
        x = a + _layernorm(a, ln1a_ref[l], ln1b_ref[l], d_model)

        # cross-attention block: a = mha2(x,enc,enc); x = a + norm2(a)
        a = _attention(x, enc, src_m,
                       wq_c_ref[l], bq_c_ref[l], wkv_c_ref[l], bkv_c_ref[l],
                       wo_c_ref[l], bo_c_ref[l], n_heads=n_heads)
        x = a + _layernorm(a, ln2a_ref[l], ln2b_ref[l], d_model)

        # feed-forward block: a = lin2(relu(lin1(x))); x = a + norm3(a)
        h = jnp.dot(x.astype(jnp.bfloat16), w1_ref[l],
                    preferred_element_type=jnp.float32) + b1_ref[l]
        h = jnp.maximum(h, 0.0)
        a = jnp.dot(h.astype(jnp.bfloat16), w2_ref[l],
                    preferred_element_type=jnp.float32) + b2_ref[l]
        x = a + _layernorm(a, ln3a_ref[l], ln3b_ref[l], d_model)

    # final decoder LayerNorm, fused into the same kernel
    o_ref[...] = _layernorm(x, lnfa_ref[...], lnfb_ref[...], d_model)


# ------------------------------ kernel wrapper --------------------------------

def _full_spec(shape):
    nd = len(shape)
    return pl.BlockSpec(shape, lambda *_: (0,) * nd)


def decoder_forward(params, pe, trg, encoder_output, src_mask, trg_mask,
                    *, d_model, n_heads):
    dp = pe.shape[-1]
    # Embedder + PositionalEncoder (glue: gather + elementwise add).
    x = jnp.take(params['embed'], trg, axis=0)            # (B, Sq, DP)
    x = x + pe[None, :x.shape[1], :]
    enc = _pad_last(encoder_output, dp)                   # zero-pad features

    # additive masks, computed once (0 where kept, -1e9 where masked out)
    trg_mask_add = (trg_mask - 1.0) * 1e9
    src_mask_add = (src_mask - 1.0) * 1e9

    B, Sq, _ = x.shape
    Skv = enc.shape[1]
    st = params['stack']
    n_layers, _, hdk = st['wq_s'].shape
    d_ff = st['w1'].shape[-1]

    kernel = functools.partial(_decoder_kernel, d_model=d_model,
                               n_heads=n_heads, n_layers=n_layers)

    # TODO(synk): dropout layers are identity (eval mode); no stochastic masking.
    out = pl.pallas_call(
        kernel,
        out_shape=jax.ShapeDtypeStruct((B, Sq, dp), jnp.float32),
        grid=(B,),
        in_specs=[
            pl.BlockSpec((None, Sq, dp), lambda b: (b, 0, 0)),
            pl.BlockSpec((None, Skv, dp), lambda b: (b, 0, 0)),
            _full_spec((Sq, Sq)),
            _full_spec((Sq, Skv)),
            # self-attention weights (stacked over layers)
            _full_spec((n_layers, dp, hdk)), _full_spec((n_layers, 1, hdk)),
            _full_spec((n_layers, dp, 2 * hdk)), _full_spec((n_layers, 1, 2 * hdk)),
            _full_spec((n_layers, hdk, dp)), _full_spec((n_layers, 1, dp)),
            _full_spec((n_layers, 1, dp)), _full_spec((n_layers, 1, dp)),
            # cross-attention weights
            _full_spec((n_layers, dp, hdk)), _full_spec((n_layers, 1, hdk)),
            _full_spec((n_layers, dp, 2 * hdk)), _full_spec((n_layers, 1, 2 * hdk)),
            _full_spec((n_layers, hdk, dp)), _full_spec((n_layers, 1, dp)),
            _full_spec((n_layers, 1, dp)), _full_spec((n_layers, 1, dp)),
            # feed-forward weights
            _full_spec((n_layers, dp, d_ff)), _full_spec((n_layers, 1, d_ff)),
            _full_spec((n_layers, d_ff, dp)), _full_spec((n_layers, 1, dp)),
            _full_spec((n_layers, 1, dp)), _full_spec((n_layers, 1, dp)),
            # final norm
            _full_spec((1, dp)), _full_spec((1, dp)),
        ],
        out_specs=pl.BlockSpec((None, Sq, dp), lambda b: (b, 0, 0)),
        compiler_params=pltpu.CompilerParams(
            dimension_semantics=("parallel",),
            vmem_limit_bytes=32 * 1024 * 1024),
    )(x, enc, trg_mask_add, src_mask_add,
      st['wq_s'], st['bq_s'], st['wkv_s'], st['bkv_s'], st['wo_s'], st['bo_s'],
      st['ln1a'], st['ln1b'],
      st['wq_c'], st['bq_c'], st['wkv_c'], st['bkv_c'], st['wo_c'], st['bo_c'],
      st['ln2a'], st['ln2b'],
      st['w1'], st['b1'], st['w2'], st['b2'], st['ln3a'], st['ln3b'],
      st['lnfa'], st['lnfb'])

    return out[..., :d_model]                             # drop lane padding


# ------------------------------ params / glue ---------------------------------

def _pad_last(x, dp):
    pad = dp - x.shape[-1]
    if pad <= 0:
        return x
    return jnp.pad(x, [(0, 0)] * (x.ndim - 1) + [(0, pad)])


def _pad_axis(x, axis, dp):
    pad = dp - x.shape[axis]
    if pad <= 0:
        return x
    cfg = [(0, 0)] * x.ndim
    cfg[axis] = (0, pad)
    return jnp.pad(x, cfg)


def _rand(key, shape, scale):
    return jax.random.normal(key, shape, jnp.float32) * scale


def positional_encoding(max_seq_len, d_model, dp=_LANE):
    # NOTE: the reference PositonalEncoder loop is buggy (OOB write at
    # i=d_model-1, re-register inside the loop). We implement the intended
    # interleaved sin/cos table with base 1000 and exponent 2*i/d_model.
    pos = jnp.arange(max_seq_len, dtype=jnp.float32)[:, None]
    idx = jnp.arange(0, d_model, 2, dtype=jnp.float32)[None, :]
    angle = pos / jnp.power(1000.0, 2.0 * idx / d_model)
    pe = jnp.zeros((max_seq_len, d_model), jnp.float32)
    pe = pe.at[:, 0::2].set(jnp.sin(angle))
    pe = pe.at[:, 1::2].set(jnp.cos(angle))
    return _pad_last(pe, dp)


def _init_attn(key, d_model, n_heads, dp):
    """Fused-head attention params: wq (DP,H*dk), wkv (DP,2*H*dk), wo (H*dk,DP).

    1/sqrt(d_k) is folded into wq/bq; pad rows/cols are exactly zero so x's pad
    lanes stay zero through every layer (required for the LayerNorm stats).
    """
    d_k = d_model // n_heads
    hdk = n_heads * d_k
    ks = jax.random.split(key, 8)
    s_in = 1.0 / math.sqrt(d_model)
    s_out = 1.0 / math.sqrt(hdk)
    scale = 1.0 / math.sqrt(d_k)
    wq = _rand(ks[0], (d_model, hdk), s_in) * scale
    bq = _rand(ks[1], (1, hdk), 0.01) * scale
    wk = _rand(ks[2], (d_model, hdk), s_in)
    bk = _rand(ks[3], (1, hdk), 0.01)
    wv = _rand(ks[4], (d_model, hdk), s_in)
    bv = _rand(ks[5], (1, hdk), 0.01)
    wo = _rand(ks[6], (hdk, d_model), s_out)
    bo = _rand(ks[7], (1, d_model), 0.01)
    return (
        _pad_axis(wq, 0, dp).astype(jnp.bfloat16), bq,
        _pad_axis(jnp.concatenate([wk, wv], -1), 0, dp).astype(jnp.bfloat16),
        jnp.concatenate([bk, bv], -1),
        _pad_last(wo, dp).astype(jnp.bfloat16),
        _pad_last(bo, dp),
    )


def _init_ffn(key, d_model, d_ff, dp):
    ks = jax.random.split(key, 4)
    w1 = _pad_axis(_rand(ks[0], (d_model, d_ff), 1.0 / math.sqrt(d_model)),
                   0, dp).astype(jnp.bfloat16)
    b1 = _rand(ks[1], (1, d_ff), 0.01)
    w2 = _pad_last(_rand(ks[2], (d_ff, d_model), 1.0 / math.sqrt(d_ff)),
                   dp).astype(jnp.bfloat16)
    b2 = _pad_last(_rand(ks[3], (1, d_model), 0.01), dp)
    return (w1, b1, w2, b2)


def init_decoder_params(key, vocab_size, d_model, N, n_heads, d_ff=2048, dp=_LANE):
    keys = jax.random.split(key, 1 + 3 * N)
    embed = _pad_last(_rand(keys[0], (vocab_size, d_model), 1.0), dp)

    self_p, cross_p, ffn_p = [], [], []
    for n in range(N):
        self_p.append(_init_attn(keys[1 + 3 * n], d_model, n_heads, dp))
        cross_p.append(_init_attn(keys[2 + 3 * n], d_model, n_heads, dp))
        ffn_p.append(_init_ffn(keys[3 + 3 * n], d_model, d_ff, dp))

    def stack(tuples, i):
        return jnp.stack([t[i] for t in tuples], axis=0)

    ln_a = jnp.stack([_pad_last(jnp.ones((1, d_model), jnp.float32), dp)] * N)
    ln_b = jnp.stack([jnp.zeros((1, dp), jnp.float32)] * N)

    stack_params = {
        'wq_s': stack(self_p, 0), 'bq_s': stack(self_p, 1),
        'wkv_s': stack(self_p, 2), 'bkv_s': stack(self_p, 3),
        'wo_s': stack(self_p, 4), 'bo_s': stack(self_p, 5),
        'ln1a': ln_a, 'ln1b': ln_b,
        'wq_c': stack(cross_p, 0), 'bq_c': stack(cross_p, 1),
        'wkv_c': stack(cross_p, 2), 'bkv_c': stack(cross_p, 3),
        'wo_c': stack(cross_p, 4), 'bo_c': stack(cross_p, 5),
        'ln2a': ln_a, 'ln2b': ln_b,
        'w1': stack(ffn_p, 0), 'b1': stack(ffn_p, 1),
        'w2': stack(ffn_p, 2), 'b2': stack(ffn_p, 3),
        'ln3a': ln_a, 'ln3b': ln_b,
        'lnfa': _pad_last(jnp.ones((1, d_model), jnp.float32), dp),
        'lnfb': jnp.zeros((1, dp), jnp.float32),
    }
    return {'embed': embed, 'stack': stack_params}


# ----------------------------------- main --------------------------------------

if __name__ == "__main__":
    vocab_size, d_model, N, n_heads = 50, 32, 2, 4
    batch, trg_len, src_len = 2, 8, 8

    key = jax.random.PRNGKey(0)
    k_par, k_trg, k_enc = jax.random.split(key, 3)

    params = init_decoder_params(k_par, vocab_size, d_model, N, n_heads)
    pe = positional_encoding(80, d_model)

    trg = jax.random.randint(k_trg, (batch, trg_len), 0, vocab_size, dtype=jnp.int32)
    encoder_output = jax.random.normal(k_enc, (batch, src_len, d_model), jnp.float32)
    trg_mask = jnp.tril(jnp.ones((trg_len, trg_len), jnp.float32))   # causal
    src_mask = jnp.ones((trg_len, src_len), jnp.float32)             # no masking

    fwd = jax.jit(functools.partial(decoder_forward, d_model=d_model, n_heads=n_heads))
    out = fwd(params, pe, trg, encoder_output, src_mask, trg_mask)
    out = jax.block_until_ready(out)
    assert out.shape == (batch, trg_len, d_model)
    assert bool(jnp.all(jnp.isfinite(out)))
    print("KERNEL_OK")
</pallas_src>

<mosaic_0001>
module attributes {stable_mosaic.version = 11 : i64} {
  func.func @_decoder_kernel(%arg0: i32, %arg1: memref<1x8x128xf32, #tpu.memory_space<vmem>>, %arg2: memref<1x8x128xf32, #tpu.memory_space<vmem>>, %arg3: memref<8x8xf32, #tpu.memory_space<vmem>>, %arg4: memref<8x8xf32, #tpu.memory_space<vmem>>, %arg5: memref<2x128x32xbf16, #tpu.memory_space<vmem>>, %arg6: memref<2x1x32xf32, #tpu.memory_space<vmem>>, %arg7: memref<2x128x64xbf16, #tpu.memory_space<vmem>>, %arg8: memref<2x1x64xf32, #tpu.memory_space<vmem>>, %arg9: memref<2x32x128xbf16, #tpu.memory_space<vmem>>, %arg10: memref<2x1x128xf32, #tpu.memory_space<vmem>>, %arg11: memref<2x1x128xf32, #tpu.memory_space<vmem>>, %arg12: memref<2x1x128xf32, #tpu.memory_space<vmem>>, %arg13: memref<2x128x32xbf16, #tpu.memory_space<vmem>>, %arg14: memref<2x1x32xf32, #tpu.memory_space<vmem>>, %arg15: memref<2x128x64xbf16, #tpu.memory_space<vmem>>, %arg16: memref<2x1x64xf32, #tpu.memory_space<vmem>>, %arg17: memref<2x32x128xbf16, #tpu.memory_space<vmem>>, %arg18: memref<2x1x128xf32, #tpu.memory_space<vmem>>, %arg19: memref<2x1x128xf32, #tpu.memory_space<vmem>>, %arg20: memref<2x1x128xf32, #tpu.memory_space<vmem>>, %arg21: memref<2x128x2048xbf16, #tpu.memory_space<vmem>>, %arg22: memref<2x1x2048xf32, #tpu.memory_space<vmem>>, %arg23: memref<2x2048x128xbf16, #tpu.memory_space<vmem>>, %arg24: memref<2x1x128xf32, #tpu.memory_space<vmem>>, %arg25: memref<2x1x128xf32, #tpu.memory_space<vmem>>, %arg26: memref<2x1x128xf32, #tpu.memory_space<vmem>>, %arg27: memref<1x128xf32, #tpu.memory_space<vmem>>, %arg28: memref<1x128xf32, #tpu.memory_space<vmem>>, %arg29: memref<1x8x128xf32, #tpu.memory_space<vmem>>) attributes {dimension_semantics = [#tpu.dimension_semantics<parallel>], iteration_bounds = array<i64: 2>, scalar_prefetch = 0 : i64, scratch_operands = 0 : i64, tpu.core_type = #tpu.core_type<tc>, window_params = [{transform_indices = @transform_0, window_bounds = array<i64: 1, 8, 128>}, {transform_indices = @transform_1, window_bounds = array<i64: 1, 8, 128>}, {pipeline_mode = #tpu.pipeline_mode<synchronous>, transform_indices = @transform_2, window_bounds = array<i64: 8, 8>}, {pipeline_mode = #tpu.pipeline_mode<synchronous>, transform_indices = @transform_3, window_bounds = array<i64: 8, 8>}, {pipeline_mode = #tpu.pipeline_mode<synchronous>, transform_indices = @transform_4, window_bounds = array<i64: 2, 128, 32>}, {pipeline_mode = #tpu.pipeline_mode<synchronous>, transform_indices = @transform_5, window_bounds = array<i64: 2, 1, 32>}, {pipeline_mode = #tpu.pipeline_mode<synchronous>, transform_indices = @transform_6, window_bounds = array<i64: 2, 128, 64>}, {pipeline_mode = #tpu.pipeline_mode<synchronous>, transform_indices = @transform_7, window_bounds = array<i64: 2, 1, 64>}, {pipeline_mode = #tpu.pipeline_mode<synchronous>, transform_indices = @transform_8, window_bounds = array<i64: 2, 32, 128>}, {pipeline_mode = #tpu.pipeline_mode<synchronous>, transform_indices = @transform_9, window_bounds = array<i64: 2, 1, 128>}, {pipeline_mode = #tpu.pipeline_mode<synchronous>, transform_indices = @transform_10, window_bounds = array<i64: 2, 1, 128>}, {pipeline_mode = #tpu.pipeline_mode<synchronous>, transform_indices = @transform_11, window_bounds = array<i64: 2, 1, 128>}, {pipeline_mode = #tpu.pipeline_mode<synchronous>, transform_indices = @transform_12, window_bounds = array<i64: 2, 128, 32>}, {pipeline_mode = #tpu.pipeline_mode<synchronous>, transform_indices = @transform_13, window_bounds = array<i64: 2, 1, 32>}, {pipeline_mode = #tpu.pipeline_mode<synchronous>, transform_indices = @transform_14, window_bounds = array<i64: 2, 128, 64>}, {pipeline_mode = #tpu.pipeline_mode<synchronous>, transform_indices = @transform_15, window_bounds = array<i64: 2, 1, 64>}, {pipeline_mode = #tpu.pipeline_mode<synchronous>, transform_indices = @transform_16, window_bounds = array<i64: 2, 32, 128>}, {pipeline_mode = #tpu.pipeline_mode<synchronous>, transform_indices = @transform_17, window_bounds = array<i64: 2, 1, 128>}, {pipeline_mode = #tpu.pipeline_mode<synchronous>, transform_indices = @transform_18, window_bounds = array<i64: 2, 1, 128>}, {pipeline_mode = #tpu.pipeline_mode<synchronous>, transform_indices = @transform_19, window_bounds = array<i64: 2, 1, 128>}, {pipeline_mode = #tpu.pipeline_mode<synchronous>, transform_indices = @transform_20, window_bounds = array<i64: 2, 128, 2048>}, {pipeline_mode = #tpu.pipeline_mode<synchronous>, transform_indices = @transform_21, window_bounds = array<i64: 2, 1, 2048>}, {pipeline_mode = #tpu.pipeline_mode<synchronous>, transform_indices = @transform_22, window_bounds = array<i64: 2, 2048, 128>}, {pipeline_mode = #tpu.pipeline_mode<synchronous>, transform_indices = @transform_23, window_bounds = array<i64: 2, 1, 128>}, {pipeline_mode = #tpu.pipeline_mode<synchronous>, transform_indices = @transform_24, window_bounds = array<i64: 2, 1, 128>}, {pipeline_mode = #tpu.pipeline_mode<synchronous>, transform_indices = @transform_25, window_bounds = array<i64: 2, 1, 128>}, {pipeline_mode = #tpu.pipeline_mode<synchronous>, transform_indices = @transform_26, window_bounds = array<i64: 1, 128>}, {pipeline_mode = #tpu.pipeline_mode<synchronous>, transform_indices = @transform_27, window_bounds = array<i64: 1, 128>}, {transform_indices = @transform_28, window_bounds = array<i64: 1, 8, 128>}]} {
    %c0 = arith.constant 0 : index
    %c0_0 = arith.constant 0 : index
    %c0_1 = arith.constant 0 : index
    %0 = vector.load %arg1[%c0, %c0_0, %c0_1] : memref<1x8x128xf32, #tpu.memory_space<vmem>>, vector<1x8x128xf32>
    %1 = vector.shape_cast %0 : vector<1x8x128xf32> to vector<8x128xf32>
    %c0_2 = arith.constant 0 : index
    %c0_3 = arith.constant 0 : index
    %c0_4 = arith.constant 0 : index
    %2 = vector.load %arg2[%c0_2, %c0_3, %c0_4] : memref<1x8x128xf32, #tpu.memory_space<vmem>>, vector<1x8x128xf32>
    %3 = vector.shape_cast %2 : vector<1x8x128xf32> to vector<8x128xf32>
    %c0_5 = arith.constant 0 : index
    %c0_6 = arith.constant 0 : index
    %4 = vector.load %arg3[%c0_5, %c0_6] : memref<8x8xf32, #tpu.memory_space<vmem>>, vector<8x8xf32>
    %c0_7 = arith.constant 0 : index
    %c0_8 = arith.constant 0 : index
    %5 = vector.load %arg4[%c0_7, %c0_8] : memref<8x8xf32, #tpu.memory_space<vmem>>, vector<8x8xf32>
    %c0_9 = arith.constant 0 : index
    %c0_10 = arith.constant 0 : index
    %c0_11 = arith.constant 0 : index
    %6 = vector.load %arg5[%c0_9, %c0_10, %c0_11] : memref<2x128x32xbf16, #tpu.memory_space<vmem>>, vector<1x128x32xbf16>
    %7 = vector.shape_cast %6 : vector<1x128x32xbf16> to vector<128x32xbf16>
    %c0_12 = arith.constant 0 : index
    %c0_13 = arith.constant 0 : index
    %c0_14 = arith.constant 0 : index
    %8 = vector.load %arg6[%c0_12, %c0_13, %c0_14] : memref<2x1x32xf32, #tpu.memory_space<vmem>>, vector<1x1x32xf32>
    %9 = vector.shape_cast %8 : vector<1x1x32xf32> to vector<1x32xf32>
    %c0_15 = arith.constant 0 : index
    %c0_16 = arith.constant 0 : index
    %c0_17 = arith.constant 0 : index
    %10 = vector.load %arg7[%c0_15, %c0_16, %c0_17] : memref<2x128x64xbf16, #tpu.memory_space<vmem>>, vector<1x128x64xbf16>
    %11 = vector.shape_cast %10 : vector<1x128x64xbf16> to vector<128x64xbf16>
    %c0_18 = arith.constant 0 : index
    %c0_19 = arith.constant 0 : index
    %c0_20 = arith.constant 0 : index
    %12 = vector.load %arg8[%c0_18, %c0_19, %c0_20] : memref<2x1x64xf32, #tpu.memory_space<vmem>>, vector<1x1x64xf32>
    %13 = vector.shape_cast %12 : vector<1x1x64xf32> to vector<1x64xf32>
    %c0_21 = arith.constant 0 : index
    %c0_22 = arith.constant 0 : index
    %c0_23 = arith.constant 0 : index
    %14 = vector.load %arg9[%c0_21, %c0_22, %c0_23] : memref<2x32x128xbf16, #tpu.memory_space<vmem>>, vector<1x32x128xbf16>
    %15 = vector.shape_cast %14 : vector<1x32x128xbf16> to vector<32x128xbf16>
    %c0_24 = arith.constant 0 : index
    %c0_25 = arith.constant 0 : index
    %c0_26 = arith.constant 0 : index
    %16 = vector.load %arg10[%c0_24, %c0_25, %c0_26] : memref<2x1x128xf32, #tpu.memory_space<vmem>>, vector<1x1x128xf32>
    %17 = vector.shape_cast %16 : vector<1x1x128xf32> to vector<1x128xf32>
    %18 = arith.truncf %1 : vector<8x128xf32> to vector<8x128xbf16>
    %cst = arith.constant dense<0.000000e+00> : vector<8x32xf32>
    %19 = tpu.matmul %18, %7, %cst {dimension_numbers = #tpu.dot_dimension_numbers<[1], [0], [0], [1], [0, 0, 1, 1], [], []>} : vector<8x128xbf16>, vector<128x32xbf16>, vector<8x32xf32> -> vector<8x32xf32>
    %20 = vector.broadcast %9 : vector<1x32xf32> to vector<8x32xf32>
    %21 = arith.addf %19, %20 : vector<8x32xf32>
    %22 = arith.truncf %1 : vector<8x128xf32> to vector<8x128xbf16>
    %cst_27 = arith.constant dense<0.000000e+00> : vector<8x64xf32>
    %23 = tpu.matmul %22, %11, %cst_27 {dimension_numbers = #tpu.dot_dimension_numbers<[1], [0], [0], [1], [0, 0, 1, 1], [], []>} : vector<8x128xbf16>, vector<128x64xbf16>, vector<8x64xf32> -> vector<8x64xf32>
    %24 = vector.broadcast %13 : vector<1x64xf32> to vector<8x64xf32>
    %25 = arith.addf %23, %24 : vector<8x64xf32>
    %26 = vector.extract_strided_slice %25 {offsets = [0, 0], sizes = [8, 32], strides = [1, 1]} : vector<8x64xf32> to vector<8x32xf32>
    %27 = vector.extract_strided_slice %25 {offsets = [0, 32], sizes = [8, 32], strides = [1, 1]} : vector<8x64xf32> to vector<8x32xf32>
    %28 = vector.extract_strided_slice %21 {offsets = [0, 0], sizes = [8, 8], strides = [1, 1]} : vector<8x32xf32> to vector<8x8xf32>
    %29 = arith.truncf %28 : vector<8x8xf32> to vector<8x8xbf16>
    %30 = vector.extract_strided_slice %26 {offsets = [0, 0], sizes = [8, 8], strides = [1, 1]} : vector<8x32xf32> to vector<8x8xf32>
    %31 = arith.truncf %30 : vector<8x8xf32> to vector<8x8xbf16>
    %cst_28 = arith.constant dense<0.000000e+00> : vector<8x8xf32>
    %32 = tpu.matmul %29, %31, %cst_28 {dimension_numbers = #tpu.dot_dimension_numbers<[1], [1], [0], [0], [0, 0, 1, 0], [], []>} : vector<8x8xbf16>, vector<8x8xbf16>, vector<8x8xf32> -> vector<8x8xf32>
    %33 = arith.addf %32, %4 : vector<8x8xf32>
    %cst_29 = arith.constant dense<0xFF800000> : vector<8xf32>
    %34 = vector.multi_reduction <maximumf>, %33, %cst_29 [1] : vector<8x8xf32> to vector<8xf32>
    %35 = vector.shape_cast %34 : vector<8xf32> to vector<8x1xf32>
    %36 = vector.broadcast %35 : vector<8x1xf32> to vector<8x8xf32>
    %37 = arith.subf %33, %36 : vector<8x8xf32>
    %38 = math.exp %37 : vector<8x8xf32>
    %cst_30 = arith.constant dense<0.000000e+00> : vector<8xf32>
    %39 = vector.multi_reduction <add>, %38, %cst_30 [1] : vector<8x8xf32> to vector<8xf32>
    %40 = vector.shape_cast %39 : vector<8xf32> to vector<8x1xf32>
    %41 = arith.truncf %38 : vector<8x8xf32> to vector<8x8xbf16>
    %42 = vector.extract_strided_slice %27 {offsets = [0, 0], sizes = [8, 8], strides = [1, 1]} : vector<8x32xf32> to vector<8x8xf32>
    %43 = arith.truncf %42 : vector<8x8xf32> to vector<8x8xbf16>
    %cst_31 = arith.constant dense<0.000000e+00> : vector<8x8xf32>
    %44 = tpu.matmul %41, %43, %cst_31 {dimension_numbers = #tpu.dot_dimension_numbers<[1], [0], [0], [1], [0, 0, 1, 1], [], []>} : vector<8x8xbf16>, vector<8x8xbf16>, vector<8x8xf32> -> vector<8x8xf32>
    %45 = tpu.reciprocal %40 {approx = true} : vector<8x1xf32> -> vector<8x1xf32>
    %46 = vector.broadcast %45 : vector<8x1xf32> to vector<8x8xf32>
    %47 = arith.mulf %44, %46 : vector<8x8xf32>
    %48 = vector.extract_strided_slice %21 {offsets = [0, 8], sizes = [8, 8], strides = [1, 1]} : vector<8x32xf32> to vector<8x8xf32>
    %49 = arith.truncf %48 : vector<8x8xf32> to vector<8x8xbf16>
    %50 = vector.extract_strided_slice %26 {offsets = [0, 8], sizes = [8, 8], strides = [1, 1]} : vector<8x32xf32> to vector<8x8xf32>
    %51 = arith.truncf %50 : vector<8x8xf32> to vector<8x8xbf16>
    %cst_32 = arith.constant dense<0.000000e+00> : vector<8x8xf32>
    %52 = tpu.matmul %49, %51, %cst_32 {dimension_numbers = #tpu.dot_dimension_numbers<[1], [1], [0], [0], [0, 0, 1, 0], [], []>} : vector<8x8xbf16>, vector<8x8xbf16>, vector<8x8xf32> -> vector<8x8xf32>
    %53 = arith.addf %52, %4 : vector<8x8xf32>
    %cst_33 = arith.constant dense<0xFF800000> : vector<8xf32>
    %54 = vector.multi_reduction <maximumf>, %53, %cst_33 [1] : vector<8x8xf32> to vector<8xf32>
    %55 = vector.shape_cast %54 : vector<8xf32> to vector<8x1xf32>
    %56 = vector.broadcast %55 : vector<8x1xf32> to vector<8x8xf32>
    %57 = arith.subf %53, %56 : vector<8x8xf32>
    %58 = math.exp %57 : vector<8x8xf32>
    %cst_34 = arith.constant dense<0.000000e+00> : vector<8xf32>
    %59 = vector.multi_reduction <add>, %58, %cst_34 [1] : vector<8x8xf32> to vector<8xf32>
    %60 = vector.shape_cast %59 : vector<8xf32> to vector<8x1xf32>
    %61 = arith.truncf %58 : vector<8x8xf32> to vector<8x8xbf16>
    %62 = vector.extract_strided_slice %27 {offsets = [0, 8], sizes = [8, 8], strides = [1, 1]} : vector<8x32xf32> to vector<8x8xf32>
    %63 = arith.truncf %62 : vector<8x8xf32> to vector<8x8xbf16>
    %cst_35 = arith.constant dense<0.000000e+00> : vector<8x8xf32>
    %64 = tpu.matmul %61, %63, %cst_35 {dimension_numbers = #tpu.dot_dimension_numbers<[1], [0], [0], [1], [0, 0, 1, 1], [], []>} : vector<8x8xbf16>, vector<8x8xbf16>, vector<8x8xf32> -> vector<8x8xf32>
    %65 = tpu.reciprocal %60 {approx = true} : vector<8x1xf32> -> vector<8x1xf32>
    %66 = vector.broadcast %65 : vector<8x1xf32> to vector<8x8xf32>
    %67 = arith.mulf %64, %66 : vector<8x8xf32>
    %68 = vector.extract_strided_slice %21 {offsets = [0, 16], sizes = [8, 8], strides = [1, 1]} : vector<8x32xf32> to vector<8x8xf32>
    %69 = arith.truncf %68 : vector<8x8xf32> to vector<8x8xbf16>
    %70 = vector.extract_strided_slice %26 {offsets = [0, 16], sizes = [8, 8], strides = [1, 1]} : vector<8x32xf32> to vector<8x8xf32>
    %71 = arith.truncf %70 : vector<8x8xf32> to vector<8x8xbf16>
    %cst_36 = arith.constant dense<0.000000e+00> : vector<8x8xf32>
    %72 = tpu.matmul %69, %71, %cst_36 {dimension_numbers = #tpu.dot_dimension_numbers<[1], [1], [0], [0], [0, 0, 1, 0], [], []>} : vector<8x8xbf16>, vector<8x8xbf16>, vector<8x8xf32> -> vector<8x8xf32>
    %73 = arith.addf %72, %4 : vector<8x8xf32>
    %cst_37 = arith.constant dense<0xFF800000> : vector<8xf32>
    %74 = vector.multi_reduction <maximumf>, %73, %cst_37 [1] : vector<8x8xf32> to vector<8xf32>
    %75 = vector.shape_cast %74 : vector<8xf32> to vector<8x1xf32>
    %76 = vector.broadcast %75 : vector<8x1xf32> to vector<8x8xf32>
    %77 = arith.subf %73, %76 : vector<8x8xf32>
    %78 = math.exp %77 : vector<8x8xf32>
    %cst_38 = arith.constant dense<0.000000e+00> : vector<8xf32>
    %79 = vector.multi_reduction <add>, %78, %cst_38 [1] : vector<8x8xf32> to vector<8xf32>
    %80 = vector.shape_cast %79 : vector<8xf32> to vector<8x1xf32>
    %81 = arith.truncf %78 : vector<8x8xf32> to vector<8x8xbf16>
    %82 = vector.extract_strided_slice %27 {offsets = [0, 16], sizes = [8, 8], strides = [1, 1]} : vector<8x32xf32> to vector<8x8xf32>
    %83 = arith.truncf %82 : vector<8x8xf32> to vector<8x8xbf16>
    %cst_39 = arith.constant dense<0.000000e+00> : vector<8x8xf32>
    %84 = tpu.matmul %81, %83, %cst_39 {dimension_numbers = #tpu.dot_dimension_numbers<[1], [0], [0], [1], [0, 0, 1, 1], [], []>} : vector<8x8xbf16>, vector<8x8xbf16>, vector<8x8xf32> -> vector<8x8xf32>
    %85 = tpu.reciprocal %80 {approx = true} : vector<8x1xf32> -> vector<8x1xf32>
    %86 = vector.broadcast %85 : vector<8x1xf32> to vector<8x8xf32>
    %87 = arith.mulf %84, %86 : vector<8x8xf32>
    %88 = vector.extract_strided_slice %21 {offsets = [0, 24], sizes = [8, 8], strides = [1, 1]} : vector<8x32xf32> to vector<8x8xf32>
    %89 = arith.truncf %88 : vector<8x8xf32> to vector<8x8xbf16>
    %90 = vector.extract_strided_slice %26 {offsets = [0, 24], sizes = [8, 8], strides = [1, 1]} : vector<8x32xf32> to vector<8x8xf32>
    %91 = arith.truncf %90 : vector<8x8xf32> to vector<8x8xbf16>
    %cst_40 = arith.constant dense<0.000000e+00> : vector<8x8xf32>
    %92 = tpu.matmul %89, %91, %cst_40 {dimension_numbers = #tpu.dot_dimension_numbers<[1], [1], [0], [0], [0, 0, 1, 0], [], []>} : vector<8x8xbf16>, vector<8x8xbf16>, vector<8x8xf32> -> vector<8x8xf32>
    %93 = arith.addf %92, %4 : vector<8x8xf32>
    %cst_41 = arith.constant dense<0xFF800000> : vector<8xf32>
    %94 = vector.multi_reduction <maximumf>, %93, %cst_41 [1] : vector<8x8xf32> to vector<8xf32>
    %95 = vector.shape_cast %94 : vector<8xf32> to vector<8x1xf32>
    %96 = vector.broadcast %95 : vector<8x1xf32> to vector<8x8xf32>
    %97 = arith.subf %93, %96 : vector<8x8xf32>
    %98 = math.exp %97 : vector<8x8xf32>
    %cst_42 = arith.constant dense<0.000000e+00> : vector<8xf32>
    %99 = vector.multi_reduction <add>, %98, %cst_42 [1] : vector<8x8xf32> to vector<8xf32>
    %100 = vector.shape_cast %99 : vector<8xf32> to vector<8x1xf32>
    %101 = arith.truncf %98 : vector<8x8xf32> to vector<8x8xbf16>
    %102 = vector.extract_strided_slice %27 {offsets = [0, 24], sizes = [8, 8], strides = [1, 1]} : vector<8x32xf32> to vector<8x8xf32>
    %103 = arith.truncf %102 : vector<8x8xf32> to vector<8x8xbf16>
    %cst_43 = arith.constant dense<0.000000e+00> : vector<8x8xf32>
    %104 = tpu.matmul %101, %103, %cst_43 {dimension_numbers = #tpu.dot_dimension_numbers<[1], [0], [0], [1], [0, 0, 1, 1], [], []>} : vector<8x8xbf16>, vector<8x8xbf16>, vector<8x8xf32> -> vector<8x8xf32>
    %105 = tpu.reciprocal %100 {approx = true} : vector<8x1xf32> -> vector<8x1xf32>
    %106 = vector.broadcast %105 : vector<8x1xf32> to vector<8x8xf32>
    %107 = arith.mulf %104, %106 : vector<8x8xf32>
    %108 = tpu.concatenate %47, %67, %87, %107 in 1 : vector<8x8xf32>, vector<8x8xf32>, vector<8x8xf32>, vector<8x8xf32> -> vector<8x32xf32>
    %109 = arith.truncf %108 : vector<8x32xf32> to vector<8x32xbf16>
    %cst_44 = arith.constant dense<0.000000e+00> : vector<8x128xf32>
    %110 = tpu.matmul %109, %15, %cst_44 {dimension_numbers = #tpu.dot_dimension_numbers<[1], [0], [0], [1], [0, 0, 1, 1], [], []>} : vector<8x32xbf16>, vector<32x128xbf16>, vector<8x128xf32> -> vector<8x128xf32>
    %111 = vector.broadcast %17 : vector<1x128xf32> to vector<8x128xf32>
    %112 = arith.addf %110, %111 : vector<8x128xf32>
    %c0_45 = arith.constant 0 : index
    %c0_46 = arith.constant 0 : index
    %c0_47 = arith.constant 0 : index
    %113 = vector.load %arg11[%c0_45, %c0_46, %c0_47] : memref<2x1x128xf32, #tpu.memory_space<vmem>>, vector<1x1x128xf32>
    %114 = vector.shape_cast %113 : vector<1x1x128xf32> to vector<1x128xf32>
    %c0_48 = arith.constant 0 : index
    %c0_49 = arith.constant 0 : index
    %c0_50 = arith.constant 0 : index
    %115 = vector.load %arg12[%c0_48, %c0_49, %c0_50] : memref<2x1x128xf32, #tpu.memory_space<vmem>>, vector<1x1x128xf32>
    %116 = vector.shape_cast %115 : vector<1x1x128xf32> to vector<1x128xf32>
    %117 = tpu.iota {dimensions = array<i32: 1>} : vector<8x128xi32>
    %c32_i32 = arith.constant 32 : i32
    %118 = vector.broadcast %c32_i32 : i32 to vector<8x128xi32>
    %119 = arith.cmpi slt, %117, %118 : vector<8x128xi32>
    %120 = arith.extui %119 : vector<8x128xi1> to vector<8x128xi32>
    %121 = arith.sitofp %120 : vector<8x128xi32> to vector<8x128xf32>
    %cst_51 = arith.constant dense<0.000000e+00> : vector<8xf32>
    %122 = vector.multi_reduction <add>, %112, %cst_51 [1] : vector<8x128xf32> to vector<8xf32>
    %123 = vector.shape_cast %122 : vector<8xf32> to vector<8x1xf32>
    %cst_52 = arith.constant 3.125000e-02 : f32
    %124 = vector.broadcast %cst_52 : f32 to vector<8x1xf32>
    %125 = arith.mulf %123, %124 : vector<8x1xf32>
    %126 = vector.broadcast %125 : vector<8x1xf32> to vector<8x128xf32>
    %127 = arith.subf %112, %126 : vector<8x128xf32>
    %128 = arith.mulf %127, %121 : vector<8x128xf32>
    %129 = arith.mulf %128, %128 : vector<8x128xf32>
    %cst_53 = arith.constant dense<0.000000e+00> : vector<8xf32>
    %130 = vector.multi_reduction <add>, %129, %cst_53 [1] : vector<8x128xf32> to vector<8xf32>
    %131 = vector.shape_cast %130 : vector<8xf32> to vector<8x1xf32>
    %cst_54 = arith.constant 0.0322580636 : f32
    %132 = vector.broadcast %cst_54 : f32 to vector<8x1xf32>
    %133 = arith.mulf %131, %132 : vector<8x1xf32>
    %134 = math.sqrt %133 : vector<8x1xf32>
    %cst_55 = arith.constant 9.99999997E-7 : f32
    %135 = vector.broadcast %cst_55 : f32 to vector<8x1xf32>
    %136 = arith.addf %134, %135 : vector<8x1xf32>
    %137 = tpu.reciprocal %136 {approx = true} : vector<8x1xf32> -> vector<8x1xf32>
    %138 = vector.broadcast %137 : vector<8x1xf32> to vector<8x128xf32>
    %139 = arith.mulf %128, %138 : vector<8x128xf32>
    %140 = vector.broadcast %114 : vector<1x128xf32> to vector<8x128xf32>
    %141 = arith.mulf %140, %139 : vector<8x128xf32>
    %142 = vector.broadcast %116 : vector<1x128xf32> to vector<8x128xf32>
    %143 = arith.addf %141, %142 : vector<8x128xf32>
    %144 = arith.addf %112, %143 : vector<8x128xf32>
    %c0_56 = arith.constant 0 : index
    %c0_57 = arith.constant 0 : index
    %c0_58 = arith.constant 0 : index
    %145 = vector.load %arg13[%c0_56, %c0_57, %c0_58] : memref<2x128x32xbf16, #tpu.memory_space<vmem>>, vector<1x128x32xbf16>
    %146 = vector.shape_cast %145 : vector<1x128x32xbf16> to vector<128x32xbf16>
    %c0_59 = arith.constant 0 : index
    %c0_60 = arith.constant 0 : index
    %c0_61 = arith.constant 0 : index
    %147 = vector.load %arg14[%c0_59, %c0_60, %c0_61] : memref<2x1x32xf32, #tpu.memory_space<vmem>>, vector<1x1x32xf32>
    %148 = vector.shape_cast %147 : vector<1x1x32xf32> to vector<1x32xf32>
    %c0_62 = arith.constant 0 : index
    %c0_63 = arith.constant 0 : index
    %c0_64 = arith.constant 0 : index
    %149 = vector.load %arg15[%c0_62, %c0_63, %c0_64] : memref<2x128x64xbf16, #tpu.memory_space<vmem>>, vector<1x128x64xbf16>
    %150 = vector.shape_cast %149 : vector<1x128x64xbf16> to vector<128x64xbf16>
    %c0_65 = arith.constant 0 : index
    %c0_66 = arith.constant 0 : index
    %c0_67 = arith.constant 0 : index
    %151 = vector.load %arg16[%c0_65, %c0_66, %c0_67] : memref<2x1x64xf32, #tpu.memory_space<vmem>>, vector<1x1x64xf32>
    %152 = vector.shape_cast %151 : vector<1x1x64xf32> to vector<1x64xf32>
    %c0_68 = arith.constant 0 : index
    %c0_69 = arith.constant 0 : index
    %c0_70 = arith.constant 0 : index
    %153 = vector.load %arg17[%c0_68, %c0_69, %c0_70] : memref<2x32x128xbf16, #tpu.memory_space<vmem>>, vector<1x32x128xbf16>
    %154 = vector.shape_cast %153 : vector<1x32x128xbf16> to vector<32x128xbf16>
    %c0_71 = arith.constant 0 : index
    %c0_72 = arith.constant 0 : index
    %c0_73 = arith.constant 0 : index
    %155 = vector.load %arg18[%c0_71, %c0_72, %c0_73] : memref<2x1x128xf32, #tpu.memory_space<vmem>>, vector<1x1x128xf32>
    %156 = vector.shape_cast %155 : vector<1x1x128xf32> to vector<1x128xf32>
    %157 = arith.truncf %144 : vector<8x128xf32> to vector<8x128xbf16>
    %cst_74 = arith.constant dense<0.000000e+00> : vector<8x32xf32>
    %158 = tpu.matmul %157, %146, %cst_74 {dimension_numbers = #tpu.dot_dimension_numbers<[1], [0], [0], [1], [0, 0, 1, 1], [], []>} : vector<8x128xbf16>, vector<128x32xbf16>, vector<8x32xf32> -> vector<8x32xf32>
    %159 = vector.broadcast %148 : vector<1x32xf32> to vector<8x32xf32>
    %160 = arith.addf %158, %159 : vector<8x32xf32>
    %161 = arith.truncf %3 : vector<8x128xf32> to vector<8x128xbf16>
    %cst_75 = arith.constant dense<0.000000e+00> : vector<8x64xf32>
    %162 = tpu.matmul %161, %150, %cst_75 {dimension_numbers = #tpu.dot_dimension_numbers<[1], [0], [0], [1], [0, 0, 1, 1], [], []>} : vector<8x128xbf16>, vector<128x64xbf16>, vector<8x64xf32> -> vector<8x64xf32>
    %163 = vector.broadcast %152 : vector<1x64xf32> to vector<8x64xf32>
    %164 = arith.addf %162, %163 : vector<8x64xf32>
    %165 = vector.extract_strided_slice %164 {offsets = [0, 0], sizes = [8, 32], strides = [1, 1]} : vector<8x64xf32> to vector<8x32xf32>
    %166 = vector.extract_strided_slice %164 {offsets = [0, 32], sizes = [8, 32], strides = [1, 1]} : vector<8x64xf32> to vector<8x32xf32>
    %167 = vector.extract_strided_slice %160 {offsets = [0, 0], sizes = [8, 8], strides = [1, 1]} : vector<8x32xf32> to vector<8x8xf32>
    %168 = arith.truncf %167 : vector<8x8xf32> to vector<8x8xbf16>
    %169 = vector.extract_strided_slice %165 {offsets = [0, 0], sizes = [8, 8], strides = [1, 1]} : vector<8x32xf32> to vector<8x8xf32>
    %170 = arith.truncf %169 : vector<8x8xf32> to vector<8x8xbf16>
    %cst_76 = arith.constant dense<0.000000e+00> : vector<8x8xf32>
    %171 = tpu.matmul %168, %170, %cst_76 {dimension_numbers = #tpu.dot_dimension_numbers<[1], [1], [0], [0], [0, 0, 1, 0], [], []>} : vector<8x8xbf16>, vector<8x8xbf16>, vector<8x8xf32> -> vector<8x8xf32>
    %172 = arith.addf %171, %5 : vector<8x8xf32>
    %cst_77 = arith.constant dense<0xFF800000> : vector<8xf32>
    %173 = vector.multi_reduction <maximumf>, %172, %cst_77 [1] : vector<8x8xf32> to vector<8xf32>
    %174 = vector.shape_cast %173 : vector<8xf32> to vector<8x1xf32>
    %175 = vector.broadcast %174 : vector<8x1xf32> to vector<8x8xf32>
    %176 = arith.subf %172, %175 : vector<8x8xf32>
    %177 = math.exp %176 : vector<8x8xf32>
    %cst_78 = arith.constant dense<0.000000e+00> : vector<8xf32>
    %178 = vector.multi_reduction <add>, %177, %cst_78 [1] : vector<8x8xf32> to vector<8xf32>
    %179 = vector.shape_cast %178 : vector<8xf32> to vector<8x1xf32>
    %180 = arith.truncf %177 : vector<8x8xf32> to vector<8x8xbf16>
    %181 = vector.extract_strided_slice %166 {offsets = [0, 0], sizes = [8, 8], strides = [1, 1]} : vector<8x32xf32> to vector<8x8xf32>
    %182 = arith.truncf %181 : vector<8x8xf32> to vector<8x8xbf16>
    %cst_79 = arith.constant dense<0.000000e+00> : vector<8x8xf32>
    %183 = tpu.matmul %180, %182, %cst_79 {dimension_numbers = #tpu.dot_dimension_numbers<[1], [0], [0], [1], [0, 0, 1, 1], [], []>} : vector<8x8xbf16>, vector<8x8xbf16>, vector<8x8xf32> -> vector<8x8xf32>
    %184 = tpu.reciprocal %179 {approx = true} : vector<8x1xf32> -> vector<8x1xf32>
    %185 = vector.broadcast %184 : vector<8x1xf32> to vector<8x8xf32>
    %186 = arith.mulf %183, %185 : vector<8x8xf32>
    %187 = vector.extract_strided_slice %160 {offsets = [0, 8], sizes = [8, 8], strides = [1, 1]} : vector<8x32xf32> to vector<8x8xf32>
    %188 = arith.truncf %187 : vector<8x8xf32> to vector<8x8xbf16>
    %189 = vector.extract_strided_slice %165 {offsets = [0, 8], sizes = [8, 8], strides = [1, 1]} : vector<8x32xf32> to vector<8x8xf32>
    %190 = arith.truncf %189 : vector<8x8xf32> to vector<8x8xbf16>
    %cst_80 = arith.constant dense<0.000000e+00> : vector<8x8xf32>
    %191 = tpu.matmul %188, %190, %cst_80 {dimension_numbers = #tpu.dot_dimension_numbers<[1], [1], [0], [0], [0, 0, 1, 0], [], []>} : vector<8x8xbf16>, vector<8x8xbf16>, vector<8x8xf32> -> vector<8x8xf32>
    %192 = arith.addf %191, %5 : vector<8x8xf32>
    %cst_81 = arith.constant dense<0xFF800000> : vector<8xf32>
    %193 = vector.multi_reduction <maximumf>, %192, %cst_81 [1] : vector<8x8xf32> to vector<8xf32>
    %194 = vector.shape_cast %193 : vector<8xf32> to vector<8x1xf32>
    %195 = vector.broadcast %194 : vector<8x1xf32> to vector<8x8xf32>
    %196 = arith.subf %192, %195 : vector<8x8xf32>
    %197 = math.exp %196 : vector<8x8xf32>
    %cst_82 = arith.constant dense<0.000000e+00> : vector<8xf32>
    %198 = vector.multi_reduction <add>, %197, %cst_82 [1] : vector<8x8xf32> to vector<8xf32>
    %199 = vector.shape_cast %198 : vector<8xf32> to vector<8x1xf32>
    %200 = arith.truncf %197 : vector<8x8xf32> to vector<8x8xbf16>
    %201 = vector.extract_strided_slice %166 {offsets = [0, 8], sizes = [8, 8], strides = [1, 1]} : vector<8x32xf32> to vector<8x8xf32>
    %202 = arith.truncf %201 : vector<8x8xf32> to vector<8x8xbf16>
    %cst_83 = arith.constant dense<0.000000e+00> : vector<8x8xf32>
    %203 = tpu.matmul %200, %202, %cst_83 {dimension_numbers = #tpu.dot_dimension_numbers<[1], [0], [0], [1], [0, 0, 1, 1], [], []>} : vector<8x8xbf16>, vector<8x8xbf16>, vector<8x8xf32> -> vector<8x8xf32>
    %204 = tpu.reciprocal %199 {approx = true} : vector<8x1xf32> -> vector<8x1xf32>
    %205 = vector.broadcast %204 : vector<8x1xf32> to vector<8x8xf32>
    %206 = arith.mulf %203, %205 : vector<8x8xf32>
    %207 = vector.extract_strided_slice %160 {offsets = [0, 16], sizes = [8, 8], strides = [1, 1]} : vector<8x32xf32> to vector<8x8xf32>
    %208 = arith.truncf %207 : vector<8x8xf32> to vector<8x8xbf16>
    %209 = vector.extract_strided_slice %165 {offsets = [0, 16], sizes = [8, 8], strides = [1, 1]} : vector<8x32xf32> to vector<8x8xf32>
    %210 = arith.truncf %209 : vector<8x8xf32> to vector<8x8xbf16>
    %cst_84 = arith.constant dense<0.000000e+00> : vector<8x8xf32>
    %211 = tpu.matmul %208, %210, %cst_84 {dimension_numbers = #tpu.dot_dimension_numbers<[1], [1], [0], [0], [0, 0, 1, 0], [], []>} : vector<8x8xbf16>, vector<8x8xbf16>, vector<8x8xf32> -> vector<8x8xf32>
    %212 = arith.addf %211, %5 : vector<8x8xf32>
    %cst_85 = arith.constant dense<0xFF800000> : vector<8xf32>
    %213 = vector.multi_reduction <maximumf>, %212, %cst_85 [1] : vector<8x8xf32> to vector<8xf32>
    %214 = vector.shape_cast %213 : vector<8xf32> to vector<8x1xf32>
    %215 = vector.broadcast %214 : vector<8x1xf32> to vector<8x8xf32>
    %216 = arith.subf %212, %215 : vector<8x8xf32>
    %217 = math.exp %216 : vector<8x8xf32>
    %cst_86 = arith.constant dense<0.000000e+00> : vector<8xf32>
    %218 = vector.multi_reduction <add>, %217, %cst_86 [1] : vector<8x8xf32> to vector<8xf32>
    %219 = vector.shape_cast %218 : vector<8xf32> to vector<8x1xf32>
    %220 = arith.truncf %217 : vector<8x8xf32> to vector<8x8xbf16>
    %221 = vector.extract_strided_slice %166 {offsets = [0, 16], sizes = [8, 8], strides = [1, 1]} : vector<8x32xf32> to vector<8x8xf32>
    %222 = arith.truncf %221 : vector<8x8xf32> to vector<8x8xbf16>
    %cst_87 = arith.constant dense<0.000000e+00> : vector<8x8xf32>
    %223 = tpu.matmul %220, %222, %cst_87 {dimension_numbers = #tpu.dot_dimension_numbers<[1], [0], [0], [1], [0, 0, 1, 1], [], []>} : vector<8x8xbf16>, vector<8x8xbf16>, vector<8x8xf32> -> vector<8x8xf32>
    %224 = tpu.reciprocal %219 {approx = true} : vector<8x1xf32> -> vector<8x1xf32>
    %225 = vector.broadcast %224 : vector<8x1xf32> to vector<8x8xf32>
    %226 = arith.mulf %223, %225 : vector<8x8xf32>
    %227 = vector.extract_strided_slice %160 {offsets = [0, 24], sizes = [8, 8], strides = [1, 1]} : vector<8x32xf32> to vector<8x8xf32>
    %228 = arith.truncf %227 : vector<8x8xf32> to vector<8x8xbf16>
    %229 = vector.extract_strided_slice %165 {offsets = [0, 24], sizes = [8, 8], strides = [1, 1]} : vector<8x32xf32> to vector<8x8xf32>
    %230 = arith.truncf %229 : vector<8x8xf32> to vector<8x8xbf16>
    %cst_88 = arith.constant dense<0.000000e+00> : vector<8x8xf32>
    %231 = tpu.matmul %228, %230, %cst_88 {dimension_numbers = #tpu.dot_dimension_numbers<[1], [1], [0], [0], [0, 0, 1, 0], [], []>} : vector<8x8xbf16>, vector<8x8xbf16>, vector<8x8xf32> -> vector<8x8xf32>
    %232 = arith.addf %231, %5 : vector<8x8xf32>
    %cst_89 = arith.constant dense<0xFF800000> : vector<8xf32>
    %233 = vector.multi_reduction <maximumf>, %232, %cst_89 [1] : vector<8x8xf32> to vector<8xf32>
    %234 = vector.shape_cast %233 : vector<8xf32> to vector<8x1xf32>
    %235 = vector.broadcast %234 : vector<8x1xf32> to vector<8x8xf32>
    %236 = arith.subf %232, %235 : vector<8x8xf32>
    %237 = math.exp %236 : vector<8x8xf32>
    %cst_90 = arith.constant dense<0.000000e+00> : vector<8xf32>
    %238 = vector.multi_reduction <add>, %237, %cst_90 [1] : vector<8x8xf32> to vector<8xf32>
    %239 = vector.shape_cast %238 : vector<8xf32> to vector<8x1xf32>
    %240 = arith.truncf %237 : vector<8x8xf32> to vector<8x8xbf16>
    %241 = vector.extract_strided_slice %166 {offsets = [0, 24], sizes = [8, 8], strides = [1, 1]} : vector<8x32xf32> to vector<8x8xf32>
    %242 = arith.truncf %241 : vector<8x8xf32> to vector<8x8xbf16>
    %cst_91 = arith.constant dense<0.000000e+00> : vector<8x8xf32>
    %243 = tpu.matmul %240, %242, %cst_91 {dimension_numbers = #tpu.dot_dimension_numbers<[1], [0], [0], [1], [0, 0, 1, 1], [], []>} : vector<8x8xbf16>, vector<8x8xbf16>, vector<8x8xf32> -> vector<8x8xf32>
    %244 = tpu.reciprocal %239 {approx = true} : vector<8x1xf32> -> vector<8x1xf32>
    %245 = vector.broadcast %244 : vector<8x1xf32> to vector<8x8xf32>
    %246 = arith.mulf %243, %245 : vector<8x8xf32>
    %247 = tpu.concatenate %186, %206, %226, %246 in 1 : vector<8x8xf32>, vector<8x8xf32>, vector<8x8xf32>, vector<8x8xf32> -> vector<8x32xf32>
    %248 = arith.truncf %247 : vector<8x32xf32> to vector<8x32xbf16>
    %cst_92 = arith.constant dense<0.000000e+00> : vector<8x128xf32>
    %249 = tpu.matmul %248, %154, %cst_92 {dimension_numbers = #tpu.dot_dimension_numbers<[1], [0], [0], [1], [0, 0, 1, 1], [], []>} : vector<8x32xbf16>, vector<32x128xbf16>, vector<8x128xf32> -> vector<8x128xf32>
    %250 = vector.broadcast %156 : vector<1x128xf32> to vector<8x128xf32>
    %251 = arith.addf %249, %250 : vector<8x128xf32>
    %c0_93 = arith.constant 0 : index
    %c0_94 = arith.constant 0 : index
    %c0_95 = arith.constant 0 : index
    %252 = vector.load %arg19[%c0_93, %c0_94, %c0_95] : memref<2x1x128xf32, #tpu.memory_space<vmem>>, vector<1x1x128xf32>
    %253 = vector.shape_cast %252 : vector<1x1x128xf32> to vector<1x128xf32>
    %c0_96 = arith.constant 0 : index
    %c0_97 = arith.constant 0 : index
    %c0_98 = arith.constant 0 : index
    %254 = vector.load %arg20[%c0_96, %c0_97, %c0_98] : memref<2x1x128xf32, #tpu.memory_space<vmem>>, vector<1x1x128xf32>
    %255 = vector.shape_cast %254 : vector<1x1x128xf32> to vector<1x128xf32>
    %256 = tpu.iota {dimensions = array<i32: 1>} : vector<8x128xi32>
    %c32_i32_99 = arith.constant 32 : i32
    %257 = vector.broadcast %c32_i32_99 : i32 to vector<8x128xi32>
    %258 = arith.cmpi slt, %256, %257 : vector<8x128xi32>
    %259 = arith.extui %258 : vector<8x128xi1> to vector<8x128xi32>
    %260 = arith.sitofp %259 : vector<8x128xi32> to vector<8x128xf32>
    %cst_100 = arith.constant dense<0.000000e+00> : vector<8xf32>
    %261 = vector.multi_reduction <add>, %251, %cst_100 [1] : vector<8x128xf32> to vector<8xf32>
    %262 = vector.shape_cast %261 : vector<8xf32> to vector<8x1xf32>
    %cst_101 = arith.constant 3.125000e-02 : f32
    %263 = vector.broadcast %cst_101 : f32 to vector<8x1xf32>
    %264 = arith.mulf %262, %263 : vector<8x1xf32>
    %265 = vector.broadcast %264 : vector<8x1xf32> to vector<8x128xf32>
    %266 = arith.subf %251, %265 : vector<8x128xf32>
    %267 = arith.mulf %266, %260 : vector<8x128xf32>
    %268 = arith.mulf %267, %267 : vector<8x128xf32>
    %cst_102 = arith.constant dense<0.000000e+00> : vector<8xf32>
    %269 = vector.multi_reduction <add>, %268, %cst_102 [1] : vector<8x128xf32> to vector<8xf32>
    %270 = vector.shape_cast %269 : vector<8xf32> to vector<8x1xf32>
    %cst_103 = arith.constant 0.0322580636 : f32
    %271 = vector.broadcast %cst_103 : f32 to vector<8x1xf32>
    %272 = arith.mulf %270, %271 : vector<8x1xf32>
    %273 = math.sqrt %272 : vector<8x1xf32>
    %cst_104 = arith.constant 9.99999997E-7 : f32
    %274 = vector.broadcast %cst_104 : f32 to vector<8x1xf32>
    %275 = arith.addf %273, %274 : vector<8x1xf32>
    %276 = tpu.reciprocal %275 {approx = true} : vector<8x1xf32> -> vector<8x1xf32>
    %277 = vector.broadcast %276 : vector<8x1xf32> to vector<8x128xf32>
    %278 = arith.mulf %267, %277 : vector<8x128xf32>
    %279 = vector.broadcast %253 : vector<1x128xf32> to vector<8x128xf32>
    %280 = arith.mulf %279, %278 : vector<8x128xf32>
    %281 = vector.broadcast %255 : vector<1x128xf32> to vector<8x128xf32>
    %282 = arith.addf %280, %281 : vector<8x128xf32>
    %283 = arith.addf %251, %282 : vector<8x128xf32>
    %284 = arith.truncf %283 : vector<8x128xf32> to vector<8x128xbf16>
    %c0_105 = arith.constant 0 : index
    %c0_106 = arith.constant 0 : index
    %c0_107 = arith.constant 0 : index
    %285 = vector.load %arg21[%c0_105, %c0_106, %c0_107] : memref<2x128x2048xbf16, #tpu.memory_space<vmem>>, vector<1x128x2048xbf16>
    %286 = vector.shape_cast %285 : vector<1x128x2048xbf16> to vector<128x2048xbf16>
    %cst_108 = arith.constant dense<0.000000e+00> : vector<8x2048xf32>
    %287 = tpu.matmul %284, %286, %cst_108 {dimension_numbers = #tpu.dot_dimension_numbers<[1], [0], [0], [1], [0, 0, 1, 1], [], []>} : vector<8x128xbf16>, vector<128x2048xbf16>, vector<8x2048xf32> -> vector<8x2048xf32>
    %c0_109 = arith.constant 0 : index
    %c0_110 = arith.constant 0 : index
    %c0_111 = arith.constant 0 : index
    %288 = vector.load %arg22[%c0_109, %c0_110, %c0_111] : memref<2x1x2048xf32, #tpu.memory_space<vmem>>, vector<1x1x2048xf32>
    %289 = vector.shape_cast %288 : vector<1x1x2048xf32> to vector<1x2048xf32>
    %290 = vector.broadcast %289 : vector<1x2048xf32> to vector<8x2048xf32>
    %291 = arith.addf %287, %290 : vector<8x2048xf32>
    %cst_112 = arith.constant 0.000000e+00 : f32
    %292 = vector.broadcast %cst_112 : f32 to vector<8x2048xf32>
    %293 = arith.maximumf %291, %292 : vector<8x2048xf32>
    %294 = arith.truncf %293 : vector<8x2048xf32> to vector<8x2048xbf16>
    %c0_113 = arith.constant 0 : index
    %c0_114 = arith.constant 0 : index
    %c0_115 = arith.constant 0 : index
    %295 = vector.load %arg23[%c0_113, %c0_114, %c0_115] : memref<2x2048x128xbf16, #tpu.memory_space<vmem>>, vector<1x2048x128xbf16>
    %296 = vector.shape_cast %295 : vector<1x2048x128xbf16> to vector<2048x128xbf16>
    %cst_116 = arith.constant dense<0.000000e+00> : vector<8x128xf32>
    %297 = tpu.matmul %294, %296, %cst_116 {dimension_numbers = #tpu.dot_dimension_numbers<[1], [0], [0], [1], [0, 0, 1, 1], [], []>} : vector<8x2048xbf16>, vector<2048x128xbf16>, vector<8x128xf32> -> vector<8x128xf32>
    %c0_117 = arith.constant 0 : index
    %c0_118 = arith.constant 0 : index
    %c0_119 = arith.constant 0 : index
    %298 = vector.load %arg24[%c0_117, %c0_118, %c0_119] : memref<2x1x128xf32, #tpu.memory_space<vmem>>, vector<1x1x128xf32>
    %299 = vector.shape_cast %298 : vector<1x1x128xf32> to vector<1x128xf32>
    %300 = vector.broadcast %299 : vector<1x128xf32> to vector<8x128xf32>
    %301 = arith.addf %297, %300 : vector<8x128xf32>
    %c0_120 = arith.constant 0 : index
    %c0_121 = arith.constant 0 : index
    %c0_122 = arith.constant 0 : index
    %302 = vector.load %arg25[%c0_120, %c0_121, %c0_122] : memref<2x1x128xf32, #tpu.memory_space<vmem>>, vector<1x1x128xf32>
    %303 = vector.shape_cast %302 : vector<1x1x128xf32> to vector<1x128xf32>
    %c0_123 = arith.constant 0 : index
    %c0_124 = arith.constant 0 : index
    %c0_125 = arith.constant 0 : index
    %304 = vector.load %arg26[%c0_123, %c0_124, %c0_125] : memref<2x1x128xf32, #tpu.memory_space<vmem>>, vector<1x1x128xf32>
    %305 = vector.shape_cast %304 : vector<1x1x128xf32> to vector<1x128xf32>
    %306 = tpu.iota {dimensions = array<i32: 1>} : vector<8x128xi32>
    %c32_i32_126 = arith.constant 32 : i32
    %307 = vector.broadcast %c32_i32_126 : i32 to vector<8x128xi32>
    %308 = arith.cmpi slt, %306, %307 : vector<8x128xi32>
    %309 = arith.extui %308 : vector<8x128xi1> to vector<8x128xi32>
    %310 = arith.sitofp %309 : vector<8x128xi32> to vector<8x128xf32>
    %cst_127 = arith.constant dense<0.000000e+00> : vector<8xf32>
    %311 = vector.multi_reduction <add>, %301, %cst_127 [1] : vector<8x128xf32> to vector<8xf32>
    %312 = vector.shape_cast %311 : vector<8xf32> to vector<8x1xf32>
    %cst_128 = arith.constant 3.125000e-02 : f32
    %313 = vector.broadcast %cst_128 : f32 to vector<8x1xf32>
    %314 = arith.mulf %312, %313 : vector<8x1xf32>
    %315 = vector.broadcast %314 : vector<8x1xf32> to vector<8x128xf32>
    %316 = arith.subf %301, %315 : vector<8x128xf32>
    %317 = arith.mulf %316, %310 : vector<8x128xf32>
    %318 = arith.mulf %317, %317 : vector<8x128xf32>
    %cst_129 = arith.constant dense<0.000000e+00> : vector<8xf32>
    %319 = vector.multi_reduction <add>, %318, %cst_129 [1] : vector<8x128xf32> to vector<8xf32>
    %320 = vector.shape_cast %319 : vector<8xf32> to vector<8x1xf32>
    %cst_130 = arith.constant 0.0322580636 : f32
    %321 = vector.broadcast %cst_130 : f32 to vector<8x1xf32>
    %322 = arith.mulf %320, %321 : vector<8x1xf32>
    %323 = math.sqrt %322 : vector<8x1xf32>
    %cst_131 = arith.constant 9.99999997E-7 : f32
    %324 = vector.broadcast %cst_131 : f32 to vector<8x1xf32>
    %325 = arith.addf %323, %324 : vector<8x1xf32>
    %326 = tpu.reciprocal %325 {approx = true} : vector<8x1xf32> -> vector<8x1xf32>
    %327 = vector.broadcast %326 : vector<8x1xf32> to vector<8x128xf32>
    %328 = arith.mulf %317, %327 : vector<8x128xf32>
    %329 = vector.broadcast %303 : vector<1x128xf32> to vector<8x128xf32>
    %330 = arith.mulf %329, %328 : vector<8x128xf32>
    %331 = vector.broadcast %305 : vector<1x128xf32> to vector<8x128xf32>
    %332 = arith.addf %330, %331 : vector<8x128xf32>
    %333 = arith.addf %301, %332 : vector<8x128xf32>
    %c1 = arith.constant 1 : index
    %c0_132 = arith.constant 0 : index
    %c0_133 = arith.constant 0 : index
    %334 = vector.load %arg5[%c1, %c0_132, %c0_133] : memref<2x128x32xbf16, #tpu.memory_space<vmem>>, vector<1x128x32xbf16>
    %335 = vector.shape_cast %334 : vector<1x128x32xbf16> to vector<128x32xbf16>
    %c1_134 = arith.constant 1 : index
    %c0_135 = arith.constant 0 : index
    %c0_136 = arith.constant 0 : index
    %336 = vector.load %arg6[%c1_134, %c0_135, %c0_136] : memref<2x1x32xf32, #tpu.memory_space<vmem>>, vector<1x1x32xf32>
    %337 = vector.shape_cast %336 : vector<1x1x32xf32> to vector<1x32xf32>
    %c1_137 = arith.constant 1 : index
    %c0_138 = arith.constant 0 : index
    %c0_139 = arith.constant 0 : index
    %338 = vector.load %arg7[%c1_137, %c0_138, %c0_139] : memref<2x128x64xbf16, #tpu.memory_space<vmem>>, vector<1x128x64xbf16>
    %339 = vector.shape_cast %338 : vector<1x128x64xbf16> to vector<128x64xbf16>
    %c1_140 = arith.constant 1 : index
    %c0_141 = arith.constant 0 : index
    %c0_142 = arith.constant 0 : index
    %340 = vector.load %arg8[%c1_140, %c0_141, %c0_142] : memref<2x1x64xf32, #tpu.memory_space<vmem>>, vector<1x1x64xf32>
    %341 = vector.shape_cast %340 : vector<1x1x64xf32> to vector<1x64xf32>
    %c1_143 = arith.constant 1 : index
    %c0_144 = arith.constant 0 : index
    %c0_145 = arith.constant 0 : index
    %342 = vector.load %arg9[%c1_143, %c0_144, %c0_145] : memref<2x32x128xbf16, #tpu.memory_space<vmem>>, vector<1x32x128xbf16>
    %343 = vector.shape_cast %342 : vector<1x32x128xbf16> to vector<32x128xbf16>
    %c1_146 = arith.constant 1 : index
    %c0_147 = arith.constant 0 : index
    %c0_148 = arith.constant 0 : index
    %344 = vector.load %arg10[%c1_146, %c0_147, %c0_148] : memref<2x1x128xf32, #tpu.memory_space<vmem>>, vector<1x1x128xf32>
    %345 = vector.shape_cast %344 : vector<1x1x128xf32> to vector<1x128xf32>
    %346 = arith.truncf %333 : vector<8x128xf32> to vector<8x128xbf16>
    %cst_149 = arith.constant dense<0.000000e+00> : vector<8x32xf32>
    %347 = tpu.matmul %346, %335, %cst_149 {dimension_numbers = #tpu.dot_dimension_numbers<[1], [0], [0], [1], [0, 0, 1, 1], [], []>} : vector<8x128xbf16>, vector<128x32xbf16>, vector<8x32xf32> -> vector<8x32xf32>
    %348 = vector.broadcast %337 : vector<1x32xf32> to vector<8x32xf32>
    %349 = arith.addf %347, %348 : vector<8x32xf32>
    %350 = arith.truncf %333 : vector<8x128xf32> to vector<8x128xbf16>
    %cst_150 = arith.constant dense<0.000000e+00> : vector<8x64xf32>
    %351 = tpu.matmul %350, %339, %cst_150 {dimension_numbers = #tpu.dot_dimension_numbers<[1], [0], [0], [1], [0, 0, 1, 1], [], []>} : vector<8x128xbf16>, vector<128x64xbf16>, vector<8x64xf32> -> vector<8x64xf32>
    %352 = vector.broadcast %341 : vector<1x64xf32> to vector<8x64xf32>
    %353 = arith.addf %351, %352 : vector<8x64xf32>
    %354 = vector.extract_strided_slice %353 {offsets = [0, 0], sizes = [8, 32], strides = [1, 1]} : vector<8x64xf32> to vector<8x32xf32>
    %355 = vector.extract_strided_slice %353 {offsets = [0, 32], sizes = [8, 32], strides = [1, 1]} : vector<8x64xf32> to vector<8x32xf32>
    %356 = vector.extract_strided_slice %349 {offsets = [0, 0], sizes = [8, 8], strides = [1, 1]} : vector<8x32xf32> to vector<8x8xf32>
    %357 = arith.truncf %356 : vector<8x8xf32> to vector<8x8xbf16>
    %358 = vector.extract_strided_slice %354 {offsets = [0, 0], sizes = [8, 8], strides = [1, 1]} : vector<8x32xf32> to vector<8x8xf32>
    %359 = arith.truncf %358 : vector<8x8xf32> to vector<8x8xbf16>
    %cst_151 = arith.constant dense<0.000000e+00> : vector<8x8xf32>
    %360 = tpu.matmul %357, %359, %cst_151 {dimension_numbers = #tpu.dot_dimension_numbers<[1], [1], [0], [0], [0, 0, 1, 0], [], []>} : vector<8x8xbf16>, vector<8x8xbf16>, vector<8x8xf32> -> vector<8x8xf32>
    %361 = arith.addf %360, %4 : vector<8x8xf32>
    %cst_152 = arith.constant dense<0xFF800000> : vector<8xf32>
    %362 = vector.multi_reduction <maximumf>, %361, %cst_152 [1] : vector<8x8xf32> to vector<8xf32>
    %363 = vector.shape_cast %362 : vector<8xf32> to vector<8x1xf32>
    %364 = vector.broadcast %363 : vector<8x1xf32> to vector<8x8xf32>
    %365 = arith.subf %361, %364 : vector<8x8xf32>
    %366 = math.exp %365 : vector<8x8xf32>
    %cst_153 = arith.constant dense<0.000000e+00> : vector<8xf32>
    %367 = vector.multi_reduction <add>, %366, %cst_153 [1] : vector<8x8xf32> to vector<8xf32>
    %368 = vector.shape_cast %367 : vector<8xf32> to vector<8x1xf32>
    %369 = arith.truncf %366 : vector<8x8xf32> to vector<8x8xbf16>
    %370 = vector.extract_strided_slice %355 {offsets = [0, 0], sizes = [8, 8], strides = [1, 1]} : vector<8x32xf32> to vector<8x8xf32>
    %371 = arith.truncf %370 : vector<8x8xf32> to vector<8x8xbf16>
    %cst_154 = arith.constant dense<0.000000e+00> : vector<8x8xf32>
    %372 = tpu.matmul %369, %371, %cst_154 {dimension_numbers = #tpu.dot_dimension_numbers<[1], [0], [0], [1], [0, 0, 1, 1], [], []>} : vector<8x8xbf16>, vector<8x8xbf16>, vector<8x8xf32> -> vector<8x8xf32>
    %373 = tpu.reciprocal %368 {approx = true} : vector<8x1xf32> -> vector<8x1xf32>
    %374 = vector.broadcast %373 : vector<8x1xf32> to vector<8x8xf32>
    %375 = arith.mulf %372, %374 : vector<8x8xf32>
    %376 = vector.extract_strided_slice %349 {offsets = [0, 8], sizes = [8, 8], strides = [1, 1]} : vector<8x32xf32> to vector<8x8xf32>
    %377 = arith.truncf %376 : vector<8x8xf32> to vector<8x8xbf16>
    %378 = vector.extract_strided_slice %354 {offsets = [0, 8], sizes = [8, 8], strides = [1, 1]} : vector<8x32xf32> to vector<8x8xf32>
    %379 = arith.truncf %378 : vector<8x8xf32> to vector<8x8xbf16>
    %cst_155 = arith.constant dense<0.000000e+00> : vector<8x8xf32>
    %380 = tpu.matmul %377, %379, %cst_155 {dimension_numbers = #tpu.dot_dimension_numbers<[1], [1], [0], [0], [0, 0, 1, 0], [], []>} : vector<8x8xbf16>, vector<8x8xbf16>, vector<8x8xf32> -> vector<8x8xf32>
    %381 = arith.addf %380, %4 : vector<8x8xf32>
    %cst_156 = arith.constant dense<0xFF800000> : vector<8xf32>
    %382 = vector.multi_reduction <maximumf>, %381, %cst_156 [1] : vector<8x8xf32> to vector<8xf32>
    %383 = vector.shape_cast %382 : vector<8xf32> to vector<8x1xf32>
    %384 = vector.broadcast %383 : vector<8x1xf32> to vector<8x8xf32>
    %385 = arith.subf %381, %384 : vector<8x8xf32>
    %386 = math.exp %385 : vector<8x8xf32>
    %cst_157 = arith.constant dense<0.000000e+00> : vector<8xf32>
    %387 = vector.multi_reduction <add>, %386, %cst_157 [1] : vector<8x8xf32> to vector<8xf32>
    %388 = vector.shape_cast %387 : vector<8xf32> to vector<8x1xf32>
    %389 = arith.truncf %386 : vector<8x8xf32> to vector<8x8xbf16>
    %390 = vector.extract_strided_slice %355 {offsets = [0, 8], sizes = [8, 8], strides = [1, 1]} : vector<8x32xf32> to vector<8x8xf32>
    %391 = arith.truncf %390 : vector<8x8xf32> to vector<8x8xbf16>
    %cst_158 = arith.constant dense<0.000000e+00> : vector<8x8xf32>
    %392 = tpu.matmul %389, %391, %cst_158 {dimension_numbers = #tpu.dot_dimension_numbers<[1], [0], [0], [1], [0, 0, 1, 1], [], []>} : vector<8x8xbf16>, vector<8x8xbf16>, vector<8x8xf32> -> vector<8x8xf32>
    %393 = tpu.reciprocal %388 {approx = true} : vector<8x1xf32> -> vector<8x1xf32>
    %394 = vector.broadcast %393 : vector<8x1xf32> to vector<8x8xf32>
    %395 = arith.mulf %392, %394 : vector<8x8xf32>
    %396 = vector.extract_strided_slice %349 {offsets = [0, 16], sizes = [8, 8], strides = [1, 1]} : vector<8x32xf32> to vector<8x8xf32>
    %397 = arith.truncf %396 : vector<8x8xf32> to vector<8x8xbf16>
    %398 = vector.extract_strided_slice %354 {offsets = [0, 16], sizes = [8, 8], strides = [1, 1]} : vector<8x32xf32> to vector<8x8xf32>
    %399 = arith.truncf %398 : vector<8x8xf32> to vector<8x8xbf16>
    %cst_159 = arith.constant dense<0.000000e+00> : vector<8x8xf32>
    %400 = tpu.matmul %397, %399, %cst_159 {dimension_numbers = #tpu.dot_dimension_numbers<[1], [1], [0], [0], [0, 0, 1, 0], [], []>} : vector<8x8xbf16>, vector<8x8xbf16>, vector<8x8xf32> -> vector<8x8xf32>
    %401 = arith.addf %400, %4 : vector<8x8xf32>
    %cst_160 = arith.constant dense<0xFF800000> : vector<8xf32>
    %402 = vector.multi_reduction <maximumf>, %401, %cst_160 [1] : vector<8x8xf32> to vector<8xf32>
    %403 = vector.shape_cast %402 : vector<8xf32> to vector<8x1xf32>
    %404 = vector.broadcast %403 : vector<8x1xf32> to vector<8x8xf32>
    %405 = arith.subf %401, %404 : vector<8x8xf32>
    %406 = math.exp %405 : vector<8x8xf32>
    %cst_161 = arith.constant dense<0.000000e+00> : vector<8xf32>
    %407 = vector.multi_reduction <add>, %406, %cst_161 [1] : vector<8x8xf32> to vector<8xf32>
    %408 = vector.shape_cast %407 : vector<8xf32> to vector<8x1xf32>
    %409 = arith.truncf %406 : vector<8x8xf32> to vector<8x8xbf16>
    %410 = vector.extract_strided_slice %355 {offsets = [0, 16], sizes = [8, 8], strides = [1, 1]} : vector<8x32xf32> to vector<8x8xf32>
    %411 = arith.truncf %410 : vector<8x8xf32> to vector<8x8xbf16>
    %cst_162 = arith.constant dense<0.000000e+00> : vector<8x8xf32>
    %412 = tpu.matmul %409, %411, %cst_162 {dimension_numbers = #tpu.dot_dimension_numbers<[1], [0], [0], [1], [0, 0, 1, 1], [], []>} : vector<8x8xbf16>, vector<8x8xbf16>, vector<8x8xf32> -> vector<8x8xf32>
    %413 = tpu.reciprocal %408 {approx = true} : vector<8x1xf32> -> vector<8x1xf32>
    %414 = vector.broadcast %413 : vector<8x1xf32> to vector<8x8xf32>
    %415 = arith.mulf %412, %414 : vector<8x8xf32>
    %416 = vector.extract_strided_slice %349 {offsets = [0, 24], sizes = [8, 8], strides = [1, 1]} : vector<8x32xf32> to vector<8x8xf32>
    %417 = arith.truncf %416 : vector<8x8xf32> to vector<8x8xbf16>
    %418 = vector.extract_strided_slice %354 {offsets = [0, 24], sizes = [8, 8], strides = [1, 1]} : vector<8x32xf32> to vector<8x8xf32>
    %419 = arith.truncf %418 : vector<8x8xf32> to vector<8x8xbf16>
    %cst_163 = arith.constant dense<0.000000e+00> : vector<8x8xf32>
    %420 = tpu.matmul %417, %419, %cst_163 {dimension_numbers = #tpu.dot_dimension_numbers<[1], [1], [0], [0], [0, 0, 1, 0], [], []>} : vector<8x8xbf16>, vector<8x8xbf16>, vector<8x8xf32> -> vector<8x8xf32>
    %421 = arith.addf %420, %4 : vector<8x8xf32>
    %cst_164 = arith.constant dense<0xFF800000> : vector<8xf32>
    %422 = vector.multi_reduction <maximumf>, %421, %cst_164 [1] : vector<8x8xf32> to vector<8xf32>
    %423 = vector.shape_cast %422 : vector<8xf32> to vector<8x1xf32>
    %424 = vector.broadcast %423 : vector<8x1xf32> to vector<8x8xf32>
    %425 = arith.subf %421, %424 : vector<8x8xf32>
    %426 = math.exp %425 : vector<8x8xf32>
    %cst_165 = arith.constant dense<0.000000e+00> : vector<8xf32>
    %427 = vector.multi_reduction <add>, %426, %cst_165 [1] : vector<8x8xf32> to vector<8xf32>
    %428 = vector.shape_cast %427 : vector<8xf32> to vector<8x1xf32>
    %429 = arith.truncf %426 : vector<8x8xf32> to vector<8x8xbf16>
    %430 = vector.extract_strided_slice %355 {offsets = [0, 24], sizes = [8, 8], strides = [1, 1]} : vector<8x32xf32> to vector<8x8xf32>
    %431 = arith.truncf %430 : vector<8x8xf32> to vector<8x8xbf16>
    %cst_166 = arith.constant dense<0.000000e+00> : vector<8x8xf32>
    %432 = tpu.matmul %429, %431, %cst_166 {dimension_numbers = #tpu.dot_dimension_numbers<[1], [0], [0], [1], [0, 0, 1, 1], [], []>} : vector<8x8xbf16>, vector<8x8xbf16>, vector<8x8xf32> -> vector<8x8xf32>
    %433 = tpu.reciprocal %428 {approx = true} : vector<8x1xf32> -> vector<8x1xf32>
    %434 = vector.broadcast %433 : vector<8x1xf32> to vector<8x8xf32>
    %435 = arith.mulf %432, %434 : vector<8x8xf32>
    %436 = tpu.concatenate %375, %395, %415, %435 in 1 : vector<8x8xf32>, vector<8x8xf32>, vector<8x8xf32>, vector<8x8xf32> -> vector<8x32xf32>
    %437 = arith.truncf %436 : vector<8x32xf32> to vector<8x32xbf16>
    %cst_167 = arith.constant dense<0.000000e+00> : vector<8x128xf32>
    %438 = tpu.matmul %437, %343, %cst_167 {dimension_numbers = #tpu.dot_dimension_numbers<[1], [0], [0], [1], [0, 0, 1, 1], [], []>} : vector<8x32xbf16>, vector<32x128xbf16>, vector<8x128xf32> -> vector<8x128xf32>
    %439 = vector.broadcast %345 : vector<1x128xf32> to vector<8x128xf32>
    %440 = arith.addf %438, %439 : vector<8x128xf32>
    %c1_168 = arith.constant 1 : index
    %c0_169 = arith.constant 0 : index
    %c0_170 = arith.constant 0 : index
    %441 = vector.load %arg11[%c1_168, %c0_169, %c0_170] : memref<2x1x128xf32, #tpu.memory_space<vmem>>, vector<1x1x128xf32>
    %442 = vector.shape_cast %441 : vector<1x1x128xf32> to vector<1x128xf32>
    %c1_171 = arith.constant 1 : index
    %c0_172 = arith.constant 0 : index
    %c0_173 = arith.constant 0 : index
    %443 = vector.load %arg12[%c1_171, %c0_172, %c0_173] : memref<2x1x128xf32, #tpu.memory_space<vmem>>, vector<1x1x128xf32>
    %444 = vector.shape_cast %443 : vector<1x1x128xf32> to vector<1x128xf32>
    %445 = tpu.iota {dimensions = array<i32: 1>} : vector<8x128xi32>
    %c32_i32_174 = arith.constant 32 : i32
    %446 = vector.broadcast %c32_i32_174 : i32 to vector<8x128xi32>
    %447 = arith.cmpi slt, %445, %446 : vector<8x128xi32>
    %448 = arith.extui %447 : vector<8x128xi1> to vector<8x128xi32>
    %449 = arith.sitofp %448 : vector<8x128xi32> to vector<8x128xf32>
    %cst_175 = arith.constant dense<0.000000e+00> : vector<8xf32>
    %450 = vector.multi_reduction <add>, %440, %cst_175 [1] : vector<8x128xf32> to vector<8xf32>
    %451 = vector.shape_cast %450 : vector<8xf32> to vector<8x1xf32>
    %cst_176 = arith.constant 3.125000e-02 : f32
    %452 = vector.broadcast %cst_176 : f32 to vector<8x1xf32>
    %453 = arith.mulf %451, %452 : vector<8x1xf32>
    %454 = vector.broadcast %453 : vector<8x1xf32> to vector<8x128xf32>
    %455 = arith.subf %440, %454 : vector<8x128xf32>
    %456 = arith.mulf %455, %449 : vector<8x128xf32>
    %457 = arith.mulf %456, %456 : vector<8x128xf32>
    %cst_177 = arith.constant dense<0.000000e+00> : vector<8xf32>
    %458 = vector.multi_reduction <add>, %457, %cst_177 [1] : vector<8x128xf32> to vector<8xf32>
    %459 = vector.shape_cast %458 : vector<8xf32> to vector<8x1xf32>
    %cst_178 = arith.constant 0.0322580636 : f32
    %460 = vector.broadcast %cst_178 : f32 to vector<8x1xf32>
    %461 = arith.mulf %459, %460 : vector<8x1xf32>
    %462 = math.sqrt %461 : vector<8x1xf32>
    %cst_179 = arith.constant 9.99999997E-7 : f32
    %463 = vector.broadcast %cst_179 : f32 to vector<8x1xf32>
    %464 = arith.addf %462, %463 : vector<8x1xf32>
    %465 = tpu.reciprocal %464 {approx = true} : vector<8x1xf32> -> vector<8x1xf32>
    %466 = vector.broadcast %465 : vector<8x1xf32> to vector<8x128xf32>
    %467 = arith.mulf %456, %466 : vector<8x128xf32>
    %468 = vector.broadcast %442 : vector<1x128xf32> to vector<8x128xf32>
    %469 = arith.mulf %468, %467 : vector<8x128xf32>
    %470 = vector.broadcast %444 : vector<1x128xf32> to vector<8x128xf32>
    %471 = arith.addf %469, %470 : vector<8x128xf32>
    %472 = arith.addf %440, %471 : vector<8x128xf32>
    %c1_180 = arith.constant 1 : index
    %c0_181 = arith.constant 0 : index
    %c0_182 = arith.constant 0 : index
    %473 = vector.load %arg13[%c1_180, %c0_181, %c0_182] : memref<2x128x32xbf16, #tpu.memory_space<vmem>>, vector<1x128x32xbf16>
    %474 = vector.shape_cast %473 : vector<1x128x32xbf16> to vector<128x32xbf16>
    %c1_183 = arith.constant 1 : index
    %c0_184 = arith.constant 0 : index
    %c0_185 = arith.constant 0 : index
    %475 = vector.load %arg14[%c1_183, %c0_184, %c0_185] : memref<2x1x32xf32, #tpu.memory_space<vmem>>, vector<1x1x32xf32>
    %476 = vector.shape_cast %475 : vector<1x1x32xf32> to vector<1x32xf32>
    %c1_186 = arith.constant 1 : index
    %c0_187 = arith.constant 0 : index
    %c0_188 = arith.constant 0 : index
    %477 = vector.load %arg15[%c1_186, %c0_187, %c0_188] : memref<2x128x64xbf16, #tpu.memory_space<vmem>>, vector<1x128x64xbf16>
    %478 = vector.shape_cast %477 : vector<1x128x64xbf16> to vector<128x64xbf16>
    %c1_189 = arith.constant 1 : index
    %c0_190 = arith.constant 0 : index
    %c0_191 = arith.constant 0 : index
    %479 = vector.load %arg16[%c1_189, %c0_190, %c0_191] : memref<2x1x64xf32, #tpu.memory_space<vmem>>, vector<1x1x64xf32>
    %480 = vector.shape_cast %479 : vector<1x1x64xf32> to vector<1x64xf32>
    %c1_192 = arith.constant 1 : index
    %c0_193 = arith.constant 0 : index
    %c0_194 = arith.constant 0 : index
    %481 = vector.load %arg17[%c1_192, %c0_193, %c0_194] : memref<2x32x128xbf16, #tpu.memory_space<vmem>>, vector<1x32x128xbf16>
    %482 = vector.shape_cast %481 : vector<1x32x128xbf16> to vector<32x128xbf16>
    %c1_195 = arith.constant 1 : index
    %c0_196 = arith.constant 0 : index
    %c0_197 = arith.constant 0 : index
    %483 = vector.load %arg18[%c1_195, %c0_196, %c0_197] : memref<2x1x128xf32, #tpu.memory_space<vmem>>, vector<1x1x128xf32>
    %484 = vector.shape_cast %483 : vector<1x1x128xf32> to vector<1x128xf32>
    %485 = arith.truncf %472 : vector<8x128xf32> to vector<8x128xbf16>
    %cst_198 = arith.constant dense<0.000000e+00> : vector<8x32xf32>
    %486 = tpu.matmul %485, %474, %cst_198 {dimension_numbers = #tpu.dot_dimension_numbers<[1], [0], [0], [1], [0, 0, 1, 1], [], []>} : vector<8x128xbf16>, vector<128x32xbf16>, vector<8x32xf32> -> vector<8x32xf32>
    %487 = vector.broadcast %476 : vector<1x32xf32> to vector<8x32xf32>
    %488 = arith.addf %486, %487 : vector<8x32xf32>
    %489 = arith.truncf %3 : vector<8x128xf32> to vector<8x128xbf16>
    %cst_199 = arith.constant dense<0.000000e+00> : vector<8x64xf32>
    %490 = tpu.matmul %489, %478, %cst_199 {dimension_numbers = #tpu.dot_dimension_numbers<[1], [0], [0], [1], [0, 0, 1, 1], [], []>} : vector<8x128xbf16>, vector<128x64xbf16>, vector<8x64xf32> -> vector<8x64xf32>
    %491 = vector.broadcast %480 : vector<1x64xf32> to vector<8x64xf32>
    %492 = arith.addf %490, %491 : vector<8x64xf32>
    %493 = vector.extract_strided_slice %492 {offsets = [0, 0], sizes = [8, 32], strides = [1, 1]} : vector<8x64xf32> to vector<8x32xf32>
    %494 = vector.extract_strided_slice %492 {offsets = [0, 32], sizes = [8, 32], strides = [1, 1]} : vector<8x64xf32> to vector<8x32xf32>
    %495 = vector.extract_strided_slice %488 {offsets = [0, 0], sizes = [8, 8], strides = [1, 1]} : vector<8x32xf32> to vector<8x8xf32>
    %496 = arith.truncf %495 : vector<8x8xf32> to vector<8x8xbf16>
    %497 = vector.extract_strided_slice %493 {offsets = [0, 0], sizes = [8, 8], strides = [1, 1]} : vector<8x32xf32> to vector<8x8xf32>
    %498 = arith.truncf %497 : vector<8x8xf32> to vector<8x8xbf16>
    %cst_200 = arith.constant dense<0.000000e+00> : vector<8x8xf32>
    %499 = tpu.matmul %496, %498, %cst_200 {dimension_numbers = #tpu.dot_dimension_numbers<[1], [1], [0], [0], [0, 0, 1, 0], [], []>} : vector<8x8xbf16>, vector<8x8xbf16>, vector<8x8xf32> -> vector<8x8xf32>
    %500 = arith.addf %499, %5 : vector<8x8xf32>
    %cst_201 = arith.constant dense<0xFF800000> : vector<8xf32>
    %501 = vector.multi_reduction <maximumf>, %500, %cst_201 [1] : vector<8x8xf32> to vector<8xf32>
    %502 = vector.shape_cast %501 : vector<8xf32> to vector<8x1xf32>
    %503 = vector.broadcast %502 : vector<8x1xf32> to vector<8x8xf32>
    %504 = arith.subf %500, %503 : vector<8x8xf32>
    %505 = math.exp %504 : vector<8x8xf32>
    %cst_202 = arith.constant dense<0.000000e+00> : vector<8xf32>
    %506 = vector.multi_reduction <add>, %505, %cst_202 [1] : vector<8x8xf32> to vector<8xf32>
    %507 = vector.shape_cast %506 : vector<8xf32> to vector<8x1xf32>
    %508 = arith.truncf %505 : vector<8x8xf32> to vector<8x8xbf16>
    %509 = vector.extract_strided_slice %494 {offsets = [0, 0], sizes = [8, 8], strides = [1, 1]} : vector<8x32xf32> to vector<8x8xf32>
    %510 = arith.truncf %509 : vector<8x8xf32> to vector<8x8xbf16>
    %cst_203 = arith.constant dense<0.000000e+00> : vector<8x8xf32>
    %511 = tpu.matmul %508, %510, %cst_203 {dimension_numbers = #tpu.dot_dimension_numbers<[1], [0], [0], [1], [0, 0, 1, 1], [], []>} : vector<8x8xbf16>, vector<8x8xbf16>, vector<8x8xf32> -> vector<8x8xf32>
    %512 = tpu.reciprocal %507 {approx = true} : vector<8x1xf32> -> vector<8x1xf32>
    %513 = vector.broadcast %512 : vector<8x1xf32> to vector<8x8xf32>
    %514 = arith.mulf %511, %513 : vector<8x8xf32>
    %515 = vector.extract_strided_slice %488 {offsets = [0, 8], sizes = [8, 8], strides = [1, 1]} : vector<8x32xf32> to vector<8x8xf32>
    %516 = arith.truncf %515 : vector<8x8xf32> to vector<8x8xbf16>
    %517 = vector.extract_strided_slice %493 {offsets = [0, 8], sizes = [8, 8], strides = [1, 1]} : vector<8x32xf32> to vector<8x8xf32>
    %518 = arith.truncf %517 : vector<8x8xf32> to vector<8x8xbf16>
    %cst_204 = arith.constant dense<0.000000e+00> : vector<8x8xf32>
    %519 = tpu.matmul %516, %518, %cst_204 {dimension_numbers = #tpu.dot_dimension_numbers<[1], [1], [0], [0], [0, 0, 1, 0], [], []>} : vector<8x8xbf16>, vector<8x8xbf16>, vector<8x8xf32> -> vector<8x8xf32>
    %520 = arith.addf %519, %5 : vector<8x8xf32>
    %cst_205 = arith.constant dense<0xFF800000> : vector<8xf32>
    %521 = vector.multi_reduction <maximumf>, %520, %cst_205 [1] : vector<8x8xf32> to vector<8xf32>
    %522 = vector.shape_cast %521 : vector<8xf32> to vector<8x1xf32>
    %523 = vector.broadcast %522 : vector<8x1xf32> to vector<8x8xf32>
    %524 = arith.subf %520, %523 : vector<8x8xf32>
    %525 = math.exp %524 : vector<8x8xf32>
    %cst_206 = arith.constant dense<0.000000e+00> : vector<8xf32>
    %526 = vector.multi_reduction <add>, %525, %cst_206 [1] : vector<8x8xf32> to vector<8xf32>
    %527 = vector.shape_cast %526 : vector<8xf32> to vector<8x1xf32>
    %528 = arith.truncf %525 : vector<8x8xf32> to vector<8x8xbf16>
    %529 = vector.extract_strided_slice %494 {offsets = [0, 8], sizes = [8, 8], strides = [1, 1]} : vector<8x32xf32> to vector<8x8xf32>
    %530 = arith.truncf %529 : vector<8x8xf32> to vector<8x8xbf16>
    %cst_207 = arith.constant dense<0.000000e+00> : vector<8x8xf32>
    %531 = tpu.matmul %528, %530, %cst_207 {dimension_numbers = #tpu.dot_dimension_numbers<[1], [0], [0], [1], [0, 0, 1, 1], [], []>} : vector<8x8xbf16>, vector<8x8xbf16>, vector<8x8xf32> -> vector<8x8xf32>
    %532 = tpu.reciprocal %527 {approx = true} : vector<8x1xf32> -> vector<8x1xf32>
    %533 = vector.broadcast %532 : vector<8x1xf32> to vector<8x8xf32>
    %534 = arith.mulf %531, %533 : vector<8x8xf32>
    %535 = vector.extract_strided_slice %488 {offsets = [0, 16], sizes = [8, 8], strides = [1, 1]} : vector<8x32xf32> to vector<8x8xf32>
    %536 = arith.truncf %535 : vector<8x8xf32> to vector<8x8xbf16>
    %537 = vector.extract_strided_slice %493 {offsets = [0, 16], sizes = [8, 8], strides = [1, 1]} : vector<8x32xf32> to vector<8x8xf32>
    %538 = arith.truncf %537 : vector<8x8xf32> to vector<8x8xbf16>
    %cst_208 = arith.constant dense<0.000000e+00> : vector<8x8xf32>
    %539 = tpu.matmul %536, %538, %cst_208 {dimension_numbers = #tpu.dot_dimension_numbers<[1], [1], [0], [0], [0, 0, 1, 0], [], []>} : vector<8x8xbf16>, vector<8x8xbf16>, vector<8x8xf32> -> vector<8x8xf32>
    %540 = arith.addf %539, %5 : vector<8x8xf32>
    %cst_209 = arith.constant dense<0xFF800000> : vector<8xf32>
    %541 = vector.multi_reduction <maximumf>, %540, %cst_209 [1] : vector<8x8xf32> to vector<8xf32>
    %542 = vector.shape_cast %541 : vector<8xf32> to vector<8x1xf32>
    %543 = vector.broadcast %542 : vector<8x1xf32> to vector<8x8xf32>
    %544 = arith.subf %540, %543 : vector<8x8xf32>
    %545 = math.exp %544 : vector<8x8xf32>
    %cst_210 = arith.constant dense<0.000000e+00> : vector<8xf32>
    %546 = vector.multi_reduction <add>, %545, %cst_210 [1] : vector<8x8xf32> to vector<8xf32>
    %547 = vector.shape_cast %546 : vector<8xf32> to vector<8x1xf32>
    %548 = arith.truncf %545 : vector<8x8xf32> to vector<8x8xbf16>
    %549 = vector.extract_strided_slice %494 {offsets = [0, 16], sizes = [8, 8], strides = [1, 1]} : vector<8x32xf32> to vector<8x8xf32>
    %550 = arith.truncf %549 : vector<8x8xf32> to vector<8x8xbf16>
    %cst_211 = arith.constant dense<0.000000e+00> : vector<8x8xf32>
    %551 = tpu.matmul %548, %550, %cst_211 {dimension_numbers = #tpu.dot_dimension_numbers<[1], [0], [0], [1], [0, 0, 1, 1], [], []>} : vector<8x8xbf16>, vector<8x8xbf16>, vector<8x8xf32> -> vector<8x8xf32>
    %552 = tpu.reciprocal %547 {approx = true} : vector<8x1xf32> -> vector<8x1xf32>
    %553 = vector.broadcast %552 : vector<8x1xf32> to vector<8x8xf32>
    %554 = arith.mulf %551, %553 : vector<8x8xf32>
    %555 = vector.extract_strided_slice %488 {offsets = [0, 24], sizes = [8, 8], strides = [1, 1]} : vector<8x32xf32> to vector<8x8xf32>
    %556 = arith.truncf %555 : vector<8x8xf32> to vector<8x8xbf16>
    %557 = vector.extract_strided_slice %493 {offsets = [0, 24], sizes = [8, 8], strides = [1, 1]} : vector<8x32xf32> to vector<8x8xf32>
    %558 = arith.truncf %557 : vector<8x8xf32> to vector<8x8xbf16>
    %cst_212 = arith.constant dense<0.000000e+00> : vector<8x8xf32>
    %559 = tpu.matmul %556, %558, %cst_212 {dimension_numbers = #tpu.dot_dimension_numbers<[1], [1], [0], [0], [0, 0, 1, 0], [], []>} : vector<8x8xbf16>, vector<8x8xbf16>, vector<8x8xf32> -> vector<8x8xf32>
    %560 = arith.addf %559, %5 : vector<8x8xf32>
    %cst_213 = arith.constant dense<0xFF800000> : vector<8xf32>
    %561 = vector.multi_reduction <maximumf>, %560, %cst_213 [1] : vector<8x8xf32> to vector<8xf32>
    %562 = vector.shape_cast %561 : vector<8xf32> to vector<8x1xf32>
    %563 = vector.broadcast %562 : vector<8x1xf32> to vector<8x8xf32>
    %564 = arith.subf %560, %563 : vector<8x8xf32>
    %565 = math.exp %564 : vector<8x8xf32>
    %cst_214 = arith.constant dense<0.000000e+00> : vector<8xf32>
    %566 = vector.multi_reduction <add>, %565, %cst_214 [1] : vector<8x8xf32> to vector<8xf32>
    %567 = vector.shape_cast %566 : vector<8xf32> to vector<8x1xf32>
    %568 = arith.truncf %565 : vector<8x8xf32> to vector<8x8xbf16>
    %569 = vector.extract_strided_slice %494 {offsets = [0, 24], sizes = [8, 8], strides = [1, 1]} : vector<8x32xf32> to vector<8x8xf32>
    %570 = arith.truncf %569 : vector<8x8xf32> to vector<8x8xbf16>
    %cst_215 = arith.constant dense<0.000000e+00> : vector<8x8xf32>
    %571 = tpu.matmul %568, %570, %cst_215 {dimension_numbers = #tpu.dot_dimension_numbers<[1], [0], [0], [1], [0, 0, 1, 1], [], []>} : vector<8x8xbf16>, vector<8x8xbf16>, vector<8x8xf32> -> vector<8x8xf32>
    %572 = tpu.reciprocal %567 {approx = true} : vector<8x1xf32> -> vector<8x1xf32>
    %573 = vector.broadcast %572 : vector<8x1xf32> to vector<8x8xf32>
    %574 = arith.mulf %571, %573 : vector<8x8xf32>
    %575 = tpu.concatenate %514, %534, %554, %574 in 1 : vector<8x8xf32>, vector<8x8xf32>, vector<8x8xf32>, vector<8x8xf32> -> vector<8x32xf32>
    %576 = arith.truncf %575 : vector<8x32xf32> to vector<8x32xbf16>
    %cst_216 = arith.constant dense<0.000000e+00> : vector<8x128xf32>
    %577 = tpu.matmul %576, %482, %cst_216 {dimension_numbers = #tpu.dot_dimension_numbers<[1], [0], [0], [1], [0, 0, 1, 1], [], []>} : vector<8x32xbf16>, vector<32x128xbf16>, vector<8x128xf32> -> vector<8x128xf32>
    %578 = vector.broadcast %484 : vector<1x128xf32> to vector<8x128xf32>
    %579 = arith.addf %577, %578 : vector<8x128xf32>
    %c1_217 = arith.constant 1 : index
    %c0_218 = arith.constant 0 : index
    %c0_219 = arith.constant 0 : index
    %580 = vector.load %arg19[%c1_217, %c0_218, %c0_219] : memref<2x1x128xf32, #tpu.memory_space<vmem>>, vector<1x1x128xf32>
    %581 = vector.shape_cast %580 : vector<1x1x128xf32> to vector<1x128xf32>
    %c1_220 = arith.constant 1 : index
    %c0_221 = arith.constant 0 : index
    %c0_222 = arith.constant 0 : index
    %582 = vector.load %arg20[%c1_220, %c0_221, %c0_222] : memref<2x1x128xf32, #tpu.memory_space<vmem>>, vector<1x1x128xf32>
    %583 = vector.shape_cast %582 : vector<1x1x128xf32> to vector<1x128xf32>
    %584 = tpu.iota {dimensions = array<i32: 1>} : vector<8x128xi32>
    %c32_i32_223 = arith.constant 32 : i32
    %585 = vector.broadcast %c32_i32_223 : i32 to vector<8x128xi32>
    %586 = arith.cmpi slt, %584, %585 : vector<8x128xi32>
    %587 = arith.extui %586 : vector<8x128xi1> to vector<8x128xi32>
    %588 = arith.sitofp %587 : vector<8x128xi32> to vector<8x128xf32>
    %cst_224 = arith.constant dense<0.000000e+00> : vector<8xf32>
    %589 = vector.multi_reduction <add>, %579, %cst_224 [1] : vector<8x128xf32> to vector<8xf32>
    %590 = vector.shape_cast %589 : vector<8xf32> to vector<8x1xf32>
    %cst_225 = arith.constant 3.125000e-02 : f32
    %591 = vector.broadcast %cst_225 : f32 to vector<8x1xf32>
    %592 = arith.mulf %590, %591 : vector<8x1xf32>
    %593 = vector.broadcast %592 : vector<8x1xf32> to vector<8x128xf32>
    %594 = arith.subf %579, %593 : vector<8x128xf32>
    %595 = arith.mulf %594, %588 : vector<8x128xf32>
    %596 = arith.mulf %595, %595 : vector<8x128xf32>
    %cst_226 = arith.constant dense<0.000000e+00> : vector<8xf32>
    %597 = vector.multi_reduction <add>, %596, %cst_226 [1] : vector<8x128xf32> to vector<8xf32>
    %598 = vector.shape_cast %597 : vector<8xf32> to vector<8x1xf32>
    %cst_227 = arith.constant 0.0322580636 : f32
    %599 = vector.broadcast %cst_227 : f32 to vector<8x1xf32>
    %600 = arith.mulf %598, %599 : vector<8x1xf32>
    %601 = math.sqrt %600 : vector<8x1xf32>
    %cst_228 = arith.constant 9.99999997E-7 : f32
    %602 = vector.broadcast %cst_228 : f32 to vector<8x1xf32>
    %603 = arith.addf %601, %602 : vector<8x1xf32>
    %604 = tpu.reciprocal %603 {approx = true} : vector<8x1xf32> -> vector<8x1xf32>
    %605 = vector.broadcast %604 : vector<8x1xf32> to vector<8x128xf32>
    %606 = arith.mulf %595, %605 : vector<8x128xf32>
    %607 = vector.broadcast %581 : vector<1x128xf32> to vector<8x128xf32>
    %608 = arith.mulf %607, %606 : vector<8x128xf32>
    %609 = vector.broadcast %583 : vector<1x128xf32> to vector<8x128xf32>
    %610 = arith.addf %608, %609 : vector<8x128xf32>
    %611 = arith.addf %579, %610 : vector<8x128xf32>
    %612 = arith.truncf %611 : vector<8x128xf32> to vector<8x128xbf16>
    %c1_229 = arith.constant 1 : index
    %c0_230 = arith.constant 0 : index
    %c0_231 = arith.constant 0 : index
    %613 = vector.load %arg21[%c1_229, %c0_230, %c0_231] : memref<2x128x2048xbf16, #tpu.memory_space<vmem>>, vector<1x128x2048xbf16>
    %614 = vector.shape_cast %613 : vector<1x128x2048xbf16> to vector<128x2048xbf16>
    %cst_232 = arith.constant dense<0.000000e+00> : vector<8x2048xf32>
    %615 = tpu.matmul %612, %614, %cst_232 {dimension_numbers = #tpu.dot_dimension_numbers<[1], [0], [0], [1], [0, 0, 1, 1], [], []>} : vector<8x128xbf16>, vector<128x2048xbf16>, vector<8x2048xf32> -> vector<8x2048xf32>
    %c1_233 = arith.constant 1 : index
    %c0_234 = arith.constant 0 : index
    %c0_235 = arith.constant 0 : index
    %616 = vector.load %arg22[%c1_233, %c0_234, %c0_235] : memref<2x1x2048xf32, #tpu.memory_space<vmem>>, vector<1x1x2048xf32>
    %617 = vector.shape_cast %616 : vector<1x1x2048xf32> to vector<1x2048xf32>
    %618 = vector.broadcast %617 : vector<1x2048xf32> to vector<8x2048xf32>
    %619 = arith.addf %615, %618 : vector<8x2048xf32>
    %cst_236 = arith.constant 0.000000e+00 : f32
    %620 = vector.broadcast %cst_236 : f32 to vector<8x2048xf32>
    %621 = arith.maximumf %619, %620 : vector<8x2048xf32>
    %622 = arith.truncf %621 : vector<8x2048xf32> to vector<8x2048xbf16>
    %c1_237 = arith.constant 1 : index
    %c0_238 = arith.constant 0 : index
    %c0_239 = arith.constant 0 : index
    %623 = vector.load %arg23[%c1_237, %c0_238, %c0_239] : memref<2x2048x128xbf16, #tpu.memory_space<vmem>>, vector<1x2048x128xbf16>
    %624 = vector.shape_cast %623 : vector<1x2048x128xbf16> to vector<2048x128xbf16>
    %cst_240 = arith.constant dense<0.000000e+00> : vector<8x128xf32>
    %625 = tpu.matmul %622, %624, %cst_240 {dimension_numbers = #tpu.dot_dimension_numbers<[1], [0], [0], [1], [0, 0, 1, 1], [], []>} : vector<8x2048xbf16>, vector<2048x128xbf16>, vector<8x128xf32> -> vector<8x128xf32>
    %c1_241 = arith.constant 1 : index
    %c0_242 = arith.constant 0 : index
    %c0_243 = arith.constant 0 : index
    %626 = vector.load %arg24[%c1_241, %c0_242, %c0_243] : memref<2x1x128xf32, #tpu.memory_space<vmem>>, vector<1x1x128xf32>
    %627 = vector.shape_cast %626 : vector<1x1x128xf32> to vector<1x128xf32>
    %628 = vector.broadcast %627 : vector<1x128xf32> to vector<8x128xf32>
    %629 = arith.addf %625, %628 : vector<8x128xf32>
    %c1_244 = arith.constant 1 : index
    %c0_245 = arith.constant 0 : index
    %c0_246 = arith.constant 0 : index
    %630 = vector.load %arg25[%c1_244, %c0_245, %c0_246] : memref<2x1x128xf32, #tpu.memory_space<vmem>>, vector<1x1x128xf32>
    %631 = vector.shape_cast %630 : vector<1x1x128xf32> to vector<1x128xf32>
    %c1_247 = arith.constant 1 : index
    %c0_248 = arith.constant 0 : index
    %c0_249 = arith.constant 0 : index
    %632 = vector.load %arg26[%c1_247, %c0_248, %c0_249] : memref<2x1x128xf32, #tpu.memory_space<vmem>>, vector<1x1x128xf32>
    %633 = vector.shape_cast %632 : vector<1x1x128xf32> to vector<1x128xf32>
    %634 = tpu.iota {dimensions = array<i32: 1>} : vector<8x128xi32>
    %c32_i32_250 = arith.constant 32 : i32
    %635 = vector.broadcast %c32_i32_250 : i32 to vector<8x128xi32>
    %636 = arith.cmpi slt, %634, %635 : vector<8x128xi32>
    %637 = arith.extui %636 : vector<8x128xi1> to vector<8x128xi32>
    %638 = arith.sitofp %637 : vector<8x128xi32> to vector<8x128xf32>
    %cst_251 = arith.constant dense<0.000000e+00> : vector<8xf32>
    %639 = vector.multi_reduction <add>, %629, %cst_251 [1] : vector<8x128xf32> to vector<8xf32>
    %640 = vector.shape_cast %639 : vector<8xf32> to vector<8x1xf32>
    %cst_252 = arith.constant 3.125000e-02 : f32
    %641 = vector.broadcast %cst_252 : f32 to vector<8x1xf32>
    %642 = arith.mulf %640, %641 : vector<8x1xf32>
    %643 = vector.broadcast %642 : vector<8x1xf32> to vector<8x128xf32>
    %644 = arith.subf %629, %643 : vector<8x128xf32>
    %645 = arith.mulf %644, %638 : vector<8x128xf32>
    %646 = arith.mulf %645, %645 : vector<8x128xf32>
    %cst_253 = arith.constant dense<0.000000e+00> : vector<8xf32>
    %647 = vector.multi_reduction <add>, %646, %cst_253 [1] : vector<8x128xf32> to vector<8xf32>
    %648 = vector.shape_cast %647 : vector<8xf32> to vector<8x1xf32>
    %cst_254 = arith.constant 0.0322580636 : f32
    %649 = vector.broadcast %cst_254 : f32 to vector<8x1xf32>
    %650 = arith.mulf %648, %649 : vector<8x1xf32>
    %651 = math.sqrt %650 : vector<8x1xf32>
    %cst_255 = arith.constant 9.99999997E-7 : f32
    %652 = vector.broadcast %cst_255 : f32 to vector<8x1xf32>
    %653 = arith.addf %651, %652 : vector<8x1xf32>
    %654 = tpu.reciprocal %653 {approx = true} : vector<8x1xf32> -> vector<8x1xf32>
    %655 = vector.broadcast %654 : vector<8x1xf32> to vector<8x128xf32>
    %656 = arith.mulf %645, %655 : vector<8x128xf32>
    %657 = vector.broadcast %631 : vector<1x128xf32> to vector<8x128xf32>
    %658 = arith.mulf %657, %656 : vector<8x128xf32>
    %659 = vector.broadcast %633 : vector<1x128xf32> to vector<8x128xf32>
    %660 = arith.addf %658, %659 : vector<8x128xf32>
    %661 = arith.addf %629, %660 : vector<8x128xf32>
    %c0_256 = arith.constant 0 : index
    %c0_257 = arith.constant 0 : index
    %662 = vector.load %arg27[%c0_256, %c0_257] : memref<1x128xf32, #tpu.memory_space<vmem>>, vector<1x128xf32>
    %c0_258 = arith.constant 0 : index
    %c0_259 = arith.constant 0 : index
    %663 = vector.load %arg28[%c0_258, %c0_259] : memref<1x128xf32, #tpu.memory_space<vmem>>, vector<1x128xf32>
    %664 = tpu.iota {dimensions = array<i32: 1>} : vector<8x128xi32>
    %c32_i32_260 = arith.constant 32 : i32
    %665 = vector.broadcast %c32_i32_260 : i32 to vector<8x128xi32>
    %666 = arith.cmpi slt, %664, %665 : vector<8x128xi32>
    %667 = arith.extui %666 : vector<8x128xi1> to vector<8x128xi32>
    %668 = arith.sitofp %667 : vector<8x128xi32> to vector<8x128xf32>
    %cst_261 = arith.constant dense<0.000000e+00> : vector<8xf32>
    %669 = vector.multi_reduction <add>, %661, %cst_261 [1] : vector<8x128xf32> to vector<8xf32>
    %670 = vector.shape_cast %669 : vector<8xf32> to vector<8x1xf32>
    %cst_262 = arith.constant 3.125000e-02 : f32
    %671 = vector.broadcast %cst_262 : f32 to vector<8x1xf32>
    %672 = arith.mulf %670, %671 : vector<8x1xf32>
    %673 = vector.broadcast %672 : vector<8x1xf32> to vector<8x128xf32>
    %674 = arith.subf %661, %673 : vector<8x128xf32>
    %675 = arith.mulf %674, %668 : vector<8x128xf32>
    %676 = arith.mulf %675, %675 : vector<8x128xf32>
    %cst_263 = arith.constant dense<0.000000e+00> : vector<8xf32>
    %677 = vector.multi_reduction <add>, %676, %cst_263 [1] : vector<8x128xf32> to vector<8xf32>
    %678 = vector.shape_cast %677 : vector<8xf32> to vector<8x1xf32>
    %cst_264 = arith.constant 0.0322580636 : f32
    %679 = vector.broadcast %cst_264 : f32 to vector<8x1xf32>
    %680 = arith.mulf %678, %679 : vector<8x1xf32>
    %681 = math.sqrt %680 : vector<8x1xf32>
    %cst_265 = arith.constant 9.99999997E-7 : f32
    %682 = vector.broadcast %cst_265 : f32 to vector<8x1xf32>
    %683 = arith.addf %681, %682 : vector<8x1xf32>
    %684 = tpu.reciprocal %683 {approx = true} : vector<8x1xf32> -> vector<8x1xf32>
    %685 = vector.broadcast %684 : vector<8x1xf32> to vector<8x128xf32>
    %686 = arith.mulf %675, %685 : vector<8x128xf32>
    %687 = vector.broadcast %662 : vector<1x128xf32> to vector<8x128xf32>
    %688 = arith.mulf %687, %686 : vector<8x128xf32>
    %689 = vector.broadcast %663 : vector<1x128xf32> to vector<8x128xf32>
    %690 = arith.addf %688, %689 : vector<8x128xf32>
    %c0_266 = arith.constant 0 : index
    %c0_267 = arith.constant 0 : index
    %c0_268 = arith.constant 0 : index
    %691 = vector.load %arg29[%c0_266, %c0_267, %c0_268] : memref<1x8x128xf32, #tpu.memory_space<vmem>>, vector<1x8x128xf32>
    %692 = vector.shape_cast %691 : vector<1x8x128xf32> to vector<8x128xf32>
    %693 = vector.shape_cast %690 : vector<8x128xf32> to vector<1x8x128xf32>
    tpu.vector_store %arg29[%c0_266, %c0_267, %c0_268], %693 {strides = array<i32>} : memref<1x8x128xf32, #tpu.memory_space<vmem>>, vector<1x8x128xf32>,
    return
  }
  func.func @transform_0(%arg0: i32) -> (i32, i32, i32) {
    %c0_i32 = arith.constant 0 : i32
    %c0_i32_0 = arith.constant 0 : i32
    %c0_i32_1 = arith.constant 0 : i32
    return %arg0, %c0_i32, %c0_i32_0 : i32, i32, i32
  }
  func.func @transform_1(%arg0: i32) -> (i32, i32, i32) {
    %c0_i32 = arith.constant 0 : i32
    %c0_i32_0 = arith.constant 0 : i32
    %c0_i32_1 = arith.constant 0 : i32
    return %arg0, %c0_i32, %c0_i32_0 : i32, i32, i32
  }
  func.func @transform_2(%arg0: i32) -> (i32, i32) {
    %c0_i32 = arith.constant 0 : i32
    %c0_i32_0 = arith.constant 0 : i32
    %c0_i32_1 = arith.constant 0 : i32
    return %c0_i32, %c0_i32_0 : i32, i32
  }
  func.func @transform_3(%arg0: i32) -> (i32, i32) {
    %c0_i32 = arith.constant 0 : i32
    %c0_i32_0 = arith.constant 0 : i32
    %c0_i32_1 = arith.constant 0 : i32
    return %c0_i32, %c0_i32_0 : i32, i32
  }
  func.func @transform_4(%arg0: i32) -> (i32, i32, i32) {
    %c0_i32 = arith.constant 0 : i32
    %c0_i32_0 = arith.constant 0 : i32
    %c0_i32_1 = arith.constant 0 : i32
    %c0_i32_2 = arith.constant 0 : i32
    return %c0_i32, %c0_i32_0, %c0_i32_1 : i32, i32, i32
  }
  func.func @transform_5(%arg0: i32) -> (i32, i32, i32) {
    %c0_i32 = arith.constant 0 : i32
    %c0_i32_0 = arith.constant 0 : i32
    %c0_i32_1 = arith.constant 0 : i32
    %c0_i32_2 = arith.constant 0 : i32
    return %c0_i32, %c0_i32_0, %c0_i32_1 : i32, i32, i32
  }
  func.func @transform_6(%arg0: i32) -> (i32, i32, i32) {
    %c0_i32 = arith.constant 0 : i32
    %c0_i32_0 = arith.constant 0 : i32
    %c0_i32_1 = arith.constant 0 : i32
    %c0_i32_2 = arith.constant 0 : i32
    return %c0_i32, %c0_i32_0, %c0_i32_1 : i32, i32, i32
  }
  func.func @transform_7(%arg0: i32) -> (i32, i32, i32) {
    %c0_i32 = arith.constant 0 : i32
    %c0_i32_0 = arith.constant 0 : i32
    %c0_i32_1 = arith.constant 0 : i32
    %c0_i32_2 = arith.constant 0 : i32
    return %c0_i32, %c0_i32_0, %c0_i32_1 : i32, i32, i32
  }
  func.func @transform_8(%arg0: i32) -> (i32, i32, i32) {
    %c0_i32 = arith.constant 0 : i32
    %c0_i32_0 = arith.constant 0 : i32
    %c0_i32_1 = arith.constant 0 : i32
    %c0_i32_2 = arith.constant 0 : i32
    return %c0_i32, %c0_i32_0, %c0_i32_1 : i32, i32, i32
  }
  func.func @transform_9(%arg0: i32) -> (i32, i32, i32) {
    %c0_i32 = arith.constant 0 : i32
    %c0_i32_0 = arith.constant 0 : i32
    %c0_i32_1 = arith.constant 0 : i32
    %c0_i32_2 = arith.constant 0 : i32
    return %c0_i32, %c0_i32_0, %c0_i32_1 : i32, i32, i32
  }
  func.func @transform_10(%arg0: i32) -> (i32, i32, i32) {
    %c0_i32 = arith.constant 0 : i32
    %c0_i32_0 = arith.constant 0 : i32
    %c0_i32_1 = arith.constant 0 : i32
    %c0_i32_2 = arith.constant 0 : i32
    return %c0_i32, %c0_i32_0, %c0_i32_1 : i32, i32, i32
  }
  func.func @transform_11(%arg0: i32) -> (i32, i32, i32) {
    %c0_i32 = arith.constant 0 : i32
    %c0_i32_0 = arith.constant 0 : i32
    %c0_i32_1 = arith.constant 0 : i32
    %c0_i32_2 = arith.constant 0 : i32
    return %c0_i32, %c0_i32_0, %c0_i32_1 : i32, i32, i32
  }
  func.func @transform_12(%arg0: i32) -> (i32, i32, i32) {
    %c0_i32 = arith.constant 0 : i32
    %c0_i32_0 = arith.constant 0 : i32
    %c0_i32_1 = arith.constant 0 : i32
    %c0_i32_2 = arith.constant 0 : i32
    return %c0_i32, %c0_i32_0, %c0_i32_1 : i32, i32, i32
  }
  func.func @transform_13(%arg0: i32) -> (i32, i32, i32) {
    %c0_i32 = arith.constant 0 : i32
    %c0_i32_0 = arith.constant 0 : i32
    %c0_i32_1 = arith.constant 0 : i32
    %c0_i32_2 = arith.constant 0 : i32
    return %c0_i32, %c0_i32_0, %c0_i32_1 : i32, i32, i32
  }
  func.func @transform_14(%arg0: i32) -> (i32, i32, i32) {
    %c0_i32 = arith.constant 0 : i32
    %c0_i32_0 = arith.constant 0 : i32
    %c0_i32_1 = arith.constant 0 : i32
    %c0_i32_2 = arith.constant 0 : i32
    return %c0_i32, %c0_i32_0, %c0_i32_1 : i32, i32, i32
  }
  func.func @transform_15(%arg0: i32) -> (i32, i32, i32) {
    %c0_i32 = arith.constant 0 : i32
    %c0_i32_0 = arith.constant 0 : i32
    %c0_i32_1 = arith.constant 0 : i32
    %c0_i32_2 = arith.constant 0 : i32
    return %c0_i32, %c0_i32_0, %c0_i32_1 : i32, i32, i32
  }
  func.func @transform_16(%arg0: i32) -> (i32, i32, i32) {
    %c0_i32 = arith.constant 0 : i32
    %c0_i32_0 = arith.constant 0 : i32
    %c0_i32_1 = arith.constant 0 : i32
    %c0_i32_2 = arith.constant 0 : i32
    return %c0_i32, %c0_i32_0, %c0_i32_1 : i32, i32, i32
  }
  func.func @transform_17(%arg0: i32) -> (i32, i32, i32) {
    %c0_i32 = arith.constant 0 : i32
    %c0_i32_0 = arith.constant 0 : i32
    %c0_i32_1 = arith.constant 0 : i32
    %c0_i32_2 = arith.constant 0 : i32
    return %c0_i32, %c0_i32_0, %c0_i32_1 : i32, i32, i32
  }
  func.func @transform_18(%arg0: i32) -> (i32, i32, i32) {
    %c0_i32 = arith.constant 0 : i32
    %c0_i32_0 = arith.constant 0 : i32
    %c0_i32_1 = arith.constant 0 : i32
    %c0_i32_2 = arith.constant 0 : i32
    return %c0_i32, %c0_i32_0, %c0_i32_1 : i32, i32, i32
  }
  func.func @transform_19(%arg0: i32) -> (i32, i32, i32) {
    %c0_i32 = arith.constant 0 : i32
    %c0_i32_0 = arith.constant 0 : i32
    %c0_i32_1 = arith.constant 0 : i32
    %c0_i32_2 = arith.constant 0 : i32
    return %c0_i32, %c0_i32_0, %c0_i32_1 : i32, i32, i32
  }
  func.func @transform_20(%arg0: i32) -> (i32, i32, i32) {
    %c0_i32 = arith.constant 0 : i32
    %c0_i32_0 = arith.constant 0 : i32
    %c0_i32_1 = arith.constant 0 : i32
    %c0_i32_2 = arith.constant 0 : i32
    return %c0_i32, %c0_i32_0, %c0_i32_1 : i32, i32, i32
  }
  func.func @transform_21(%arg0: i32) -> (i32, i32, i32) {
    %c0_i32 = arith.constant 0 : i32
    %c0_i32_0 = arith.constant 0 : i32
    %c0_i32_1 = arith.constant 0 : i32
    %c0_i32_2 = arith.constant 0 : i32
    return %c0_i32, %c0_i32_0, %c0_i32_1 : i32, i32, i32
  }
  func.func @transform_22(%arg0: i32) -> (i32, i32, i32) {
    %c0_i32 = arith.constant 0 : i32
    %c0_i32_0 = arith.constant 0 : i32
    %c0_i32_1 = arith.constant 0 : i32
    %c0_i32_2 = arith.constant 0 : i32
    return %c0_i32, %c0_i32_0, %c0_i32_1 : i32, i32, i32
  }
  func.func @transform_23(%arg0: i32) -> (i32, i32, i32) {
    %c0_i32 = arith.constant 0 : i32
    %c0_i32_0 = arith.constant 0 : i32
    %c0_i32_1 = arith.constant 0 : i32
    %c0_i32_2 = arith.constant 0 : i32
    return %c0_i32, %c0_i32_0, %c0_i32_1 : i32, i32, i32
  }
  func.func @transform_24(%arg0: i32) -> (i32, i32, i32) {
    %c0_i32 = arith.constant 0 : i32
    %c0_i32_0 = arith.constant 0 : i32
    %c0_i32_1 = arith.constant 0 : i32
    %c0_i32_2 = arith.constant 0 : i32
    return %c0_i32, %c0_i32_0, %c0_i32_1 : i32, i32, i32
  }
  func.func @transform_25(%arg0: i32) -> (i32, i32, i32) {
    %c0_i32 = arith.constant 0 : i32
    %c0_i32_0 = arith.constant 0 : i32
    %c0_i32_1 = arith.constant 0 : i32
    %c0_i32_2 = arith.constant 0 : i32
    return %c0_i32, %c0_i32_0, %c0_i32_1 : i32, i32, i32
  }
  func.func @transform_26(%arg0: i32) -> (i32, i32) {
    %c0_i32 = arith.constant 0 : i32
    %c0_i32_0 = arith.constant 0 : i32
    %c0_i32_1 = arith.constant 0 : i32
    return %c0_i32, %c0_i32_0 : i32, i32
  }
  func.func @transform_27(%arg0: i32) -> (i32, i32) {
    %c0_i32 = arith.constant 0 : i32
    %c0_i32_0 = arith.constant 0 : i32
    %c0_i32_1 = arith.constant 0 : i32
    return %c0_i32, %c0_i32_0 : i32, i32
  }
  func.func @transform_28(%arg0: i32) -> (i32, i32, i32) {
    %c0_i32 = arith.constant 0 : i32
    %c0_i32_0 = arith.constant 0 : i32
    %c0_i32_1 = arith.constant 0 : i32
    return %arg0, %c0_i32, %c0_i32_0 : i32, i32, i32
  }
}

</mosaic_0001>

<llo_original>
// kernel: decoder_forward.1
$region0: #{decoder_forward.1}
  #allocation0 [shape = 'u32[]', space=smem, size = 0x4, offset = 0x4, fixed_abs, tag = 'smem constant byte address 0x4 - core index']
  #allocation1 [shape = 'u32[144,128]{1,0:T(1,128)}', space=vmem, size = 0x12000, scoped, tag = 'internal scratch']
  %s0 = inlined_call_operand.vmem [shape: f32[2,8,128], index: 0, kind: input, shape index: {}]
  %s1 = inlined_call_operand.vmem [shape: f32[2,8,128], index: 1, kind: input, shape index: {}]
  %s2 = inlined_call_operand.vmem [shape: f32[8,8], index: 2, kind: input, shape index: {}]
  %s3 = inlined_call_operand.vmem [shape: f32[8,8], index: 3, kind: input, shape index: {}]
  %s4 = inlined_call_operand.vmem [shape: bf16[2,128,32], index: 4, kind: input, shape index: {}]
  %s5 = inlined_call_operand.vmem [shape: f32[2,1,32], index: 5, kind: input, shape index: {}]
  %s6 = inlined_call_operand.vmem [shape: bf16[2,128,64], index: 6, kind: input, shape index: {}]
  %s7 = inlined_call_operand.vmem [shape: f32[2,1,64], index: 7, kind: input, shape index: {}]
  %s8 = inlined_call_operand.vmem [shape: bf16[2,32,128], index: 8, kind: input, shape index: {}]
  %s9 = inlined_call_operand.vmem [shape: f32[2,1,128], index: 9, kind: input, shape index: {}]
  %s10 = inlined_call_operand.vmem [shape: f32[2,1,128], index: 10, kind: input, shape index: {}]
  %s11 = inlined_call_operand.vmem [shape: f32[2,1,128], index: 11, kind: input, shape index: {}]
  %s12 = inlined_call_operand.vmem [shape: bf16[2,128,32], index: 12, kind: input, shape index: {}]
  %s13 = inlined_call_operand.vmem [shape: f32[2,1,32], index: 13, kind: input, shape index: {}]
  %s14 = inlined_call_operand.vmem [shape: bf16[2,128,64], index: 14, kind: input, shape index: {}]
  %s15 = inlined_call_operand.vmem [shape: f32[2,1,64], index: 15, kind: input, shape index: {}]
  %s16 = inlined_call_operand.vmem [shape: bf16[2,32,128], index: 16, kind: input, shape index: {}]
  %s17 = inlined_call_operand.vmem [shape: f32[2,1,128], index: 17, kind: input, shape index: {}]
  %s18 = inlined_call_operand.vmem [shape: f32[2,1,128], index: 18, kind: input, shape index: {}]
  %s19 = inlined_call_operand.vmem [shape: f32[2,1,128], index: 19, kind: input, shape index: {}]
  %s20 = inlined_call_operand.hbm [shape: bf16[2,128,2048], index: 20, kind: input, shape index: {}]
  %s21 = inlined_call_operand.vmem [shape: f32[2,1,2048], index: 21, kind: input, shape index: {}]
  %s22 = inlined_call_operand.hbm [shape: bf16[2,2048,128], index: 22, kind: input, shape index: {}]
  %s23 = inlined_call_operand.vmem [shape: f32[2,1,128], index: 23, kind: input, shape index: {}]
  %s24 = inlined_call_operand.vmem [shape: f32[2,1,128], index: 24, kind: input, shape index: {}]
  %s25 = inlined_call_operand.vmem [shape: f32[2,1,128], index: 25, kind: input, shape index: {}]
  %s26 = inlined_call_operand.vmem [shape: f32[1,128], index: 26, kind: input, shape index: {}]
  %s27 = inlined_call_operand.vmem [shape: f32[1,128], index: 27, kind: input, shape index: {}]
  %s28 = inlined_call_operand.hbm [shape: f32[2,8,128], index: 28, kind: output, shape index: {}]
  %s29 = sld [smem:[#allocation0]]
  $region153: #{decoder_forward.1} parent=0
    _
  %s31 = ssub.s32 1, %s29
  %s32 = scalar_select 0, %s31, %s29
  $region1: #{decoder_forward.1} parent=0
    #allocation2 [shape = 'u8[1048576]{0}', space=vmem, size = 0x100000, scoped, tag = 'input window, operand 20, single buffered']
    #allocation3 [shape = 's32[2]{0}', space=sflag, size = 0x8, scoped, tag = 'scoped memory for decoder_forward.1']
    #allocation4 [shape = 's32[2]{0}', space=sflag, size = 0x8, scoped, tag = 'scoped memory for decoder_forward.1']
    #allocation5 [shape = 'u8[1048576]{0}', space=vmem, size = 0x100000, scoped, tag = 'input window, operand 22, single buffered']
    #allocation6 [shape = 's32[1]{0}', space=sflag, size = 0x4, scoped, tag = 'scoped memory for decoder_forward.1']
    #allocation7 [shape = 'u8[8192]{0}', space=vmem, size = 0x2000, scoped, tag = 'output window, operand 0']
    %33 = vsyncpa [#allocation3], 0
    %34 = vsyncpa [#allocation6], 0
    %35 = vsyncpa [#allocation4], 0
    %s36 = scalar_lea.sflag [#allocation4], 1
    %37 = vsyncpa %s36, 0
    loop: start=0, step=1, limit=4
    $region2: #{decoder_forward.1} parent=1 // loop_pre_header
      _
    $region3: #{decoder_forward.1} parent=1 // loop_header
      %s39 = sphi 0, %s43
      %p40 = scmp.ge.s32.totalorder %s39, 4
      %s49 = sphi 0, %s51
      %s52 = sphi 0, %s49
      %s53 = sphi 0, %s52
      %s69 = sphi 0, %s53
      %s75 = sphi 0, %s77
      %s78 = sphi 0, %s75
      %s79 = sphi 0, %s78
      %s95 = sphi 0, %s79
      %s99 = sphi 0, %s99
      %s101 = sphi 0, %s99
      %s102 = sphi 0, %s101
      %s116 = sphi 0, %s102
      %s120 = sphi 0, %s120
      %s122 = sphi 0, %s120
      %s123 = sphi 0, %s122
      %s137 = sphi 0, %s123
      %s141 = sphi 0, %s141
      %s143 = sphi 0, %s141
      %s144 = sphi 0, %s143
      %s158 = sphi 0, %s144
      %s162 = sphi 0, %s162
      %s164 = sphi 0, %s162
      %s165 = sphi 0, %s164
      %s179 = sphi 0, %s165
      %s183 = sphi 0, %s183
      %s185 = sphi 0, %s183
      %s186 = sphi 0, %s185
      %s200 = sphi 0, %s186
      %s204 = sphi 0, %s204
      %s206 = sphi 0, %s204
      %s207 = sphi 0, %s206
      %s221 = sphi 0, %s207
      %s225 = sphi 0, %s225
      %s227 = sphi 0, %s225
      %s228 = sphi 0, %s227
      %s242 = sphi 0, %s228
      %s246 = sphi 0, %s246
      %s248 = sphi 0, %s246
      %s249 = sphi 0, %s248
      %s263 = sphi 0, %s249
      %s267 = sphi 0, %s267
      %s269 = sphi 0, %s267
      %s270 = sphi 0, %s269
      %s284 = sphi 0, %s270
      %s288 = sphi 0, %s288
      %s290 = sphi 0, %s288
      %s291 = sphi 0, %s290
      %s305 = sphi 0, %s291
      %s309 = sphi 0, %s309
      %s311 = sphi 0, %s309
      %s312 = sphi 0, %s311
      %s326 = sphi 0, %s312
      %s330 = sphi 0, %s330
      %s332 = sphi 0, %s330
      %s333 = sphi 0, %s332
      %s347 = sphi 0, %s333
      %s351 = sphi 0, %s351
      %s353 = sphi 0, %s351
      %s354 = sphi 0, %s353
      %s368 = sphi 0, %s354
      %s372 = sphi 0, %s372
      %s374 = sphi 0, %s372
      %s375 = sphi 0, %s374
      %s389 = sphi 0, %s375
      %s393 = sphi 0, %s393
      %s395 = sphi 0, %s393
      %s396 = sphi 0, %s395
      %s410 = sphi 0, %s396
      %s414 = sphi 0, %s414
      %s416 = sphi 0, %s414
      %s417 = sphi 0, %s416
      %s431 = sphi 0, %s417
      %s435 = sphi 0, %s435
      %s437 = sphi 0, %s435
      %s438 = sphi 0, %s437
      %s452 = sphi 0, %s438
      %s456 = sphi 0, %s456
      %s458 = sphi 0, %s456
      %s459 = sphi 0, %s458
      %s473 = sphi 0, %s459
      %s477 = sphi 0, %s477
      %s479 = sphi 0, %s477
      %s480 = sphi 0, %s479
      %s494 = sphi 0, %s480
      %s498 = sphi 0, %s498
      %s500 = sphi 0, %s498
      %s501 = sphi 0, %s500
      %s515 = sphi 0, %s501
      %s519 = sphi 0, %s519
      %s521 = sphi 0, %s519
      %s522 = sphi 0, %s521
      %s536 = sphi 0, %s522
      %s540 = sphi 0, %s540
      %s542 = sphi 0, %s540
      %s543 = sphi 0, %s542
      %s557 = sphi 0, %s543
      %s561 = sphi 0, %s561
      %s563 = sphi 0, %s561
      %s564 = sphi 0, %s563
      %s578 = sphi 0, %s564
      %s582 = sphi 0, %s582
      %s584 = sphi 0, %s582
      %s585 = sphi 0, %s584
      %s599 = sphi 0, %s585
      %s603 = sphi 0, %s603
      %s605 = sphi 0, %s603
      %s606 = sphi 0, %s605
      %s620 = sphi 0, %s606
      %s624 = sphi 0, %s624
      %s626 = sphi 0, %s624
      %s627 = sphi 0, %s626
      %s641 = sphi 0, %s627
      %s647 = sphi 0, %s649
      %s650 = sphi 0, %s647
      %s651 = sphi 0, %s650
      %s667 = sphi 0, %s651
    $region4: #{decoder_forward.1} parent=1 // loop_header_branch
      %42 = sbr.rel (%p40) target = $region8
    $region5: #{decoder_forward.1} parent=1 // loop_body
      %s44 = ssub.s32 %s39, 1
      %s45 = ssub.s32 %s39, 2
      %s46 = sadd.s32 %s39, 1
      %s47 = ssub.s32 %s39, %s46
      %p48 = scmp.eq.s32.totalorder %s47, 0
      %s50 = sadd.s32 %s49, 1
      %s51 = scalar_select %p48, %s49, %s50
      %p54 = pneg %p48
      %p55 = scmp.eq.s32.totalorder %s39, 1
      %p56 = por %p54, %p55
      %p57 = scmp.ne.s32.totalorder %s49, %s52
      %p58 = scmp.eq.s32.totalorder %s39, 0
      %p59 = por %p57, %p58
      %p60 = scmp.ne.s32.totalorder %s49, %s52
      %p61 = scmp.eq.s32.totalorder %s44, 1
      %p62 = por %p60, %p61
      %p63 = scmp.ne.s32.totalorder %s52, %s53
      %p64 = scmp.eq.s32.totalorder %s44, 0
      %p65 = por %p63, %p64
      %p66 = scmp.ne.s32.totalorder %s52, %s53
      %p67 = scmp.eq.s32.totalorder %s45, 1
      %p68 = por %p66, %p67
      %p70 = scmp.ne.s32.totalorder %s53, %s69
      %p71 = scmp.eq.s32.totalorder %s45, 0
      %p72 = por %p70, %p71
      %s73 = ssub.s32 %s39, %s46
      %p74 = scmp.eq.s32.totalorder %s73, 0
      %s76 = sadd.s32 %s75, 1
      %s77 = scalar_select %p74, %s75, %s76
      %p80 = pneg %p74
      %p81 = scmp.eq.s32.totalorder %s39, 1
      %p82 = por %p80, %p81
      %p83 = scmp.ne.s32.totalorder %s75, %s78
      %p84 = scmp.eq.s32.totalorder %s39, 0
      %p85 = por %p83, %p84
      %p86 = scmp.ne.s32.totalorder %s75, %s78
      %p87 = scmp.eq.s32.totalorder %s44, 1
      %p88 = por %p86, %p87
      %p89 = scmp.ne.s32.totalorder %s78, %s79
      %p90 = scmp.eq.s32.totalorder %s44, 0
      %p91 = por %p89, %p90
      %p92 = scmp.ne.s32.totalorder %s78, %s79
      %p93 = scmp.eq.s32.totalorder %s45, 1
      %p94 = por %p92, %p93
      %p96 = scmp.ne.s32.totalorder %s79, %s95
      %p97 = scmp.eq.s32.totalorder %s45, 0
      %p98 = por %p96, %p97
      %s100 = sadd.s32 %s99, 1
      %p103 = scmp.eq.s32.totalorder %s39, 1
      %p104 = scmp.ne.s32.totalorder %s99, %s101
      %p105 = scmp.eq.s32.totalorder %s39, 0
      %p106 = por %p104, %p105
      %p107 = scmp.ne.s32.totalorder %s99, %s101
      %p108 = scmp.eq.s32.totalorder %s44, 1
      %p109 = por %p107, %p108
      %p110 = scmp.ne.s32.totalorder %s101, %s102
      %p111 = scmp.eq.s32.totalorder %s44, 0
      %p112 = por %p110, %p111
      %p113 = scmp.ne.s32.totalorder %s101, %s102
      %p114 = scmp.eq.s32.totalorder %s45, 1
      %p115 = por %p113, %p114
      %p117 = scmp.ne.s32.totalorder %s102, %s116
      %p118 = scmp.eq.s32.totalorder %s45, 0
      %p119 = por %p117, %p118
      %s121 = sadd.s32 %s120, 1
      %p124 = scmp.eq.s32.totalorder %s39, 1
      %p125 = scmp.ne.s32.totalorder %s120, %s122
      %p126 = scmp.eq.s32.totalorder %s39, 0
      %p127 = por %p125, %p126
      %p128 = scmp.ne.s32.totalorder %s120, %s122
      %p129 = scmp.eq.s32.totalorder %s44, 1
      %p130 = por %p128, %p129
      %p131 = scmp.ne.s32.totalorder %s122, %s123
      %p132 = scmp.eq.s32.totalorder %s44, 0
      %p133 = por %p131, %p132
      %p134 = scmp.ne.s32.totalorder %s122, %s123
      %p135 = scmp.eq.s32.totalorder %s45, 1
      %p136 = por %p134, %p135
      %p138 = scmp.ne.s32.totalorder %s123, %s137
      %p139 = scmp.eq.s32.totalorder %s45, 0
      %p140 = por %p138, %p139
      %s142 = sadd.s32 %s141, 1
      %p145 = scmp.eq.s32.totalorder %s39, 1
      %p146 = scmp.ne.s32.totalorder %s141, %s143
      %p147 = scmp.eq.s32.totalorder %s39, 0
      %p148 = por %p146, %p147
      %p149 = scmp.ne.s32.totalorder %s141, %s143
      %p150 = scmp.eq.s32.totalorder %s44, 1
      %p151 = por %p149, %p150
      %p152 = scmp.ne.s32.totalorder %s143, %s144
      %p153 = scmp.eq.s32.totalorder %s44, 0
      %p154 = por %p152, %p153
      %p155 = scmp.ne.s32.totalorder %s143, %s144
      %p156 = scmp.eq.s32.totalorder %s45, 1
      %p157 = por %p155, %p156
      %p159 = scmp.ne.s32.totalorder %s144, %s158
      %p160 = scmp.eq.s32.totalorder %s45, 0
      %p161 = por %p159, %p160
      %s163 = sadd.s32 %s162, 1
      %p166 = scmp.eq.s32.totalorder %s39, 1
      %p167 = scmp.ne.s32.totalorder %s162, %s164
      %p168 = scmp.eq.s32.totalorder %s39, 0
      %p169 = por %p167, %p168
      %p170 = scmp.ne.s32.totalorder %s162, %s164
      %p171 = scmp.eq.s32.totalorder %s44, 1
      %p172 = por %p170, %p171
      %p173 = scmp.ne.s32.totalorder %s164, %s165
      %p174 = scmp.eq.s32.totalorder %s44, 0
      %p175 = por %p173, %p174
      %p176 = scmp.ne.s32.totalorder %s164, %s165
      %p177 = scmp.eq.s32.totalorder %s45, 1
      %p178 = por %p176, %p177
      %p180 = scmp.ne.s32.totalorder %s165, %s179
      %p181 = scmp.eq.s32.totalorder %s45, 0
      %p182 = por %p180, %p181
      %s184 = sadd.s32 %s183, 1
      %p187 = scmp.eq.s32.totalorder %s39, 1
      %p188 = scmp.ne.s32.totalorder %s183, %s185
      %p189 = scmp.eq.s32.totalorder %s39, 0
      %p190 = por %p188, %p189
      %p191 = scmp.ne.s32.totalorder %s183, %s185
      %p192 = scmp.eq.s32.totalorder %s44, 1
      %p193 = por %p191, %p192
      %p194 = scmp.ne.s32.totalorder %s185, %s186
      %p195 = scmp.eq.s32.totalorder %s44, 0
      %p196 = por %p194, %p195
      %p197 = scmp.ne.s32.totalorder %s185, %s186
      %p198 = scmp.eq.s32.totalorder %s45, 1
      %p199 = por %p197, %p198
      %p201 = scmp.ne.s32.totalorder %s186, %s200
      %p202 = scmp.eq.s32.totalorder %s45, 0
      %p203 = por %p201, %p202
      %s205 = sadd.s32 %s204, 1
      %p208 = scmp.eq.s32.totalorder %s39, 1
      %p209 = scmp.ne.s32.totalorder %s204, %s206
      %p210 = scmp.eq.s32.totalorder %s39, 0
      %p211 = por %p209, %p210
      %p212 = scmp.ne.s32.totalorder %s204, %s206
      %p213 = scmp.eq.s32.totalorder %s44, 1
      %p214 = por %p212, %p213
      %p215 = scmp.ne.s32.totalorder %s206, %s207
      %p216 = scmp.eq.s32.totalorder %s44, 0
      %p217 = por %p215, %p216
      %p218 = scmp.ne.s32.totalorder %s206, %s207
      %p219 = scmp.eq.s32.totalorder %s45, 1
      %p220 = por %p218, %p219
      %p222 = scmp.ne.s32.totalorder %s207, %s221
      %p223 = scmp.eq.s32.totalorder %s45, 0
      %p224 = por %p222, %p223
      %s226 = sadd.s32 %s225, 1
      %p229 = scmp.eq.s32.totalorder %s39, 1
      %p230 = scmp.ne.s32.totalorder %s225, %s227
      %p231 = scmp.eq.s32.totalorder %s39, 0
      %p232 = por %p230, %p231
      %p233 = scmp.ne.s32.totalorder %s225, %s227
      %p234 = scmp.eq.s32.totalorder %s44, 1
      %p235 = por %p233, %p234
      %p236 = scmp.ne.s32.totalorder %s227, %s228
      %p237 = scmp.eq.s32.totalorder %s44, 0
      %p238 = por %p236, %p237
      %p239 = scmp.ne.s32.totalorder %s227, %s228
      %p240 = scmp.eq.s32.totalorder %s45, 1
      %p241 = por %p239, %p240
      %p243 = scmp.ne.s32.totalorder %s228, %s242
      %p244 = scmp.eq.s32.totalorder %s45, 0
      %p245 = por %p243, %p244
      %s247 = sadd.s32 %s246, 1
      %p250 = scmp.eq.s32.totalorder %s39, 1
      %p251 = scmp.ne.s32.totalorder %s246, %s248
      %p252 = scmp.eq.s32.totalorder %s39, 0
      %p253 = por %p251, %p252
      %p254 = scmp.ne.s32.totalorder %s246, %s248
      %p255 = scmp.eq.s32.totalorder %s44, 1
      %p256 = por %p254, %p255
      %p257 = scmp.ne.s32.totalorder %s248, %s249
      %p258 = scmp.eq.s32.totalorder %s44, 0
      %p259 = por %p257, %p258
      %p260 = scmp.ne.s32.totalorder %s248, %s249
      %p261 = scmp.eq.s32.totalorder %s45, 1
      %p262 = por %p260, %p261
      %p264 = scmp.ne.s32.totalorder %s249, %s263
      %p265 = scmp.eq.s32.totalorder %s45, 0
      %p266 = por %p264, %p265
      %s268 = sadd.s32 %s267, 1
      %p271 = scmp.eq.s32.totalorder %s39, 1
      %p272 = scmp.ne.s32.totalorder %s267, %s269
      %p273 = scmp.eq.s32.totalorder %s39, 0
      %p274 = por %p272, %p273
      %p275 = scmp.ne.s32.totalorder %s267, %s269
      %p276 = scmp.eq.s32.totalorder %s44, 1
      %p277 = por %p275, %p276
      %p278 = scmp.ne.s32.totalorder %s269, %s270
      %p279 = scmp.eq.s32.totalorder %s44, 0
      %p280 = por %p278, %p279
      %p281 = scmp.ne.s32.totalorder %s269, %s270
      %p282 = scmp.eq.s32.totalorder %s45, 1
      %p283 = por %p281, %p282
      %p285 = scmp.ne.s32.totalorder %s270, %s284
      %p286 = scmp.eq.s32.totalorder %s45, 0
      %p287 = por %p285, %p286
      %s289 = sadd.s32 %s288, 1
      %p292 = scmp.eq.s32.totalorder %s39, 1
      %p293 = scmp.ne.s32.totalorder %s288, %s290
      %p294 = scmp.eq.s32.totalorder %s39, 0
      %p295 = por %p293, %p294
      %p296 = scmp.ne.s32.totalorder %s288, %s290
      %p297 = scmp.eq.s32.totalorder %s44, 1
      %p298 = por %p296, %p297
      %p299 = scmp.ne.s32.totalorder %s290, %s291
      %p300 = scmp.eq.s32.totalorder %s44, 0
      %p301 = por %p299, %p300
      %p302 = scmp.ne.s32.totalorder %s290, %s291
      %p303 = scmp.eq.s32.totalorder %s45, 1
      %p304 = por %p302, %p303
      %p306 = scmp.ne.s32.totalorder %s291, %s305
      %p307 = scmp.eq.s32.totalorder %s45, 0
      %p308 = por %p306, %p307
      %s310 = sadd.s32 %s309, 1
      %p313 = scmp.eq.s32.totalorder %s39, 1
      %p314 = scmp.ne.s32.totalorder %s309, %s311
      %p315 = scmp.eq.s32.totalorder %s39, 0
      %p316 = por %p314, %p315
      %p317 = scmp.ne.s32.totalorder %s309, %s311
      %p318 = scmp.eq.s32.totalorder %s44, 1
      %p319 = por %p317, %p318
      %p320 = scmp.ne.s32.totalorder %s311, %s312
      %p321 = scmp.eq.s32.totalorder %s44, 0
      %p322 = por %p320, %p321
      %p323 = scmp.ne.s32.totalorder %s311, %s312
      %p324 = scmp.eq.s32.totalorder %s45, 1
      %p325 = por %p323, %p324
      %p327 = scmp.ne.s32.totalorder %s312, %s326
      %p328 = scmp.eq.s32.totalorder %s45, 0
      %p329 = por %p327, %p328
      %s331 = sadd.s32 %s330, 1
      %p334 = scmp.eq.s32.totalorder %s39, 1
      %p335 = scmp.ne.s32.totalorder %s330, %s332
      %p336 = scmp.eq.s32.totalorder %s39, 0
      %p337 = por %p335, %p336
      %p338 = scmp.ne.s32.totalorder %s330, %s332
      %p339 = scmp.eq.s32.totalorder %s44, 1
      %p340 = por %p338, %p339
      %p341 = scmp.ne.s32.totalorder %s332, %s333
      %p342 = scmp.eq.s32.totalorder %s44, 0
      %p343 = por %p341, %p342
      %p344 = scmp.ne.s32.totalorder %s332, %s333
      %p345 = scmp.eq.s32.totalorder %s45, 1
      %p346 = por %p344, %p345
      %p348 = scmp.ne.s32.totalorder %s333, %s347
      %p349 = scmp.eq.s32.totalorder %s45, 0
      %p350 = por %p348, %p349
      %s352 = sadd.s32 %s351, 1
      %p355 = scmp.eq.s32.totalorder %s39, 1
      %p356 = scmp.ne.s32.totalorder %s351, %s353
      %p357 = scmp.eq.s32.totalorder %s39, 0
      %p358 = por %p356, %p357
      %p359 = scmp.ne.s32.totalorder %s351, %s353
      %p360 = scmp.eq.s32.totalorder %s44, 1
      %p361 = por %p359, %p360
      %p362 = scmp.ne.s32.totalorder %s353, %s354
      %p363 = scmp.eq.s32.totalorder %s44, 0
      %p364 = por %p362, %p363
      %p365 = scmp.ne.s32.totalorder %s353, %s354
      %p366 = scmp.eq.s32.totalorder %s45, 1
      %p367 = por %p365, %p366
      %p369 = scmp.ne.s32.totalorder %s354, %s368
      %p370 = scmp.eq.s32.totalorder %s45, 0
      %p371 = por %p369, %p370
      %s373 = sadd.s32 %s372, 1
      %p376 = scmp.eq.s32.totalorder %s39, 1
      %p377 = scmp.ne.s32.totalorder %s372, %s374
      %p378 = scmp.eq.s32.totalorder %s39, 0
      %p379 = por %p377, %p378
      %p380 = scmp.ne.s32.totalorder %s372, %s374
      %p381 = scmp.eq.s32.totalorder %s44, 1
      %p382 = por %p380, %p381
      %p383 = scmp.ne.s32.totalorder %s374, %s375
      %p384 = scmp.eq.s32.totalorder %s44, 0
      %p385 = por %p383, %p384
      %p386 = scmp.ne.s32.totalorder %s374, %s375
      %p387 = scmp.eq.s32.totalorder %s45, 1
      %p388 = por %p386, %p387
      %p390 = scmp.ne.s32.totalorder %s375, %s389
      %p391 = scmp.eq.s32.totalorder %s45, 0
      %p392 = por %p390, %p391
      %s394 = sadd.s32 %s393, 1
      %p397 = scmp.eq.s32.totalorder %s39, 1
      %p398 = scmp.ne.s32.totalorder %s393, %s395
      %p399 = scmp.eq.s32.totalorder %s39, 0
      %p400 = por %p398, %p399
      %p401 = scmp.ne.s32.totalorder %s393, %s395
      %p402 = scmp.eq.s32.totalorder %s44, 1
      %p403 = por %p401, %p402
      %p404 = scmp.ne.s32.totalorder %s395, %s396
      %p405 = scmp.eq.s32.totalorder %s44, 0
      %p406 = por %p404, %p405
      %p407 = scmp.ne.s32.totalorder %s395, %s396
      %p408 = scmp.eq.s32.totalorder %s45, 1
      %p409 = por %p407, %p408
      %p411 = scmp.ne.s32.totalorder %s396, %s410
      %p412 = scmp.eq.s32.totalorder %s45, 0
      %p413 = por %p411, %p412
      %s415 = sadd.s32 %s414, 1
      %p418 = scmp.eq.s32.totalorder %s39, 1
      %p419 = scmp.ne.s32.totalorder %s414, %s416
      %p420 = scmp.eq.s32.totalorder %s39, 0
      %p421 = por %p419, %p420
      %p422 = scmp.ne.s32.totalorder %s414, %s416
      %p423 = scmp.eq.s32.totalorder %s44, 1
      %p424 = por %p422, %p423
      %p425 = scmp.ne.s32.totalorder %s416, %s417
      %p426 = scmp.eq.s32.totalorder %s44, 0
      %p427 = por %p425, %p426
      %p428 = scmp.ne.s32.totalorder %s416, %s417
      %p429 = scmp.eq.s32.totalorder %s45, 1
      %p430 = por %p428, %p429
      %p432 = scmp.ne.s32.totalorder %s417, %s431
      %p433 = scmp.eq.s32.totalorder %s45, 0
      %p434 = por %p432, %p433
      %s436 = sadd.s32 %s435, 1
      %p439 = scmp.eq.s32.totalorder %s39, 1
      %p440 = scmp.ne.s32.totalorder %s435, %s437
      %p441 = scmp.eq.s32.totalorder %s39, 0
      %p442 = por %p440, %p441
      %p443 = scmp.ne.s32.totalorder %s435, %s437
      %p444 = scmp.eq.s32.totalorder %s44, 1
      %p445 = por %p443, %p444
      %p446 = scmp.ne.s32.totalorder %s437, %s438
      %p447 = scmp.eq.s32.totalorder %s44, 0
      %p448 = por %p446, %p447
      %p449 = scmp.ne.s32.totalorder %s437, %s438
      %p450 = scmp.eq.s32.totalorder %s45, 1
      %p451 = por %p449, %p450
      %p453 = scmp.ne.s32.totalorder %s438, %s452
      %p454 = scmp.eq.s32.totalorder %s45, 0
      %p455 = por %p453, %p454
      %s457 = sadd.s32 %s456, 1
      %p460 = scmp.eq.s32.totalorder %s39, 1
      %p461 = scmp.ne.s32.totalorder %s456, %s458
      %p462 = scmp.eq.s32.totalorder %s39, 0
      %p463 = por %p461, %p462
      %p464 = scmp.ne.s32.totalorder %s456, %s458
      %p465 = scmp.eq.s32.totalorder %s44, 1
      %p466 = por %p464, %p465
      %p467 = scmp.ne.s32.totalorder %s458, %s459
      %p468 = scmp.eq.s32.totalorder %s44, 0
      %p469 = por %p467, %p468
      %p470 = scmp.ne.s32.totalorder %s458, %s459
      %p471 = scmp.eq.s32.totalorder %s45, 1
      %p472 = por %p470, %p471
      %p474 = scmp.ne.s32.totalorder %s459, %s473
      %p475 = scmp.eq.s32.totalorder %s45, 0
      %p476 = por %p474, %p475
      %s478 = sadd.s32 %s477, 1
      %p481 = scmp.eq.s32.totalorder %s39, 1
      %p482 = scmp.ne.s32.totalorder %s477, %s479
      %p483 = scmp.eq.s32.totalorder %s39, 0
      %p484 = por %p482, %p483
      %p485 = scmp.ne.s32.totalorder %s477, %s479
      %p486 = scmp.eq.s32.totalorder %s44, 1
      %p487 = por %p485, %p486
      %p488 = scmp.ne.s32.totalorder %s479, %s480
      %p489 = scmp.eq.s32.totalorder %s44, 0
      %p490 = por %p488, %p489
      %p491 = scmp.ne.s32.totalorder %s479, %s480
      %p492 = scmp.eq.s32.totalorder %s45, 1
      %p493 = por %p491, %p492
      %p495 = scmp.ne.s32.totalorder %s480, %s494
      %p496 = scmp.eq.s32.totalorder %s45, 0
      %p497 = por %p495, %p496
      %s499 = sadd.s32 %s498, 1
      %p502 = scmp.eq.s32.totalorder %s39, 1
      %p503 = scmp.ne.s32.totalorder %s498, %s500
      %p504 = scmp.eq.s32.totalorder %s39, 0
      %p505 = por %p503, %p504
      %p506 = scmp.ne.s32.totalorder %s498, %s500
      %p507 = scmp.eq.s32.totalorder %s44, 1
      %p508 = por %p506, %p507
      %p509 = scmp.ne.s32.totalorder %s500, %s501
      %p510 = scmp.eq.s32.totalorder %s44, 0
      %p511 = por %p509, %p510
      %p512 = scmp.ne.s32.totalorder %s500, %s501
      %p513 = scmp.eq.s32.totalorder %s45, 1
      %p514 = por %p512, %p513
      %p516 = scmp.ne.s32.totalorder %s501, %s515
      %p517 = scmp.eq.s32.totalorder %s45, 0
      %p518 = por %p516, %p517
      %s520 = sadd.s32 %s519, 1
      %p523 = scmp.eq.s32.totalorder %s39, 1
      %p524 = scmp.ne.s32.totalorder %s519, %s521
      %p525 = scmp.eq.s32.totalorder %s39, 0
      %p526 = por %p524, %p525
      %p527 = scmp.ne.s32.totalorder %s519, %s521
      %p528 = scmp.eq.s32.totalorder %s44, 1
      %p529 = por %p527, %p528
      %p530 = scmp.ne.s32.totalorder %s521, %s522
      %p531 = scmp.eq.s32.totalorder %s44, 0
      %p532 = por %p530, %p531
      %p533 = scmp.ne.s32.totalorder %s521, %s522
      %p534 = scmp.eq.s32.totalorder %s45, 1
      %p535 = por %p533, %p534
      %p537 = scmp.ne.s32.totalorder %s522, %s536
      %p538 = scmp.eq.s32.totalorder %s45, 0
      %p539 = por %p537, %p538
      %s541 = sadd.s32 %s540, 1
      %p544 = scmp.eq.s32.totalorder %s39, 1
      %p545 = scmp.ne.s32.totalorder %s540, %s542
      %p546 = scmp.eq.s32.totalorder %s39, 0
      %p547 = por %p545, %p546
      %p548 = scmp.ne.s32.totalorder %s540, %s542
      %p549 = scmp.eq.s32.totalorder %s44, 1
      %p550 = por %p548, %p549
      %p551 = scmp.ne.s32.totalorder %s542, %s543
      %p552 = scmp.eq.s32.totalorder %s44, 0
      %p553 = por %p551, %p552
      %p554 = scmp.ne.s32.totalorder %s542, %s543
      %p555 = scmp.eq.s32.totalorder %s45, 1
      %p556 = por %p554, %p555
      %p558 = scmp.ne.s32.totalorder %s543, %s557
      %p559 = scmp.eq.s32.totalorder %s45, 0
      %p560 = por %p558, %p559
      %s562 = sadd.s32 %s561, 1
      %p565 = scmp.eq.s32.totalorder %s39, 1
      %p566 = scmp.ne.s32.totalorder %s561, %s563
      %p567 = scmp.eq.s32.totalorder %s39, 0
      %p568 = por %p566, %p567
      %p569 = scmp.ne.s32.totalorder %s561, %s563
      %p570 = scmp.eq.s32.totalorder %s44, 1
      %p571 = por %p569, %p570
      %p572 = scmp.ne.s32.totalorder %s563, %s564
      %p573 = scmp.eq.s32.totalorder %s44, 0
      %p574 = por %p572, %p573
      %p575 = scmp.ne.s32.totalorder %s563, %s564
      %p576 = scmp.eq.s32.totalorder %s45, 1
      %p577 = por %p575, %p576
      %p579 = scmp.ne.s32.totalorder %s564, %s578
      %p580 = scmp.eq.s32.totalorder %s45, 0
      %p581 = por %p579, %p580
      %s583 = sadd.s32 %s582, 1
      %p586 = scmp.eq.s32.totalorder %s39, 1
      %p587 = scmp.ne.s32.totalorder %s582, %s584
      %p588 = scmp.eq.s32.totalorder %s39, 0
      %p589 = por %p587, %p588
      %p590 = scmp.ne.s32.totalorder %s582, %s584
      %p591 = scmp.eq.s32.totalorder %s44, 1
      %p592 = por %p590, %p591
      %p593 = scmp.ne.s32.totalorder %s584, %s585
      %p594 = scmp.eq.s32.totalorder %s44, 0
      %p595 = por %p593, %p594
      %p596 = scmp.ne.s32.totalorder %s584, %s585
      %p597 = scmp.eq.s32.totalorder %s45, 1
      %p598 = por %p596, %p597
      %p600 = scmp.ne.s32.totalorder %s585, %s599
      %p601 = scmp.eq.s32.totalorder %s45, 0
      %p602 = por %p600, %p601
      %s604 = sadd.s32 %s603, 1
      %p607 = scmp.eq.s32.totalorder %s39, 1
      %p608 = scmp.ne.s32.totalorder %s603, %s605
      %p609 = scmp.eq.s32.totalorder %s39, 0
      %p610 = por %p608, %p609
      %p611 = scmp.ne.s32.totalorder %s603, %s605
      %p612 = scmp.eq.s32.totalorder %s44, 1
      %p613 = por %p611, %p612
      %p614 = scmp.ne.s32.totalorder %s605, %s606
      %p615 = scmp.eq.s32.totalorder %s44, 0
      %p616 = por %p614, %p615
      %p617 = scmp.ne.s32.totalorder %s605, %s606
      %p618 = scmp.eq.s32.totalorder %s45, 1
      %p619 = por %p617, %p618
      %p621 = scmp.ne.s32.totalorder %s606, %s620
      %p622 = scmp.eq.s32.totalorder %s45, 0
      %p623 = por %p621, %p622
      %s625 = sadd.s32 %s624, 1
      %p628 = scmp.eq.s32.totalorder %s39, 1
      %p629 = scmp.ne.s32.totalorder %s624, %s626
      %p630 = scmp.eq.s32.totalorder %s39, 0
      %p631 = por %p629, %p630
      %p632 = scmp.ne.s32.totalorder %s624, %s626
      %p633 = scmp.eq.s32.totalorder %s44, 1
      %p634 = por %p632, %p633
      %p635 = scmp.ne.s32.totalorder %s626, %s627
      %p636 = scmp.eq.s32.totalorder %s44, 0
      %p637 = por %p635, %p636
      %p638 = scmp.ne.s32.totalorder %s626, %s627
      %p639 = scmp.eq.s32.totalorder %s45, 1
      %p640 = por %p638, %p639
      %p642 = scmp.ne.s32.totalorder %s627, %s641
      %p643 = scmp.eq.s32.totalorder %s45, 0
      %p644 = por %p642, %p643
      %s645 = ssub.s32 %s39, %s46
      %p646 = scmp.eq.s32.totalorder %s645, 0
      %s648 = sadd.s32 %s647, 1
      %s649 = scalar_select %p646, %s647, %s648
      %p652 = pneg %p646
      %p653 = scmp.eq.s32.totalorder %s39, 1
      %p654 = por %p652, %p653
      %p655 = scmp.ne.s32.totalorder %s647, %s650
      %p656 = scmp.eq.s32.totalorder %s39, 0
      %p657 = por %p655, %p656
      %p658 = scmp.ne.s32.totalorder %s647, %s650
      %p659 = scmp.eq.s32.totalorder %s44, 1
      %p660 = por %p658, %p659
      %p661 = scmp.ne.s32.totalorder %s650, %s651
      %p662 = scmp.eq.s32.totalorder %s44, 0
      %p663 = por %p661, %p662
      %p664 = scmp.ne.s32.totalorder %s650, %s651
      %p665 = scmp.eq.s32.totalorder %s45, 1
      %p666 = por %p664, %p665
      %p668 = scmp.ne.s32.totalorder %s651, %s667
      %p669 = scmp.eq.s32.totalorder %s45, 0
      %p670 = por %p668, %p669
      %p671 = scmp.le.s32.totalorder 1, %s39
      %p672 = scmp.lt.s32.totalorder %s39, 3
      %p673 = pnand %p671, %p672
      %p674 = pneg %p673
      // Predicated region
      $region9: #{decoder_forward.1} parent=5 // pred_check
        _
      $region10: #{decoder_forward.1} parent=5 // pred_check_branch
        %676 = sbr.rel (%p673) target = $region12
      $region11: #{decoder_forward.1} parent=5 // pred_region
        %s677 = ssub.s32 %s39, 1
        // Predicated region
        $region13: #{decoder_forward.1} parent=11 // pred_check
          %p678 = pneg %p112
        $region14: #{decoder_forward.1} parent=11 // pred_check_branch
          %680 = sbr.rel (%p678) target = $region16
        $region15: #{decoder_forward.1} parent=11 // pred_region
          _
        $region16: #{decoder_forward.1} parent=11 // pred_fallthru
          _
        // Predicated region
        $region17: #{decoder_forward.1} parent=11 // pred_check
          %p681 = pneg %p133
        $region18: #{decoder_forward.1} parent=11 // pred_check_branch
          %683 = sbr.rel (%p681) target = $region20
        $region19: #{decoder_forward.1} parent=11 // pred_region
          _
        $region20: #{decoder_forward.1} parent=11 // pred_fallthru
          _
        // Predicated region
        $region21: #{decoder_forward.1} parent=11 // pred_check
          %p684 = pneg %p154
        $region22: #{decoder_forward.1} parent=11 // pred_check_branch
          %686 = sbr.rel (%p684) target = $region24
        $region23: #{decoder_forward.1} parent=11 // pred_region
          _
        $region24: #{decoder_forward.1} parent=11 // pred_fallthru
          _
        // Predicated region
        $region25: #{decoder_forward.1} parent=11 // pred_check
          %p687 = pneg %p175
        $region26: #{decoder_forward.1} parent=11 // pred_check_branch
          %689 = sbr.rel (%p687) target = $region28
        $region27: #{decoder_forward.1} parent=11 // pred_region
          _
        $region28: #{decoder_forward.1} parent=11 // pred_fallthru
          _
        // Predicated region
        $region29: #{decoder_forward.1} parent=11 // pred_check
          %p690 = pneg %p196
        $region30: #{decoder_forward.1} parent=11 // pred_check_branch
          %692 = sbr.rel (%p690) target = $region32
        $region31: #{decoder_forward.1} parent=11 // pred_region
          _
        $region32: #{decoder_forward.1} parent=11 // pred_fallthru
          _
        // Predicated region
        $region33: #{decoder_forward.1} parent=11 // pred_check
          %p693 = pneg %p217
        $region34: #{decoder_forward.1} parent=11 // pred_check_branch
          %695 = sbr.rel (%p693) target = $region36
        $region35: #{decoder_forward.1} parent=11 // pred_region
          _
        $region36: #{decoder_forward.1} parent=11 // pred_fallthru
          _
        // Predicated region
        $region37: #{decoder_forward.1} parent=11 // pred_check
          %p696 = pneg %p238
        $region38: #{decoder_forward.1} parent=11 // pred_check_branch
          %698 = sbr.rel (%p696) target = $region40
        $region39: #{decoder_forward.1} parent=11 // pred_region
          _
        $region40: #{decoder_forward.1} parent=11 // pred_fallthru
          _
        // Predicated region
        $region41: #{decoder_forward.1} parent=11 // pred_check
          %p699 = pneg %p259
        $region42: #{decoder_forward.1} parent=11 // pred_check_branch
          %701 = sbr.rel (%p699) target = $region44
        $region43: #{decoder_forward.1} parent=11 // pred_region
          _
        $region44: #{decoder_forward.1} parent=11 // pred_fallthru
          _
        // Predicated region
        $region45: #{decoder_forward.1} parent=11 // pred_check
          %p702 = pneg %p280
        $region46: #{decoder_forward.1} parent=11 // pred_check_branch
          %704 = sbr.rel (%p702) target = $region48
        $region47: #{decoder_forward.1} parent=11 // pred_region
          _
        $region48: #{decoder_forward.1} parent=11 // pred_fallthru
          _
        // Predicated region
        $region49: #{decoder_forward.1} parent=11 // pred_check
          %p705 = pneg %p301
        $region50: #{decoder_forward.1} parent=11 // pred_check_branch
          %707 = sbr.rel (%p705) target = $region52
        $region51: #{decoder_forward.1} parent=11 // pred_region
          _
        $region52: #{decoder_forward.1} parent=11 // pred_fallthru
          _
        // Predicated region
        $region53: #{decoder_forward.1} parent=11 // pred_check
          %p708 = pneg %p322
        $region54: #{decoder_forward.1} parent=11 // pred_check_branch
          %710 = sbr.rel (%p708) target = $region56
        $region55: #{decoder_forward.1} parent=11 // pred_region
          _
        $region56: #{decoder_forward.1} parent=11 // pred_fallthru
          _
        // Predicated region
        $region57: #{decoder_forward.1} parent=11 // pred_check
          %p711 = pneg %p343
        $region58: #{decoder_forward.1} parent=11 // pred_check_branch
          %713 = sbr.rel (%p711) target = $region60
        $region59: #{decoder_forward.1} parent=11 // pred_region
          _
        $region60: #{decoder_forward.1} parent=11 // pred_fallthru
          _
        // Predicated region
        $region61: #{decoder_forward.1} parent=11 // pred_check
          %p714 = pneg %p364
        $region62: #{decoder_forward.1} parent=11 // pred_check_branch
          %716 = sbr.rel (%p714) target = $region64
        $region63: #{decoder_forward.1} parent=11 // pred_region
          _
        $region64: #{decoder_forward.1} parent=11 // pred_fallthru
          _
        // Predicated region
        $region65: #{decoder_forward.1} parent=11 // pred_check
          %p717 = pneg %p385
        $region66: #{decoder_forward.1} parent=11 // pred_check_branch
          %719 = sbr.rel (%p717) target = $region68
        $region67: #{decoder_forward.1} parent=11 // pred_region
          _
        $region68: #{decoder_forward.1} parent=11 // pred_fallthru
          _
        // Predicated region
        $region69: #{decoder_forward.1} parent=11 // pred_check
          %p720 = pneg %p406
        $region70: #{decoder_forward.1} parent=11 // pred_check_branch
          %722 = sbr.rel (%p720) target = $region72
        $region71: #{decoder_forward.1} parent=11 // pred_region
          _
        $region72: #{decoder_forward.1} parent=11 // pred_fallthru
          _
        // Predicated region
        $region73: #{decoder_forward.1} parent=11 // pred_check
          %p723 = pneg %p427
        $region74: #{decoder_forward.1} parent=11 // pred_check_branch
          %725 = sbr.rel (%p723) target = $region76
        $region75: #{decoder_forward.1} parent=11 // pred_region
          _
        $region76: #{decoder_forward.1} parent=11 // pred_fallthru
          _
        // Predicated region
        $region77: #{decoder_forward.1} parent=11 // pred_check
          %p726 = pneg %p448
        $region78: #{decoder_forward.1} parent=11 // pred_check_branch
          %728 = sbr.rel (%p726) target = $region80
        $region79: #{decoder_forward.1} parent=11 // pred_region
          _
        $region80: #{decoder_forward.1} parent=11 // pred_fallthru
          _
        // Predicated region
        $region81: #{decoder_forward.1} parent=11 // pred_check
          %p729 = pneg %p469
        $region82: #{decoder_forward.1} parent=11 // pred_check_branch
          %731 = sbr.rel (%p729) target = $region84
        $region83: #{decoder_forward.1} parent=11 // pred_region
          _
        $region84: #{decoder_forward.1} parent=11 // pred_fallthru
          _
        // Predicated region
        $region85: #{decoder_forward.1} parent=11 // pred_check
          %p732 = pneg %p490
        $region86: #{decoder_forward.1} parent=11 // pred_check_branch
          %734 = sbr.rel (%p732) target = $region88
        $region87: #{decoder_forward.1} parent=11 // pred_region
          %s736 = ssub.s32 32768, 32768
          %737 = vsyncadd [#allocation3], %s736
          %s738 = sshll.u32 [#allocation2], 4
          %s739 = int_to_ptr.vmem [resolvable:$true] %s738
          %744 = dma.hbm_to_vmem [thread:$0]  %s20, 32768, %s739, [#allocation3], 1024, 1024, 64
        $region88: #{decoder_forward.1} parent=11 // pred_fallthru
          _
        // Predicated region
        $region89: #{decoder_forward.1} parent=11 // pred_check
          %p745 = pneg %p511
        $region90: #{decoder_forward.1} parent=11 // pred_check_branch
          %747 = sbr.rel (%p745) target = $region92
        $region91: #{decoder_forward.1} parent=11 // pred_region
          _
        $region92: #{decoder_forward.1} parent=11 // pred_fallthru
          _
        // Predicated region
        $region93: #{decoder_forward.1} parent=11 // pred_check
          %p748 = pneg %p532
        $region94: #{decoder_forward.1} parent=11 // pred_check_branch
          %750 = sbr.rel (%p748) target = $region96
        $region95: #{decoder_forward.1} parent=11 // pred_region
          %s752 = ssub.s32 32768, 32768
          %753 = vsyncadd [#allocation6], %s752
          %s754 = sshll.u32 [#allocation5], 4
          %s755 = int_to_ptr.vmem [resolvable:$true] %s754
          %760 = dma.hbm_to_vmem [thread:$0]  %s22, 32768, %s755, [#allocation6], 64, 64, 4
        $region96: #{decoder_forward.1} parent=11 // pred_fallthru
          _
        // Predicated region
        $region97: #{decoder_forward.1} parent=11 // pred_check
          %p761 = pneg %p553
        $region98: #{decoder_forward.1} parent=11 // pred_check_branch
          %763 = sbr.rel (%p761) target = $region100
        $region99: #{decoder_forward.1} parent=11 // pred_region
          _
        $region100: #{decoder_forward.1} parent=11 // pred_fallthru
          _
        // Predicated region
        $region101: #{decoder_forward.1} parent=11 // pred_check
          %p764 = pneg %p574
        $region102: #{decoder_forward.1} parent=11 // pred_check_branch
          %766 = sbr.rel (%p764) target = $region104
        $region103: #{decoder_forward.1} parent=11 // pred_region
          _
        $region104: #{decoder_forward.1} parent=11 // pred_fallthru
          _
        // Predicated region
        $region105: #{decoder_forward.1} parent=11 // pred_check
          %p767 = pneg %p595
        $region106: #{decoder_forward.1} parent=11 // pred_check_branch
          %769 = sbr.rel (%p767) target = $region108
        $region107: #{decoder_forward.1} parent=11 // pred_region
          _
        $region108: #{decoder_forward.1} parent=11 // pred_fallthru
          _
        // Predicated region
        $region109: #{decoder_forward.1} parent=11 // pred_check
          %p770 = pneg %p616
        $region110: #{decoder_forward.1} parent=11 // pred_check_branch
          %772 = sbr.rel (%p770) target = $region112
        $region111: #{decoder_forward.1} parent=11 // pred_region
          _
        $region112: #{decoder_forward.1} parent=11 // pred_fallthru
          _
        // Predicated region
        $region113: #{decoder_forward.1} parent=11 // pred_check
          %p773 = pneg %p637
        $region114: #{decoder_forward.1} parent=11 // pred_check_branch
          %775 = sbr.rel (%p773) target = $region116
        $region115: #{decoder_forward.1} parent=11 // pred_region
          _
        $region116: #{decoder_forward.1} parent=11 // pred_fallthru
          _
      $region12: #{decoder_forward.1} parent=5 // pred_fallthru
        _
      %p776 = scmp.lt.s32.totalorder %s39, 2
      // Predicated region
      $region117: #{decoder_forward.1} parent=5 // pred_check
        %p777 = pneg %p776
      $region118: #{decoder_forward.1} parent=5 // pred_check_branch
        %779 = sbr.rel (%p777) target = $region120
      $region119: #{decoder_forward.1} parent=5 // pred_region
        // Predicated region
        $region121: #{decoder_forward.1} parent=119 // pred_check
          %p780 = pneg %p59
        $region122: #{decoder_forward.1} parent=119 // pred_check_branch
          %782 = sbr.rel (%p780) target = $region124
        $region123: #{decoder_forward.1} parent=119 // pred_region
          %p783 = scmp.lt.s32.totalorder %s39, 1
          %s784 = scalar_select %p783, %s39, 1
          %s785 = smul.addr %s784, 8
          %s786 = scalar_lea.vmem %s0, %s785
        $region124: #{decoder_forward.1} parent=119 // pred_fallthru
          _
        // Predicated region
        $region125: #{decoder_forward.1} parent=119 // pred_check
          %p787 = pneg %p85
        $region126: #{decoder_forward.1} parent=119 // pred_check_branch
          %789 = sbr.rel (%p787) target = $region128
        $region127: #{decoder_forward.1} parent=119 // pred_region
          %p790 = scmp.lt.s32.totalorder %s39, 1
          %s791 = scalar_select %p790, %s39, 1
          %s792 = smul.addr %s791, 8
          %s793 = scalar_lea.vmem %s1, %s792
        $region128: #{decoder_forward.1} parent=119 // pred_fallthru
          _
      $region120: #{decoder_forward.1} parent=5 // pred_fallthru
        _
      %p794 = scmp.le.s32.totalorder 1, %s39
      %p795 = scmp.lt.s32.totalorder %s39, 3
      %p796 = pnand %p794, %p795
      %p797 = pneg %p796
      // Predicated region
      $region129: #{decoder_forward.1} parent=5 // pred_check
        _
      $region130: #{decoder_forward.1} parent=5 // pred_check_branch
        %799 = sbr.rel (%p796) target = $region132
      $region131: #{decoder_forward.1} parent=5 // pred_region
        %s800 = ssub.s32 %s39, 1
        // Predicated region
        $region133: #{decoder_forward.1} parent=131 // pred_check
          %p801 = pneg %p490
        $region134: #{decoder_forward.1} parent=131 // pred_check_branch
          %803 = sbr.rel (%p801) target = $region136
        $region135: #{decoder_forward.1} parent=131 // pred_region
          %804 = dma.done [#allocation3], 32768
        $region136: #{decoder_forward.1} parent=131 // pred_fallthru
          _
        // Predicated region
        $region137: #{decoder_forward.1} parent=131 // pred_check
          %p805 = pneg %p532
        $region138: #{decoder_forward.1} parent=131 // pred_check_branch
          %807 = sbr.rel (%p805) target = $region140
        $region139: #{decoder_forward.1} parent=131 // pred_region
          %808 = dma.done [#allocation6], 32768
        $region140: #{decoder_forward.1} parent=131 // pred_fallthru
          _
        %p809 = scmp.lt.s32.totalorder %s44, 1
        %s810 = scalar_select %p809, %s44, 1
        %s811 = smul.addr %s810, 8
        %s812 = scalar_lea.vmem %s0, %s811
        %p813 = pneg %p65
        %p814 = pneg %p62
        %p815 = scmp.lt.s32.totalorder %s44, 1
        %s816 = scalar_select %p815, %s44, 1
        %s817 = smul.addr %s816, 8
        %s818 = scalar_lea.vmem %s1, %s817
        %p819 = pneg %p91
        %p820 = pneg %p88
        %p821 = pneg %p112
        %p822 = pneg %p109
        %p823 = pneg %p133
        %p824 = pneg %p130
        %p825 = pneg %p154
        %p826 = pneg %p151
        %p827 = pneg %p175
        %p828 = pneg %p172
        %p829 = pneg %p196
        %p830 = pneg %p193
        %p831 = pneg %p217
        %p832 = pneg %p214
        %p833 = pneg %p238
        %p834 = pneg %p235
        %p835 = pneg %p259
        %p836 = pneg %p256
        %p837 = pneg %p280
        %p838 = pneg %p277
        %p839 = pneg %p301
        %p840 = pneg %p298
        %p841 = pneg %p322
        %p842 = pneg %p319
        %p843 = pneg %p343
        %p844 = pneg %p340
        %p845 = pneg %p364
        %p846 = pneg %p361
        %p847 = pneg %p385
        %p848 = pneg %p382
        %p849 = pneg %p406
        %p850 = pneg %p403
        %p851 = pneg %p427
        %p852 = pneg %p424
        %p853 = pneg %p448
        %p854 = pneg %p445
        %p855 = pneg %p469
        %p856 = pneg %p466
        %p857 = pneg %p490
        %p858 = pneg %p487
        %p859 = pneg %p511
        %p860 = pneg %p508
        %p861 = pneg %p532
        %p862 = pneg %p529
        %p863 = pneg %p553
        %p864 = pneg %p550
        %p865 = pneg %p574
        %p866 = pneg %p571
        %p867 = pneg %p595
        %p868 = pneg %p592
        %p869 = pneg %p616
        %p870 = pneg %p613
        %p871 = pneg %p637
        %p872 = pneg %p634
        %p873 = pneg %p663
        %p874 = pneg %p660
        %s875 = sand.u32 %s650, 1
        %s876 = scalar_lea.sflag [#allocation4], %s875
        %s877 = sand.u32 %s650, 1
        %s878 = smul.addr %s877, 8
        %s879 = scalar_lea.vmem [#allocation7], %s878
        %p880 = scmp.lt.s32.totalorder %s44, 1
        %s881 = scalar_select %p880, %s44, 1
        %s882 = smul.addr %s881, 8
        %s883 = scalar_lea.vmem %s0, %s882
        %p884 = scmp.lt.s32.totalorder %s44, 1
        %s885 = scalar_select %p884, %s44, 1
        %s886 = smul.addr %s885, 8
        %s887 = scalar_lea.vmem %s1, %s886
        %v889 = vld [vmem:[%s883] sm:$0xff]
        %v890 = vld [vmem:[%s887] sm:$0xff]
        %v891 = vld [vmem:[%s2] sm:$0xff]
        %v892 = vld [vmem:[%s3] sm:$0xff]
        %v893 = vld [vmem:[%s4] sm:$0xf]
        %v894 = vld [vmem:[%s4 + $0x4] sm:$0xf]
        %v895 = vld [vmem:[%s4 + $0x8] sm:$0xf]
        %v896 = vld [vmem:[%s4 + $0xc] sm:$0xf]
        %v897 = vld [vmem:[%s4 + $0x10] sm:$0xf]
        %v898 = vld [vmem:[%s4 + $0x14] sm:$0xf]
        %v899 = vld [vmem:[%s4 + $0x18] sm:$0xf]
        %v900 = vld [vmem:[%s4 + $0x1c] sm:$0xf]
        %v901 = vld [vmem:[%s4 + $0x20] sm:$0xf]
        %v902 = vld [vmem:[%s4 + $0x24] sm:$0xf]
        %v903 = vld [vmem:[%s4 + $0x28] sm:$0xf]
        %v904 = vld [vmem:[%s4 + $0x2c] sm:$0xf]
        %v905 = vld [vmem:[%s4 + $0x30] sm:$0xf]
        %v906 = vld [vmem:[%s4 + $0x34] sm:$0xf]
        %v907 = vld [vmem:[%s4 + $0x38] sm:$0xf]
        %v908 = vld [vmem:[%s4 + $0x3c] sm:$0xf]
        %v909 = vld [vmem:[%s5] sm:$0x1]
        %v910 = vld [vmem:[%s6] sm:$0xf]
        %v911 = vld [vmem:[%s6 + $0x4] sm:$0xf]
        %v912 = vld [vmem:[%s6 + $0x8] sm:$0xf]
        %v913 = vld [vmem:[%s6 + $0xc] sm:$0xf]
        %v914 = vld [vmem:[%s6 + $0x10] sm:$0xf]
        %v915 = vld [vmem:[%s6 + $0x14] sm:$0xf]
        %v916 = vld [vmem:[%s6 + $0x18] sm:$0xf]
        %v917 = vld [vmem:[%s6 + $0x1c] sm:$0xf]
        %v918 = vld [vmem:[%s6 + $0x20] sm:$0xf]
        %v919 = vld [vmem:[%s6 + $0x24] sm:$0xf]
        %v920 = vld [vmem:[%s6 + $0x28] sm:$0xf]
        %v921 = vld [vmem:[%s6 + $0x2c] sm:$0xf]
        %v922 = vld [vmem:[%s6 + $0x30] sm:$0xf]
        %v923 = vld [vmem:[%s6 + $0x34] sm:$0xf]
        %v924 = vld [vmem:[%s6 + $0x38] sm:$0xf]
        %v925 = vld [vmem:[%s6 + $0x3c] sm:$0xf]
        %v926 = vld [vmem:[%s7] sm:$0x1]
        %v927 = vld [vmem:[%s8] sm:$0xf]
        %v928 = vld [vmem:[%s8 + $0x4] sm:$0xf]
        %v929 = vld [vmem:[%s8 + $0x8] sm:$0xf]
        %v930 = vld [vmem:[%s8 + $0xc] sm:$0xf]
        %v931 = vld [vmem:[%s9] sm:$0x1]
        %v932 = vpack.c.bf16 %v889, %v889
        %v934 = vlaneseq
        %v935 = vshrl.u32 %v934, 7
        %v936 = vsub.s32 0, %v935
        %v937 = vrot.slane %v909, %v936
        %v955 = vunpack.c.l.b16 %v893
        %v956 = vunpack.c.l.b16 %v894
        %v957 = vunpack.c.l.b16 %v895
        %v958 = vunpack.c.l.b16 %v896
        %v959 = vunpack.c.l.b16 %v897
        %v960 = vunpack.c.l.b16 %v898
        %v961 = vunpack.c.l.b16 %v899
        %v962 = vunpack.c.l.b16 %v900
        %v963 = vunpack.c.l.b16 %v901
        %v964 = vunpack.c.l.b16 %v902
        %v965 = vunpack.c.l.b16 %v903
        %v966 = vunpack.c.l.b16 %v904
        %v967 = vunpack.c.l.b16 %v905
        %v968 = vunpack.c.l.b16 %v906
        %v969 = vunpack.c.l.b16 %v907
        %v970 = vunpack.c.l.b16 %v908
        %v971 = vpack.c.b16 %v956, %v955
        %v972 = vpack.c.b16 %v958, %v957
        %v973 = vpack.c.b16 %v960, %v959
        %v974 = vpack.c.b16 %v962, %v961
        %v975 = vpack.c.b16 %v964, %v963
        %v976 = vpack.c.b16 %v966, %v965
        %v977 = vpack.c.b16 %v968, %v967
        %v978 = vpack.c.b16 %v970, %v969
        %987 = vmatprep.subr.bf16.mxu0 0
        %988 = vmatpush1.bf16.msra.mxu0 %v978
        %989 = vmatprep.subr.bf16.mxu0 0
        %990 = vmatpush1.bf16.msra.mxu0 %v977
        %991 = vmatprep.subr.bf16.mxu0 0
        %992 = vmatpush1.bf16.msra.mxu0 %v976
        %993 = vmatprep.subr.bf16.mxu0 0
        %994 = vmatpush1.bf16.msra.mxu0 %v975
        %995 = vmatprep.subr.bf16.mxu0 0
        %996 = vmatpush1.bf16.msra.mxu0 %v974
        %997 = vmatprep.subr.bf16.mxu0 0
        %998 = vmatpush1.bf16.msra.mxu0 %v973
        %999 = vmatprep.subr.bf16.mxu0 0
        %1000 = vmatpush1.bf16.msra.mxu0 %v972
        %1001 = vmatprep.subr.bf16.mxu0 0
        %1002 = vmatpush1.bf16.msra.mxu0 %v971
        %1003 = vmatprep.subr.bf16.mxu0 0
        %1004 = vmatpush2.bf16.msra.mxu0 0
        %1005 = vmatprep.subr.bf16.mxu0 0
        %1006 = vmatpush2.bf16.msra.mxu0 0
        %1007 = vmatprep.subr.bf16.mxu0 0
        %1008 = vmatpush2.bf16.msra.mxu0 0
        %1009 = vmatprep.subr.bf16.mxu0 0
        %1010 = vmatpush2.bf16.msra.mxu0 0
        %1011 = vmatprep.subr.bf16.mxu0 0
        %1012 = vmatpush2.bf16.msra.mxu0 0
        %1013 = vmatprep.subr.bf16.mxu0 0
        %1014 = vmatpush2.bf16.msra.mxu0 0
        %1015 = vmatprep.subr.bf16.mxu0 0
        %1016 = vmatpush2.bf16.msra.mxu0 0
        %1017 = vmatprep.subr.bf16.mxu0 0
        %1018 = vmatpush2.bf16.msra.mxu0 0
        %1019 = vmatprep.mubr.bf16.mxu0 0
        %1020 = vmatmul.mubr.bf16.gmra.mxu0 %v932
        %v1021 = vpop.f32.mrf.mxu0
        %v1022 = vadd.f32 %v937, %v1021
        %v1023 = vpop.f32.mrf.mxu0
        %v1024 = vpop.f32.mrf.mxu0
        %v1025 = vpop.f32.mrf.mxu0
        %1026 = vdwg.mxu0
        %v1028 = vlaneseq
        %v1029 = vshrl.u32 %v1028, 7
        %v1030 = vsub.s32 0, %v1029
        %v1031 = vrot.slane %v926, %v1030
        %v1049 = vunpack.c.l.b16 %v910
        %v1050 = vunpack.c.l.b16 %v911
        %v1051 = vunpack.c.l.b16 %v912
        %v1052 = vunpack.c.l.b16 %v913
        %v1053 = vunpack.c.l.b16 %v914
        %v1054 = vunpack.c.l.b16 %v915
        %v1055 = vunpack.c.l.b16 %v916
        %v1056 = vunpack.c.l.b16 %v917
        %v1057 = vunpack.c.l.b16 %v918
        %v1058 = vunpack.c.l.b16 %v919
        %v1059 = vunpack.c.l.b16 %v920
        %v1060 = vunpack.c.l.b16 %v921
        %v1061 = vunpack.c.l.b16 %v922
        %v1062 = vunpack.c.l.b16 %v923
        %v1063 = vunpack.c.l.b16 %v924
        %v1064 = vunpack.c.l.b16 %v925
        %v1065 = vpack.c.b16 %v1050, %v1049
        %v1066 = vpack.c.b16 %v1052, %v1051
        %v1067 = vpack.c.b16 %v1054, %v1053
        %v1068 = vpack.c.b16 %v1056, %v1055
        %v1069 = vpack.c.b16 %v1058, %v1057
        %v1070 = vpack.c.b16 %v1060, %v1059
        %v1071 = vpack.c.b16 %v1062, %v1061
        %v1072 = vpack.c.b16 %v1064, %v1063
        %1081 = vmatprep.subr.bf16.mxu0 0
        %1082 = vmatpush1.bf16.msra.mxu0 %v1072
        %1083 = vmatprep.subr.bf16.mxu0 0
        %1084 = vmatpush1.bf16.msra.mxu0 %v1071
        %1085 = vmatprep.subr.bf16.mxu0 0
        %1086 = vmatpush1.bf16.msra.mxu0 %v1070
        %1087 = vmatprep.subr.bf16.mxu0 0
        %1088 = vmatpush1.bf16.msra.mxu0 %v1069
        %1089 = vmatprep.subr.bf16.mxu0 0
        %1090 = vmatpush1.bf16.msra.mxu0 %v1068
        %1091 = vmatprep.subr.bf16.mxu0 0
        %1092 = vmatpush1.bf16.msra.mxu0 %v1067
        %1093 = vmatprep.subr.bf16.mxu0 0
        %1094 = vmatpush1.bf16.msra.mxu0 %v1066
        %1095 = vmatprep.subr.bf16.mxu0 0
        %1096 = vmatpush1.bf16.msra.mxu0 %v1065
        %1097 = vmatprep.subr.bf16.mxu0 0
        %1098 = vmatpush2.bf16.msra.mxu0 0
        %1099 = vmatprep.subr.bf16.mxu0 0
        %1100 = vmatpush2.bf16.msra.mxu0 0
        %1101 = vmatprep.subr.bf16.mxu0 0
        %1102 = vmatpush2.bf16.msra.mxu0 0
        %1103 = vmatprep.subr.bf16.mxu0 0
        %1104 = vmatpush2.bf16.msra.mxu0 0
        %1105 = vmatprep.subr.bf16.mxu0 0
        %1106 = vmatpush2.bf16.msra.mxu0 0
        %1107 = vmatprep.subr.bf16.mxu0 0
        %1108 = vmatpush2.bf16.msra.mxu0 0
        %1109 = vmatprep.subr.bf16.mxu0 0
        %1110 = vmatpush2.bf16.msra.mxu0 0
        %1111 = vmatprep.subr.bf16.mxu0 0
        %1112 = vmatpush2.bf16.msra.mxu0 0
        %1113 = vmatprep.mubr.bf16.mxu0 0
        %1114 = vmatmul.mubr.bf16.gmra.mxu0 %v932
        %v1115 = vpop.f32.mrf.mxu0
        %v1116 = vadd.f32 %v1031, %v1115
        %v1117 = vpop.f32.mrf.mxu0
        %v1118 = vpop.f32.mrf.mxu0
        %v1119 = vpop.f32.mrf.mxu0
        %1120 = vdwg.mxu0
        %v1121 = vpack.c.bf16 %v1022, %v1022
        %v1122 = vpack.c.bf16 %v1116, %v1116
        %vm1123 = vcmask 64512
        %v1125 = vsel %vm1123, %v1121, 0
        %v1128 = vsel %vm1123, %v1122, 0
        %1130 = vmatprep.subr.bf16.mxu0 0
        %1131 = vmatpush1.bf16.xpose.msra.mxu0 0
        %1132 = vmatprep.subr.bf16.mxu0 0
        %1133 = vmatpush1.bf16.xpose.msra.mxu0 0
        %1134 = vmatprep.subr.bf16.mxu0 0
        %1135 = vmatpush1.bf16.xpose.msra.mxu0 0
        %1136 = vmatprep.subr.bf16.mxu0 0
        %1137 = vmatpush1.bf16.xpose.msra.mxu0 0
        %1138 = vmatprep.subr.bf16.mxu0 0
        %1139 = vmatpush1.bf16.xpose.msra.mxu0 0
        %1140 = vmatprep.subr.bf16.mxu0 0
        %1141 = vmatpush1.bf16.xpose.msra.mxu0 0
        %1142 = vmatprep.subr.bf16.mxu0 0
        %1143 = vmatpush1.bf16.xpose.msra.mxu0 0
        %1144 = vmatprep.subr.bf16.mxu0 0
        %1145 = vmatpush1.bf16.xpose.msra.mxu0 %v1128
        %1146 = vmatprep.subr.bf16.mxu0 0
        %1147 = vmatpush2.bf16.xpose.msra.mxu0 0
        %1148 = vmatprep.subr.bf16.mxu0 0
        %1149 = vmatpush2.bf16.xpose.msra.mxu0 0
        %1150 = vmatprep.subr.bf16.mxu0 0
        %1151 = vmatpush2.bf16.xpose.msra.mxu0 0
        %1152 = vmatprep.subr.bf16.mxu0 0
        %1153 = vmatpush2.bf16.xpose.msra.mxu0 0
        %1154 = vmatprep.subr.bf16.mxu0 0
        %1155 = vmatpush2.bf16.xpose.msra.mxu0 0
        %1156 = vmatprep.subr.bf16.mxu0 0
        %1157 = vmatpush2.bf16.xpose.msra.mxu0 0
        %1158 = vmatprep.subr.bf16.mxu0 0
        %1159 = vmatpush2.bf16.xpose.msra.mxu0 0
        %1160 = vmatprep.subr.bf16.mxu0 0
        %1161 = vmatpush2.bf16.xpose.msra.mxu0 0
        %1162 = vmatprep.mubr.bf16.mxu0 0
        %1163 = vmatmul.mubr.bf16.gmra.mxu0 %v1125
        %v1164 = vpop.f32.mrf.mxu0
        %v1165 = vadd.f32 %v891, %v1164
        %v1166 = vpop.f32.mrf.mxu0
        %v1167 = vpop.f32.mrf.mxu0
        %v1168 = vpop.f32.mrf.mxu0
        %1169 = vdwg.mxu0
        %v1170 = vsel %vm1123, %v1165, -inf
        %1171 = vmax.xlane.f32.xlu0 %v1170
        %v1172 = vpop.xlane.xlu0 %1171
        %v1173 = vsub.f32 %v1165, %v1172
        %v1174 = vmul.f32 %v1173, 1.442695
        %v1175 = vpow.pop %v1174
        %v1176 = vsel %vm1123, %v1175, 0.0
        %1177 = vadd.xlane.f32.xlu0 %v1176
        %v1178 = vpop.xlane.xlu0 %1177
        %v1179 = vpack.c.bf16 %v1175, %v1175
        %1181 = vrot.lane.b32.xlu0 %v1122, 96
        %v1182 = vpop.permute.xlu0 %1181
        %v1184 = vsel %vm1123, %v1179, 0
        %vm1186 = vcmask 1043456
        %v1188 = vsel %vm1186, %v1182, 0
        %1190 = vmatprep.subr.bf16.mxu0 0
        %1191 = vmatpush1.bf16.msra.mxu0 0
        %1192 = vmatprep.subr.bf16.mxu0 0
        %1193 = vmatpush1.bf16.msra.mxu0 0
        %1194 = vmatprep.subr.bf16.mxu0 0
        %1195 = vmatpush1.bf16.msra.mxu0 0
        %1196 = vmatprep.subr.bf16.mxu0 0
        %1197 = vmatpush1.bf16.msra.mxu0 0
        %1198 = vmatprep.subr.bf16.mxu0 0
        %1199 = vmatpush1.bf16.msra.mxu0 0
        %1200 = vmatprep.subr.bf16.mxu0 0
        %1201 = vmatpush1.bf16.msra.mxu0 0
        %1202 = vmatprep.subr.bf16.mxu0 0
        %1203 = vmatpush1.bf16.msra.mxu0 0
        %1204 = vmatprep.subr.bf16.mxu0 0
        %1205 = vmatpush1.bf16.msra.mxu0 %v1188
        %1206 = vmatprep.subr.bf16.mxu0 0
        %1207 = vmatpush2.bf16.msra.mxu0 0
        %1208 = vmatprep.subr.bf16.mxu0 0
        %1209 = vmatpush2.bf16.msra.mxu0 0
        %1210 = vmatprep.subr.bf16.mxu0 0
        %1211 = vmatpush2.bf16.msra.mxu0 0
        %1212 = vmatprep.subr.bf16.mxu0 0
        %1213 = vmatpush2.bf16.msra.mxu0 0
        %1214 = vmatprep.subr.bf16.mxu0 0
        %1215 = vmatpush2.bf16.msra.mxu0 0
        %1216 = vmatprep.subr.bf16.mxu0 0
        %1217 = vmatpush2.bf16.msra.mxu0 0
        %1218 = vmatprep.subr.bf16.mxu0 0
        %1219 = vmatpush2.bf16.msra.mxu0 0
        %1220 = vmatprep.subr.bf16.mxu0 0
        %1221 = vmatpush2.bf16.msra.mxu0 0
        %1222 = vmatprep.mubr.bf16.mxu0 0
        %1223 = vmatmul.mubr.bf16.gmra.mxu0 %v1184
        %v1224 = vpop.f32.mrf.mxu0
        %v1225 = vadd.f32 0.0, %v1224
        %v1226 = vpop.f32.mrf.mxu0
        %v1227 = vpop.f32.mrf.mxu0
        %v1228 = vpop.f32.mrf.mxu0
        %1229 = vdwg.mxu0
        %v1230 = vrcp.pop %v1178
        %v1231 = vmul.f32 %v1225, %v1230
        %1233 = vrot.lane.b32.xlu0 %v1121, 120
        %v1234 = vpop.permute.xlu0 %1233
        %1235 = vrot.lane.b32.xlu0 %v1122, 120
        %v1236 = vpop.permute.xlu0 %1235
        %v1238 = vsel %vm1123, %v1234, 0
        %v1241 = vsel %vm1123, %v1236, 0
        %1243 = vmatprep.subr.bf16.mxu0 0
        %1244 = vmatpush1.bf16.xpose.msra.mxu0 0
        %1245 = vmatprep.subr.bf16.mxu0 0
        %1246 = vmatpush1.bf16.xpose.msra.mxu0 0
        %1247 = vmatprep.subr.bf16.mxu0 0
        %1248 = vmatpush1.bf16.xpose.msra.mxu0 0
        %1249 = vmatprep.subr.bf16.mxu0 0
        %1250 = vmatpush1.bf16.xpose.msra.mxu0 0
        %1251 = vmatprep.subr.bf16.mxu0 0
        %1252 = vmatpush1.bf16.xpose.msra.mxu0 0
        %1253 = vmatprep.subr.bf16.mxu0 0
        %1254 = vmatpush1.bf16.xpose.msra.mxu0 0
        %1255 = vmatprep.subr.bf16.mxu0 0
        %1256 = vmatpush1.bf16.xpose.msra.mxu0 0
        %1257 = vmatprep.subr.bf16.mxu0 0
        %1258 = vmatpush1.bf16.xpose.msra.mxu0 %v1241
        %1259 = vmatprep.subr.bf16.mxu0 0
        %1260 = vmatpush2.bf16.xpose.msra.mxu0 0
        %1261 = vmatprep.subr.bf16.mxu0 0
        %1262 = vmatpush2.bf16.xpose.msra.mxu0 0
        %1263 = vmatprep.subr.bf16.mxu0 0
        %1264 = vmatpush2.bf16.xpose.msra.mxu0 0
        %1265 = vmatprep.subr.bf16.mxu0 0
        %1266 = vmatpush2.bf16.xpose.msra.mxu0 0
        %1267 = vmatprep.subr.bf16.mxu0 0
        %1268 = vmatpush2.bf16.xpose.msra.mxu0 0
        %1269 = vmatprep.subr.bf16.mxu0 0
        %1270 = vmatpush2.bf16.xpose.msra.mxu0 0
        %1271 = vmatprep.subr.bf16.mxu0 0
        %1272 = vmatpush2.bf16.xpose.msra.mxu0 0
        %1273 = vmatprep.subr.bf16.mxu0 0
        %1274 = vmatpush2.bf16.xpose.msra.mxu0 0
        %1275 = vmatprep.mubr.bf16.mxu0 0
        %1276 = vmatmul.mubr.bf16.gmra.mxu0 %v1238
        %v1277 = vpop.f32.mrf.mxu0
        %v1278 = vadd.f32 %v891, %v1277
        %v1279 = vpop.f32.mrf.mxu0
        %v1280 = vpop.f32.mrf.mxu0
        %v1281 = vpop.f32.mrf.mxu0
        %1282 = vdwg.mxu0
        %v1283 = vsel %vm1123, %v1278, -inf
        %1284 = vmax.xlane.f32.xlu0 %v1283
        %v1285 = vpop.xlane.xlu0 %1284
        %v1286 = vsub.f32 %v1278, %v1285
        %v1287 = vmul.f32 %v1286, 1.442695
        %v1288 = vpow.pop %v1287
        %v1289 = vsel %vm1123, %v1288, 0.0
        %1290 = vadd.xlane.f32.xlu0 %v1289
        %v1291 = vpop.xlane.xlu0 %1290
        %v1292 = vpack.c.bf16 %v1288, %v1288
        %1293 = vrot.lane.b32.xlu0 %v1122, 88
        %v1294 = vpop.permute.xlu0 %1293
        %v1296 = vsel %vm1123, %v1292, 0
        %v1299 = vsel %vm1186, %v1294, 0
        %1301 = vmatprep.subr.bf16.mxu0 0
        %1302 = vmatpush1.bf16.msra.mxu0 0
        %1303 = vmatprep.subr.bf16.mxu0 0
        %1304 = vmatpush1.bf16.msra.mxu0 0
        %1305 = vmatprep.subr.bf16.mxu0 0
        %1306 = vmatpush1.bf16.msra.mxu0 0
        %1307 = vmatprep.subr.bf16.mxu0 0
        %1308 = vmatpush1.bf16.msra.mxu0 0
        %1309 = vmatprep.subr.bf16.mxu0 0
        %1310 = vmatpush1.bf16.msra.mxu0 0
        %1311 = vmatprep.subr.bf16.mxu0 0
        %1312 = vmatpush1.bf16.msra.mxu0 0
        %1313 = vmatprep.subr.bf16.mxu0 0
        %1314 = vmatpush1.bf16.msra.mxu0 0
        %1315 = vmatprep.subr.bf16.mxu0 0
        %1316 = vmatpush1.bf16.msra.mxu0 %v1299
        %1317 = vmatprep.subr.bf16.mxu0 0
        %1318 = vmatpush2.bf16.msra.mxu0 0
        %1319 = vmatprep.subr.bf16.mxu0 0
        %1320 = vmatpush2.bf16.msra.mxu0 0
        %1321 = vmatprep.subr.bf16.mxu0 0
        %1322 = vmatpush2.bf16.msra.mxu0 0
        %1323 = vmatprep.subr.bf16.mxu0 0
        %1324 = vmatpush2.bf16.msra.mxu0 0
        %1325 = vmatprep.subr.bf16.mxu0 0
        %1326 = vmatpush2.bf16.msra.mxu0 0
        %1327 = vmatprep.subr.bf16.mxu0 0
        %1328 = vmatpush2.bf16.msra.mxu0 0
        %1329 = vmatprep.subr.bf16.mxu0 0
        %1330 = vmatpush2.bf16.msra.mxu0 0
        %1331 = vmatprep.subr.bf16.mxu0 0
        %1332 = vmatpush2.bf16.msra.mxu0 0
        %1333 = vmatprep.mubr.bf16.mxu0 0
        %1334 = vmatmul.mubr.bf16.gmra.mxu0 %v1296
        %v1335 = vpop.f32.mrf.mxu0
        %v1336 = vadd.f32 0.0, %v1335
        %v1337 = vpop.f32.mrf.mxu0
        %v1338 = vpop.f32.mrf.mxu0
        %v1339 = vpop.f32.mrf.mxu0
        %1340 = vdwg.mxu0
        %v1341 = vrcp.pop %v1291
        %v1342 = vmul.f32 %v1336, %v1341
        %1343 = vrot.lane.b32.xlu0 %v1121, 112
        %v1344 = vpop.permute.xlu0 %1343
        %1345 = vrot.lane.b32.xlu0 %v1122, 112
        %v1346 = vpop.permute.xlu0 %1345
        %v1348 = vsel %vm1123, %v1344, 0
        %v1351 = vsel %vm1123, %v1346, 0
        %1353 = vmatprep.subr.bf16.mxu0 0
        %1354 = vmatpush1.bf16.xpose.msra.mxu0 0
        %1355 = vmatprep.subr.bf16.mxu0 0
        %1356 = vmatpush1.bf16.xpose.msra.mxu0 0
        %1357 = vmatprep.subr.bf16.mxu0 0
        %1358 = vmatpush1.bf16.xpose.msra.mxu0 0
        %1359 = vmatprep.subr.bf16.mxu0 0
        %1360 = vmatpush1.bf16.xpose.msra.mxu0 0
        %1361 = vmatprep.subr.bf16.mxu0 0
        %1362 = vmatpush1.bf16.xpose.msra.mxu0 0
        %1363 = vmatprep.subr.bf16.mxu0 0
        %1364 = vmatpush1.bf16.xpose.msra.mxu0 0
        %1365 = vmatprep.subr.bf16.mxu0 0
        %1366 = vmatpush1.bf16.xpose.msra.mxu0 0
        %1367 = vmatprep.subr.bf16.mxu0 0
        %1368 = vmatpush1.bf16.xpose.msra.mxu0 %v1351
        %1369 = vmatprep.subr.bf16.mxu0 0
        %1370 = vmatpush2.bf16.xpose.msra.mxu0 0
        %1371 = vmatprep.subr.bf16.mxu0 0
        %1372 = vmatpush2.bf16.xpose.msra.mxu0 0
        %1373 = vmatprep.subr.bf16.mxu0 0
        %1374 = vmatpush2.bf16.xpose.msra.mxu0 0
        %1375 = vmatprep.subr.bf16.mxu0 0
        %1376 = vmatpush2.bf16.xpose.msra.mxu0 0
        %1377 = vmatprep.subr.bf16.mxu0 0
        %1378 = vmatpush2.bf16.xpose.msra.mxu0 0
        %1379 = vmatprep.subr.bf16.mxu0 0
        %1380 = vmatpush2.bf16.xpose.msra.mxu0 0
        %1381 = vmatprep.subr.bf16.mxu0 0
        %1382 = vmatpush2.bf16.xpose.msra.mxu0 0
        %1383 = vmatprep.subr.bf16.mxu0 0
        %1384 = vmatpush2.bf16.xpose.msra.mxu0 0
        %1385 = vmatprep.mubr.bf16.mxu0 0
        %1386 = vmatmul.mubr.bf16.gmra.mxu0 %v1348
        %v1387 = vpop.f32.mrf.mxu0
        %v1388 = vadd.f32 %v891, %v1387
        %v1389 = vpop.f32.mrf.mxu0
        %v1390 = vpop.f32.mrf.mxu0
        %v1391 = vpop.f32.mrf.mxu0
        %1392 = vdwg.mxu0
        %v1393 = vsel %vm1123, %v1388, -inf
        %1394 = vmax.xlane.f32.xlu0 %v1393
        %v1395 = vpop.xlane.xlu0 %1394
        %v1396 = vsub.f32 %v1388, %v1395
        %v1397 = vmul.f32 %v1396, 1.442695
        %v1398 = vpow.pop %v1397
        %v1399 = vsel %vm1123, %v1398, 0.0
        %1400 = vadd.xlane.f32.xlu0 %v1399
        %v1401 = vpop.xlane.xlu0 %1400
        %v1402 = vpack.c.bf16 %v1398, %v1398
        %1403 = vrot.lane.b32.xlu0 %v1122, 80
        %v1404 = vpop.permute.xlu0 %1403
        %v1406 = vsel %vm1123, %v1402, 0
        %v1409 = vsel %vm1186, %v1404, 0
        %1411 = vmatprep.subr.bf16.mxu0 0
        %1412 = vmatpush1.bf16.msra.mxu0 0
        %1413 = vmatprep.subr.bf16.mxu0 0
        %1414 = vmatpush1.bf16.msra.mxu0 0
        %1415 = vmatprep.subr.bf16.mxu0 0
        %1416 = vmatpush1.bf16.msra.mxu0 0
        %1417 = vmatprep.subr.bf16.mxu0 0
        %1418 = vmatpush1.bf16.msra.mxu0 0
        %1419 = vmatprep.subr.bf16.mxu0 0
        %1420 = vmatpush1.bf16.msra.mxu0 0
        %1421 = vmatprep.subr.bf16.mxu0 0
        %1422 = vmatpush1.bf16.msra.mxu0 0
        %1423 = vmatprep.subr.bf16.mxu0 0
        %1424 = vmatpush1.bf16.msra.mxu0 0
        %1425 = vmatprep.subr.bf16.mxu0 0
        %1426 = vmatpush1.bf16.msra.mxu0 %v1409
        %1427 = vmatprep.subr.bf16.mxu0 0
        %1428 = vmatpush2.bf16.msra.mxu0 0
        %1429 = vmatprep.subr.bf16.mxu0 0
        %1430 = vmatpush2.bf16.msra.mxu0 0
        %1431 = vmatprep.subr.bf16.mxu0 0
        %1432 = vmatpush2.bf16.msra.mxu0 0
        %1433 = vmatprep.subr.bf16.mxu0 0
        %1434 = vmatpush2.bf16.msra.mxu0 0
        %1435 = vmatprep.subr.bf16.mxu0 0
        %1436 = vmatpush2.bf16.msra.mxu0 0
        %1437 = vmatprep.subr.bf16.mxu0 0
        %1438 = vmatpush2.bf16.msra.mxu0 0
        %1439 = vmatprep.subr.bf16.mxu0 0
        %1440 = vmatpush2.bf16.msra.mxu0 0
        %1441 = vmatprep.subr.bf16.mxu0 0
        %1442 = vmatpush2.bf16.msra.mxu0 0
        %1443 = vmatprep.mubr.bf16.mxu0 0
        %1444 = vmatmul.mubr.bf16.gmra.mxu0 %v1406
        %v1445 = vpop.f32.mrf.mxu0
        %v1446 = vadd.f32 0.0, %v1445
        %v1447 = vpop.f32.mrf.mxu0
        %v1448 = vpop.f32.mrf.mxu0
        %v1449 = vpop.f32.mrf.mxu0
        %1450 = vdwg.mxu0
        %v1451 = vrcp.pop %v1401
        %v1452 = vmul.f32 %v1446, %v1451
        %1453 = vrot.lane.b32.xlu0 %v1121, 104
        %v1454 = vpop.permute.xlu0 %1453
        %1455 = vrot.lane.b32.xlu0 %v1122, 104
        %v1456 = vpop.permute.xlu0 %1455
        %v1458 = vsel %vm1123, %v1454, 0
        %v1461 = vsel %vm1123, %v1456, 0
        %1463 = vmatprep.subr.bf16.mxu0 0
        %1464 = vmatpush1.bf16.xpose.msra.mxu0 0
        %1465 = vmatprep.subr.bf16.mxu0 0
        %1466 = vmatpush1.bf16.xpose.msra.mxu0 0
        %1467 = vmatprep.subr.bf16.mxu0 0
        %1468 = vmatpush1.bf16.xpose.msra.mxu0 0
        %1469 = vmatprep.subr.bf16.mxu0 0
        %1470 = vmatpush1.bf16.xpose.msra.mxu0 0
        %1471 = vmatprep.subr.bf16.mxu0 0
        %1472 = vmatpush1.bf16.xpose.msra.mxu0 0
        %1473 = vmatprep.subr.bf16.mxu0 0
        %1474 = vmatpush1.bf16.xpose.msra.mxu0 0
        %1475 = vmatprep.subr.bf16.mxu0 0
        %1476 = vmatpush1.bf16.xpose.msra.mxu0 0
        %1477 = vmatprep.subr.bf16.mxu0 0
        %1478 = vmatpush1.bf16.xpose.msra.mxu0 %v1461
        %1479 = vmatprep.subr.bf16.mxu0 0
        %1480 = vmatpush2.bf16.xpose.msra.mxu0 0
        %1481 = vmatprep.subr.bf16.mxu0 0
        %1482 = vmatpush2.bf16.xpose.msra.mxu0 0
        %1483 = vmatprep.subr.bf16.mxu0 0
        %1484 = vmatpush2.bf16.xpose.msra.mxu0 0
        %1485 = vmatprep.subr.bf16.mxu0 0
        %1486 = vmatpush2.bf16.xpose.msra.mxu0 0
        %1487 = vmatprep.subr.bf16.mxu0 0
        %1488 = vmatpush2.bf16.xpose.msra.mxu0 0
        %1489 = vmatprep.subr.bf16.mxu0 0
        %1490 = vmatpush2.bf16.xpose.msra.mxu0 0
        %1491 = vmatprep.subr.bf16.mxu0 0
        %1492 = vmatpush2.bf16.xpose.msra.mxu0 0
        %1493 = vmatprep.subr.bf16.mxu0 0
        %1494 = vmatpush2.bf16.xpose.msra.mxu0 0
        %1495 = vmatprep.mubr.bf16.mxu0 0
        %1496 = vmatmul.mubr.bf16.gmra.mxu0 %v1458
        %v1497 = vpop.f32.mrf.mxu0
        %v1498 = vadd.f32 %v891, %v1497
        %v1499 = vpop.f32.mrf.mxu0
        %v1500 = vpop.f32.mrf.mxu0
        %v1501 = vpop.f32.mrf.mxu0
        %1502 = vdwg.mxu0
        %v1503 = vsel %vm1123, %v1498, -inf
        %1504 = vmax.xlane.f32.xlu0 %v1503
        %v1505 = vpop.xlane.xlu0 %1504
        %v1506 = vsub.f32 %v1498, %v1505
        %v1507 = vmul.f32 %v1506, 1.442695
        %v1508 = vpow.pop %v1507
        %v1509 = vsel %vm1123, %v1508, 0.0
        %1510 = vadd.xlane.f32.xlu0 %v1509
        %v1511 = vpop.xlane.xlu0 %1510
        %v1512 = vpack.c.bf16 %v1508, %v1508
        %1513 = vrot.lane.b32.xlu0 %v1122, 72
        %v1514 = vpop.permute.xlu0 %1513
        %v1516 = vsel %vm1123, %v1512, 0
        %v1519 = vsel %vm1186, %v1514, 0
        %1521 = vmatprep.subr.bf16.mxu0 0
        %1522 = vmatpush1.bf16.msra.mxu0 0
        %1523 = vmatprep.subr.bf16.mxu0 0
        %1524 = vmatpush1.bf16.msra.mxu0 0
        %1525 = vmatprep.subr.bf16.mxu0 0
        %1526 = vmatpush1.bf16.msra.mxu0 0
        %1527 = vmatprep.subr.bf16.mxu0 0
        %1528 = vmatpush1.bf16.msra.mxu0 0
        %1529 = vmatprep.subr.bf16.mxu0 0
        %1530 = vmatpush1.bf16.msra.mxu0 0
        %1531 = vmatprep.subr.bf16.mxu0 0
        %1532 = vmatpush1.bf16.msra.mxu0 0
        %1533 = vmatprep.subr.bf16.mxu0 0
        %1534 = vmatpush1.bf16.msra.mxu0 0
        %1535 = vmatprep.subr.bf16.mxu0 0
        %1536 = vmatpush1.bf16.msra.mxu0 %v1519
        %1537 = vmatprep.subr.bf16.mxu0 0
        %1538 = vmatpush2.bf16.msra.mxu0 0
        %1539 = vmatprep.subr.bf16.mxu0 0
        %1540 = vmatpush2.bf16.msra.mxu0 0
        %1541 = vmatprep.subr.bf16.mxu0 0
        %1542 = vmatpush2.bf16.msra.mxu0 0
        %1543 = vmatprep.subr.bf16.mxu0 0
        %1544 = vmatpush2.bf16.msra.mxu0 0
        %1545 = vmatprep.subr.bf16.mxu0 0
        %1546 = vmatpush2.bf16.msra.mxu0 0
        %1547 = vmatprep.subr.bf16.mxu0 0
        %1548 = vmatpush2.bf16.msra.mxu0 0
        %1549 = vmatprep.subr.bf16.mxu0 0
        %1550 = vmatpush2.bf16.msra.mxu0 0
        %1551 = vmatprep.subr.bf16.mxu0 0
        %1552 = vmatpush2.bf16.msra.mxu0 0
        %1553 = vmatprep.mubr.bf16.mxu0 0
        %1554 = vmatmul.mubr.bf16.gmra.mxu0 %v1516
        %v1555 = vpop.f32.mrf.mxu0
        %v1556 = vadd.f32 0.0, %v1555
        %v1557 = vpop.f32.mrf.mxu0
        %v1558 = vpop.f32.mrf.mxu0
        %v1559 = vpop.f32.mrf.mxu0
        %1560 = vdwg.mxu0
        %v1561 = vrcp.pop %v1511
        %v1562 = vmul.f32 %v1556, %v1561
        %1564 = vrot.lane.b32.xlu0 %v1342, 8
        %v1565 = vpop.permute.xlu0 %1564
        %1568 = vrot.lane.b32.xlu0 %v1452, 16
        %v1569 = vpop.permute.xlu0 %1568
        %1572 = vrot.lane.b32.xlu0 %v1562, 24
        %v1573 = vpop.permute.xlu0 %1572
        %v1575 = vsel %vm1123, %v1231, %v1565
        %vm1576 = vcmask 130048
        %v1577 = vsel %vm1576, %v1575, %v1569
        %vm1578 = vcmask 195584
        %v1579 = vsel %vm1578, %v1577, %v1573
        %v1580 = vpack.c.bf16 %v1579, %v1579
        %v1582 = vlaneseq
        %v1583 = vshrl.u32 %v1582, 7
        %v1584 = vsub.s32 0, %v1583
        %v1585 = vrot.slane %v931, %v1584
        %v1591 = vunpack.c.l.b16 %v927
        %v1592 = vunpack.c.l.b16 %v928
        %v1593 = vunpack.c.l.b16 %v929
        %v1594 = vunpack.c.l.b16 %v930
        %v1595 = vpack.c.b16 %v1592, %v1591
        %v1596 = vpack.c.b16 %v1594, %v1593
        %vm1599 = vcmask 261120
        %v1601 = vsel %vm1599, %v1580, 0
        %1603 = vmatprep.subr.bf16.mxu0 0
        %1604 = vmatpush1.bf16.msra.mxu0 0
        %1605 = vmatprep.subr.bf16.mxu0 0
        %1606 = vmatpush1.bf16.msra.mxu0 0
        %1607 = vmatprep.subr.bf16.mxu0 0
        %1608 = vmatpush1.bf16.msra.mxu0 0
        %1609 = vmatprep.subr.bf16.mxu0 0
        %1610 = vmatpush1.bf16.msra.mxu0 0
        %1611 = vmatprep.subr.bf16.mxu0 0
        %1612 = vmatpush1.bf16.msra.mxu0 0
        %1613 = vmatprep.subr.bf16.mxu0 0
        %1614 = vmatpush1.bf16.msra.mxu0 0
        %1615 = vmatprep.subr.bf16.mxu0 0
        %1616 = vmatpush1.bf16.msra.mxu0 %v1596
        %1617 = vmatprep.subr.bf16.mxu0 0
        %1618 = vmatpush1.bf16.msra.mxu0 %v1595
        %1619 = vmatprep.subr.bf16.mxu0 0
        %1620 = vmatpush2.bf16.msra.mxu0 0
        %1621 = vmatprep.subr.bf16.mxu0 0
        %1622 = vmatpush2.bf16.msra.mxu0 0
        %1623 = vmatprep.subr.bf16.mxu0 0
        %1624 = vmatpush2.bf16.msra.mxu0 0
        %1625 = vmatprep.subr.bf16.mxu0 0
        %1626 = vmatpush2.bf16.msra.mxu0 0
        %1627 = vmatprep.subr.bf16.mxu0 0
        %1628 = vmatpush2.bf16.msra.mxu0 0
        %1629 = vmatprep.subr.bf16.mxu0 0
        %1630 = vmatpush2.bf16.msra.mxu0 0
        %1631 = vmatprep.subr.bf16.mxu0 0
        %1632 = vmatpush2.bf16.msra.mxu0 0
        %1633 = vmatprep.subr.bf16.mxu0 0
        %1634 = vmatpush2.bf16.msra.mxu0 0
        %1635 = vmatprep.mubr.bf16.mxu0 0
        %1636 = vmatmul.mubr.bf16.gmra.mxu0 %v1601
        %v1637 = vpop.f32.mrf.mxu0
        %v1638 = vadd.f32 %v1585, %v1637
        %v1639 = vpop.f32.mrf.mxu0
        %v1640 = vpop.f32.mrf.mxu0
        %v1641 = vpop.f32.mrf.mxu0
        %1642 = vdwg.mxu0
        %v1643 = vld [vmem:[%s10] sm:$0x1]
        %v1644 = vld [vmem:[%s11] sm:$0x1]
        %v1645 = vlaneseq
        %v1646 = vand.u32 %v1645, 127
        %vm1647 = vcmp.lt.s32.totalorder %v1646, 32
        %v1648 = vsel %vm1647, 1, 0
        %v1649 = vcvt.s32.f32 %v1648
        %1650 = vadd.xlane.f32.xlu0 %v1638
        %v1651 = vpop.xlane.xlu0 %1650
        %v1652 = vmul.f32 %v1651, 0.03125
        %v1653 = vsub.f32 %v1638, %v1652
        %v1654 = vmul.f32 %v1653, %v1649
        %v1655 = vmul.f32 %v1654, %v1654
        %1656 = vadd.xlane.f32.xlu0 %v1655
        %v1657 = vpop.xlane.xlu0 %1656
        %v1658 = vmul.f32 %v1657, 0.032258064
        %v1659 = vrsqrt.pop %v1658
        %v1660 = vmul.f32 %v1658, %v1659
        %vm1661 = vcmp.eq.f32.partialorder %v1658, inf
        %v1662 = vsel %vm1661, %v1658, %v1660
        %vm1663 = vcmp.eq.f32.partialorder %v1658, 0.0
        %v1664 = vand.u32 %v1658, 2147483648
        %v1665 = vsel %vm1663, %v1664, %v1662
        %v1666 = vadd.f32 %v1665, 1e-06
        %v1667 = vrcp.pop %v1666
        %v1668 = vmul.f32 %v1654, %v1667
        %v1670 = vlaneseq
        %v1671 = vshrl.u32 %v1670, 7
        %v1672 = vsub.s32 0, %v1671
        %v1673 = vrot.slane %v1643, %v1672
        %v1675 = vmul.f32 %v1673, %v1668
        %v1677 = vlaneseq
        %v1678 = vshrl.u32 %v1677, 7
        %v1679 = vsub.s32 0, %v1678
        %v1680 = vrot.slane %v1644, %v1679
        %v1682 = vadd.f32 %v1675, %v1680
        %v1683 = vadd.f32 %v1638, %v1682
        %v1684 = vld [vmem:[%s12] sm:$0xf]
        %v1685 = vld [vmem:[%s12 + $0x4] sm:$0xf]
        %v1686 = vld [vmem:[%s12 + $0x8] sm:$0xf]
        %v1687 = vld [vmem:[%s12 + $0xc] sm:$0xf]
        %v1688 = vld [vmem:[%s12 + $0x10] sm:$0xf]
        %v1689 = vld [vmem:[%s12 + $0x14] sm:$0xf]
        %v1690 = vld [vmem:[%s12 + $0x18] sm:$0xf]
        %v1691 = vld [vmem:[%s12 + $0x1c] sm:$0xf]
        %v1692 = vld [vmem:[%s12 + $0x20] sm:$0xf]
        %v1693 = vld [vmem:[%s12 + $0x24] sm:$0xf]
        %v1694 = vld [vmem:[%s12 + $0x28] sm:$0xf]
        %v1695 = vld [vmem:[%s12 + $0x2c] sm:$0xf]
        %v1696 = vld [vmem:[%s12 + $0x30] sm:$0xf]
        %v1697 = vld [vmem:[%s12 + $0x34] sm:$0xf]
        %v1698 = vld [vmem:[%s12 + $0x38] sm:$0xf]
        %v1699 = vld [vmem:[%s12 + $0x3c] sm:$0xf]
        %v1700 = vld [vmem:[%s13] sm:$0x1]
        %v1701 = vld [vmem:[%s14] sm:$0xf]
        %v1702 = vld [vmem:[%s14 + $0x4] sm:$0xf]
        %v1703 = vld [vmem:[%s14 + $0x8] sm:$0xf]
        %v1704 = vld [vmem:[%s14 + $0xc] sm:$0xf]
        %v1705 = vld [vmem:[%s14 + $0x10] sm:$0xf]
        %v1706 = vld [vmem:[%s14 + $0x14] sm:$0xf]
        %v1707 = vld [vmem:[%s14 + $0x18] sm:$0xf]
        %v1708 = vld [vmem:[%s14 + $0x1c] sm:$0xf]
        %v1709 = vld [vmem:[%s14 + $0x20] sm:$0xf]
        %v1710 = vld [vmem:[%s14 + $0x24] sm:$0xf]
        %v1711 = vld [vmem:[%s14 + $0x28] sm:$0xf]
        %v1712 = vld [vmem:[%s14 + $0x2c] sm:$0xf]
        %v1713 = vld [vmem:[%s14 + $0x30] sm:$0xf]
        %v1714 = vld [vmem:[%s14 + $0x34] sm:$0xf]
        %v1715 = vld [vmem:[%s14 + $0x38] sm:$0xf]
        %v1716 = vld [vmem:[%s14 + $0x3c] sm:$0xf]
        %v1717 = vld [vmem:[%s15] sm:$0x1]
        %v1718 = vld [vmem:[%s16] sm:$0xf]
        %v1719 = vld [vmem:[%s16 + $0x4] sm:$0xf]
        %v1720 = vld [vmem:[%s16 + $0x8] sm:$0xf]
        %v1721 = vld [vmem:[%s16 + $0xc] sm:$0xf]
        %v1722 = vld [vmem:[%s17] sm:$0x1]
        %v1723 = vpack.c.bf16 %v1683, %v1683
        %v1725 = vlaneseq
        %v1726 = vshrl.u32 %v1725, 7
        %v1727 = vsub.s32 0, %v1726
        %v1728 = vrot.slane %v1700, %v1727
        %v1746 = vunpack.c.l.b16 %v1684
        %v1747 = vunpack.c.l.b16 %v1685
        %v1748 = vunpack.c.l.b16 %v1686
        %v1749 = vunpack.c.l.b16 %v1687
        %v1750 = vunpack.c.l.b16 %v1688
        %v1751 = vunpack.c.l.b16 %v1689
        %v1752 = vunpack.c.l.b16 %v1690
        %v1753 = vunpack.c.l.b16 %v1691
        %v1754 = vunpack.c.l.b16 %v1692
        %v1755 = vunpack.c.l.b16 %v1693
        %v1756 = vunpack.c.l.b16 %v1694
        %v1757 = vunpack.c.l.b16 %v1695
        %v1758 = vunpack.c.l.b16 %v1696
        %v1759 = vunpack.c.l.b16 %v1697
        %v1760 = vunpack.c.l.b16 %v1698
        %v1761 = vunpack.c.l.b16 %v1699
        %v1762 = vpack.c.b16 %v1747, %v1746
        %v1763 = vpack.c.b16 %v1749, %v1748
        %v1764 = vpack.c.b16 %v1751, %v1750
        %v1765 = vpack.c.b16 %v1753, %v1752
        %v1766 = vpack.c.b16 %v1755, %v1754
        %v1767 = vpack.c.b16 %v1757, %v1756
        %v1768 = vpack.c.b16 %v1759, %v1758
        %v1769 = vpack.c.b16 %v1761, %v1760
        %1778 = vmatprep.subr.bf16.mxu0 0
        %1779 = vmatpush1.bf16.msra.mxu0 %v1769
        %1780 = vmatprep.subr.bf16.mxu0 0
        %1781 = vmatpush1.bf16.msra.mxu0 %v1768
        %1782 = vmatprep.subr.bf16.mxu0 0
        %1783 = vmatpush1.bf16.msra.mxu0 %v1767
        %1784 = vmatprep.subr.bf16.mxu0 0
        %1785 = vmatpush1.bf16.msra.mxu0 %v1766
        %1786 = vmatprep.subr.bf16.mxu0 0
        %1787 = vmatpush1.bf16.msra.mxu0 %v1765
        %1788 = vmatprep.subr.bf16.mxu0 0
        %1789 = vmatpush1.bf16.msra.mxu0 %v1764
        %1790 = vmatprep.subr.bf16.mxu0 0
        %1791 = vmatpush1.bf16.msra.mxu0 %v1763
        %1792 = vmatprep.subr.bf16.mxu0 0
        %1793 = vmatpush1.bf16.msra.mxu0 %v1762
        %1794 = vmatprep.subr.bf16.mxu0 0
        %1795 = vmatpush2.bf16.msra.mxu0 0
        %1796 = vmatprep.subr.bf16.mxu0 0
        %1797 = vmatpush2.bf16.msra.mxu0 0
        %1798 = vmatprep.subr.bf16.mxu0 0
        %1799 = vmatpush2.bf16.msra.mxu0 0
        %1800 = vmatprep.subr.bf16.mxu0 0
        %1801 = vmatpush2.bf16.msra.mxu0 0
        %1802 = vmatprep.subr.bf16.mxu0 0
        %1803 = vmatpush2.bf16.msra.mxu0 0
        %1804 = vmatprep.subr.bf16.mxu0 0
        %1805 = vmatpush2.bf16.msra.mxu0 0
        %1806 = vmatprep.subr.bf16.mxu0 0
        %1807 = vmatpush2.bf16.msra.mxu0 0
        %1808 = vmatprep.subr.bf16.mxu0 0
        %1809 = vmatpush2.bf16.msra.mxu0 0
        %1810 = vmatprep.mubr.bf16.mxu0 0
        %1811 = vmatmul.mubr.bf16.gmra.mxu0 %v1723
        %v1812 = vpop.f32.mrf.mxu0
        %v1813 = vadd.f32 %v1728, %v1812
        %v1814 = vpop.f32.mrf.mxu0
        %v1815 = vpop.f32.mrf.mxu0
        %v1816 = vpop.f32.mrf.mxu0
        %1817 = vdwg.mxu0
        %v1818 = vpack.c.bf16 %v890, %v890
        %v1820 = vlaneseq
        %v1821 = vshrl.u32 %v1820, 7
        %v1822 = vsub.s32 0, %v1821
        %v1823 = vrot.slane %v1717, %v1822
        %v1841 = vunpack.c.l.b16 %v1701
        %v1842 = vunpack.c.l.b16 %v1702
        %v1843 = vunpack.c.l.b16 %v1703
        %v1844 = vunpack.c.l.b16 %v1704
        %v1845 = vunpack.c.l.b16 %v1705
        %v1846 = vunpack.c.l.b16 %v1706
        %v1847 = vunpack.c.l.b16 %v1707
        %v1848 = vunpack.c.l.b16 %v1708
        %v1849 = vunpack.c.l.b16 %v1709
        %v1850 = vunpack.c.l.b16 %v1710
        %v1851 = vunpack.c.l.b16 %v1711
        %v1852 = vunpack.c.l.b16 %v1712
        %v1853 = vunpack.c.l.b16 %v1713
        %v1854 = vunpack.c.l.b16 %v1714
        %v1855 = vunpack.c.l.b16 %v1715
        %v1856 = vunpack.c.l.b16 %v1716
        %v1857 = vpack.c.b16 %v1842, %v1841
        %v1858 = vpack.c.b16 %v1844, %v1843
        %v1859 = vpack.c.b16 %v1846, %v1845
        %v1860 = vpack.c.b16 %v1848, %v1847
        %v1861 = vpack.c.b16 %v1850, %v1849
        %v1862 = vpack.c.b16 %v1852, %v1851
        %v1863 = vpack.c.b16 %v1854, %v1853
        %v1864 = vpack.c.b16 %v1856, %v1855
        %1873 = vmatprep.subr.bf16.mxu0 0
        %1874 = vmatpush1.bf16.msra.mxu0 %v1864
        %1875 = vmatprep.subr.bf16.mxu0 0
        %1876 = vmatpush1.bf16.msra.mxu0 %v1863
        %1877 = vmatprep.subr.bf16.mxu0 0
        %1878 = vmatpush1.bf16.msra.mxu0 %v1862
        %1879 = vmatprep.subr.bf16.mxu0 0
        %1880 = vmatpush1.bf16.msra.mxu0 %v1861
        %1881 = vmatprep.subr.bf16.mxu0 0
        %1882 = vmatpush1.bf16.msra.mxu0 %v1860
        %1883 = vmatprep.subr.bf16.mxu0 0
        %1884 = vmatpush1.bf16.msra.mxu0 %v1859
        %1885 = vmatprep.subr.bf16.mxu0 0
        %1886 = vmatpush1.bf16.msra.mxu0 %v1858
        %1887 = vmatprep.subr.bf16.mxu0 0
        %1888 = vmatpush1.bf16.msra.mxu0 %v1857
        %1889 = vmatprep.subr.bf16.mxu0 0
        %1890 = vmatpush2.bf16.msra.mxu0 0
        %1891 = vmatprep.subr.bf16.mxu0 0
        %1892 = vmatpush2.bf16.msra.mxu0 0
        %1893 = vmatprep.subr.bf16.mxu0 0
        %1894 = vmatpush2.bf16.msra.mxu0 0
        %1895 = vmatprep.subr.bf16.mxu0 0
        %1896 = vmatpush2.bf16.msra.mxu0 0
        %1897 = vmatprep.subr.bf16.mxu0 0
        %1898 = vmatpush2.bf16.msra.mxu0 0
        %1899 = vmatprep.subr.bf16.mxu0 0
        %1900 = vmatpush2.bf16.msra.mxu0 0
        %1901 = vmatprep.subr.bf16.mxu0 0
        %1902 = vmatpush2.bf16.msra.mxu0 0
        %1903 = vmatprep.subr.bf16.mxu0 0
        %1904 = vmatpush2.bf16.msra.mxu0 0
        %1905 = vmatprep.mubr.bf16.mxu0 0
        %1906 = vmatmul.mubr.bf16.gmra.mxu0 %v1818
        %v1907 = vpop.f32.mrf.mxu0
        %v1908 = vadd.f32 %v1823, %v1907
        %v1909 = vpop.f32.mrf.mxu0
        %v1910 = vpop.f32.mrf.mxu0
        %v1911 = vpop.f32.mrf.mxu0
        %1912 = vdwg.mxu0
        %v1913 = vpack.c.bf16 %v1813, %v1813
        %v1914 = vpack.c.bf16 %v1908, %v1908
        %v1916 = vsel %vm1123, %v1913, 0
        %v1919 = vsel %vm1123, %v1914, 0
        %1921 = vmatprep.subr.bf16.mxu0 0
        %1922 = vmatpush1.bf16.xpose.msra.mxu0 0
        %1923 = vmatprep.subr.bf16.mxu0 0
        %1924 = vmatpush1.bf16.xpose.msra.mxu0 0
        %1925 = vmatprep.subr.bf16.mxu0 0
        %1926 = vmatpush1.bf16.xpose.msra.mxu0 0
        %1927 = vmatprep.subr.bf16.mxu0 0
        %1928 = vmatpush1.bf16.xpose.msra.mxu0 0
        %1929 = vmatprep.subr.bf16.mxu0 0
        %1930 = vmatpush1.bf16.xpose.msra.mxu0 0
        %1931 = vmatprep.subr.bf16.mxu0 0
        %1932 = vmatpush1.bf16.xpose.msra.mxu0 0
        %1933 = vmatprep.subr.bf16.mxu0 0
        %1934 = vmatpush1.bf16.xpose.msra.mxu0 0
        %1935 = vmatprep.subr.bf16.mxu0 0
        %1936 = vmatpush1.bf16.xpose.msra.mxu0 %v1919
        %1937 = vmatprep.subr.bf16.mxu0 0
        %1938 = vmatpush2.bf16.xpose.msra.mxu0 0
        %1939 = vmatprep.subr.bf16.mxu0 0
        %1940 = vmatpush2.bf16.xpose.msra.mxu0 0
        %1941 = vmatprep.subr.bf16.mxu0 0
        %1942 = vmatpush2.bf16.xpose.msra.mxu0 0
        %1943 = vmatprep.subr.bf16.mxu0 0
        %1944 = vmatpush2.bf16.xpose.msra.mxu0 0
        %1945 = vmatprep.subr.bf16.mxu0 0
        %1946 = vmatpush2.bf16.xpose.msra.mxu0 0
        %1947 = vmatprep.subr.bf16.mxu0 0
        %1948 = vmatpush2.bf16.xpose.msra.mxu0 0
        %1949 = vmatprep.subr.bf16.mxu0 0
        %1950 = vmatpush2.bf16.xpose.msra.mxu0 0
        %1951 = vmatprep.subr.bf16.mxu0 0
        %1952 = vmatpush2.bf16.xpose.msra.mxu0 0
        %1953 = vmatprep.mubr.bf16.mxu0 0
        %1954 = vmatmul.mubr.bf16.gmra.mxu0 %v1916
        %v1955 = vpop.f32.mrf.mxu0
        %v1956 = vadd.f32 %v892, %v1955
        %v1957 = vpop.f32.mrf.mxu0
        %v1958 = vpop.f32.mrf.mxu0
        %v1959 = vpop.f32.mrf.mxu0
        %1960 = vdwg.mxu0
        %v1961 = vsel %vm1123, %v1956, -inf
        %1962 = vmax.xlane.f32.xlu0 %v1961
        %v1963 = vpop.xlane.xlu0 %1962
        %v1964 = vsub.f32 %v1956, %v1963
        %v1965 = vmul.f32 %v1964, 1.442695
        %v1966 = vpow.pop %v1965
        %v1967 = vsel %vm1123, %v1966, 0.0
        %1968 = vadd.xlane.f32.xlu0 %v1967
        %v1969 = vpop.xlane.xlu0 %1968
        %v1970 = vpack.c.bf16 %v1966, %v1966
        %1972 = vrot.lane.b32.xlu0 %v1914, 96
        %v1973 = vpop.permute.xlu0 %1972
        %v1975 = vsel %vm1123, %v1970, 0
        %v1978 = vsel %vm1186, %v1973, 0
        %1980 = vmatprep.subr.bf16.mxu0 0
        %1981 = vmatpush1.bf16.msra.mxu0 0
        %1982 = vmatprep.subr.bf16.mxu0 0
        %1983 = vmatpush1.bf16.msra.mxu0 0
        %1984 = vmatprep.subr.bf16.mxu0 0
        %1985 = vmatpush1.bf16.msra.mxu0 0
        %1986 = vmatprep.subr.bf16.mxu0 0
        %1987 = vmatpush1.bf16.msra.mxu0 0
        %1988 = vmatprep.subr.bf16.mxu0 0
        %1989 = vmatpush1.bf16.msra.mxu0 0
        %1990 = vmatprep.subr.bf16.mxu0 0
        %1991 = vmatpush1.bf16.msra.mxu0 0
        %1992 = vmatprep.subr.bf16.mxu0 0
        %1993 = vmatpush1.bf16.msra.mxu0 0
        %1994 = vmatprep.subr.bf16.mxu0 0
        %1995 = vmatpush1.bf16.msra.mxu0 %v1978
        %1996 = vmatprep.subr.bf16.mxu0 0
        %1997 = vmatpush2.bf16.msra.mxu0 0
        %1998 = vmatprep.subr.bf16.mxu0 0
        %1999 = vmatpush2.bf16.msra.mxu0 0
        %2000 = vmatprep.subr.bf16.mxu0 0
        %2001 = vmatpush2.bf16.msra.mxu0 0
        %2002 = vmatprep.subr.bf16.mxu0 0
        %2003 = vmatpush2.bf16.msra.mxu0 0
        %2004 = vmatprep.subr.bf16.mxu0 0
        %2005 = vmatpush2.bf16.msra.mxu0 0
        %2006 = vmatprep.subr.bf16.mxu0 0
        %2007 = vmatpush2.bf16.msra.mxu0 0
        %2008 = vmatprep.subr.bf16.mxu0 0
        %2009 = vmatpush2.bf16.msra.mxu0 0
        %2010 = vmatprep.subr.bf16.mxu0 0
        %2011 = vmatpush2.bf16.msra.mxu0 0
        %2012 = vmatprep.mubr.bf16.mxu0 0
        %2013 = vmatmul.mubr.bf16.gmra.mxu0 %v1975
        %v2014 = vpop.f32.mrf.mxu0
        %v2015 = vadd.f32 0.0, %v2014
        %v2016 = vpop.f32.mrf.mxu0
        %v2017 = vpop.f32.mrf.mxu0
        %v2018 = vpop.f32.mrf.mxu0
        %2019 = vdwg.mxu0
        %v2020 = vrcp.pop %v1969
        %v2021 = vmul.f32 %v2015, %v2020
        %2023 = vrot.lane.b32.xlu0 %v1913, 120
        %v2024 = vpop.permute.xlu0 %2023
        %2025 = vrot.lane.b32.xlu0 %v1914, 120
        %v2026 = vpop.permute.xlu0 %2025
        %v2028 = vsel %vm1123, %v2024, 0
        %v2031 = vsel %vm1123, %v2026, 0
        %2033 = vmatprep.subr.bf16.mxu0 0
        %2034 = vmatpush1.bf16.xpose.msra.mxu0 0
        %2035 = vmatprep.subr.bf16.mxu0 0
        %2036 = vmatpush1.bf16.xpose.msra.mxu0 0
        %2037 = vmatprep.subr.bf16.mxu0 0
        %2038 = vmatpush1.bf16.xpose.msra.mxu0 0
        %2039 = vmatprep.subr.bf16.mxu0 0
        %2040 = vmatpush1.bf16.xpose.msra.mxu0 0
        %2041 = vmatprep.subr.bf16.mxu0 0
        %2042 = vmatpush1.bf16.xpose.msra.mxu0 0
        %2043 = vmatprep.subr.bf16.mxu0 0
        %2044 = vmatpush1.bf16.xpose.msra.mxu0 0
        %2045 = vmatprep.subr.bf16.mxu0 0
        %2046 = vmatpush1.bf16.xpose.msra.mxu0 0
        %2047 = vmatprep.subr.bf16.mxu0 0
        %2048 = vmatpush1.bf16.xpose.msra.mxu0 %v2031
        %2049 = vmatprep.subr.bf16.mxu0 0
        %2050 = vmatpush2.bf16.xpose.msra.mxu0 0
        %2051 = vmatprep.subr.bf16.mxu0 0
        %2052 = vmatpush2.bf16.xpose.msra.mxu0 0
        %2053 = vmatprep.subr.bf16.mxu0 0
        %2054 = vmatpush2.bf16.xpose.msra.mxu0 0
        %2055 = vmatprep.subr.bf16.mxu0 0
        %2056 = vmatpush2.bf16.xpose.msra.mxu0 0
        %2057 = vmatprep.subr.bf16.mxu0 0
        %2058 = vmatpush2.bf16.xpose.msra.mxu0 0
        %2059 = vmatprep.subr.bf16.mxu0 0
        %2060 = vmatpush2.bf16.xpose.msra.mxu0 0
        %2061 = vmatprep.subr.bf16.mxu0 0
        %2062 = vmatpush2.bf16.xpose.msra.mxu0 0
        %2063 = vmatprep.subr.bf16.mxu0 0
        %2064 = vmatpush2.bf16.xpose.msra.mxu0 0
        %2065 = vmatprep.mubr.bf16.mxu0 0
        %2066 = vmatmul.mubr.bf16.gmra.mxu0 %v2028
        %v2067 = vpop.f32.mrf.mxu0
        %v2068 = vadd.f32 %v892, %v2067
        %v2069 = vpop.f32.mrf.mxu0
        %v2070 = vpop.f32.mrf.mxu0
        %v2071 = vpop.f32.mrf.mxu0
        %2072 = vdwg.mxu0
        %v2073 = vsel %vm1123, %v2068, -inf
        %2074 = vmax.xlane.f32.xlu0 %v2073
        %v2075 = vpop.xlane.xlu0 %2074
        %v2076 = vsub.f32 %v2068, %v2075
        %v2077 = vmul.f32 %v2076, 1.442695
        %v2078 = vpow.pop %v2077
        %v2079 = vsel %vm1123, %v2078, 0.0
        %2080 = vadd.xlane.f32.xlu0 %v2079
        %v2081 = vpop.xlane.xlu0 %2080
        %v2082 = vpack.c.bf16 %v2078, %v2078
        %2083 = vrot.lane.b32.xlu0 %v1914, 88
        %v2084 = vpop.permute.xlu0 %2083
        %v2086 = vsel %vm1123, %v2082, 0
        %v2089 = vsel %vm1186, %v2084, 0
        %2091 = vmatprep.subr.bf16.mxu0 0
        %2092 = vmatpush1.bf16.msra.mxu0 0
        %2093 = vmatprep.subr.bf16.mxu0 0
        %2094 = vmatpush1.bf16.msra.mxu0 0
        %2095 = vmatprep.subr.bf16.mxu0 0
        %2096 = vmatpush1.bf16.msra.mxu0 0
        %2097 = vmatprep.subr.bf16.mxu0 0
        %2098 = vmatpush1.bf16.msra.mxu0 0
        %2099 = vmatprep.subr.bf16.mxu0 0
        %2100 = vmatpush1.bf16.msra.mxu0 0
        %2101 = vmatprep.subr.bf16.mxu0 0
        %2102 = vmatpush1.bf16.msra.mxu0 0
        %2103 = vmatprep.subr.bf16.mxu0 0
        %2104 = vmatpush1.bf16.msra.mxu0 0
        %2105 = vmatprep.subr.bf16.mxu0 0
        %2106 = vmatpush1.bf16.msra.mxu0 %v2089
        %2107 = vmatprep.subr.bf16.mxu0 0
        %2108 = vmatpush2.bf16.msra.mxu0 0
        %2109 = vmatprep.subr.bf16.mxu0 0
        %2110 = vmatpush2.bf16.msra.mxu0 0
        %2111 = vmatprep.subr.bf16.mxu0 0
        %2112 = vmatpush2.bf16.msra.mxu0 0
        %2113 = vmatprep.subr.bf16.mxu0 0
        %2114 = vmatpush2.bf16.msra.mxu0 0
        %2115 = vmatprep.subr.bf16.mxu0 0
        %2116 = vmatpush2.bf16.msra.mxu0 0
        %2117 = vmatprep.subr.bf16.mxu0 0
        %2118 = vmatpush2.bf16.msra.mxu0 0
        %2119 = vmatprep.subr.bf16.mxu0 0
        %2120 = vmatpush2.bf16.msra.mxu0 0
        %2121 = vmatprep.subr.bf16.mxu0 0
        %2122 = vmatpush2.bf16.msra.mxu0 0
        %2123 = vmatprep.mubr.bf16.mxu0 0
        %2124 = vmatmul.mubr.bf16.gmra.mxu0 %v2086
        %v2125 = vpop.f32.mrf.mxu0
        %v2126 = vadd.f32 0.0, %v2125
        %v2127 = vpop.f32.mrf.mxu0
        %v2128 = vpop.f32.mrf.mxu0
        %v2129 = vpop.f32.mrf.mxu0
        %2130 = vdwg.mxu0
        %v2131 = vrcp.pop %v2081
        %v2132 = vmul.f32 %v2126, %v2131
        %2133 = vrot.lane.b32.xlu0 %v1913, 112
        %v2134 = vpop.permute.xlu0 %2133
        %2135 = vrot.lane.b32.xlu0 %v1914, 112
        %v2136 = vpop.permute.xlu0 %2135
        %v2138 = vsel %vm1123, %v2134, 0
        %v2141 = vsel %vm1123, %v2136, 0
        %2143 = vmatprep.subr.bf16.mxu0 0
        %2144 = vmatpush1.bf16.xpose.msra.mxu0 0
        %2145 = vmatprep.subr.bf16.mxu0 0
        %2146 = vmatpush1.bf16.xpose.msra.mxu0 0
        %2147 = vmatprep.subr.bf16.mxu0 0
        %2148 = vmatpush1.bf16.xpose.msra.mxu0 0
        %2149 = vmatprep.subr.bf16.mxu0 0
        %2150 = vmatpush1.bf16.xpose.msra.mxu0 0
        %2151 = vmatprep.subr.bf16.mxu0 0
        %2152 = vmatpush1.bf16.xpose.msra.mxu0 0
        %2153 = vmatprep.subr.bf16.mxu0 0
        %2154 = vmatpush1.bf16.xpose.msra.mxu0 0
        %2155 = vmatprep.subr.bf16.mxu0 0
        %2156 = vmatpush1.bf16.xpose.msra.mxu0 0
        %2157 = vmatprep.subr.bf16.mxu0 0
        %2158 = vmatpush1.bf16.xpose.msra.mxu0 %v2141
        %2159 = vmatprep.subr.bf16.mxu0 0
        %2160 = vmatpush2.bf16.xpose.msra.mxu0 0
        %2161 = vmatprep.subr.bf16.mxu0 0
        %2162 = vmatpush2.bf16.xpose.msra.mxu0 0
        %2163 = vmatprep.subr.bf16.mxu0 0
        %2164 = vmatpush2.bf16.xpose.msra.mxu0 0
        %2165 = vmatprep.subr.bf16.mxu0 0
        %2166 = vmatpush2.bf16.xpose.msra.mxu0 0
        %2167 = vmatprep.subr.bf16.mxu0 0
        %2168 = vmatpush2.bf16.xpose.msra.mxu0 0
        %2169 = vmatprep.subr.bf16.mxu0 0
        %2170 = vmatpush2.bf16.xpose.msra.mxu0 0
        %2171 = vmatprep.subr.bf16.mxu0 0
        %2172 = vmatpush2.bf16.xpose.msra.mxu0 0
        %2173 = vmatprep.subr.bf16.mxu0 0
        %2174 = vmatpush2.bf16.xpose.msra.mxu0 0
        %2175 = vmatprep.mubr.bf16.mxu0 0
        %2176 = vmatmul.mubr.bf16.gmra.mxu0 %v2138
        %v2177 = vpop.f32.mrf.mxu0
        %v2178 = vadd.f32 %v892, %v2177
        %v2179 = vpop.f32.mrf.mxu0
        %v2180 = vpop.f32.mrf.mxu0
        %v2181 = vpop.f32.mrf.mxu0
        %2182 = vdwg.mxu0
        %v2183 = vsel %vm1123, %v2178, -inf
        %2184 = vmax.xlane.f32.xlu0 %v2183
        %v2185 = vpop.xlane.xlu0 %2184
        %v2186 = vsub.f32 %v2178, %v2185
        %v2187 = vmul.f32 %v2186, 1.442695
        %v2188 = vpow.pop %v2187
        %v2189 = vsel %vm1123, %v2188, 0.0
        %2190 = vadd.xlane.f32.xlu0 %v2189
        %v2191 = vpop.xlane.xlu0 %2190
        %v2192 = vpack.c.bf16 %v2188, %v2188
        %2193 = vrot.lane.b32.xlu0 %v1914, 80
        %v2194 = vpop.permute.xlu0 %2193
        %v2196 = vsel %vm1123, %v2192, 0
        %v2199 = vsel %vm1186, %v2194, 0
        %2201 = vmatprep.subr.bf16.mxu0 0
        %2202 = vmatpush1.bf16.msra.mxu0 0
        %2203 = vmatprep.subr.bf16.mxu0 0
        %2204 = vmatpush1.bf16.msra.mxu0 0
        %2205 = vmatprep.subr.bf16.mxu0 0
        %2206 = vmatpush1.bf16.msra.mxu0 0
        %2207 = vmatprep.subr.bf16.mxu0 0
        %2208 = vmatpush1.bf16.msra.mxu0 0
        %2209 = vmatprep.subr.bf16.mxu0 0
        %2210 = vmatpush1.bf16.msra.mxu0 0
        %2211 = vmatprep.subr.bf16.mxu0 0
        %2212 = vmatpush1.bf16.msra.mxu0 0
        %2213 = vmatprep.subr.bf16.mxu0 0
        %2214 = vmatpush1.bf16.msra.mxu0 0
        %2215 = vmatprep.subr.bf16.mxu0 0
        %2216 = vmatpush1.bf16.msra.mxu0 %v2199
        %2217 = vmatprep.subr.bf16.mxu0 0
        %2218 = vmatpush2.bf16.msra.mxu0 0
        %2219 = vmatprep.subr.bf16.mxu0 0
        %2220 = vmatpush2.bf16.msra.mxu0 0
        %2221 = vmatprep.subr.bf16.mxu0 0
        %2222 = vmatpush2.bf16.msra.mxu0 0
        %2223 = vmatprep.subr.bf16.mxu0 0
        %2224 = vmatpush2.bf16.msra.mxu0 0
        %2225 = vmatprep.subr.bf16.mxu0 0
        %2226 = vmatpush2.bf16.msra.mxu0 0
        %2227 = vmatprep.subr.bf16.mxu0 0
        %2228 = vmatpush2.bf16.msra.mxu0 0
        %2229 = vmatprep.subr.bf16.mxu0 0
        %2230 = vmatpush2.bf16.msra.mxu0 0
        %2231 = vmatprep.subr.bf16.mxu0 0
        %2232 = vmatpush2.bf16.msra.mxu0 0
        %2233 = vmatprep.mubr.bf16.mxu0 0
        %2234 = vmatmul.mubr.bf16.gmra.mxu0 %v2196
        %v2235 = vpop.f32.mrf.mxu0
        %v2236 = vadd.f32 0.0, %v2235
        %v2237 = vpop.f32.mrf.mxu0
        %v2238 = vpop.f32.mrf.mxu0
        %v2239 = vpop.f32.mrf.mxu0
        %2240 = vdwg.mxu0
        %v2241 = vrcp.pop %v2191
        %v2242 = vmul.f32 %v2236, %v2241
        %2243 = vrot.lane.b32.xlu0 %v1913, 104
        %v2244 = vpop.permute.xlu0 %2243
        %2245 = vrot.lane.b32.xlu0 %v1914, 104
        %v2246 = vpop.permute.xlu0 %2245
        %v2248 = vsel %vm1123, %v2244, 0
        %v2251 = vsel %vm1123, %v2246, 0
        %2253 = vmatprep.subr.bf16.mxu0 0
        %2254 = vmatpush1.bf16.xpose.msra.mxu0 0
        %2255 = vmatprep.subr.bf16.mxu0 0
        %2256 = vmatpush1.bf16.xpose.msra.mxu0 0
        %2257 = vmatprep.subr.bf16.mxu0 0
        %2258 = vmatpush1.bf16.xpose.msra.mxu0 0
        %2259 = vmatprep.subr.bf16.mxu0 0
        %2260 = vmatpush1.bf16.xpose.msra.mxu0 0
        %2261 = vmatprep.subr.bf16.mxu0 0
        %2262 = vmatpush1.bf16.xpose.msra.mxu0 0
        %2263 = vmatprep.subr.bf16.mxu0 0
        %2264 = vmatpush1.bf16.xpose.msra.mxu0 0
        %2265 = vmatprep.subr.bf16.mxu0 0
        %2266 = vmatpush1.bf16.xpose.msra.mxu0 0
        %2267 = vmatprep.subr.bf16.mxu0 0
        %2268 = vmatpush1.bf16.xpose.msra.mxu0 %v2251
        %2269 = vmatprep.subr.bf16.mxu0 0
        %2270 = vmatpush2.bf16.xpose.msra.mxu0 0
        %2271 = vmatprep.subr.bf16.mxu0 0
        %2272 = vmatpush2.bf16.xpose.msra.mxu0 0
        %2273 = vmatprep.subr.bf16.mxu0 0
        %2274 = vmatpush2.bf16.xpose.msra.mxu0 0
        %2275 = vmatprep.subr.bf16.mxu0 0
        %2276 = vmatpush2.bf16.xpose.msra.mxu0 0
        %2277 = vmatprep.subr.bf16.mxu0 0
        %2278 = vmatpush2.bf16.xpose.msra.mxu0 0
        %2279 = vmatprep.subr.bf16.mxu0 0
        %2280 = vmatpush2.bf16.xpose.msra.mxu0 0
        %2281 = vmatprep.subr.bf16.mxu0 0
        %2282 = vmatpush2.bf16.xpose.msra.mxu0 0
        %2283 = vmatprep.subr.bf16.mxu0 0
        %2284 = vmatpush2.bf16.xpose.msra.mxu0 0
        %2285 = vmatprep.mubr.bf16.mxu0 0
        %2286 = vmatmul.mubr.bf16.gmra.mxu0 %v2248
        %v2287 = vpop.f32.mrf.mxu0
        %v2288 = vadd.f32 %v892, %v2287
        %v2289 = vpop.f32.mrf.mxu0
        %v2290 = vpop.f32.mrf.mxu0
        %v2291 = vpop.f32.mrf.mxu0
        %2292 = vdwg.mxu0
        %v2293 = vsel %vm1123, %v2288, -inf
        %2294 = vmax.xlane.f32.xlu0 %v2293
        %v2295 = vpop.xlane.xlu0 %2294
        %v2296 = vsub.f32 %v2288, %v2295
        %v2297 = vmul.f32 %v2296, 1.442695
        %v2298 = vpow.pop %v2297
        %v2299 = vsel %vm1123, %v2298, 0.0
        %2300 = vadd.xlane.f32.xlu0 %v2299
        %v2301 = vpop.xlane.xlu0 %2300
        %v2302 = vpack.c.bf16 %v2298, %v2298
        %2303 = vrot.lane.b32.xlu0 %v1914, 72
        %v2304 = vpop.permute.xlu0 %2303
        %v2306 = vsel %vm1123, %v2302, 0
        %v2309 = vsel %vm1186, %v2304, 0
        %2311 = vmatprep.subr.bf16.mxu0 0
        %2312 = vmatpush1.bf16.msra.mxu0 0
        %2313 = vmatprep.subr.bf16.mxu0 0
        %2314 = vmatpush1.bf16.msra.mxu0 0
        %2315 = vmatprep.subr.bf16.mxu0 0
        %2316 = vmatpush1.bf16.msra.mxu0 0
        %2317 = vmatprep.subr.bf16.mxu0 0
        %2318 = vmatpush1.bf16.msra.mxu0 0
        %2319 = vmatprep.subr.bf16.mxu0 0
        %2320 = vmatpush1.bf16.msra.mxu0 0
        %2321 = vmatprep.subr.bf16.mxu0 0
        %2322 = vmatpush1.bf16.msra.mxu0 0
        %2323 = vmatprep.subr.bf16.mxu0 0
        %2324 = vmatpush1.bf16.msra.mxu0 0
        %2325 = vmatprep.subr.bf16.mxu0 0
        %2326 = vmatpush1.bf16.msra.mxu0 %v2309
        %2327 = vmatprep.subr.bf16.mxu0 0
        %2328 = vmatpush2.bf16.msra.mxu0 0
        %2329 = vmatprep.subr.bf16.mxu0 0
        %2330 = vmatpush2.bf16.msra.mxu0 0
        %2331 = vmatprep.subr.bf16.mxu0 0
        %2332 = vmatpush2.bf16.msra.mxu0 0
        %2333 = vmatprep.subr.bf16.mxu0 0
        %2334 = vmatpush2.bf16.msra.mxu0 0
        %2335 = vmatprep.subr.bf16.mxu0 0
        %2336 = vmatpush2.bf16.msra.mxu0 0
        %2337 = vmatprep.subr.bf16.mxu0 0
        %2338 = vmatpush2.bf16.msra.mxu0 0
        %2339 = vmatprep.subr.bf16.mxu0 0
        %2340 = vmatpush2.bf16.msra.mxu0 0
        %2341 = vmatprep.subr.bf16.mxu0 0
        %2342 = vmatpush2.bf16.msra.mxu0 0
        %2343 = vmatprep.mubr.bf16.mxu0 0
        %2344 = vmatmul.mubr.bf16.gmra.mxu0 %v2306
        %v2345 = vpop.f32.mrf.mxu0
        %v2346 = vadd.f32 0.0, %v2345
        %v2347 = vpop.f32.mrf.mxu0
        %v2348 = vpop.f32.mrf.mxu0
        %v2349 = vpop.f32.mrf.mxu0
        %2350 = vdwg.mxu0
        %v2351 = vrcp.pop %v2301
        %v2352 = vmul.f32 %v2346, %v2351
        %2354 = vrot.lane.b32.xlu0 %v2132, 8
        %v2355 = vpop.permute.xlu0 %2354
        %2358 = vrot.lane.b32.xlu0 %v2242, 16
        %v2359 = vpop.permute.xlu0 %2358
        %2362 = vrot.lane.b32.xlu0 %v2352, 24
        %v2363 = vpop.permute.xlu0 %2362
        %v2365 = vsel %vm1123, %v2021, %v2355
        %v2366 = vsel %vm1576, %v2365, %v2359
        %v2367 = vsel %vm1578, %v2366, %v2363
        %v2368 = vpack.c.bf16 %v2367, %v2367
        %v2370 = vlaneseq
        %v2371 = vshrl.u32 %v2370, 7
        %v2372 = vsub.s32 0, %v2371
        %v2373 = vrot.slane %v1722, %v2372
        %v2379 = vunpack.c.l.b16 %v1718
        %v2380 = vunpack.c.l.b16 %v1719
        %v2381 = vunpack.c.l.b16 %v1720
        %v2382 = vunpack.c.l.b16 %v1721
        %v2383 = vpack.c.b16 %v2380, %v2379
        %v2384 = vpack.c.b16 %v2382, %v2381
        %v2388 = vsel %vm1599, %v2368, 0
        %2390 = vmatprep.subr.bf16.mxu0 0
        %2391 = vmatpush1.bf16.msra.mxu0 0
        %2392 = vmatprep.subr.bf16.mxu0 0
        %2393 = vmatpush1.bf16.msra.mxu0 0
        %2394 = vmatprep.subr.bf16.mxu0 0
        %2395 = vmatpush1.bf16.msra.mxu0 0
        %2396 = vmatprep.subr.bf16.mxu0 0
        %2397 = vmatpush1.bf16.msra.mxu0 0
        %2398 = vmatprep.subr.bf16.mxu0 0
        %2399 = vmatpush1.bf16.msra.mxu0 0
        %2400 = vmatprep.subr.bf16.mxu0 0
        %2401 = vmatpush1.bf16.msra.mxu0 0
        %2402 = vmatprep.subr.bf16.mxu0 0
        %2403 = vmatpush1.bf16.msra.mxu0 %v2384
        %2404 = vmatprep.subr.bf16.mxu0 0
        %2405 = vmatpush1.bf16.msra.mxu0 %v2383
        %2406 = vmatprep.subr.bf16.mxu0 0
        %2407 = vmatpush2.bf16.msra.mxu0 0
        %2408 = vmatprep.subr.bf16.mxu0 0
        %2409 = vmatpush2.bf16.msra.mxu0 0
        %2410 = vmatprep.subr.bf16.mxu0 0
        %2411 = vmatpush2.bf16.msra.mxu0 0
        %2412 = vmatprep.subr.bf16.mxu0 0
        %2413 = vmatpush2.bf16.msra.mxu0 0
        %2414 = vmatprep.subr.bf16.mxu0 0
        %2415 = vmatpush2.bf16.msra.mxu0 0
        %2416 = vmatprep.subr.bf16.mxu0 0
        %2417 = vmatpush2.bf16.msra.mxu0 0
        %2418 = vmatprep.subr.bf16.mxu0 0
        %2419 = vmatpush2.bf16.msra.mxu0 0
        %2420 = vmatprep.subr.bf16.mxu0 0
        %2421 = vmatpush2.bf16.msra.mxu0 0
        %2422 = vmatprep.mubr.bf16.mxu0 0
        %2423 = vmatmul.mubr.bf16.gmra.mxu0 %v2388
        %v2424 = vpop.f32.mrf.mxu0
        %v2425 = vadd.f32 %v2373, %v2424
        %v2426 = vpop.f32.mrf.mxu0
        %v2427 = vpop.f32.mrf.mxu0
        %v2428 = vpop.f32.mrf.mxu0
        %2429 = vdwg.mxu0
        %v2430 = vld [vmem:[%s18] sm:$0x1]
        %v2431 = vld [vmem:[%s19] sm:$0x1]
        %2432 = vadd.xlane.f32.xlu0 %v2425
        %v2433 = vpop.xlane.xlu0 %2432
        %v2434 = vmul.f32 %v2433, 0.03125
        %v2435 = vsub.f32 %v2425, %v2434
        %v2436 = vmul.f32 %v2435, %v1649
        %v2437 = vmul.f32 %v2436, %v2436
        %2438 = vadd.xlane.f32.xlu0 %v2437
        %v2439 = vpop.xlane.xlu0 %2438
        %v2440 = vmul.f32 %v2439, 0.032258064
        %v2441 = vrsqrt.pop %v2440
        %v2442 = vmul.f32 %v2440, %v2441
        %vm2443 = vcmp.eq.f32.partialorder %v2440, inf
        %v2444 = vsel %vm2443, %v2440, %v2442
        %vm2445 = vcmp.eq.f32.partialorder %v2440, 0.0
        %v2446 = vand.u32 %v2440, 2147483648
        %v2447 = vsel %vm2445, %v2446, %v2444
        %v2448 = vadd.f32 %v2447, 1e-06
        %v2449 = vrcp.pop %v2448
        %v2450 = vmul.f32 %v2436, %v2449
        %v2452 = vlaneseq
        %v2453 = vshrl.u32 %v2452, 7
        %v2454 = vsub.s32 0, %v2453
        %v2455 = vrot.slane %v2430, %v2454
        %v2457 = vmul.f32 %v2455, %v2450
        %v2459 = vlaneseq
        %v2460 = vshrl.u32 %v2459, 7
        %v2461 = vsub.s32 0, %v2460
        %v2462 = vrot.slane %v2431, %v2461
        %v2464 = vadd.f32 %v2457, %v2462
        %v2465 = vadd.f32 %v2425, %v2464
        %v2466 = vpack.c.bf16 %v2465, %v2465
        %v2467 = vld [vmem:[#allocation2] sm:$0xff]
        %v2468 = vld [vmem:[#allocation2 + $0x8] sm:$0xff]
        %v2469 = vld [vmem:[#allocation2 + $0x10] sm:$0xff]
        %v2470 = vld [vmem:[#allocation2 + $0x18] sm:$0xff]
        %v2471 = vld [vmem:[#allocation2 + $0x20] sm:$0xff]
        %v2472 = vld [vmem:[#allocation2 + $0x28] sm:$0xff]
        %v2473 = vld [vmem:[#allocation2 + $0x30] sm:$0xff]
        %v2474 = vld [vmem:[#allocation2 + $0x38] sm:$0xff]
        %v2475 = vld [vmem:[#allocation2 + $0x40] sm:$0xff]
        %v2476 = vld [vmem:[#allocation2 + $0x48] sm:$0xff]
        %v2477 = vld [vmem:[#allocation2 + $0x50] sm:$0xff]
        %v2478 = vld [vmem:[#allocation2 + $0x58] sm:$0xff]
        %v2479 = vld [vmem:[#allocation2 + $0x60] sm:$0xff]
        %v2480 = vld [vmem:[#allocation2 + $0x68] sm:$0xff]
        %v2481 = vld [vmem:[#allocation2 + $0x70] sm:$0xff]
        %v2482 = vld [vmem:[#allocation2 + $0x78] sm:$0xff]
        %v2483 = vld [vmem:[#allocation2 + $0x80] sm:$0xff]
        %v2484 = vld [vmem:[#allocation2 + $0x88] sm:$0xff]
        %v2485 = vld [vmem:[#allocation2 + $0x90] sm:$0xff]
        %v2486 = vld [vmem:[#allocation2 + $0x98] sm:$0xff]
        %v2487 = vld [vmem:[#allocation2 + $0xa0] sm:$0xff]
        %v2488 = vld [vmem:[#allocation2 + $0xa8] sm:$0xff]
        %v2489 = vld [vmem:[#allocation2 + $0xb0] sm:$0xff]
        %v2490 = vld [vmem:[#allocation2 + $0xb8] sm:$0xff]
        %v2491 = vld [vmem:[#allocation2 + $0xc0] sm:$0xff]
        %v2492 = vld [vmem:[#allocation2 + $0xc8] sm:$0xff]
        %v2493 = vld [vmem:[#allocation2 + $0xd0] sm:$0xff]
        %v2494 = vld [vmem:[#allocation2 + $0xd8] sm:$0xff]
        %v2495 = vld [vmem:[#allocation2 + $0xe0] sm:$0xff]
        %v2496 = vld [vmem:[#allocation2 + $0xe8] sm:$0xff]
        %v2497 = vld [vmem:[#allocation2 + $0xf0] sm:$0xff]
        %v2498 = vld [vmem:[#allocation2 + $0xf8] sm:$0xff]
        %v2499 = vld [vmem:[#allocation2 + $0x100] sm:$0xff]
        %v2500 = vld [vmem:[#allocation2 + $0x108] sm:$0xff]
        %v2501 = vld [vmem:[#allocation2 + $0x110] sm:$0xff]
        %v2502 = vld [vmem:[#allocation2 + $0x118] sm:$0xff]
        %v2503 = vld [vmem:[#allocation2 + $0x120] sm:$0xff]
        %v2504 = vld [vmem:[#allocation2 + $0x128] sm:$0xff]
        %v2505 = vld [vmem:[#allocation2 + $0x130] sm:$0xff]
        %v2506 = vld [vmem:[#allocation2 + $0x138] sm:$0xff]
        %v2507 = vld [vmem:[#allocation2 + $0x140] sm:$0xff]
        %v2508 = vld [vmem:[#allocation2 + $0x148] sm:$0xff]
        %v2509 = vld [vmem:[#allocation2 + $0x150] sm:$0xff]
        %v2510 = vld [vmem:[#allocation2 + $0x158] sm:$0xff]
        %v2511 = vld [vmem:[#allocation2 + $0x160] sm:$0xff]
        %v2512 = vld [vmem:[#allocation2 + $0x168] sm:$0xff]
        %v2513 = vld [vmem:[#allocation2 + $0x170] sm:$0xff]
        %v2514 = vld [vmem:[#allocation2 + $0x178] sm:$0xff]
        %v2515 = vld [vmem:[#allocation2 + $0x180] sm:$0xff]
        %v2516 = vld [vmem:[#allocation2 + $0x188] sm:$0xff]
        %v2517 = vld [vmem:[#allocation2 + $0x190] sm:$0xff]
        %v2518 = vld [vmem:[#allocation2 + $0x198] sm:$0xff]
        %v2519 = vld [vmem:[#allocation2 + $0x1a0] sm:$0xff]
        %v2520 = vld [vmem:[#allocation2 + $0x1a8] sm:$0xff]
        %v2521 = vld [vmem:[#allocation2 + $0x1b0] sm:$0xff]
        %v2522 = vld [vmem:[#allocation2 + $0x1b8] sm:$0xff]
        %v2523 = vld [vmem:[#allocation2 + $0x1c0] sm:$0xff]
        %v2524 = vld [vmem:[#allocation2 + $0x1c8] sm:$0xff]
        %v2525 = vld [vmem:[#allocation2 + $0x1d0] sm:$0xff]
        %v2526 = vld [vmem:[#allocation2 + $0x1d8] sm:$0xff]
        %v2527 = vld [vmem:[#allocation2 + $0x1e0] sm:$0xff]
        %v2528 = vld [vmem:[#allocation2 + $0x1e8] sm:$0xff]
        %v2529 = vld [vmem:[#allocation2 + $0x1f0] sm:$0xff]
        %v2530 = vld [vmem:[#allocation2 + $0x1f8] sm:$0xff]
        %v2531 = vld [vmem:[#allocation2 + $0x200] sm:$0xff]
        %v2532 = vld [vmem:[#allocation2 + $0x208] sm:$0xff]
        %v2533 = vld [vmem:[#allocation2 + $0x210] sm:$0xff]
        %v2534 = vld [vmem:[#allocation2 + $0x218] sm:$0xff]
        %v2535 = vld [vmem:[#allocation2 + $0x220] sm:$0xff]
        %v2536 = vld [vmem:[#allocation2 + $0x228] sm:$0xff]
        %v2537 = vld [vmem:[#allocation2 + $0x230] sm:$0xff]
        %v2538 = vld [vmem:[#allocation2 + $0x238] sm:$0xff]
        %v2539 = vld [vmem:[#allocation2 + $0x240] sm:$0xff]
        %v2540 = vld [vmem:[#allocation2 + $0x248] sm:$0xff]
        %v2541 = vld [vmem:[#allocation2 + $0x250] sm:$0xff]
        %v2542 = vld [vmem:[#allocation2 + $0x258] sm:$0xff]
        %v2543 = vld [vmem:[#allocation2 + $0x260] sm:$0xff]
        %v2544 = vld [vmem:[#allocation2 + $0x268] sm:$0xff]
        %v2545 = vld [vmem:[#allocation2 + $0x270] sm:$0xff]
        %v2546 = vld [vmem:[#allocation2 + $0x278] sm:$0xff]
        %v2547 = vld [vmem:[#allocation2 + $0x280] sm:$0xff]
        %v2548 = vld [vmem:[#allocation2 + $0x288] sm:$0xff]
        %v2549 = vld [vmem:[#allocation2 + $0x290] sm:$0xff]
        %v2550 = vld [vmem:[#allocation2 + $0x298] sm:$0xff]
        %v2551 = vld [vmem:[#allocation2 + $0x2a0] sm:$0xff]
        %v2552 = vld [vmem:[#allocation2 + $0x2a8] sm:$0xff]
        %v2553 = vld [vmem:[#allocation2 + $0x2b0] sm:$0xff]
        %v2554 = vld [vmem:[#allocation2 + $0x2b8] sm:$0xff]
        %v2555 = vld [vmem:[#allocation2 + $0x2c0] sm:$0xff]
        %v2556 = vld [vmem:[#allocation2 + $0x2c8] sm:$0xff]
        %v2557 = vld [vmem:[#allocation2 + $0x2d0] sm:$0xff]
        %v2558 = vld [vmem:[#allocation2 + $0x2d8] sm:$0xff]
        %v2559 = vld [vmem:[#allocation2 + $0x2e0] sm:$0xff]
        %v2560 = vld [vmem:[#allocation2 + $0x2e8] sm:$0xff]
        %v2561 = vld [vmem:[#allocation2 + $0x2f0] sm:$0xff]
        %v2562 = vld [vmem:[#allocation2 + $0x2f8] sm:$0xff]
        %v2563 = vld [vmem:[#allocation2 + $0x300] sm:$0xff]
        %v2564 = vld [vmem:[#allocation2 + $0x308] sm:$0xff]
        %v2565 = vld [vmem:[#allocation2 + $0x310] sm:$0xff]
        %v2566 = vld [vmem:[#allocation2 + $0x318] sm:$0xff]
        %v2567 = vld [vmem:[#allocation2 + $0x320] sm:$0xff]
        %v2568 = vld [vmem:[#allocation2 + $0x328] sm:$0xff]
        %v2569 = vld [vmem:[#allocation2 + $0x330] sm:$0xff]
        %v2570 = vld [vmem:[#allocation2 + $0x338] sm:$0xff]
        %v2571 = vld [vmem:[#allocation2 + $0x340] sm:$0xff]
        %v2572 = vld [vmem:[#allocation2 + $0x348] sm:$0xff]
        %v2573 = vld [vmem:[#allocation2 + $0x350] sm:$0xff]
        %v2574 = vld [vmem:[#allocation2 + $0x358] sm:$0xff]
        %v2575 = vld [vmem:[#allocation2 + $0x360] sm:$0xff]
        %v2576 = vld [vmem:[#allocation2 + $0x368] sm:$0xff]
        %v2577 = vld [vmem:[#allocation2 + $0x370] sm:$0xff]
        %v2578 = vld [vmem:[#allocation2 + $0x378] sm:$0xff]
        %v2579 = vld [vmem:[#allocation2 + $0x380] sm:$0xff]
        %v2580 = vld [vmem:[#allocation2 + $0x388] sm:$0xff]
        %v2581 = vld [vmem:[#allocation2 + $0x390] sm:$0xff]
        %v2582 = vld [vmem:[#allocation2 + $0x398] sm:$0xff]
        %v2583 = vld [vmem:[#allocation2 + $0x3a0] sm:$0xff]
        %v2584 = vld [vmem:[#allocation2 + $0x3a8] sm:$0xff]
        %v2585 = vld [vmem:[#allocation2 + $0x3b0] sm:$0xff]
        %v2586 = vld [vmem:[#allocation2 + $0x3b8] sm:$0xff]
        %v2587 = vld [vmem:[#allocation2 + $0x3c0] sm:$0xff]
        %v2588 = vld [vmem:[#allocation2 + $0x3c8] sm:$0xff]
        %v2589 = vld [vmem:[#allocation2 + $0x3d0] sm:$0xff]
        %v2590 = vld [vmem:[#allocation2 + $0x3d8] sm:$0xff]
        %v2591 = vld [vmem:[#allocation2 + $0x3e0] sm:$0xff]
        %v2592 = vld [vmem:[#allocation2 + $0x3e8] sm:$0xff]
        %v2593 = vld [vmem:[#allocation2 + $0x3f0] sm:$0xff]
        %v2594 = vld [vmem:[#allocation2 + $0x3f8] sm:$0xff]
        %v2595 = vld [vmem:[%s21] sm:$0xff]
        %v2596 = vld [vmem:[%s21 + $0x8] sm:$0xff]
        %v2599 = vlaneseq
        %v2600 = vshrl.u32 %v2599, 7
        %v2601 = vsub.s32 0, %v2600
        %v2602 = vrot.slane %v2595, %v2601
        %v2603 = vlaneseq
        %v2604 = vshrl.u32 %v2603, 7
        %v2605 = vsub.s32 1, %v2604
        %v2606 = vrot.slane %v2595, %v2605
        %v2607 = vlaneseq
        %v2608 = vshrl.u32 %v2607, 7
        %v2609 = vsub.s32 2, %v2608
        %v2610 = vrot.slane %v2595, %v2609
        %v2611 = vlaneseq
        %v2612 = vshrl.u32 %v2611, 7
        %v2613 = vsub.s32 3, %v2612
        %v2614 = vrot.slane %v2595, %v2613
        %v2615 = vlaneseq
        %v2616 = vshrl.u32 %v2615, 7
        %v2617 = vsub.s32 4, %v2616
        %v2618 = vrot.slane %v2595, %v2617
        %v2619 = vlaneseq
        %v2620 = vshrl.u32 %v2619, 7
        %v2621 = vsub.s32 5, %v2620
        %v2622 = vrot.slane %v2595, %v2621
        %v2623 = vlaneseq
        %v2624 = vshrl.u32 %v2623, 7
        %v2625 = vsub.s32 6, %v2624
        %v2626 = vrot.slane %v2595, %v2625
        %v2627 = vlaneseq
        %v2628 = vshrl.u32 %v2627, 7
        %v2629 = vsub.s32 7, %v2628
        %v2630 = vrot.slane %v2595, %v2629
        %v2631 = vlaneseq
        %v2632 = vshrl.u32 %v2631, 7
        %v2633 = vsub.s32 0, %v2632
        %v2634 = vrot.slane %v2596, %v2633
        %v2635 = vlaneseq
        %v2636 = vshrl.u32 %v2635, 7
        %v2637 = vsub.s32 1, %v2636
        %v2638 = vrot.slane %v2596, %v2637
        %v2639 = vlaneseq
        %v2640 = vshrl.u32 %v2639, 7
        %v2641 = vsub.s32 2, %v2640
        %v2642 = vrot.slane %v2596, %v2641
        %v2643 = vlaneseq
        %v2644 = vshrl.u32 %v2643, 7
        %v2645 = vsub.s32 3, %v2644
        %v2646 = vrot.slane %v2596, %v2645
        %v2647 = vlaneseq
        %v2648 = vshrl.u32 %v2647, 7
        %v2649 = vsub.s32 4, %v2648
        %v2650 = vrot.slane %v2596, %v2649
        %v2651 = vlaneseq
        %v2652 = vshrl.u32 %v2651, 7
        %v2653 = vsub.s32 5, %v2652
        %v2654 = vrot.slane %v2596, %v2653
        %v2655 = vlaneseq
        %v2656 = vshrl.u32 %v2655, 7
        %v2657 = vsub.s32 6, %v2656
        %v2658 = vrot.slane %v2596, %v2657
        %v2659 = vlaneseq
        %v2660 = vshrl.u32 %v2659, 7
        %v2661 = vsub.s32 7, %v2660
        %v2662 = vrot.slane %v2596, %v2661
        %v2807 = vunpack.c.l.b16 %v2467
        %v2808 = vunpack.c.h.b16 %v2467
        %v2809 = vunpack.c.l.b16 %v2468
        %v2810 = vunpack.c.h.b16 %v2468
        %v2811 = vunpack.c.l.b16 %v2469
        %v2812 = vunpack.c.h.b16 %v2469
        %v2813 = vunpack.c.l.b16 %v2470
        %v2814 = vunpack.c.h.b16 %v2470
        %v2815 = vunpack.c.l.b16 %v2471
        %v2816 = vunpack.c.h.b16 %v2471
        %v2817 = vunpack.c.l.b16 %v2472
        %v2818 = vunpack.c.h.b16 %v2472
        %v2819 = vunpack.c.l.b16 %v2473
        %v2820 = vunpack.c.h.b16 %v2473
        %v2821 = vunpack.c.l.b16 %v2474
        %v2822 = vunpack.c.h.b16 %v2474
        %v2823 = vunpack.c.l.b16 %v2475
        %v2824 = vunpack.c.h.b16 %v2475
        %v2825 = vunpack.c.l.b16 %v2476
        %v2826 = vunpack.c.h.b16 %v2476
        %v2827 = vunpack.c.l.b16 %v2477
        %v2828 = vunpack.c.h.b16 %v2477
        %v2829 = vunpack.c.l.b16 %v2478
        %v2830 = vunpack.c.h.b16 %v2478
        %v2831 = vunpack.c.l.b16 %v2479
        %v2832 = vunpack.c.h.b16 %v2479
        %v2833 = vunpack.c.l.b16 %v2480
        %v2834 = vunpack.c.h.b16 %v2480
        %v2835 = vunpack.c.l.b16 %v2481
        %v2836 = vunpack.c.h.b16 %v2481
        %v2837 = vunpack.c.l.b16 %v2482
        %v2838 = vunpack.c.h.b16 %v2482
        %v2839 = vunpack.c.l.b16 %v2483
        %v2840 = vunpack.c.h.b16 %v2483
        %v2841 = vunpack.c.l.b16 %v2484
        %v2842 = vunpack.c.h.b16 %v2484
        %v2843 = vunpack.c.l.b16 %v2485
        %v2844 = vunpack.c.h.b16 %v2485
        %v2845 = vunpack.c.l.b16 %v2486
        %v2846 = vunpack.c.h.b16 %v2486
        %v2847 = vunpack.c.l.b16 %v2487
        %v2848 = vunpack.c.h.b16 %v2487
        %v2849 = vunpack.c.l.b16 %v2488
        %v2850 = vunpack.c.h.b16 %v2488
        %v2851 = vunpack.c.l.b16 %v2489
        %v2852 = vunpack.c.h.b16 %v2489
        %v2853 = vunpack.c.l.b16 %v2490
        %v2854 = vunpack.c.h.b16 %v2490
        %v2855 = vunpack.c.l.b16 %v2491
        %v2856 = vunpack.c.h.b16 %v2491
        %v2857 = vunpack.c.l.b16 %v2492
        %v2858 = vunpack.c.h.b16 %v2492
        %v2859 = vunpack.c.l.b16 %v2493
        %v2860 = vunpack.c.h.b16 %v2493
        %v2861 = vunpack.c.l.b16 %v2494
        %v2862 = vunpack.c.h.b16 %v2494
        %v2863 = vunpack.c.l.b16 %v2495
        %v2864 = vunpack.c.h.b16 %v2495
        %v2865 = vunpack.c.l.b16 %v2496
        %v2866 = vunpack.c.h.b16 %v2496
        %v2867 = vunpack.c.l.b16 %v2497
        %v2868 = vunpack.c.h.b16 %v2497
        %v2869 = vunpack.c.l.b16 %v2498
        %v2870 = vunpack.c.h.b16 %v2498
        %v2871 = vunpack.c.l.b16 %v2499
        %v2872 = vunpack.c.h.b16 %v2499
        %v2873 = vunpack.c.l.b16 %v2500
        %v2874 = vunpack.c.h.b16 %v2500
        %v2875 = vunpack.c.l.b16 %v2501
        %v2876 = vunpack.c.h.b16 %v2501
        %v2877 = vunpack.c.l.b16 %v2502
        %v2878 = vunpack.c.h.b16 %v2502
        %v2879 = vunpack.c.l.b16 %v2503
        %v2880 = vunpack.c.h.b16 %v2503
        %v2881 = vunpack.c.l.b16 %v2504
        %v2882 = vunpack.c.h.b16 %v2504
        %v2883 = vunpack.c.l.b16 %v2505
        %v2884 = vunpack.c.h.b16 %v2505
        %v2885 = vunpack.c.l.b16 %v2506
        %v2886 = vunpack.c.h.b16 %v2506
        %v2887 = vunpack.c.l.b16 %v2507
        %v2888 = vunpack.c.h.b16 %v2507
        %v2889 = vunpack.c.l.b16 %v2508
        %v2890 = vunpack.c.h.b16 %v2508
        %v2891 = vunpack.c.l.b16 %v2509
        %v2892 = vunpack.c.h.b16 %v2509
        %v2893 = vunpack.c.l.b16 %v2510
        %v2894 = vunpack.c.h.b16 %v2510
        %v2895 = vunpack.c.l.b16 %v2511
        %v2896 = vunpack.c.h.b16 %v2511
        %v2897 = vunpack.c.l.b16 %v2512
        %v2898 = vunpack.c.h.b16 %v2512
        %v2899 = vunpack.c.l.b16 %v2513
        %v2900 = vunpack.c.h.b16 %v2513
        %v2901 = vunpack.c.l.b16 %v2514
        %v2902 = vunpack.c.h.b16 %v2514
        %v2903 = vunpack.c.l.b16 %v2515
        %v2904 = vunpack.c.h.b16 %v2515
        %v2905 = vunpack.c.l.b16 %v2516
        %v2906 = vunpack.c.h.b16 %v2516
        %v2907 = vunpack.c.l.b16 %v2517
        %v2908 = vunpack.c.h.b16 %v2517
        %v2909 = vunpack.c.l.b16 %v2518
        %v2910 = vunpack.c.h.b16 %v2518
        %v2911 = vunpack.c.l.b16 %v2519
        %v2912 = vunpack.c.h.b16 %v2519
        %v2913 = vunpack.c.l.b16 %v2520
        %v2914 = vunpack.c.h.b16 %v2520
        %v2915 = vunpack.c.l.b16 %v2521
        %v2916 = vunpack.c.h.b16 %v2521
        %v2917 = vunpack.c.l.b16 %v2522
        %v2918 = vunpack.c.h.b16 %v2522
        %v2919 = vunpack.c.l.b16 %v2523
        %v2920 = vunpack.c.h.b16 %v2523
        %v2921 = vunpack.c.l.b16 %v2524
        %v2922 = vunpack.c.h.b16 %v2524
        %v2923 = vunpack.c.l.b16 %v2525
        %v2924 = vunpack.c.h.b16 %v2525
        %v2925 = vunpack.c.l.b16 %v2526
        %v2926 = vunpack.c.h.b16 %v2526
        %v2927 = vunpack.c.l.b16 %v2527
        %v2928 = vunpack.c.h.b16 %v2527
        %v2929 = vunpack.c.l.b16 %v2528
        %v2930 = vunpack.c.h.b16 %v2528
        %v2931 = vunpack.c.l.b16 %v2529
        %v2932 = vunpack.c.h.b16 %v2529
        %v2933 = vunpack.c.l.b16 %v2530
        %v2934 = vunpack.c.h.b16 %v2530
        %v2935 = vunpack.c.l.b16 %v2531
        %v2936 = vunpack.c.h.b16 %v2531
        %v2937 = vunpack.c.l.b16 %v2532
        %v2938 = vunpack.c.h.b16 %v2532
        %v2939 = vunpack.c.l.b16 %v2533
        %v2940 = vunpack.c.h.b16 %v2533
        %v2941 = vunpack.c.l.b16 %v2534
        %v2942 = vunpack.c.h.b16 %v2534
        %v2943 = vunpack.c.l.b16 %v2535
        %v2944 = vunpack.c.h.b16 %v2535
        %v2945 = vunpack.c.l.b16 %v2536
        %v2946 = vunpack.c.h.b16 %v2536
        %v2947 = vunpack.c.l.b16 %v2537
        %v2948 = vunpack.c.h.b16 %v2537
        %v2949 = vunpack.c.l.b16 %v2538
        %v2950 = vunpack.c.h.b16 %v2538
        %v2951 = vunpack.c.l.b16 %v2539
        %v2952 = vunpack.c.h.b16 %v2539
        %v2953 = vunpack.c.l.b16 %v2540
        %v2954 = vunpack.c.h.b16 %v2540
        %v2955 = vunpack.c.l.b16 %v2541
        %v2956 = vunpack.c.h.b16 %v2541
        %v2957 = vunpack.c.l.b16 %v2542
        %v2958 = vunpack.c.h.b16 %v2542
        %v2959 = vunpack.c.l.b16 %v2543
        %v2960 = vunpack.c.h.b16 %v2543
        %v2961 = vunpack.c.l.b16 %v2544
        %v2962 = vunpack.c.h.b16 %v2544
        %v2963 = vunpack.c.l.b16 %v2545
        %v2964 = vunpack.c.h.b16 %v2545
        %v2965 = vunpack.c.l.b16 %v2546
        %v2966 = vunpack.c.h.b16 %v2546
        %v2967 = vunpack.c.l.b16 %v2547
        %v2968 = vunpack.c.h.b16 %v2547
        %v2969 = vunpack.c.l.b16 %v2548
        %v2970 = vunpack.c.h.b16 %v2548
        %v2971 = vunpack.c.l.b16 %v2549
        %v2972 = vunpack.c.h.b16 %v2549
        %v2973 = vunpack.c.l.b16 %v2550
        %v2974 = vunpack.c.h.b16 %v2550
        %v2975 = vunpack.c.l.b16 %v2551
        %v2976 = vunpack.c.h.b16 %v2551
        %v2977 = vunpack.c.l.b16 %v2552
        %v2978 = vunpack.c.h.b16 %v2552
        %v2979 = vunpack.c.l.b16 %v2553
        %v2980 = vunpack.c.h.b16 %v2553
        %v2981 = vunpack.c.l.b16 %v2554
        %v2982 = vunpack.c.h.b16 %v2554
        %v2983 = vunpack.c.l.b16 %v2555
        %v2984 = vunpack.c.h.b16 %v2555
        %v2985 = vunpack.c.l.b16 %v2556
        %v2986 = vunpack.c.h.b16 %v2556
        %v2987 = vunpack.c.l.b16 %v2557
        %v2988 = vunpack.c.h.b16 %v2557
        %v2989 = vunpack.c.l.b16 %v2558
        %v2990 = vunpack.c.h.b16 %v2558
        %v2991 = vunpack.c.l.b16 %v2559
        %v2992 = vunpack.c.h.b16 %v2559
        %v2993 = vunpack.c.l.b16 %v2560
        %v2994 = vunpack.c.h.b16 %v2560
        %v2995 = vunpack.c.l.b16 %v2561
        %v2996 = vunpack.c.h.b16 %v2561
        %v2997 = vunpack.c.l.b16 %v2562
        %v2998 = vunpack.c.h.b16 %v2562
        %v2999 = vunpack.c.l.b16 %v2563
        %v3000 = vunpack.c.h.b16 %v2563
        %v3001 = vunpack.c.l.b16 %v2564
        %v3002 = vunpack.c.h.b16 %v2564
        %v3003 = vunpack.c.l.b16 %v2565
        %v3004 = vunpack.c.h.b16 %v2565
        %v3005 = vunpack.c.l.b16 %v2566
        %v3006 = vunpack.c.h.b16 %v2566
        %v3007 = vunpack.c.l.b16 %v2567
        %v3008 = vunpack.c.h.b16 %v2567
        %v3009 = vunpack.c.l.b16 %v2568
        %v3010 = vunpack.c.h.b16 %v2568
        %v3011 = vunpack.c.l.b16 %v2569
        %v3012 = vunpack.c.h.b16 %v2569
        %v3013 = vunpack.c.l.b16 %v2570
        %v3014 = vunpack.c.h.b16 %v2570
        %v3015 = vunpack.c.l.b16 %v2571
        %v3016 = vunpack.c.h.b16 %v2571
        %v3017 = vunpack.c.l.b16 %v2572
        %v3018 = vunpack.c.h.b16 %v2572
        %v3019 = vunpack.c.l.b16 %v2573
        %v3020 = vunpack.c.h.b16 %v2573
        %v3021 = vunpack.c.l.b16 %v2574
        %v3022 = vunpack.c.h.b16 %v2574
        %v3023 = vunpack.c.l.b16 %v2575
        %v3024 = vunpack.c.h.b16 %v2575
        %v3025 = vunpack.c.l.b16 %v2576
        %v3026 = vunpack.c.h.b16 %v2576
        %v3027 = vunpack.c.l.b16 %v2577
        %v3028 = vunpack.c.h.b16 %v2577
        %v3029 = vunpack.c.l.b16 %v2578
        %v3030 = vunpack.c.h.b16 %v2578
        %v3031 = vunpack.c.l.b16 %v2579
        %v3032 = vunpack.c.h.b16 %v2579
        %v3033 = vunpack.c.l.b16 %v2580
        %v3034 = vunpack.c.h.b16 %v2580
        %v3035 = vunpack.c.l.b16 %v2581
        %v3036 = vunpack.c.h.b16 %v2581
        %v3037 = vunpack.c.l.b16 %v2582
        %v3038 = vunpack.c.h.b16 %v2582
        %v3039 = vunpack.c.l.b16 %v2583
        %v3040 = vunpack.c.h.b16 %v2583
        %v3041 = vunpack.c.l.b16 %v2584
        %v3042 = vunpack.c.h.b16 %v2584
        %v3043 = vunpack.c.l.b16 %v2585
        %v3044 = vunpack.c.h.b16 %v2585
        %v3045 = vunpack.c.l.b16 %v2586
        %v3046 = vunpack.c.h.b16 %v2586
        %v3047 = vunpack.c.l.b16 %v2587
        %v3048 = vunpack.c.h.b16 %v2587
        %v3049 = vunpack.c.l.b16 %v2588
        %v3050 = vunpack.c.h.b16 %v2588
        %v3051 = vunpack.c.l.b16 %v2589
        %v3052 = vunpack.c.h.b16 %v2589
        %v3053 = vunpack.c.l.b16 %v2590
        %v3054 = vunpack.c.h.b16 %v2590
        %v3055 = vunpack.c.l.b16 %v2591
        %v3056 = vunpack.c.h.b16 %v2591
        %v3057 = vunpack.c.l.b16 %v2592
        %v3058 = vunpack.c.h.b16 %v2592
        %v3059 = vunpack.c.l.b16 %v2593
        %v3060 = vunpack.c.h.b16 %v2593
        %v3061 = vunpack.c.l.b16 %v2594
        %v3062 = vunpack.c.h.b16 %v2594
        %v3063 = vpack.c.b16 %v2823, %v2807
        %v3064 = vpack.c.b16 %v2824, %v2808
        %v3065 = vpack.c.b16 %v2825, %v2809
        %v3066 = vpack.c.b16 %v2826, %v2810
        %v3067 = vpack.c.b16 %v2827, %v2811
        %v3068 = vpack.c.b16 %v2828, %v2812
        %v3069 = vpack.c.b16 %v2829, %v2813
        %v3070 = vpack.c.b16 %v2830, %v2814
        %v3071 = vpack.c.b16 %v2831, %v2815
        %v3072 = vpack.c.b16 %v2832, %v2816
        %v3073 = vpack.c.b16 %v2833, %v2817
        %v3074 = vpack.c.b16 %v2834, %v2818
        %v3075 = vpack.c.b16 %v2835, %v2819
        %v3076 = vpack.c.b16 %v2836, %v2820
        %v3077 = vpack.c.b16 %v2837, %v2821
        %v3078 = vpack.c.b16 %v2838, %v2822
        %v3079 = vpack.c.b16 %v2855, %v2839
        %v3080 = vpack.c.b16 %v2856, %v2840
        %v3081 = vpack.c.b16 %v2857, %v2841
        %v3082 = vpack.c.b16 %v2858, %v2842
        %v3083 = vpack.c.b16 %v2859, %v2843
        %v3084 = vpack.c.b16 %v2860, %v2844
        %v3085 = vpack.c.b16 %v2861, %v2845
        %v3086 = vpack.c.b16 %v2862, %v2846
        %v3087 = vpack.c.b16 %v2863, %v2847
        %v3088 = vpack.c.b16 %v2864, %v2848
        %v3089 = vpack.c.b16 %v2865, %v2849
        %v3090 = vpack.c.b16 %v2866, %v2850
        %v3091 = vpack.c.b16 %v2867, %v2851
        %v3092 = vpack.c.b16 %v2868, %v2852
        %v3093 = vpack.c.b16 %v2869, %v2853
        %v3094 = vpack.c.b16 %v2870, %v2854
        %v3095 = vpack.c.b16 %v2887, %v2871
        %v3096 = vpack.c.b16 %v2888, %v2872
        %v3097 = vpack.c.b16 %v2889, %v2873
        %v3098 = vpack.c.b16 %v2890, %v2874
        %v3099 = vpack.c.b16 %v2891, %v2875
        %v3100 = vpack.c.b16 %v2892, %v2876
        %v3101 = vpack.c.b16 %v2893, %v2877
        %v3102 = vpack.c.b16 %v2894, %v2878
        %v3103 = vpack.c.b16 %v2895, %v2879
        %v3104 = vpack.c.b16 %v2896, %v2880
        %v3105 = vpack.c.b16 %v2897, %v2881
        %v3106 = vpack.c.b16 %v2898, %v2882
        %v3107 = vpack.c.b16 %v2899, %v2883
        %v3108 = vpack.c.b16 %v2900, %v2884
        %v3109 = vpack.c.b16 %v2901, %v2885
        %v3110 = vpack.c.b16 %v2902, %v2886
        %v3111 = vpack.c.b16 %v2919, %v2903
        %v3112 = vpack.c.b16 %v2920, %v2904
        %v3113 = vpack.c.b16 %v2921, %v2905
        %v3114 = vpack.c.b16 %v2922, %v2906
        %v3115 = vpack.c.b16 %v2923, %v2907
        %v3116 = vpack.c.b16 %v2924, %v2908
        %v3117 = vpack.c.b16 %v2925, %v2909
        %v3118 = vpack.c.b16 %v2926, %v2910
        %v3119 = vpack.c.b16 %v2927, %v2911
        %v3120 = vpack.c.b16 %v2928, %v2912
        %v3121 = vpack.c.b16 %v2929, %v2913
        %v3122 = vpack.c.b16 %v2930, %v2914
        %v3123 = vpack.c.b16 %v2931, %v2915
        %v3124 = vpack.c.b16 %v2932, %v2916
        %v3125 = vpack.c.b16 %v2933, %v2917
        %v3126 = vpack.c.b16 %v2934, %v2918
        %v3127 = vpack.c.b16 %v2951, %v2935
        %v3128 = vpack.c.b16 %v2952, %v2936
        %v3129 = vpack.c.b16 %v2953, %v2937
        %v3130 = vpack.c.b16 %v2954, %v2938
        %v3131 = vpack.c.b16 %v2955, %v2939
        %v3132 = vpack.c.b16 %v2956, %v2940
        %v3133 = vpack.c.b16 %v2957, %v2941
        %v3134 = vpack.c.b16 %v2958, %v2942
        %v3135 = vpack.c.b16 %v2959, %v2943
        %v3136 = vpack.c.b16 %v2960, %v2944
        %v3137 = vpack.c.b16 %v2961, %v2945
        %v3138 = vpack.c.b16 %v2962, %v2946
        %v3139 = vpack.c.b16 %v2963, %v2947
        %v3140 = vpack.c.b16 %v2964, %v2948
        %v3141 = vpack.c.b16 %v2965, %v2949
        %v3142 = vpack.c.b16 %v2966, %v2950
        %v3143 = vpack.c.b16 %v2983, %v2967
        %v3144 = vpack.c.b16 %v2984, %v2968
        %v3145 = vpack.c.b16 %v2985, %v2969
        %v3146 = vpack.c.b16 %v2986, %v2970
        %v3147 = vpack.c.b16 %v2987, %v2971
        %v3148 = vpack.c.b16 %v2988, %v2972
        %v3149 = vpack.c.b16 %v2989, %v2973
        %v3150 = vpack.c.b16 %v2990, %v2974
        %v3151 = vpack.c.b16 %v2991, %v2975
        %v3152 = vpack.c.b16 %v2992, %v2976
        %v3153 = vpack.c.b16 %v2993, %v2977
        %v3154 = vpack.c.b16 %v2994, %v2978
        %v3155 = vpack.c.b16 %v2995, %v2979
        %v3156 = vpack.c.b16 %v2996, %v2980
        %v3157 = vpack.c.b16 %v2997, %v2981
        %v3158 = vpack.c.b16 %v2998, %v2982
        %v3159 = vpack.c.b16 %v3015, %v2999
        %v3160 = vpack.c.b16 %v3016, %v3000
        %v3161 = vpack.c.b16 %v3017, %v3001
        %v3162 = vpack.c.b16 %v3018, %v3002
        %v3163 = vpack.c.b16 %v3019, %v3003
        %v3164 = vpack.c.b16 %v3020, %v3004
        %v3165 = vpack.c.b16 %v3021, %v3005
        %v3166 = vpack.c.b16 %v3022, %v3006
        %v3167 = vpack.c.b16 %v3023, %v3007
        %v3168 = vpack.c.b16 %v3024, %v3008
        %v3169 = vpack.c.b16 %v3025, %v3009
        %v3170 = vpack.c.b16 %v3026, %v3010
        %v3171 = vpack.c.b16 %v3027, %v3011
        %v3172 = vpack.c.b16 %v3028, %v3012
        %v3173 = vpack.c.b16 %v3029, %v3013
        %v3174 = vpack.c.b16 %v3030, %v3014
        %v3175 = vpack.c.b16 %v3047, %v3031
        %v3176 = vpack.c.b16 %v3048, %v3032
        %v3177 = vpack.c.b16 %v3049, %v3033
        %v3178 = vpack.c.b16 %v3050, %v3034
        %v3179 = vpack.c.b16 %v3051, %v3035
        %v3180 = vpack.c.b16 %v3052, %v3036
        %v3181 = vpack.c.b16 %v3053, %v3037
        %v3182 = vpack.c.b16 %v3054, %v3038
        %v3183 = vpack.c.b16 %v3055, %v3039
        %v3184 = vpack.c.b16 %v3056, %v3040
        %v3185 = vpack.c.b16 %v3057, %v3041
        %v3186 = vpack.c.b16 %v3058, %v3042
        %v3187 = vpack.c.b16 %v3059, %v3043
        %v3188 = vpack.c.b16 %v3060, %v3044
        %v3189 = vpack.c.b16 %v3061, %v3045
        %v3190 = vpack.c.b16 %v3062, %v3046
        %3319 = vmatprep.subr.bf16.mxu0 %v3176
        %3320 = vmatpush1.bf16.msra.mxu0 %v3175
        %3321 = vmatprep.subr.bf16.mxu0 %v3160
        %3322 = vmatpush1.bf16.msra.mxu0 %v3159
        %3323 = vmatprep.subr.bf16.mxu0 %v3144
        %3324 = vmatpush1.bf16.msra.mxu0 %v3143
        %3325 = vmatprep.subr.bf16.mxu0 %v3128
        %3326 = vmatpush1.bf16.msra.mxu0 %v3127
        %3327 = vmatprep.subr.bf16.mxu0 %v3112
        %3328 = vmatpush1.bf16.msra.mxu0 %v3111
        %3329 = vmatprep.subr.bf16.mxu0 %v3096
        %3330 = vmatpush1.bf16.msra.mxu0 %v3095
        %3331 = vmatprep.subr.bf16.mxu0 %v3080
        %3332 = vmatpush1.bf16.msra.mxu0 %v3079
        %3333 = vmatprep.subr.bf16.mxu0 %v3064
        %3334 = vmatpush1.bf16.msra.mxu0 %v3063
        %3335 = vmatprep.subr.bf16.mxu0 0
        %3336 = vmatpush2.bf16.msra.mxu0 0
        %3337 = vmatprep.subr.bf16.mxu0 0
        %3338 = vmatpush2.bf16.msra.mxu0 0
        %3339 = vmatprep.subr.bf16.mxu0 0
        %3340 = vmatpush2.bf16.msra.mxu0 0
        %3341 = vmatprep.subr.bf16.mxu0 0
        %3342 = vmatpush2.bf16.msra.mxu0 0
        %3343 = vmatprep.subr.bf16.mxu0 0
        %3344 = vmatpush2.bf16.msra.mxu0 0
        %3345 = vmatprep.subr.bf16.mxu0 0
        %3346 = vmatpush2.bf16.msra.mxu0 0
        %3347 = vmatprep.subr.bf16.mxu0 0
        %3348 = vmatpush2.bf16.msra.mxu0 0
        %3349 = vmatprep.subr.bf16.mxu0 0
        %3350 = vmatpush2.bf16.msra.mxu0 0
        %3351 = vmatprep.mubr.bf16.mxu0 0
        %3352 = vmatmul.mubr.bf16.gmra.mxu0 %v2466
        %v3353 = vpop.f32.mrf.mxu0
        %v3354 = vadd.f32 %v2602, %v3353
        %v3355 = vpop.f32.mrf.mxu0
        %v3356 = vadd.f32 %v2606, %v3355
        %v3357 = vpop.f32.mrf.mxu0
        %v3358 = vpop.f32.mrf.mxu0
        %3359 = vdwg.mxu0
        %3360 = vmatprep.subr.bf16.mxu0 %v3178
        %3361 = vmatpush1.bf16.msra.mxu0 %v3177
        %3362 = vmatprep.subr.bf16.mxu0 %v3162
        %3363 = vmatpush1.bf16.msra.mxu0 %v3161
        %3364 = vmatprep.subr.bf16.mxu0 %v3146
        %3365 = vmatpush1.bf16.msra.mxu0 %v3145
        %3366 = vmatprep.subr.bf16.mxu0 %v3130
        %3367 = vmatpush1.bf16.msra.mxu0 %v3129
        %3368 = vmatprep.subr.bf16.mxu0 %v3114
        %3369 = vmatpush1.bf16.msra.mxu0 %v3113
        %3370 = vmatprep.subr.bf16.mxu0 %v3098
        %3371 = vmatpush1.bf16.msra.mxu0 %v3097
        %3372 = vmatprep.subr.bf16.mxu0 %v3082
        %3373 = vmatpush1.bf16.msra.mxu0 %v3081
        %3374 = vmatprep.subr.bf16.mxu0 %v3066
        %3375 = vmatpush1.bf16.msra.mxu0 %v3065
        %3376 = vmatprep.subr.bf16.mxu0 0
        %3377 = vmatpush2.bf16.msra.mxu0 0
        %3378 = vmatprep.subr.bf16.mxu0 0
        %3379 = vmatpush2.bf16.msra.mxu0 0
        %3380 = vmatprep.subr.bf16.mxu0 0
        %3381 = vmatpush2.bf16.msra.mxu0 0
        %3382 = vmatprep.subr.bf16.mxu0 0
        %3383 = vmatpush2.bf16.msra.mxu0 0
        %3384 = vmatprep.subr.bf16.mxu0 0
        %3385 = vmatpush2.bf16.msra.mxu0 0
        %3386 = vmatprep.subr.bf16.mxu0 0
        %3387 = vmatpush2.bf16.msra.mxu0 0
        %3388 = vmatprep.subr.bf16.mxu0 0
        %3389 = vmatpush2.bf16.msra.mxu0 0
        %3390 = vmatprep.subr.bf16.mxu0 0
        %3391 = vmatpush2.bf16.msra.mxu0 0
        %3392 = vmatprep.mubr.bf16.mxu0 0
        %3393 = vmatmul.mubr.bf16.gmra.mxu0 %v2466
        %v3394 = vpop.f32.mrf.mxu0
        %v3395 = vadd.f32 %v2610, %v3394
        %v3396 = vpop.f32.mrf.mxu0
        %v3397 = vadd.f32 %v2614, %v3396
        %v3398 = vpop.f32.mrf.mxu0
        %v3399 = vpop.f32.mrf.mxu0
        %3400 = vdwg.mxu0
        %3401 = vmatprep.subr.bf16.mxu0 %v3180
        %3402 = vmatpush1.bf16.msra.mxu0 %v3179
        %3403 = vmatprep.subr.bf16.mxu0 %v3164
        %3404 = vmatpush1.bf16.msra.mxu0 %v3163
        %3405 = vmatprep.subr.bf16.mxu0 %v3148
        %3406 = vmatpush1.bf16.msra.mxu0 %v3147
        %3407 = vmatprep.subr.bf16.mxu0 %v3132
        %3408 = vmatpush1.bf16.msra.mxu0 %v3131
        %3409 = vmatprep.subr.bf16.mxu0 %v3116
        %3410 = vmatpush1.bf16.msra.mxu0 %v3115
        %3411 = vmatprep.subr.bf16.mxu0 %v3100
        %3412 = vmatpush1.bf16.msra.mxu0 %v3099
        %3413 = vmatprep.subr.bf16.mxu0 %v3084
        %3414 = vmatpush1.bf16.msra.mxu0 %v3083
        %3415 = vmatprep.subr.bf16.mxu0 %v3068
        %3416 = vmatpush1.bf16.msra.mxu0 %v3067
        %3417 = vmatprep.subr.bf16.mxu0 0
        %3418 = vmatpush2.bf16.msra.mxu0 0
        %3419 = vmatprep.subr.bf16.mxu0 0
        %3420 = vmatpush2.bf16.msra.mxu0 0
        %3421 = vmatprep.subr.bf16.mxu0 0
        %3422 = vmatpush2.bf16.msra.mxu0 0
        %3423 = vmatprep.subr.bf16.mxu0 0
        %3424 = vmatpush2.bf16.msra.mxu0 0
        %3425 = vmatprep.subr.bf16.mxu0 0
        %3426 = vmatpush2.bf16.msra.mxu0 0
        %3427 = vmatprep.subr.bf16.mxu0 0
        %3428 = vmatpush2.bf16.msra.mxu0 0
        %3429 = vmatprep.subr.bf16.mxu0 0
        %3430 = vmatpush2.bf16.msra.mxu0 0
        %3431 = vmatprep.subr.bf16.mxu0 0
        %3432 = vmatpush2.bf16.msra.mxu0 0
        %3433 = vmatprep.mubr.bf16.mxu0 0
        %3434 = vmatmul.mubr.bf16.gmra.mxu0 %v2466
        %v3435 = vpop.f32.mrf.mxu0
        %v3436 = vadd.f32 %v2618, %v3435
        %v3437 = vpop.f32.mrf.mxu0
        %v3438 = vadd.f32 %v2622, %v3437
        %v3439 = vpop.f32.mrf.mxu0
        %v3440 = vpop.f32.mrf.mxu0
        %3441 = vdwg.mxu0
        %3442 = vmatprep.subr.bf16.mxu0 %v3182
        %3443 = vmatpush1.bf16.msra.mxu0 %v3181
        %3444 = vmatprep.subr.bf16.mxu0 %v3166
        %3445 = vmatpush1.bf16.msra.mxu0 %v3165
        %3446 = vmatprep.subr.bf16.mxu0 %v3150
        %3447 = vmatpush1.bf16.msra.mxu0 %v3149
        %3448 = vmatprep.subr.bf16.mxu0 %v3134
        %3449 = vmatpush1.bf16.msra.mxu0 %v3133
        %3450 = vmatprep.subr.bf16.mxu0 %v3118
        %3451 = vmatpush1.bf16.msra.mxu0 %v3117
        %3452 = vmatprep.subr.bf16.mxu0 %v3102
        %3453 = vmatpush1.bf16.msra.mxu0 %v3101
        %3454 = vmatprep.subr.bf16.mxu0 %v3086
        %3455 = vmatpush1.bf16.msra.mxu0 %v3085
        %3456 = vmatprep.subr.bf16.mxu0 %v3070
        %3457 = vmatpush1.bf16.msra.mxu0 %v3069
        %3458 = vmatprep.subr.bf16.mxu0 0
        %3459 = vmatpush2.bf16.msra.mxu0 0
        %3460 = vmatprep.subr.bf16.mxu0 0
        %3461 = vmatpush2.bf16.msra.mxu0 0
        %3462 = vmatprep.subr.bf16.mxu0 0
        %3463 = vmatpush2.bf16.msra.mxu0 0
        %3464 = vmatprep.subr.bf16.mxu0 0
        %3465 = vmatpush2.bf16.msra.mxu0 0
        %3466 = vmatprep.subr.bf16.mxu0 0
        %3467 = vmatpush2.bf16.msra.mxu0 0
        %3468 = vmatprep.subr.bf16.mxu0 0
        %3469 = vmatpush2.bf16.msra.mxu0 0
        %3470 = vmatprep.subr.bf16.mxu0 0
        %3471 = vmatpush2.bf16.msra.mxu0 0
        %3472 = vmatprep.subr.bf16.mxu0 0
        %3473 = vmatpush2.bf16.msra.mxu0 0
        %3474 = vmatprep.mubr.bf16.mxu0 0
        %3475 = vmatmul.mubr.bf16.gmra.mxu0 %v2466
        %v3476 = vpop.f32.mrf.mxu0
        %v3477 = vadd.f32 %v2626, %v3476
        %v3478 = vpop.f32.mrf.mxu0
        %v3479 = vadd.f32 %v2630, %v3478
        %v3480 = vpop.f32.mrf.mxu0
        %v3481 = vpop.f32.mrf.mxu0
        %3482 = vdwg.mxu0
        %3483 = vmatprep.subr.bf16.mxu0 %v3184
        %3484 = vmatpush1.bf16.msra.mxu0 %v3183
        %3485 = vmatprep.subr.bf16.mxu0 %v3168
        %3486 = vmatpush1.bf16.msra.mxu0 %v3167
        %3487 = vmatprep.subr.bf16.mxu0 %v3152
        %3488 = vmatpush1.bf16.msra.mxu0 %v3151
        %3489 = vmatprep.subr.bf16.mxu0 %v3136
        %3490 = vmatpush1.bf16.msra.mxu0 %v3135
        %3491 = vmatprep.subr.bf16.mxu0 %v3120
        %3492 = vmatpush1.bf16.msra.mxu0 %v3119
        %3493 = vmatprep.subr.bf16.mxu0 %v3104
        %3494 = vmatpush1.bf16.msra.mxu0 %v3103
        %3495 = vmatprep.subr.bf16.mxu0 %v3088
        %3496 = vmatpush1.bf16.msra.mxu0 %v3087
        %3497 = vmatprep.subr.bf16.mxu0 %v3072
        %3498 = vmatpush1.bf16.msra.mxu0 %v3071
        %3499 = vmatprep.subr.bf16.mxu0 0
        %3500 = vmatpush2.bf16.msra.mxu0 0
        %3501 = vmatprep.subr.bf16.mxu0 0
        %3502 = vmatpush2.bf16.msra.mxu0 0
        %3503 = vmatprep.subr.bf16.mxu0 0
        %3504 = vmatpush2.bf16.msra.mxu0 0
        %3505 = vmatprep.subr.bf16.mxu0 0
        %3506 = vmatpush2.bf16.msra.mxu0 0
        %3507 = vmatprep.subr.bf16.mxu0 0
        %3508 = vmatpush2.bf16.msra.mxu0 0
        %3509 = vmatprep.subr.bf16.mxu0 0
        %3510 = vmatpush2.bf16.msra.mxu0 0
        %3511 = vmatprep.subr.bf16.mxu0 0
        %3512 = vmatpush2.bf16.msra.mxu0 0
        %3513 = vmatprep.subr.bf16.mxu0 0
        %3514 = vmatpush2.bf16.msra.mxu0 0
        %3515 = vmatprep.mubr.bf16.mxu0 0
        %3516 = vmatmul.mubr.bf16.gmra.mxu0 %v2466
        %v3517 = vpop.f32.mrf.mxu0
        %v3518 = vadd.f32 %v2634, %v3517
        %v3519 = vpop.f32.mrf.mxu0
        %v3520 = vadd.f32 %v2638, %v3519
        %v3521 = vpop.f32.mrf.mxu0
        %v3522 = vpop.f32.mrf.mxu0
        %3523 = vdwg.mxu0
        %3524 = vmatprep.subr.bf16.mxu0 %v3186
        %3525 = vmatpush1.bf16.msra.mxu0 %v3185
        %3526 = vmatprep.subr.bf16.mxu0 %v3170
        %3527 = vmatpush1.bf16.msra.mxu0 %v3169
        %3528 = vmatprep.subr.bf16.mxu0 %v3154
        %3529 = vmatpush1.bf16.msra.mxu0 %v3153
        %3530 = vmatprep.subr.bf16.mxu0 %v3138
        %3531 = vmatpush1.bf16.msra.mxu0 %v3137
        %3532 = vmatprep.subr.bf16.mxu0 %v3122
        %3533 = vmatpush1.bf16.msra.mxu0 %v3121
        %3534 = vmatprep.subr.bf16.mxu0 %v3106
        %3535 = vmatpush1.bf16.msra.mxu0 %v3105
        %3536 = vmatprep.subr.bf16.mxu0 %v3090
        %3537 = vmatpush1.bf16.msra.mxu0 %v3089
        %3538 = vmatprep.subr.bf16.mxu0 %v3074
        %3539 = vmatpush1.bf16.msra.mxu0 %v3073
        %3540 = vmatprep.subr.bf16.mxu0 0
        %3541 = vmatpush2.bf16.msra.mxu0 0
        %3542 = vmatprep.subr.bf16.mxu0 0
        %3543 = vmatpush2.bf16.msra.mxu0 0
        %3544 = vmatprep.subr.bf16.mxu0 0
        %3545 = vmatpush2.bf16.msra.mxu0 0
        %3546 = vmatprep.subr.bf16.mxu0 0
        %3547 = vmatpush2.bf16.msra.mxu0 0
        %3548 = vmatprep.subr.bf16.mxu0 0
        %3549 = vmatpush2.bf16.msra.mxu0 0
        %3550 = vmatprep.subr.bf16.mxu0 0
        %3551 = vmatpush2.bf16.msra.mxu0 0
        %3552 = vmatprep.subr.bf16.mxu0 0
        %3553 = vmatpush2.bf16.msra.mxu0 0
        %3554 = vmatprep.subr.bf16.mxu0 0
        %3555 = vmatpush2.bf16.msra.mxu0 0
        %3556 = vmatprep.mubr.bf16.mxu0 0
        %3557 = vmatmul.mubr.bf16.gmra.mxu0 %v2466
        %v3558 = vpop.f32.mrf.mxu0
        %v3559 = vadd.f32 %v2642, %v3558
        %v3560 = vpop.f32.mrf.mxu0
        %v3561 = vadd.f32 %v2646, %v3560
        %v3562 = vpop.f32.mrf.mxu0
        %v3563 = vpop.f32.mrf.mxu0
        %3564 = vdwg.mxu0
        %3565 = vmatprep.subr.bf16.mxu0 %v3188
        %3566 = vmatpush1.bf16.msra.mxu0 %v3187
        %3567 = vmatprep.subr.bf16.mxu0 %v3172
        %3568 = vmatpush1.bf16.msra.mxu0 %v3171
        %3569 = vmatprep.subr.bf16.mxu0 %v3156
        %3570 = vmatpush1.bf16.msra.mxu0 %v3155
        %3571 = vmatprep.subr.bf16.mxu0 %v3140
        %3572 = vmatpush1.bf16.msra.mxu0 %v3139
        %3573 = vmatprep.subr.bf16.mxu0 %v3124
        %3574 = vmatpush1.bf16.msra.mxu0 %v3123
        %3575 = vmatprep.subr.bf16.mxu0 %v3108
        %3576 = vmatpush1.bf16.msra.mxu0 %v3107
        %3577 = vmatprep.subr.bf16.mxu0 %v3092
        %3578 = vmatpush1.bf16.msra.mxu0 %v3091
        %3579 = vmatprep.subr.bf16.mxu0 %v3076
        %3580 = vmatpush1.bf16.msra.mxu0 %v3075
        %3581 = vmatprep.subr.bf16.mxu0 0
        %3582 = vmatpush2.bf16.msra.mxu0 0
        %3583 = vmatprep.subr.bf16.mxu0 0
        %3584 = vmatpush2.bf16.msra.mxu0 0
        %3585 = vmatprep.subr.bf16.mxu0 0
        %3586 = vmatpush2.bf16.msra.mxu0 0
        %3587 = vmatprep.subr.bf16.mxu0 0
        %3588 = vmatpush2.bf16.msra.mxu0 0
        %3589 = vmatprep.subr.bf16.mxu0 0
        %3590 = vmatpush2.bf16.msra.mxu0 0
        %3591 = vmatprep.subr.bf16.mxu0 0
        %3592 = vmatpush2.bf16.msra.mxu0 0
        %3593 = vmatprep.subr.bf16.mxu0 0
        %3594 = vmatpush2.bf16.msra.mxu0 0
        %3595 = vmatprep.subr.bf16.mxu0 0
        %3596 = vmatpush2.bf16.msra.mxu0 0
        %3597 = vmatprep.mubr.bf16.mxu0 0
        %3598 = vmatmul.mubr.bf16.gmra.mxu0 %v2466
        %v3599 = vpop.f32.mrf.mxu0
        %v3600 = vadd.f32 %v2650, %v3599
        %v3601 = vpop.f32.mrf.mxu0
        %v3602 = vadd.f32 %v2654, %v3601
        %v3603 = vpop.f32.mrf.mxu0
        %v3604 = vpop.f32.mrf.mxu0
        %3605 = vdwg.mxu0
        %3606 = vmatprep.subr.bf16.mxu0 %v3190
        %3607 = vmatpush1.bf16.msra.mxu0 %v3189
        %3608 = vmatprep.subr.bf16.mxu0 %v3174
        %3609 = vmatpush1.bf16.msra.mxu0 %v3173
        %3610 = vmatprep.subr.bf16.mxu0 %v3158
        %3611 = vmatpush1.bf16.msra.mxu0 %v3157
        %3612 = vmatprep.subr.bf16.mxu0 %v3142
        %3613 = vmatpush1.bf16.msra.mxu0 %v3141
        %3614 = vmatprep.subr.bf16.mxu0 %v3126
        %3615 = vmatpush1.bf16.msra.mxu0 %v3125
        %3616 = vmatprep.subr.bf16.mxu0 %v3110
        %3617 = vmatpush1.bf16.msra.mxu0 %v3109
        %3618 = vmatprep.subr.bf16.mxu0 %v3094
        %3619 = vmatpush1.bf16.msra.mxu0 %v3093
        %3620 = vmatprep.subr.bf16.mxu0 %v3078
        %3621 = vmatpush1.bf16.msra.mxu0 %v3077
        %3622 = vmatprep.subr.bf16.mxu0 0
        %3623 = vmatpush2.bf16.msra.mxu0 0
        %3624 = vmatprep.subr.bf16.mxu0 0
        %3625 = vmatpush2.bf16.msra.mxu0 0
        %3626 = vmatprep.subr.bf16.mxu0 0
        %3627 = vmatpush2.bf16.msra.mxu0 0
        %3628 = vmatprep.subr.bf16.mxu0 0
        %3629 = vmatpush2.bf16.msra.mxu0 0
        %3630 = vmatprep.subr.bf16.mxu0 0
        %3631 = vmatpush2.bf16.msra.mxu0 0
        %3632 = vmatprep.subr.bf16.mxu0 0
        %3633 = vmatpush2.bf16.msra.mxu0 0
        %3634 = vmatprep.subr.bf16.mxu0 0
        %3635 = vmatpush2.bf16.msra.mxu0 0
        %3636 = vmatprep.subr.bf16.mxu0 0
        %3637 = vmatpush2.bf16.msra.mxu0 0
        %3638 = vmatprep.mubr.bf16.mxu0 0
        %3639 = vmatmul.mubr.bf16.gmra.mxu0 %v2466
        %v3640 = vpop.f32.mrf.mxu0
        %v3641 = vadd.f32 %v2658, %v3640
        %v3642 = vpop.f32.mrf.mxu0
        %v3643 = vadd.f32 %v2662, %v3642
        %v3644 = vpop.f32.mrf.mxu0
        %v3645 = vpop.f32.mrf.mxu0
        %3646 = vdwg.mxu0
        %v3647 = vmax.f32 %v3354, 0.0
        %v3648 = vmax.f32 %v3356, 0.0
        %v3649 = vmax.f32 %v3395, 0.0
        %v3650 = vmax.f32 %v3397, 0.0
        %v3651 = vmax.f32 %v3436, 0.0
        %v3652 = vmax.f32 %v3438, 0.0
        %v3653 = vmax.f32 %v3477, 0.0
        %v3654 = vmax.f32 %v3479, 0.0
        %v3655 = vmax.f32 %v3518, 0.0
        %v3656 = vmax.f32 %v3520, 0.0
        %v3657 = vmax.f32 %v3559, 0.0
        %v3658 = vmax.f32 %v3561, 0.0
        %v3659 = vmax.f32 %v3600, 0.0
        %v3660 = vmax.f32 %v3602, 0.0
        %v3661 = vmax.f32 %v3641, 0.0
        %v3662 = vmax.f32 %v3643, 0.0
        %v3663 = vpack.c.bf16 %v3647, %v3647
        %v3664 = vpack.c.bf16 %v3648, %v3648
        %v3665 = vpack.c.bf16 %v3649, %v3649
        %v3666 = vpack.c.bf16 %v3650, %v3650
        %v3667 = vpack.c.bf16 %v3651, %v3651
        %v3668 = vpack.c.bf16 %v3652, %v3652
        %v3669 = vpack.c.bf16 %v3653, %v3653
        %v3670 = vpack.c.bf16 %v3654, %v3654
        %v3671 = vpack.c.bf16 %v3655, %v3655
        %v3672 = vpack.c.bf16 %v3656, %v3656
        %v3673 = vpack.c.bf16 %v3657, %v3657
        %v3674 = vpack.c.bf16 %v3658, %v3658
        %v3675 = vpack.c.bf16 %v3659, %v3659
        %v3676 = vpack.c.bf16 %v3660, %v3660
        %v3677 = vpack.c.bf16 %v3661, %v3661
        %v3678 = vpack.c.bf16 %v3662, %v3662
        %v3679 = vld [vmem:[#allocation5] sm:$0xf]
        %v3680 = vld [vmem:[#allocation5 + $0x4] sm:$0xf]
        %v3681 = vld [vmem:[#allocation5 + $0x8] sm:$0xf]
        %v3682 = vld [vmem:[#allocation5 + $0xc] sm:$0xf]
        %v3683 = vld [vmem:[#allocation5 + $0x10] sm:$0xf]
        %v3684 = vld [vmem:[#allocation5 + $0x14] sm:$0xf]
        %v3685 = vld [vmem:[#allocation5 + $0x18] sm:$0xf]
        %v3686 = vld [vmem:[#allocation5 + $0x1c] sm:$0xf]
        %v3687 = vld [vmem:[#allocation5 + $0x20] sm:$0xf]
        %v3688 = vld [vmem:[#allocation5 + $0x24] sm:$0xf]
        %v3689 = vld [vmem:[#allocation5 + $0x28] sm:$0xf]
        %v3690 = vld [vmem:[#allocation5 + $0x2c] sm:$0xf]
        %v3691 = vld [vmem:[#allocation5 + $0x30] sm:$0xf]
        %v3692 = vld [vmem:[#allocation5 + $0x34] sm:$0xf]
        %v3693 = vld [vmem:[#allocation5 + $0x38] sm:$0xf]
        %v3694 = vld [vmem:[#allocation5 + $0x3c] sm:$0xf]
        %v3695 = vld [vmem:[#allocation5 + $0x40] sm:$0xf]
        %v3696 = vld [vmem:[#allocation5 + $0x44] sm:$0xf]
        %v3697 = vld [vmem:[#allocation5 + $0x48] sm:$0xf]
        %v3698 = vld [vmem:[#allocation5 + $0x4c] sm:$0xf]
        %v3699 = vld [vmem:[#allocation5 + $0x50] sm:$0xf]
        %v3700 = vld [vmem:[#allocation5 + $0x54] sm:$0xf]
        %v3701 = vld [vmem:[#allocation5 + $0x58] sm:$0xf]
        %v3702 = vld [vmem:[#allocation5 + $0x5c] sm:$0xf]
        %v3703 = vld [vmem:[#allocation5 + $0x60] sm:$0xf]
        %v3704 = vld [vmem:[#allocation5 + $0x64] sm:$0xf]
        %v3705 = vld [vmem:[#allocation5 + $0x68] sm:$0xf]
        %v3706 = vld [vmem:[#allocation5 + $0x6c] sm:$0xf]
        %v3707 = vld [vmem:[#allocation5 + $0x70] sm:$0xf]
        %v3708 = vld [vmem:[#allocation5 + $0x74] sm:$0xf]
        %v3709 = vld [vmem:[#allocation5 + $0x78] sm:$0xf]
        %v3710 = vld [vmem:[#allocation5 + $0x7c] sm:$0xf]
        %v3711 = vld [vmem:[#allocation5 + $0x80] sm:$0xf]
        %v3712 = vld [vmem:[#allocation5 + $0x84] sm:$0xf]
        %v3713 = vld [vmem:[#allocation5 + $0x88] sm:$0xf]
        %v3714 = vld [vmem:[#allocation5 + $0x8c] sm:$0xf]
        %v3715 = vld [vmem:[#allocation5 + $0x90] sm:$0xf]
        %v3716 = vld [vmem:[#allocation5 + $0x94] sm:$0xf]
        %v3717 = vld [vmem:[#allocation5 + $0x98] sm:$0xf]
        %v3718 = vld [vmem:[#allocation5 + $0x9c] sm:$0xf]
        %v3719 = vld [vmem:[#allocation5 + $0xa0] sm:$0xf]
        %v3720 = vld [vmem:[#allocation5 + $0xa4] sm:$0xf]
        %v3721 = vld [vmem:[#allocation5 + $0xa8] sm:$0xf]
        %v3722 = vld [vmem:[#allocation5 + $0xac] sm:$0xf]
        %v3723 = vld [vmem:[#allocation5 + $0xb0] sm:$0xf]
        %v3724 = vld [vmem:[#allocation5 + $0xb4] sm:$0xf]
        %v3725 = vld [vmem:[#allocation5 + $0xb8] sm:$0xf]
        %v3726 = vld [vmem:[#allocation5 + $0xbc] sm:$0xf]
        %v3727 = vld [vmem:[#allocation5 + $0xc0] sm:$0xf]
        %v3728 = vld [vmem:[#allocation5 + $0xc4] sm:$0xf]
        %v3729 = vld [vmem:[#allocation5 + $0xc8] sm:$0xf]
        %v3730 = vld [vmem:[#allocation5 + $0xcc] sm:$0xf]
        %v3731 = vld [vmem:[#allocation5 + $0xd0] sm:$0xf]
        %v3732 = vld [vmem:[#allocation5 + $0xd4] sm:$0xf]
        %v3733 = vld [vmem:[#allocation5 + $0xd8] sm:$0xf]
        %v3734 = vld [vmem:[#allocation5 + $0xdc] sm:$0xf]
        %v3735 = vld [vmem:[#allocation5 + $0xe0] sm:$0xf]
        %v3736 = vld [vmem:[#allocation5 + $0xe4] sm:$0xf]
        %v3737 = vld [vmem:[#allocation5 + $0xe8] sm:$0xf]
        %v3738 = vld [vmem:[#allocation5 + $0xec] sm:$0xf]
        %v3739 = vld [vmem:[#allocation5 + $0xf0] sm:$0xf]
        %v3740 = vld [vmem:[#allocation5 + $0xf4] sm:$0xf]
        %v3741 = vld [vmem:[#allocation5 + $0xf8] sm:$0xf]
        %v3742 = vld [vmem:[#allocation5 + $0xfc] sm:$0xf]
        %v3743 = vld [vmem:[#allocation5 + $0x100] sm:$0xf]
        %v3744 = vld [vmem:[#allocation5 + $0x104] sm:$0xf]
        %v3745 = vld [vmem:[#allocation5 + $0x108] sm:$0xf]
        %v3746 = vld [vmem:[#allocation5 + $0x10c] sm:$0xf]
        %v3747 = vld [vmem:[#allocation5 + $0x110] sm:$0xf]
        %v3748 = vld [vmem:[#allocation5 + $0x114] sm:$0xf]
        %v3749 = vld [vmem:[#allocation5 + $0x118] sm:$0xf]
        %v3750 = vld [vmem:[#allocation5 + $0x11c] sm:$0xf]
        %v3751 = vld [vmem:[#allocation5 + $0x120] sm:$0xf]
        %v3752 = vld [vmem:[#allocation5 + $0x124] sm:$0xf]
        %v3753 = vld [vmem:[#allocation5 + $0x128] sm:$0xf]
        %v3754 = vld [vmem:[#allocation5 + $0x12c] sm:$0xf]
        %v3755 = vld [vmem:[#allocation5 + $0x130] sm:$0xf]
        %v3756 = vld [vmem:[#allocation5 + $0x134] sm:$0xf]
        %v3757 = vld [vmem:[#allocation5 + $0x138] sm:$0xf]
        %v3758 = vld [vmem:[#allocation5 + $0x13c] sm:$0xf]
        %v3759 = vld [vmem:[#allocation5 + $0x140] sm:$0xf]
        %v3760 = vld [vmem:[#allocation5 + $0x144] sm:$0xf]
        %v3761 = vld [vmem:[#allocation5 + $0x148] sm:$0xf]
        %v3762 = vld [vmem:[#allocation5 + $0x14c] sm:$0xf]
        %v3763 = vld [vmem:[#allocation5 + $0x150] sm:$0xf]
        %v3764 = vld [vmem:[#allocation5 + $0x154] sm:$0xf]
        %v3765 = vld [vmem:[#allocation5 + $0x158] sm:$0xf]
        %v3766 = vld [vmem:[#allocation5 + $0x15c] sm:$0xf]
        %v3767 = vld [vmem:[#allocation5 + $0x160] sm:$0xf]
        %v3768 = vld [vmem:[#allocation5 + $0x164] sm:$0xf]
        %v3769 = vld [vmem:[#allocation5 + $0x168] sm:$0xf]
        %v3770 = vld [vmem:[#allocation5 + $0x16c] sm:$0xf]
        %v3771 = vld [vmem:[#allocation5 + $0x170] sm:$0xf]
        %v3772 = vld [vmem:[#allocation5 + $0x174] sm:$0xf]
        %v3773 = vld [vmem:[#allocation5 + $0x178] sm:$0xf]
        %v3774 = vld [vmem:[#allocation5 + $0x17c] sm:$0xf]
        %v3775 = vld [vmem:[#allocation5 + $0x180] sm:$0xf]
        %v3776 = vld [vmem:[#allocation5 + $0x184] sm:$0xf]
        %v3777 = vld [vmem:[#allocation5 + $0x188] sm:$0xf]
        %v3778 = vld [vmem:[#allocation5 + $0x18c] sm:$0xf]
        %v3779 = vld [vmem:[#allocation5 + $0x190] sm:$0xf]
        %v3780 = vld [vmem:[#allocation5 + $0x194] sm:$0xf]
        %v3781 = vld [vmem:[#allocation5 + $0x198] sm:$0xf]
        %v3782 = vld [vmem:[#allocation5 + $0x19c] sm:$0xf]
        %v3783 = vld [vmem:[#allocation5 + $0x1a0] sm:$0xf]
        %v3784 = vld [vmem:[#allocation5 + $0x1a4] sm:$0xf]
        %v3785 = vld [vmem:[#allocation5 + $0x1a8] sm:$0xf]
        %v3786 = vld [vmem:[#allocation5 + $0x1ac] sm:$0xf]
        %v3787 = vld [vmem:[#allocation5 + $0x1b0] sm:$0xf]
        %v3788 = vld [vmem:[#allocation5 + $0x1b4] sm:$0xf]
        %v3789 = vld [vmem:[#allocation5 + $0x1b8] sm:$0xf]
        %v3790 = vld [vmem:[#allocation5 + $0x1bc] sm:$0xf]
        %v3791 = vld [vmem:[#allocation5 + $0x1c0] sm:$0xf]
        %v3792 = vld [vmem:[#allocation5 + $0x1c4] sm:$0xf]
        %v3793 = vld [vmem:[#allocation5 + $0x1c8] sm:$0xf]
        %v3794 = vld [vmem:[#allocation5 + $0x1cc] sm:$0xf]
        %v3795 = vld [vmem:[#allocation5 + $0x1d0] sm:$0xf]
        %v3796 = vld [vmem:[#allocation5 + $0x1d4] sm:$0xf]
        %v3797 = vld [vmem:[#allocation5 + $0x1d8] sm:$0xf]
        %v3798 = vld [vmem:[#allocation5 + $0x1dc] sm:$0xf]
        %v3799 = vld [vmem:[#allocation5 + $0x1e0] sm:$0xf]
        %v3800 = vld [vmem:[#allocation5 + $0x1e4] sm:$0xf]
        %v3801 = vld [vmem:[#allocation5 + $0x1e8] sm:$0xf]
        %v3802 = vld [vmem:[#allocation5 + $0x1ec] sm:$0xf]
        %v3803 = vld [vmem:[#allocation5 + $0x1f0] sm:$0xf]
        %v3804 = vld [vmem:[#allocation5 + $0x1f4] sm:$0xf]
        %v3805 = vld [vmem:[#allocation5 + $0x1f8] sm:$0xf]
        %v3806 = vld [vmem:[#allocation5 + $0x1fc] sm:$0xf]
        %v3807 = vld [vmem:[#allocation5 + $0x200] sm:$0xf]
        %v3808 = vld [vmem:[#allocation5 + $0x204] sm:$0xf]
        %v3809 = vld [vmem:[#allocation5 + $0x208] sm:$0xf]
        %v3810 = vld [vmem:[#allocation5 + $0x20c] sm:$0xf]
        %v3811 = vld [vmem:[#allocation5 + $0x210] sm:$0xf]
        %v3812 = vld [vmem:[#allocation5 + $0x214] sm:$0xf]
        %v3813 = vld [vmem:[#allocation5 + $0x218] sm:$0xf]
        %v3814 = vld [vmem:[#allocation5 + $0x21c] sm:$0xf]
        %v3815 = vld [vmem:[#allocation5 + $0x220] sm:$0xf]
        %v3816 = vld [vmem:[#allocation5 + $0x224] sm:$0xf]
        %v3817 = vld [vmem:[#allocation5 + $0x228] sm:$0xf]
        %v3818 = vld [vmem:[#allocation5 + $0x22c] sm:$0xf]
        %v3819 = vld [vmem:[#allocation5 + $0x230] sm:$0xf]
        %v3820 = vld [vmem:[#allocation5 + $0x234] sm:$0xf]
        %v3821 = vld [vmem:[#allocation5 + $0x238] sm:$0xf]
        %v3822 = vld [vmem:[#allocation5 + $0x23c] sm:$0xf]
        %v3823 = vld [vmem:[#allocation5 + $0x240] sm:$0xf]
        %v3824 = vld [vmem:[#allocation5 + $0x244] sm:$0xf]
        %v3825 = vld [vmem:[#allocation5 + $0x248] sm:$0xf]
        %v3826 = vld [vmem:[#allocation5 + $0x24c] sm:$0xf]
        %v3827 = vld [vmem:[#allocation5 + $0x250] sm:$0xf]
        %v3828 = vld [vmem:[#allocation5 + $0x254] sm:$0xf]
        %v3829 = vld [vmem:[#allocation5 + $0x258] sm:$0xf]
        %v3830 = vld [vmem:[#allocation5 + $0x25c] sm:$0xf]
        %v3831 = vld [vmem:[#allocation5 + $0x260] sm:$0xf]
        %v3832 = vld [vmem:[#allocation5 + $0x264] sm:$0xf]
        %v3833 = vld [vmem:[#allocation5 + $0x268] sm:$0xf]
        %v3834 = vld [vmem:[#allocation5 + $0x26c] sm:$0xf]
        %v3835 = vld [vmem:[#allocation5 + $0x270] sm:$0xf]
        %v3836 = vld [vmem:[#allocation5 + $0x274] sm:$0xf]
        %v3837 = vld [vmem:[#allocation5 + $0x278] sm:$0xf]
        %v3838 = vld [vmem:[#allocation5 + $0x27c] sm:$0xf]
        %v3839 = vld [vmem:[#allocation5 + $0x280] sm:$0xf]
        %v3840 = vld [vmem:[#allocation5 + $0x284] sm:$0xf]
        %v3841 = vld [vmem:[#allocation5 + $0x288] sm:$0xf]
        %v3842 = vld [vmem:[#allocation5 + $0x28c] sm:$0xf]
        %v3843 = vld [vmem:[#allocation5 + $0x290] sm:$0xf]
        %v3844 = vld [vmem:[#allocation5 + $0x294] sm:$0xf]
        %v3845 = vld [vmem:[#allocation5 + $0x298] sm:$0xf]
        %v3846 = vld [vmem:[#allocation5 + $0x29c] sm:$0xf]
        %v3847 = vld [vmem:[#allocation5 + $0x2a0] sm:$0xf]
        %v3848 = vld [vmem:[#allocation5 + $0x2a4] sm:$0xf]
        %v3849 = vld [vmem:[#allocation5 + $0x2a8] sm:$0xf]
        %v3850 = vld [vmem:[#allocation5 + $0x2ac] sm:$0xf]
        %v3851 = vld [vmem:[#allocation5 + $0x2b0] sm:$0xf]
        %v3852 = vld [vmem:[#allocation5 + $0x2b4] sm:$0xf]
        %v3853 = vld [vmem:[#allocation5 + $0x2b8] sm:$0xf]
        %v3854 = vld [vmem:[#allocation5 + $0x2bc] sm:$0xf]
        %v3855 = vld [vmem:[#allocation5 + $0x2c0] sm:$0xf]
        %v3856 = vld [vmem:[#allocation5 + $0x2c4] sm:$0xf]
        %v3857 = vld [vmem:[#allocation5 + $0x2c8] sm:$0xf]
        %v3858 = vld [vmem:[#allocation5 + $0x2cc] sm:$0xf]
        %v3859 = vld [vmem:[#allocation5 + $0x2d0] sm:$0xf]
        %v3860 = vld [vmem:[#allocation5 + $0x2d4] sm:$0xf]
        %v3861 = vld [vmem:[#allocation5 + $0x2d8] sm:$0xf]
        %v3862 = vld [vmem:[#allocation5 + $0x2dc] sm:$0xf]
        %v3863 = vld [vmem:[#allocation5 + $0x2e0] sm:$0xf]
        %v3864 = vld [vmem:[#allocation5 + $0x2e4] sm:$0xf]
        %v3865 = vld [vmem:[#allocation5 + $0x2e8] sm:$0xf]
        %v3866 = vld [vmem:[#allocation5 + $0x2ec] sm:$0xf]
        %v3867 = vld [vmem:[#allocation5 + $0x2f0] sm:$0xf]
        %v3868 = vld [vmem:[#allocation5 + $0x2f4] sm:$0xf]
        %v3869 = vld [vmem:[#allocation5 + $0x2f8] sm:$0xf]
        %v3870 = vld [vmem:[#allocation5 + $0x2fc] sm:$0xf]
        %v3871 = vld [vmem:[#allocation5 + $0x300] sm:$0xf]
        %v3872 = vld [vmem:[#allocation5 + $0x304] sm:$0xf]
        %v3873 = vld [vmem:[#allocation5 + $0x308] sm:$0xf]
        %v3874 = vld [vmem:[#allocation5 + $0x30c] sm:$0xf]
        %v3875 = vld [vmem:[#allocation5 + $0x310] sm:$0xf]
        %v3876 = vld [vmem:[#allocation5 + $0x314] sm:$0xf]
        %v3877 = vld [vmem:[#allocation5 + $0x318] sm:$0xf]
        %v3878 = vld [vmem:[#allocation5 + $0x31c] sm:$0xf]
        %v3879 = vld [vmem:[#allocation5 + $0x320] sm:$0xf]
        %v3880 = vld [vmem:[#allocation5 + $0x324] sm:$0xf]
        %v3881 = vld [vmem:[#allocation5 + $0x328] sm:$0xf]
        %v3882 = vld [vmem:[#allocation5 + $0x32c] sm:$0xf]
        %v3883 = vld [vmem:[#allocation5 + $0x330] sm:$0xf]
        %v3884 = vld [vmem:[#allocation5 + $0x334] sm:$0xf]
        %v3885 = vld [vmem:[#allocation5 + $0x338] sm:$0xf]
        %v3886 = vld [vmem:[#allocation5 + $0x33c] sm:$0xf]
        %v3887 = vld [vmem:[#allocation5 + $0x340] sm:$0xf]
        %v3888 = vld [vmem:[#allocation5 + $0x344] sm:$0xf]
        %v3889 = vld [vmem:[#allocation5 + $0x348] sm:$0xf]
        %v3890 = vld [vmem:[#allocation5 + $0x34c] sm:$0xf]
        %v3891 = vld [vmem:[#allocation5 + $0x350] sm:$0xf]
        %v3892 = vld [vmem:[#allocation5 + $0x354] sm:$0xf]
        %v3893 = vld [vmem:[#allocation5 + $0x358] sm:$0xf]
        %v3894 = vld [vmem:[#allocation5 + $0x35c] sm:$0xf]
        %v3895 = vld [vmem:[#allocation5 + $0x360] sm:$0xf]
        %v3896 = vld [vmem:[#allocation5 + $0x364] sm:$0xf]
        %v3897 = vld [vmem:[#allocation5 + $0x368] sm:$0xf]
        %v3898 = vld [vmem:[#allocation5 + $0x36c] sm:$0xf]
        %v3899 = vld [vmem:[#allocation5 + $0x370] sm:$0xf]
        %v3900 = vld [vmem:[#allocation5 + $0x374] sm:$0xf]
        %v3901 = vld [vmem:[#allocation5 + $0x378] sm:$0xf]
        %v3902 = vld [vmem:[#allocation5 + $0x37c] sm:$0xf]
        %v3903 = vld [vmem:[#allocation5 + $0x380] sm:$0xf]
        %v3904 = vld [vmem:[#allocation5 + $0x384] sm:$0xf]
        %v3905 = vld [vmem:[#allocation5 + $0x388] sm:$0xf]
        %v3906 = vld [vmem:[#allocation5 + $0x38c] sm:$0xf]
        %v3907 = vld [vmem:[#allocation5 + $0x390] sm:$0xf]
        %v3908 = vld [vmem:[#allocation5 + $0x394] sm:$0xf]
        %v3909 = vld [vmem:[#allocation5 + $0x398] sm:$0xf]
        %v3910 = vld [vmem:[#allocation5 + $0x39c] sm:$0xf]
        %v3911 = vld [vmem:[#allocation5 + $0x3a0] sm:$0xf]
        %v3912 = vld [vmem:[#allocation5 + $0x3a4] sm:$0xf]
        %v3913 = vld [vmem:[#allocation5 + $0x3a8] sm:$0xf]
        %v3914 = vld [vmem:[#allocation5 + $0x3ac] sm:$0xf]
        %v3915 = vld [vmem:[#allocation5 + $0x3b0] sm:$0xf]
        %v3916 = vld [vmem:[#allocation5 + $0x3b4] sm:$0xf]
        %v3917 = vld [vmem:[#allocation5 + $0x3b8] sm:$0xf]
        %v3918 = vld [vmem:[#allocation5 + $0x3bc] sm:$0xf]
        %v3919 = vld [vmem:[#allocation5 + $0x3c0] sm:$0xf]
        %v3920 = vld [vmem:[#allocation5 + $0x3c4] sm:$0xf]
        %v3921 = vld [vmem:[#allocation5 + $0x3c8] sm:$0xf]
        %v3922 = vld [vmem:[#allocation5 + $0x3cc] sm:$0xf]
        %v3923 = vld [vmem:[#allocation5 + $0x3d0] sm:$0xf]
        %v3924 = vld [vmem:[#allocation5 + $0x3d4] sm:$0xf]
        %v3925 = vld [vmem:[#allocation5 + $0x3d8] sm:$0xf]
        %v3926 = vld [vmem:[#allocation5 + $0x3dc] sm:$0xf]
        %v3927 = vld [vmem:[#allocation5 + $0x3e0] sm:$0xf]
        %v3928 = vld [vmem:[#allocation5 + $0x3e4] sm:$0xf]
        %v3929 = vld [vmem:[#allocation5 + $0x3e8] sm:$0xf]
        %v3930 = vld [vmem:[#allocation5 + $0x3ec] sm:$0xf]
        %v3931 = vld [vmem:[#allocation5 + $0x3f0] sm:$0xf]
        %v3932 = vld [vmem:[#allocation5 + $0x3f4] sm:$0xf]
        %v3933 = vld [vmem:[#allocation5 + $0x3f8] sm:$0xf]
        %v3934 = vld [vmem:[#allocation5 + $0x3fc] sm:$0xf]
        %v3935 = vld [vmem:[%s23] sm:$0x1]
        %v3937 = vlaneseq
        %v3938 = vshrl.u32 %v3937, 7
        %v3939 = vsub.s32 0, %v3938
        %v3940 = vrot.slane %v3935, %v3939
        %v4198 = vunpack.c.l.b16 %v3679
        %v4199 = vunpack.c.l.b16 %v3680
        %v4200 = vunpack.c.l.b16 %v3681
        %v4201 = vunpack.c.l.b16 %v3682
        %v4202 = vunpack.c.l.b16 %v3683
        %v4203 = vunpack.c.l.b16 %v3684
        %v4204 = vunpack.c.l.b16 %v3685
        %v4205 = vunpack.c.l.b16 %v3686
        %v4206 = vunpack.c.l.b16 %v3687
        %v4207 = vunpack.c.l.b16 %v3688
        %v4208 = vunpack.c.l.b16 %v3689
        %v4209 = vunpack.c.l.b16 %v3690
        %v4210 = vunpack.c.l.b16 %v3691
        %v4211 = vunpack.c.l.b16 %v3692
        %v4212 = vunpack.c.l.b16 %v3693
        %v4213 = vunpack.c.l.b16 %v3694
        %v4214 = vunpack.c.l.b16 %v3695
        %v4215 = vunpack.c.l.b16 %v3696
        %v4216 = vunpack.c.l.b16 %v3697
        %v4217 = vunpack.c.l.b16 %v3698
        %v4218 = vunpack.c.l.b16 %v3699
        %v4219 = vunpack.c.l.b16 %v3700
        %v4220 = vunpack.c.l.b16 %v3701
        %v4221 = vunpack.c.l.b16 %v3702
        %v4222 = vunpack.c.l.b16 %v3703
        %v4223 = vunpack.c.l.b16 %v3704
        %v4224 = vunpack.c.l.b16 %v3705
        %v4225 = vunpack.c.l.b16 %v3706
        %v4226 = vunpack.c.l.b16 %v3707
        %v4227 = vunpack.c.l.b16 %v3708
        %v4228 = vunpack.c.l.b16 %v3709
        %v4229 = vunpack.c.l.b16 %v3710
        %v4230 = vunpack.c.l.b16 %v3711
        %v4231 = vunpack.c.l.b16 %v3712
        %v4232 = vunpack.c.l.b16 %v3713
        %v4233 = vunpack.c.l.b16 %v3714
        %v4234 = vunpack.c.l.b16 %v3715
        %v4235 = vunpack.c.l.b16 %v3716
        %v4236 = vunpack.c.l.b16 %v3717
        %v4237 = vunpack.c.l.b16 %v3718
        %v4238 = vunpack.c.l.b16 %v3719
        %v4239 = vunpack.c.l.b16 %v3720
        %v4240 = vunpack.c.l.b16 %v3721
        %v4241 = vunpack.c.l.b16 %v3722
        %v4242 = vunpack.c.l.b16 %v3723
        %v4243 = vunpack.c.l.b16 %v3724
        %v4244 = vunpack.c.l.b16 %v3725
        %v4245 = vunpack.c.l.b16 %v3726
        %v4246 = vunpack.c.l.b16 %v3727
        %v4247 = vunpack.c.l.b16 %v3728
        %v4248 = vunpack.c.l.b16 %v3729
        %v4249 = vunpack.c.l.b16 %v3730
        %v4250 = vunpack.c.l.b16 %v3731
        %v4251 = vunpack.c.l.b16 %v3732
        %v4252 = vunpack.c.l.b16 %v3733
        %v4253 = vunpack.c.l.b16 %v3734
        %v4254 = vunpack.c.l.b16 %v3735
        %v4255 = vunpack.c.l.b16 %v3736
        %v4256 = vunpack.c.l.b16 %v3737
        %v4257 = vunpack.c.l.b16 %v3738
        %v4258 = vunpack.c.l.b16 %v3739
        %v4259 = vunpack.c.l.b16 %v3740
        %v4260 = vunpack.c.l.b16 %v3741
        %v4261 = vunpack.c.l.b16 %v3742
        %v4262 = vunpack.c.l.b16 %v3743
        %v4263 = vunpack.c.l.b16 %v3744
        %v4264 = vunpack.c.l.b16 %v3745
        %v4265 = vunpack.c.l.b16 %v3746
        %v4266 = vunpack.c.l.b16 %v3747
        %v4267 = vunpack.c.l.b16 %v3748
        %v4268 = vunpack.c.l.b16 %v3749
        %v4269 = vunpack.c.l.b16 %v3750
        %v4270 = vunpack.c.l.b16 %v3751
        %v4271 = vunpack.c.l.b16 %v3752
        %v4272 = vunpack.c.l.b16 %v3753
        %v4273 = vunpack.c.l.b16 %v3754
        %v4274 = vunpack.c.l.b16 %v3755
        %v4275 = vunpack.c.l.b16 %v3756
        %v4276 = vunpack.c.l.b16 %v3757
        %v4277 = vunpack.c.l.b16 %v3758
        %v4278 = vunpack.c.l.b16 %v3759
        %v4279 = vunpack.c.l.b16 %v3760
        %v4280 = vunpack.c.l.b16 %v3761
        %v4281 = vunpack.c.l.b16 %v3762
        %v4282 = vunpack.c.l.b16 %v3763
        %v4283 = vunpack.c.l.b16 %v3764
        %v4284 = vunpack.c.l.b16 %v3765
        %v4285 = vunpack.c.l.b16 %v3766
        %v4286 = vunpack.c.l.b16 %v3767
        %v4287 = vunpack.c.l.b16 %v3768
        %v4288 = vunpack.c.l.b16 %v3769
        %v4289 = vunpack.c.l.b16 %v3770
        %v4290 = vunpack.c.l.b16 %v3771
        %v4291 = vunpack.c.l.b16 %v3772
        %v4292 = vunpack.c.l.b16 %v3773
        %v4293 = vunpack.c.l.b16 %v3774
        %v4294 = vunpack.c.l.b16 %v3775
        %v4295 = vunpack.c.l.b16 %v3776
        %v4296 = vunpack.c.l.b16 %v3777
        %v4297 = vunpack.c.l.b16 %v3778
        %v4298 = vunpack.c.l.b16 %v3779
        %v4299 = vunpack.c.l.b16 %v3780
        %v4300 = vunpack.c.l.b16 %v3781
        %v4301 = vunpack.c.l.b16 %v3782
        %v4302 = vunpack.c.l.b16 %v3783
        %v4303 = vunpack.c.l.b16 %v3784
        %v4304 = vunpack.c.l.b16 %v3785
        %v4305 = vunpack.c.l.b16 %v3786
        %v4306 = vunpack.c.l.b16 %v3787
        %v4307 = vunpack.c.l.b16 %v3788
        %v4308 = vunpack.c.l.b16 %v3789
        %v4309 = vunpack.c.l.b16 %v3790
        %v4310 = vunpack.c.l.b16 %v3791
        %v4311 = vunpack.c.l.b16 %v3792
        %v4312 = vunpack.c.l.b16 %v3793
        %v4313 = vunpack.c.l.b16 %v3794
        %v4314 = vunpack.c.l.b16 %v3795
        %v4315 = vunpack.c.l.b16 %v3796
        %v4316 = vunpack.c.l.b16 %v3797
        %v4317 = vunpack.c.l.b16 %v3798
        %v4318 = vunpack.c.l.b16 %v3799
        %v4319 = vunpack.c.l.b16 %v3800
        %v4320 = vunpack.c.l.b16 %v3801
        %v4321 = vunpack.c.l.b16 %v3802
        %v4322 = vunpack.c.l.b16 %v3803
        %v4323 = vunpack.c.l.b16 %v3804
        %v4324 = vunpack.c.l.b16 %v3805
        %v4325 = vunpack.c.l.b16 %v3806
        %v4326 = vunpack.c.l.b16 %v3807
        %v4327 = vunpack.c.l.b16 %v3808
        %v4328 = vunpack.c.l.b16 %v3809
        %v4329 = vunpack.c.l.b16 %v3810
        %v4330 = vunpack.c.l.b16 %v3811
        %v4331 = vunpack.c.l.b16 %v3812
        %v4332 = vunpack.c.l.b16 %v3813
        %v4333 = vunpack.c.l.b16 %v3814
        %v4334 = vunpack.c.l.b16 %v3815
        %v4335 = vunpack.c.l.b16 %v3816
        %v4336 = vunpack.c.l.b16 %v3817
        %v4337 = vunpack.c.l.b16 %v3818
        %v4338 = vunpack.c.l.b16 %v3819
        %v4339 = vunpack.c.l.b16 %v3820
        %v4340 = vunpack.c.l.b16 %v3821
        %v4341 = vunpack.c.l.b16 %v3822
        %v4342 = vunpack.c.l.b16 %v3823
        %v4343 = vunpack.c.l.b16 %v3824
        %v4344 = vunpack.c.l.b16 %v3825
        %v4345 = vunpack.c.l.b16 %v3826
        %v4346 = vunpack.c.l.b16 %v3827
        %v4347 = vunpack.c.l.b16 %v3828
        %v4348 = vunpack.c.l.b16 %v3829
        %v4349 = vunpack.c.l.b16 %v3830
        %v4350 = vunpack.c.l.b16 %v3831
        %v4351 = vunpack.c.l.b16 %v3832
        %v4352 = vunpack.c.l.b16 %v3833
        %v4353 = vunpack.c.l.b16 %v3834
        %v4354 = vunpack.c.l.b16 %v3835
        %v4355 = vunpack.c.l.b16 %v3836
        %v4356 = vunpack.c.l.b16 %v3837
        %v4357 = vunpack.c.l.b16 %v3838
        %v4358 = vunpack.c.l.b16 %v3839
        %v4359 = vunpack.c.l.b16 %v3840
        %v4360 = vunpack.c.l.b16 %v3841
        %v4361 = vunpack.c.l.b16 %v3842
        %v4362 = vunpack.c.l.b16 %v3843
        %v4363 = vunpack.c.l.b16 %v3844
        %v4364 = vunpack.c.l.b16 %v3845
        %v4365 = vunpack.c.l.b16 %v3846
        %v4366 = vunpack.c.l.b16 %v3847
        %v4367 = vunpack.c.l.b16 %v3848
        %v4368 = vunpack.c.l.b16 %v3849
        %v4369 = vunpack.c.l.b16 %v3850
        %v4370 = vunpack.c.l.b16 %v3851
        %v4371 = vunpack.c.l.b16 %v3852
        %v4372 = vunpack.c.l.b16 %v3853
        %v4373 = vunpack.c.l.b16 %v3854
        %v4374 = vunpack.c.l.b16 %v3855
        %v4375 = vunpack.c.l.b16 %v3856
        %v4376 = vunpack.c.l.b16 %v3857
        %v4377 = vunpack.c.l.b16 %v3858
        %v4378 = vunpack.c.l.b16 %v3859
        %v4379 = vunpack.c.l.b16 %v3860
        %v4380 = vunpack.c.l.b16 %v3861
        %v4381 = vunpack.c.l.b16 %v3862
        %v4382 = vunpack.c.l.b16 %v3863
        %v4383 = vunpack.c.l.b16 %v3864
        %v4384 = vunpack.c.l.b16 %v3865
        %v4385 = vunpack.c.l.b16 %v3866
        %v4386 = vunpack.c.l.b16 %v3867
        %v4387 = vunpack.c.l.b16 %v3868
        %v4388 = vunpack.c.l.b16 %v3869
        %v4389 = vunpack.c.l.b16 %v3870
        %v4390 = vunpack.c.l.b16 %v3871
        %v4391 = vunpack.c.l.b16 %v3872
        %v4392 = vunpack.c.l.b16 %v3873
        %v4393 = vunpack.c.l.b16 %v3874
        %v4394 = vunpack.c.l.b16 %v3875
        %v4395 = vunpack.c.l.b16 %v3876
        %v4396 = vunpack.c.l.b16 %v3877
        %v4397 = vunpack.c.l.b16 %v3878
        %v4398 = vunpack.c.l.b16 %v3879
        %v4399 = vunpack.c.l.b16 %v3880
        %v4400 = vunpack.c.l.b16 %v3881
        %v4401 = vunpack.c.l.b16 %v3882
        %v4402 = vunpack.c.l.b16 %v3883
        %v4403 = vunpack.c.l.b16 %v3884
        %v4404 = vunpack.c.l.b16 %v3885
        %v4405 = vunpack.c.l.b16 %v3886
        %v4406 = vunpack.c.l.b16 %v3887
        %v4407 = vunpack.c.l.b16 %v3888
        %v4408 = vunpack.c.l.b16 %v3889
        %v4409 = vunpack.c.l.b16 %v3890
        %v4410 = vunpack.c.l.b16 %v3891
        %v4411 = vunpack.c.l.b16 %v3892
        %v4412 = vunpack.c.l.b16 %v3893
        %v4413 = vunpack.c.l.b16 %v3894
        %v4414 = vunpack.c.l.b16 %v3895
        %v4415 = vunpack.c.l.b16 %v3896
        %v4416 = vunpack.c.l.b16 %v3897
        %v4417 = vunpack.c.l.b16 %v3898
        %v4418 = vunpack.c.l.b16 %v3899
        %v4419 = vunpack.c.l.b16 %v3900
        %v4420 = vunpack.c.l.b16 %v3901
        %v4421 = vunpack.c.l.b16 %v3902
        %v4422 = vunpack.c.l.b16 %v3903
        %v4423 = vunpack.c.l.b16 %v3904
        %v4424 = vunpack.c.l.b16 %v3905
        %v4425 = vunpack.c.l.b16 %v3906
        %v4426 = vunpack.c.l.b16 %v3907
        %v4427 = vunpack.c.l.b16 %v3908
        %v4428 = vunpack.c.l.b16 %v3909
        %v4429 = vunpack.c.l.b16 %v3910
        %v4430 = vunpack.c.l.b16 %v3911
        %v4431 = vunpack.c.l.b16 %v3912
        %v4432 = vunpack.c.l.b16 %v3913
        %v4433 = vunpack.c.l.b16 %v3914
        %v4434 = vunpack.c.l.b16 %v3915
        %v4435 = vunpack.c.l.b16 %v3916
        %v4436 = vunpack.c.l.b16 %v3917
        %v4437 = vunpack.c.l.b16 %v3918
        %v4438 = vunpack.c.l.b16 %v3919
        %v4439 = vunpack.c.l.b16 %v3920
        %v4440 = vunpack.c.l.b16 %v3921
        %v4441 = vunpack.c.l.b16 %v3922
        %v4442 = vunpack.c.l.b16 %v3923
        %v4443 = vunpack.c.l.b16 %v3924
        %v4444 = vunpack.c.l.b16 %v3925
        %v4445 = vunpack.c.l.b16 %v3926
        %v4446 = vunpack.c.l.b16 %v3927
        %v4447 = vunpack.c.l.b16 %v3928
        %v4448 = vunpack.c.l.b16 %v3929
        %v4449 = vunpack.c.l.b16 %v3930
        %v4450 = vunpack.c.l.b16 %v3931
        %v4451 = vunpack.c.l.b16 %v3932
        %v4452 = vunpack.c.l.b16 %v3933
        %v4453 = vunpack.c.l.b16 %v3934
        %v4454 = vpack.c.b16 %v4199, %v4198
        %v4455 = vpack.c.b16 %v4201, %v4200
        %v4456 = vpack.c.b16 %v4203, %v4202
        %v4457 = vpack.c.b16 %v4205, %v4204
        %v4458 = vpack.c.b16 %v4207, %v4206
        %v4459 = vpack.c.b16 %v4209, %v4208
        %v4460 = vpack.c.b16 %v4211, %v4210
        %v4461 = vpack.c.b16 %v4213, %v4212
        %v4462 = vpack.c.b16 %v4215, %v4214
        %v4463 = vpack.c.b16 %v4217, %v4216
        %v4464 = vpack.c.b16 %v4219, %v4218
        %v4465 = vpack.c.b16 %v4221, %v4220
        %v4466 = vpack.c.b16 %v4223, %v4222
        %v4467 = vpack.c.b16 %v4225, %v4224
        %v4468 = vpack.c.b16 %v4227, %v4226
        %v4469 = vpack.c.b16 %v4229, %v4228
        %v4470 = vpack.c.b16 %v4231, %v4230
        %v4471 = vpack.c.b16 %v4233, %v4232
        %v4472 = vpack.c.b16 %v4235, %v4234
        %v4473 = vpack.c.b16 %v4237, %v4236
        %v4474 = vpack.c.b16 %v4239, %v4238
        %v4475 = vpack.c.b16 %v4241, %v4240
        %v4476 = vpack.c.b16 %v4243, %v4242
        %v4477 = vpack.c.b16 %v4245, %v4244
        %v4478 = vpack.c.b16 %v4247, %v4246
        %v4479 = vpack.c.b16 %v4249, %v4248
        %v4480 = vpack.c.b16 %v4251, %v4250
        %v4481 = vpack.c.b16 %v4253, %v4252
        %v4482 = vpack.c.b16 %v4255, %v4254
        %v4483 = vpack.c.b16 %v4257, %v4256
        %v4484 = vpack.c.b16 %v4259, %v4258
        %v4485 = vpack.c.b16 %v4261, %v4260
        %v4486 = vpack.c.b16 %v4263, %v4262
        %v4487 = vpack.c.b16 %v4265, %v4264
        %v4488 = vpack.c.b16 %v4267, %v4266
        %v4489 = vpack.c.b16 %v4269, %v4268
        %v4490 = vpack.c.b16 %v4271, %v4270
        %v4491 = vpack.c.b16 %v4273, %v4272
        %v4492 = vpack.c.b16 %v4275, %v4274
        %v4493 = vpack.c.b16 %v4277, %v4276
        %v4494 = vpack.c.b16 %v4279, %v4278
        %v4495 = vpack.c.b16 %v4281, %v4280
        %v4496 = vpack.c.b16 %v4283, %v4282
        %v4497 = vpack.c.b16 %v4285, %v4284
        %v4498 = vpack.c.b16 %v4287, %v4286
        %v4499 = vpack.c.b16 %v4289, %v4288
        %v4500 = vpack.c.b16 %v4291, %v4290
        %v4501 = vpack.c.b16 %v4293, %v4292
        %v4502 = vpack.c.b16 %v4295, %v4294
        %v4503 = vpack.c.b16 %v4297, %v4296
        %v4504 = vpack.c.b16 %v4299, %v4298
        %v4505 = vpack.c.b16 %v4301, %v4300
        %v4506 = vpack.c.b16 %v4303, %v4302
        %v4507 = vpack.c.b16 %v4305, %v4304
        %v4508 = vpack.c.b16 %v4307, %v4306
        %v4509 = vpack.c.b16 %v4309, %v4308
        %v4510 = vpack.c.b16 %v4311, %v4310
        %v4511 = vpack.c.b16 %v4313, %v4312
        %v4512 = vpack.c.b16 %v4315, %v4314
        %v4513 = vpack.c.b16 %v4317, %v4316
        %v4514 = vpack.c.b16 %v4319, %v4318
        %v4515 = vpack.c.b16 %v4321, %v4320
        %v4516 = vpack.c.b16 %v4323, %v4322
        %v4517 = vpack.c.b16 %v4325, %v4324
        %v4518 = vpack.c.b16 %v4327, %v4326
        %v4519 = vpack.c.b16 %v4329, %v4328
        %v4520 = vpack.c.b16 %v4331, %v4330
        %v4521 = vpack.c.b16 %v4333, %v4332
        %v4522 = vpack.c.b16 %v4335, %v4334
        %v4523 = vpack.c.b16 %v4337, %v4336
        %v4524 = vpack.c.b16 %v4339, %v4338
        %v4525 = vpack.c.b16 %v4341, %v4340
        %v4526 = vpack.c.b16 %v4343, %v4342
        %v4527 = vpack.c.b16 %v4345, %v4344
        %v4528 = vpack.c.b16 %v4347, %v4346
        %v4529 = vpack.c.b16 %v4349, %v4348
        %v4530 = vpack.c.b16 %v4351, %v4350
        %v4531 = vpack.c.b16 %v4353, %v4352
        %v4532 = vpack.c.b16 %v4355, %v4354
        %v4533 = vpack.c.b16 %v4357, %v4356
        %v4534 = vpack.c.b16 %v4359, %v4358
        %v4535 = vpack.c.b16 %v4361, %v4360
        %v4536 = vpack.c.b16 %v4363, %v4362
        %v4537 = vpack.c.b16 %v4365, %v4364
        %v4538 = vpack.c.b16 %v4367, %v4366
        %v4539 = vpack.c.b16 %v4369, %v4368
        %v4540 = vpack.c.b16 %v4371, %v4370
        %v4541 = vpack.c.b16 %v4373, %v4372
        %v4542 = vpack.c.b16 %v4375, %v4374
        %v4543 = vpack.c.b16 %v4377, %v4376
        %v4544 = vpack.c.b16 %v4379, %v4378
        %v4545 = vpack.c.b16 %v4381, %v4380
        %v4546 = vpack.c.b16 %v4383, %v4382
        %v4547 = vpack.c.b16 %v4385, %v4384
        %v4548 = vpack.c.b16 %v4387, %v4386
        %v4549 = vpack.c.b16 %v4389, %v4388
        %v4550 = vpack.c.b16 %v4391, %v4390
        %v4551 = vpack.c.b16 %v4393, %v4392
        %v4552 = vpack.c.b16 %v4395, %v4394
        %v4553 = vpack.c.b16 %v4397, %v4396
        %v4554 = vpack.c.b16 %v4399, %v4398
        %v4555 = vpack.c.b16 %v4401, %v4400
        %v4556 = vpack.c.b16 %v4403, %v4402
        %v4557 = vpack.c.b16 %v4405, %v4404
        %v4558 = vpack.c.b16 %v4407, %v4406
        %v4559 = vpack.c.b16 %v4409, %v4408
        %v4560 = vpack.c.b16 %v4411, %v4410
        %v4561 = vpack.c.b16 %v4413, %v4412
        %v4562 = vpack.c.b16 %v4415, %v4414
        %v4563 = vpack.c.b16 %v4417, %v4416
        %v4564 = vpack.c.b16 %v4419, %v4418
        %v4565 = vpack.c.b16 %v4421, %v4420
        %v4566 = vpack.c.b16 %v4423, %v4422
        %v4567 = vpack.c.b16 %v4425, %v4424
        %v4568 = vpack.c.b16 %v4427, %v4426
        %v4569 = vpack.c.b16 %v4429, %v4428
        %v4570 = vpack.c.b16 %v4431, %v4430
        %v4571 = vpack.c.b16 %v4433, %v4432
        %v4572 = vpack.c.b16 %v4435, %v4434
        %v4573 = vpack.c.b16 %v4437, %v4436
        %v4574 = vpack.c.b16 %v4439, %v4438
        %v4575 = vpack.c.b16 %v4441, %v4440
        %v4576 = vpack.c.b16 %v4443, %v4442
        %v4577 = vpack.c.b16 %v4445, %v4444
        %v4578 = vpack.c.b16 %v4447, %v4446
        %v4579 = vpack.c.b16 %v4449, %v4448
        %v4580 = vpack.c.b16 %v4451, %v4450
        %v4581 = vpack.c.b16 %v4453, %v4452
        %4710 = vmatprep.subr.bf16.mxu0 0
        %4711 = vmatpush1.bf16.msra.mxu0 %v4461
        %4712 = vmatprep.subr.bf16.mxu0 0
        %4713 = vmatpush1.bf16.msra.mxu0 %v4460
        %4714 = vmatprep.subr.bf16.mxu0 0
        %4715 = vmatpush1.bf16.msra.mxu0 %v4459
        %4716 = vmatprep.subr.bf16.mxu0 0
        %4717 = vmatpush1.bf16.msra.mxu0 %v4458
        %4718 = vmatprep.subr.bf16.mxu0 0
        %4719 = vmatpush1.bf16.msra.mxu0 %v4457
        %4720 = vmatprep.subr.bf16.mxu0 0
        %4721 = vmatpush1.bf16.msra.mxu0 %v4456
        %4722 = vmatprep.subr.bf16.mxu0 0
        %4723 = vmatpush1.bf16.msra.mxu0 %v4455
        %4724 = vmatprep.subr.bf16.mxu0 0
        %4725 = vmatpush1.bf16.msra.mxu0 %v4454
        %4726 = vmatprep.subr.bf16.mxu0 0
        %4727 = vmatpush2.bf16.msra.mxu0 %v4469
        %4728 = vmatprep.subr.bf16.mxu0 0
        %4729 = vmatpush2.bf16.msra.mxu0 %v4468
        %4730 = vmatprep.subr.bf16.mxu0 0
        %4731 = vmatpush2.bf16.msra.mxu0 %v4467
        %4732 = vmatprep.subr.bf16.mxu0 0
        %4733 = vmatpush2.bf16.msra.mxu0 %v4466
        %4734 = vmatprep.subr.bf16.mxu0 0
        %4735 = vmatpush2.bf16.msra.mxu0 %v4465
        %4736 = vmatprep.subr.bf16.mxu0 0
        %4737 = vmatpush2.bf16.msra.mxu0 %v4464
        %4738 = vmatprep.subr.bf16.mxu0 0
        %4739 = vmatpush2.bf16.msra.mxu0 %v4463
        %4740 = vmatprep.subr.bf16.mxu0 0
        %4741 = vmatpush2.bf16.msra.mxu0 %v4462
        %4742 = vmatprep.mubr.bf16.mxu0 %v3664
        %4743 = vmatmul.mubr.bf16.gmra.mxu0 %v3663
        %v4744 = vpop.f32.mrf.mxu0
        %v4745 = vadd.f32 %v3940, %v4744
        %v4746 = vpop.f32.mrf.mxu0
        %v4747 = vpop.f32.mrf.mxu0
        %v4748 = vpop.f32.mrf.mxu0
        %4749 = vdwg.mxu0
        %4750 = vmatprep.subr.bf16.mxu0 0
        %4751 = vmatpush1.bf16.msra.mxu0 %v4477
        %4752 = vmatprep.subr.bf16.mxu0 0
        %4753 = vmatpush1.bf16.msra.mxu0 %v4476
        %4754 = vmatprep.subr.bf16.mxu0 0
        %4755 = vmatpush1.bf16.msra.mxu0 %v4475
        %4756 = vmatprep.subr.bf16.mxu0 0
        %4757 = vmatpush1.bf16.msra.mxu0 %v4474
        %4758 = vmatprep.subr.bf16.mxu0 0
        %4759 = vmatpush1.bf16.msra.mxu0 %v4473
        %4760 = vmatprep.subr.bf16.mxu0 0
        %4761 = vmatpush1.bf16.msra.mxu0 %v4472
        %4762 = vmatprep.subr.bf16.mxu0 0
        %4763 = vmatpush1.bf16.msra.mxu0 %v4471
        %4764 = vmatprep.subr.bf16.mxu0 0
        %4765 = vmatpush1.bf16.msra.mxu0 %v4470
        %4766 = vmatprep.subr.bf16.mxu0 0
        %4767 = vmatpush2.bf16.msra.mxu0 %v4485
        %4768 = vmatprep.subr.bf16.mxu0 0
        %4769 = vmatpush2.bf16.msra.mxu0 %v4484
        %4770 = vmatprep.subr.bf16.mxu0 0
        %4771 = vmatpush2.bf16.msra.mxu0 %v4483
        %4772 = vmatprep.subr.bf16.mxu0 0
        %4773 = vmatpush2.bf16.msra.mxu0 %v4482
        %4774 = vmatprep.subr.bf16.mxu0 0
        %4775 = vmatpush2.bf16.msra.mxu0 %v4481
        %4776 = vmatprep.subr.bf16.mxu0 0
        %4777 = vmatpush2.bf16.msra.mxu0 %v4480
        %4778 = vmatprep.subr.bf16.mxu0 0
        %4779 = vmatpush2.bf16.msra.mxu0 %v4479
        %4780 = vmatprep.subr.bf16.mxu0 0
        %4781 = vmatpush2.bf16.msra.mxu0 %v4478
        %4782 = vmatprep.mubr.bf16.mxu0 %v3666
        %4783 = vmatmul.mubr.bf16.gmra.mxu0 %v3665
        %v4784 = vpop.f32.mrf.mxu0
        %v4785 = vadd.f32 %v4745, %v4784
        %v4786 = vpop.f32.mrf.mxu0
        %v4787 = vpop.f32.mrf.mxu0
        %v4788 = vpop.f32.mrf.mxu0
        %4789 = vdwg.mxu0
        %4790 = vmatprep.subr.bf16.mxu0 0
        %4791 = vmatpush1.bf16.msra.mxu0 %v4493
        %4792 = vmatprep.subr.bf16.mxu0 0
        %4793 = vmatpush1.bf16.msra.mxu0 %v4492
        %4794 = vmatprep.subr.bf16.mxu0 0
        %4795 = vmatpush1.bf16.msra.mxu0 %v4491
        %4796 = vmatprep.subr.bf16.mxu0 0
        %4797 = vmatpush1.bf16.msra.mxu0 %v4490
        %4798 = vmatprep.subr.bf16.mxu0 0
        %4799 = vmatpush1.bf16.msra.mxu0 %v4489
        %4800 = vmatprep.subr.bf16.mxu0 0
        %4801 = vmatpush1.bf16.msra.mxu0 %v4488
        %4802 = vmatprep.subr.bf16.mxu0 0
        %4803 = vmatpush1.bf16.msra.mxu0 %v4487
        %4804 = vmatprep.subr.bf16.mxu0 0
        %4805 = vmatpush1.bf16.msra.mxu0 %v4486
        %4806 = vmatprep.subr.bf16.mxu0 0
        %4807 = vmatpush2.bf16.msra.mxu0 %v4501
        %4808 = vmatprep.subr.bf16.mxu0 0
        %4809 = vmatpush2.bf16.msra.mxu0 %v4500
        %4810 = vmatprep.subr.bf16.mxu0 0
        %4811 = vmatpush2.bf16.msra.mxu0 %v4499
        %4812 = vmatprep.subr.bf16.mxu0 0
        %4813 = vmatpush2.bf16.msra.mxu0 %v4498
        %4814 = vmatprep.subr.bf16.mxu0 0
        %4815 = vmatpush2.bf16.msra.mxu0 %v4497
        %4816 = vmatprep.subr.bf16.mxu0 0
        %4817 = vmatpush2.bf16.msra.mxu0 %v4496
        %4818 = vmatprep.subr.bf16.mxu0 0
        %4819 = vmatpush2.bf16.msra.mxu0 %v4495
        %4820 = vmatprep.subr.bf16.mxu0 0
        %4821 = vmatpush2.bf16.msra.mxu0 %v4494
        %4822 = vmatprep.mubr.bf16.mxu0 %v3668
        %4823 = vmatmul.mubr.bf16.gmra.mxu0 %v3667
        %v4824 = vpop.f32.mrf.mxu0
        %v4825 = vadd.f32 %v4785, %v4824
        %v4826 = vpop.f32.mrf.mxu0
        %v4827 = vpop.f32.mrf.mxu0
        %v4828 = vpop.f32.mrf.mxu0
        %4829 = vdwg.mxu0
        %4830 = vmatprep.subr.bf16.mxu0 0
        %4831 = vmatpush1.bf16.msra.mxu0 %v4509
        %4832 = vmatprep.subr.bf16.mxu0 0
        %4833 = vmatpush1.bf16.msra.mxu0 %v4508
        %4834 = vmatprep.subr.bf16.mxu0 0
        %4835 = vmatpush1.bf16.msra.mxu0 %v4507
        %4836 = vmatprep.subr.bf16.mxu0 0
        %4837 = vmatpush1.bf16.msra.mxu0 %v4506
        %4838 = vmatprep.subr.bf16.mxu0 0
        %4839 = vmatpush1.bf16.msra.mxu0 %v4505
        %4840 = vmatprep.subr.bf16.mxu0 0
        %4841 = vmatpush1.bf16.msra.mxu0 %v4504
        %4842 = vmatprep.subr.bf16.mxu0 0
        %4843 = vmatpush1.bf16.msra.mxu0 %v4503
        %4844 = vmatprep.subr.bf16.mxu0 0
        %4845 = vmatpush1.bf16.msra.mxu0 %v4502
        %4846 = vmatprep.subr.bf16.mxu0 0
        %4847 = vmatpush2.bf16.msra.mxu0 %v4517
        %4848 = vmatprep.subr.bf16.mxu0 0
        %4849 = vmatpush2.bf16.msra.mxu0 %v4516
        %4850 = vmatprep.subr.bf16.mxu0 0
        %4851 = vmatpush2.bf16.msra.mxu0 %v4515
        %4852 = vmatprep.subr.bf16.mxu0 0
        %4853 = vmatpush2.bf16.msra.mxu0 %v4514
        %4854 = vmatprep.subr.bf16.mxu0 0
        %4855 = vmatpush2.bf16.msra.mxu0 %v4513
        %4856 = vmatprep.subr.bf16.mxu0 0
        %4857 = vmatpush2.bf16.msra.mxu0 %v4512
        %4858 = vmatprep.subr.bf16.mxu0 0
        %4859 = vmatpush2.bf16.msra.mxu0 %v4511
        %4860 = vmatprep.subr.bf16.mxu0 0
        %4861 = vmatpush2.bf16.msra.mxu0 %v4510
        %4862 = vmatprep.mubr.bf16.mxu0 %v3670
        %4863 = vmatmul.mubr.bf16.gmra.mxu0 %v3669
        %v4864 = vpop.f32.mrf.mxu0
        %v4865 = vadd.f32 %v4825, %v4864
        %v4866 = vpop.f32.mrf.mxu0
        %v4867 = vpop.f32.mrf.mxu0
        %v4868 = vpop.f32.mrf.mxu0
        %4869 = vdwg.mxu0
        %4870 = vmatprep.subr.bf16.mxu0 0
        %4871 = vmatpush1.bf16.msra.mxu0 %v4525
        %4872 = vmatprep.subr.bf16.mxu0 0
        %4873 = vmatpush1.bf16.msra.mxu0 %v4524
        %4874 = vmatprep.subr.bf16.mxu0 0
        %4875 = vmatpush1.bf16.msra.mxu0 %v4523
        %4876 = vmatprep.subr.bf16.mxu0 0
        %4877 = vmatpush1.bf16.msra.mxu0 %v4522
        %4878 = vmatprep.subr.bf16.mxu0 0
        %4879 = vmatpush1.bf16.msra.mxu0 %v4521
        %4880 = vmatprep.subr.bf16.mxu0 0
        %4881 = vmatpush1.bf16.msra.mxu0 %v4520
        %4882 = vmatprep.subr.bf16.mxu0 0
        %4883 = vmatpush1.bf16.msra.mxu0 %v4519
        %4884 = vmatprep.subr.bf16.mxu0 0
        %4885 = vmatpush1.bf16.msra.mxu0 %v4518
        %4886 = vmatprep.subr.bf16.mxu0 0
        %4887 = vmatpush2.bf16.msra.mxu0 %v4533
        %4888 = vmatprep.subr.bf16.mxu0 0
        %4889 = vmatpush2.bf16.msra.mxu0 %v4532
        %4890 = vmatprep.subr.bf16.mxu0 0
        %4891 = vmatpush2.bf16.msra.mxu0 %v4531
        %4892 = vmatprep.subr.bf16.mxu0 0
        %4893 = vmatpush2.bf16.msra.mxu0 %v4530
        %4894 = vmatprep.subr.bf16.mxu0 0
        %4895 = vmatpush2.bf16.msra.mxu0 %v4529
        %4896 = vmatprep.subr.bf16.mxu0 0
        %4897 = vmatpush2.bf16.msra.mxu0 %v4528
        %4898 = vmatprep.subr.bf16.mxu0 0
        %4899 = vmatpush2.bf16.msra.mxu0 %v4527
        %4900 = vmatprep.subr.bf16.mxu0 0
        %4901 = vmatpush2.bf16.msra.mxu0 %v4526
        %4902 = vmatprep.mubr.bf16.mxu0 %v3672
        %4903 = vmatmul.mubr.bf16.gmra.mxu0 %v3671
        %v4904 = vpop.f32.mrf.mxu0
        %v4905 = vadd.f32 %v4865, %v4904
        %v4906 = vpop.f32.mrf.mxu0
        %v4907 = vpop.f32.mrf.mxu0
        %v4908 = vpop.f32.mrf.mxu0
        %4909 = vdwg.mxu0
        %4910 = vmatprep.subr.bf16.mxu0 0
        %4911 = vmatpush1.bf16.msra.mxu0 %v4541
        %4912 = vmatprep.subr.bf16.mxu0 0
        %4913 = vmatpush1.bf16.msra.mxu0 %v4540
        %4914 = vmatprep.subr.bf16.mxu0 0
        %4915 = vmatpush1.bf16.msra.mxu0 %v4539
        %4916 = vmatprep.subr.bf16.mxu0 0
        %4917 = vmatpush1.bf16.msra.mxu0 %v4538
        %4918 = vmatprep.subr.bf16.mxu0 0
        %4919 = vmatpush1.bf16.msra.mxu0 %v4537
        %4920 = vmatprep.subr.bf16.mxu0 0
        %4921 = vmatpush1.bf16.msra.mxu0 %v4536
        %4922 = vmatprep.subr.bf16.mxu0 0
        %4923 = vmatpush1.bf16.msra.mxu0 %v4535
        %4924 = vmatprep.subr.bf16.mxu0 0
        %4925 = vmatpush1.bf16.msra.mxu0 %v4534
        %4926 = vmatprep.subr.bf16.mxu0 0
        %4927 = vmatpush2.bf16.msra.mxu0 %v4549
        %4928 = vmatprep.subr.bf16.mxu0 0
        %4929 = vmatpush2.bf16.msra.mxu0 %v4548
        %4930 = vmatprep.subr.bf16.mxu0 0
        %4931 = vmatpush2.bf16.msra.mxu0 %v4547
        %4932 = vmatprep.subr.bf16.mxu0 0
        %4933 = vmatpush2.bf16.msra.mxu0 %v4546
        %4934 = vmatprep.subr.bf16.mxu0 0
        %4935 = vmatpush2.bf16.msra.mxu0 %v4545
        %4936 = vmatprep.subr.bf16.mxu0 0
        %4937 = vmatpush2.bf16.msra.mxu0 %v4544
        %4938 = vmatprep.subr.bf16.mxu0 0
        %4939 = vmatpush2.bf16.msra.mxu0 %v4543
        %4940 = vmatprep.subr.bf16.mxu0 0
        %4941 = vmatpush2.bf16.msra.mxu0 %v4542
        %4942 = vmatprep.mubr.bf16.mxu0 %v3674
        %4943 = vmatmul.mubr.bf16.gmra.mxu0 %v3673
        %v4944 = vpop.f32.mrf.mxu0
        %v4945 = vadd.f32 %v4905, %v4944
        %v4946 = vpop.f32.mrf.mxu0
        %v4947 = vpop.f32.mrf.mxu0
        %v4948 = vpop.f32.mrf.mxu0
        %4949 = vdwg.mxu0
        %4950 = vmatprep.subr.bf16.mxu0 0
        %4951 = vmatpush1.bf16.msra.mxu0 %v4557
        %4952 = vmatprep.subr.bf16.mxu0 0
        %4953 = vmatpush1.bf16.msra.mxu0 %v4556
        %4954 = vmatprep.subr.bf16.mxu0 0
        %4955 = vmatpush1.bf16.msra.mxu0 %v4555
        %4956 = vmatprep.subr.bf16.mxu0 0
        %4957 = vmatpush1.bf16.msra.mxu0 %v4554
        %4958 = vmatprep.subr.bf16.mxu0 0
        %4959 = vmatpush1.bf16.msra.mxu0 %v4553
        %4960 = vmatprep.subr.bf16.mxu0 0
        %4961 = vmatpush1.bf16.msra.mxu0 %v4552
        %4962 = vmatprep.subr.bf16.mxu0 0
        %4963 = vmatpush1.bf16.msra.mxu0 %v4551
        %4964 = vmatprep.subr.bf16.mxu0 0
        %4965 = vmatpush1.bf16.msra.mxu0 %v4550
        %4966 = vmatprep.subr.bf16.mxu0 0
        %4967 = vmatpush2.bf16.msra.mxu0 %v4565
        %4968 = vmatprep.subr.bf16.mxu0 0
        %4969 = vmatpush2.bf16.msra.mxu0 %v4564
        %4970 = vmatprep.subr.bf16.mxu0 0
        %4971 = vmatpush2.bf16.msra.mxu0 %v4563
        %4972 = vmatprep.subr.bf16.mxu0 0
        %4973 = vmatpush2.bf16.msra.mxu0 %v4562
        %4974 = vmatprep.subr.bf16.mxu0 0
        %4975 = vmatpush2.bf16.msra.mxu0 %v4561
        %4976 = vmatprep.subr.bf16.mxu0 0
        %4977 = vmatpush2.bf16.msra.mxu0 %v4560
        %4978 = vmatprep.subr.bf16.mxu0 0
        %4979 = vmatpush2.bf16.msra.mxu0 %v4559
        %4980 = vmatprep.subr.bf16.mxu0 0
        %4981 = vmatpush2.bf16.msra.mxu0 %v4558
        %4982 = vmatprep.mubr.bf16.mxu0 %v3676
        %4983 = vmatmul.mubr.bf16.gmra.mxu0 %v3675
        %v4984 = vpop.f32.mrf.mxu0
        %v4985 = vadd.f32 %v4945, %v4984
        %v4986 = vpop.f32.mrf.mxu0
        %v4987 = vpop.f32.mrf.mxu0
        %v4988 = vpop.f32.mrf.mxu0
        %4989 = vdwg.mxu0
        %4990 = vmatprep.subr.bf16.mxu0 0
        %4991 = vmatpush1.bf16.msra.mxu0 %v4573
        %4992 = vmatprep.subr.bf16.mxu0 0
        %4993 = vmatpush1.bf16.msra.mxu0 %v4572
        %4994 = vmatprep.subr.bf16.mxu0 0
        %4995 = vmatpush1.bf16.msra.mxu0 %v4571
        %4996 = vmatprep.subr.bf16.mxu0 0
        %4997 = vmatpush1.bf16.msra.mxu0 %v4570
        %4998 = vmatprep.subr.bf16.mxu0 0
        %4999 = vmatpush1.bf16.msra.mxu0 %v4569
        %5000 = vmatprep.subr.bf16.mxu0 0
        %5001 = vmatpush1.bf16.msra.mxu0 %v4568
        %5002 = vmatprep.subr.bf16.mxu0 0
        %5003 = vmatpush1.bf16.msra.mxu0 %v4567
        %5004 = vmatprep.subr.bf16.mxu0 0
        %5005 = vmatpush1.bf16.msra.mxu0 %v4566
        %5006 = vmatprep.subr.bf16.mxu0 0
        %5007 = vmatpush2.bf16.msra.mxu0 %v4581
        %5008 = vmatprep.subr.bf16.mxu0 0
        %5009 = vmatpush2.bf16.msra.mxu0 %v4580
        %5010 = vmatprep.subr.bf16.mxu0 0
        %5011 = vmatpush2.bf16.msra.mxu0 %v4579
        %5012 = vmatprep.subr.bf16.mxu0 0
        %5013 = vmatpush2.bf16.msra.mxu0 %v4578
        %5014 = vmatprep.subr.bf16.mxu0 0
        %5015 = vmatpush2.bf16.msra.mxu0 %v4577
        %5016 = vmatprep.subr.bf16.mxu0 0
        %5017 = vmatpush2.bf16.msra.mxu0 %v4576
        %5018 = vmatprep.subr.bf16.mxu0 0
        %5019 = vmatpush2.bf16.msra.mxu0 %v4575
        %5020 = vmatprep.subr.bf16.mxu0 0
        %5021 = vmatpush2.bf16.msra.mxu0 %v4574
        %5022 = vmatprep.mubr.bf16.mxu0 %v3678
        %5023 = vmatmul.mubr.bf16.gmra.mxu0 %v3677
        %v5024 = vpop.f32.mrf.mxu0
        %v5025 = vadd.f32 %v4985, %v5024
        %v5026 = vpop.f32.mrf.mxu0
        %v5027 = vpop.f32.mrf.mxu0
        %v5028 = vpop.f32.mrf.mxu0
        %5029 = vdwg.mxu0
        %v5030 = vld [vmem:[%s24] sm:$0x1]
        %v5031 = vld [vmem:[%s25] sm:$0x1]
        %5032 = vadd.xlane.f32.xlu0 %v5025
        %v5033 = vpop.xlane.xlu0 %5032
        %v5034 = vmul.f32 %v5033, 0.03125
        %v5035 = vsub.f32 %v5025, %v5034
        %v5036 = vmul.f32 %v5035, %v1649
        %v5037 = vmul.f32 %v5036, %v5036
        %5038 = vadd.xlane.f32.xlu0 %v5037
        %v5039 = vpop.xlane.xlu0 %5038
        %v5040 = vmul.f32 %v5039, 0.032258064
        %v5041 = vrsqrt.pop %v5040
        %v5042 = vmul.f32 %v5040, %v5041
        %vm5043 = vcmp.eq.f32.partialorder %v5040, inf
        %v5044 = vsel %vm5043, %v5040, %v5042
        %vm5045 = vcmp.eq.f32.partialorder %v5040, 0.0
        %v5046 = vand.u32 %v5040, 2147483648
        %v5047 = vsel %vm5045, %v5046, %v5044
        %v5048 = vadd.f32 %v5047, 1e-06
        %v5049 = vrcp.pop %v5048
        %v5050 = vmul.f32 %v5036, %v5049
        %v5052 = vlaneseq
        %v5053 = vshrl.u32 %v5052, 7
        %v5054 = vsub.s32 0, %v5053
        %v5055 = vrot.slane %v5030, %v5054
        %v5057 = vmul.f32 %v5055, %v5050
        %v5059 = vlaneseq
        %v5060 = vshrl.u32 %v5059, 7
        %v5061 = vsub.s32 0, %v5060
        %v5062 = vrot.slane %v5031, %v5061
        %v5064 = vadd.f32 %v5057, %v5062
        %v5065 = vadd.f32 %v5025, %v5064
        %s5066 = scalar_lea.vmem %s4, 64
        %v5067 = vld [vmem:[%s5066] sm:$0xf]
        %v5068 = vld [vmem:[%s5066 + $0x4] sm:$0xf]
        %v5069 = vld [vmem:[%s5066 + $0x8] sm:$0xf]
        %v5070 = vld [vmem:[%s5066 + $0xc] sm:$0xf]
        %v5071 = vld [vmem:[%s5066 + $0x10] sm:$0xf]
        %v5072 = vld [vmem:[%s5066 + $0x14] sm:$0xf]
        %v5073 = vld [vmem:[%s5066 + $0x18] sm:$0xf]
        %v5074 = vld [vmem:[%s5066 + $0x1c] sm:$0xf]
        %v5075 = vld [vmem:[%s5066 + $0x20] sm:$0xf]
        %v5076 = vld [vmem:[%s5066 + $0x24] sm:$0xf]
        %v5077 = vld [vmem:[%s5066 + $0x28] sm:$0xf]
        %v5078 = vld [vmem:[%s5066 + $0x2c] sm:$0xf]
        %v5079 = vld [vmem:[%s5066 + $0x30] sm:$0xf]
        %v5080 = vld [vmem:[%s5066 + $0x34] sm:$0xf]
        %v5081 = vld [vmem:[%s5066 + $0x38] sm:$0xf]
        %v5082 = vld [vmem:[%s5066 + $0x3c] sm:$0xf]
        %s5083 = scalar_lea.vmem %s5, 1
        %v5084 = vld [vmem:[%s5083] sm:$0x1]
        %s5085 = scalar_lea.vmem %s6, 64
        %v5086 = vld [vmem:[%s5085] sm:$0xf]
        %v5087 = vld [vmem:[%s5085 + $0x4] sm:$0xf]
        %v5088 = vld [vmem:[%s5085 + $0x8] sm:$0xf]
        %v5089 = vld [vmem:[%s5085 + $0xc] sm:$0xf]
        %v5090 = vld [vmem:[%s5085 + $0x10] sm:$0xf]
        %v5091 = vld [vmem:[%s5085 + $0x14] sm:$0xf]
        %v5092 = vld [vmem:[%s5085 + $0x18] sm:$0xf]
        %v5093 = vld [vmem:[%s5085 + $0x1c] sm:$0xf]
        %v5094 = vld [vmem:[%s5085 + $0x20] sm:$0xf]
        %v5095 = vld [vmem:[%s5085 + $0x24] sm:$0xf]
        %v5096 = vld [vmem:[%s5085 + $0x28] sm:$0xf]
        %v5097 = vld [vmem:[%s5085 + $0x2c] sm:$0xf]
        %v5098 = vld [vmem:[%s5085 + $0x30] sm:$0xf]
        %v5099 = vld [vmem:[%s5085 + $0x34] sm:$0xf]
        %v5100 = vld [vmem:[%s5085 + $0x38] sm:$0xf]
        %v5101 = vld [vmem:[%s5085 + $0x3c] sm:$0xf]
        %s5102 = scalar_lea.vmem %s7, 1
        %v5103 = vld [vmem:[%s5102] sm:$0x1]
        %s5104 = scalar_lea.vmem %s8, 16
        %v5105 = vld [vmem:[%s5104] sm:$0xf]
        %v5106 = vld [vmem:[%s5104 + $0x4] sm:$0xf]
        %v5107 = vld [vmem:[%s5104 + $0x8] sm:$0xf]
        %v5108 = vld [vmem:[%s5104 + $0xc] sm:$0xf]
        %s5109 = scalar_lea.vmem %s9, 1
        %v5110 = vld [vmem:[%s5109] sm:$0x1]
        %v5111 = vpack.c.bf16 %v5065, %v5065
        %v5113 = vlaneseq
        %v5114 = vshrl.u32 %v5113, 7
        %v5115 = vsub.s32 0, %v5114
        %v5116 = vrot.slane %v5084, %v5115
        %v5134 = vunpack.c.l.b16 %v5067
        %v5135 = vunpack.c.l.b16 %v5068
        %v5136 = vunpack.c.l.b16 %v5069
        %v5137 = vunpack.c.l.b16 %v5070
        %v5138 = vunpack.c.l.b16 %v5071
        %v5139 = vunpack.c.l.b16 %v5072
        %v5140 = vunpack.c.l.b16 %v5073
        %v5141 = vunpack.c.l.b16 %v5074
        %v5142 = vunpack.c.l.b16 %v5075
        %v5143 = vunpack.c.l.b16 %v5076
        %v5144 = vunpack.c.l.b16 %v5077
        %v5145 = vunpack.c.l.b16 %v5078
        %v5146 = vunpack.c.l.b16 %v5079
        %v5147 = vunpack.c.l.b16 %v5080
        %v5148 = vunpack.c.l.b16 %v5081
        %v5149 = vunpack.c.l.b16 %v5082
        %v5150 = vpack.c.b16 %v5135, %v5134
        %v5151 = vpack.c.b16 %v5137, %v5136
        %v5152 = vpack.c.b16 %v5139, %v5138
        %v5153 = vpack.c.b16 %v5141, %v5140
        %v5154 = vpack.c.b16 %v5143, %v5142
        %v5155 = vpack.c.b16 %v5145, %v5144
        %v5156 = vpack.c.b16 %v5147, %v5146
        %v5157 = vpack.c.b16 %v5149, %v5148
        %5166 = vmatprep.subr.bf16.mxu0 0
        %5167 = vmatpush1.bf16.msra.mxu0 %v5157
        %5168 = vmatprep.subr.bf16.mxu0 0
        %5169 = vmatpush1.bf16.msra.mxu0 %v5156
        %5170 = vmatprep.subr.bf16.mxu0 0
        %5171 = vmatpush1.bf16.msra.mxu0 %v5155
        %5172 = vmatprep.subr.bf16.mxu0 0
        %5173 = vmatpush1.bf16.msra.mxu0 %v5154
        %5174 = vmatprep.subr.bf16.mxu0 0
        %5175 = vmatpush1.bf16.msra.mxu0 %v5153
        %5176 = vmatprep.subr.bf16.mxu0 0
        %5177 = vmatpush1.bf16.msra.mxu0 %v5152
        %5178 = vmatprep.subr.bf16.mxu0 0
        %5179 = vmatpush1.bf16.msra.mxu0 %v5151
        %5180 = vmatprep.subr.bf16.mxu0 0
        %5181 = vmatpush1.bf16.msra.mxu0 %v5150
        %5182 = vmatprep.subr.bf16.mxu0 0
        %5183 = vmatpush2.bf16.msra.mxu0 0
        %5184 = vmatprep.subr.bf16.mxu0 0
        %5185 = vmatpush2.bf16.msra.mxu0 0
        %5186 = vmatprep.subr.bf16.mxu0 0
        %5187 = vmatpush2.bf16.msra.mxu0 0
        %5188 = vmatprep.subr.bf16.mxu0 0
        %5189 = vmatpush2.bf16.msra.mxu0 0
        %5190 = vmatprep.subr.bf16.mxu0 0
        %5191 = vmatpush2.bf16.msra.mxu0 0
        %5192 = vmatprep.subr.bf16.mxu0 0
        %5193 = vmatpush2.bf16.msra.mxu0 0
        %5194 = vmatprep.subr.bf16.mxu0 0
        %5195 = vmatpush2.bf16.msra.mxu0 0
        %5196 = vmatprep.subr.bf16.mxu0 0
        %5197 = vmatpush2.bf16.msra.mxu0 0
        %5198 = vmatprep.mubr.bf16.mxu0 0
        %5199 = vmatmul.mubr.bf16.gmra.mxu0 %v5111
        %v5200 = vpop.f32.mrf.mxu0
        %v5201 = vadd.f32 %v5116, %v5200
        %v5202 = vpop.f32.mrf.mxu0
        %v5203 = vpop.f32.mrf.mxu0
        %v5204 = vpop.f32.mrf.mxu0
        %5205 = vdwg.mxu0
        %v5207 = vlaneseq
        %v5208 = vshrl.u32 %v5207, 7
        %v5209 = vsub.s32 0, %v5208
        %v5210 = vrot.slane %v5103, %v5209
        %v5228 = vunpack.c.l.b16 %v5086
        %v5229 = vunpack.c.l.b16 %v5087
        %v5230 = vunpack.c.l.b16 %v5088
        %v5231 = vunpack.c.l.b16 %v5089
        %v5232 = vunpack.c.l.b16 %v5090
        %v5233 = vunpack.c.l.b16 %v5091
        %v5234 = vunpack.c.l.b16 %v5092
        %v5235 = vunpack.c.l.b16 %v5093
        %v5236 = vunpack.c.l.b16 %v5094
        %v5237 = vunpack.c.l.b16 %v5095
        %v5238 = vunpack.c.l.b16 %v5096
        %v5239 = vunpack.c.l.b16 %v5097
        %v5240 = vunpack.c.l.b16 %v5098
        %v5241 = vunpack.c.l.b16 %v5099
        %v5242 = vunpack.c.l.b16 %v5100
        %v5243 = vunpack.c.l.b16 %v5101
        %v5244 = vpack.c.b16 %v5229, %v5228
        %v5245 = vpack.c.b16 %v5231, %v5230
        %v5246 = vpack.c.b16 %v5233, %v5232
        %v5247 = vpack.c.b16 %v5235, %v5234
        %v5248 = vpack.c.b16 %v5237, %v5236
        %v5249 = vpack.c.b16 %v5239, %v5238
        %v5250 = vpack.c.b16 %v5241, %v5240
        %v5251 = vpack.c.b16 %v5243, %v5242
        %5260 = vmatprep.subr.bf16.mxu0 0
        %5261 = vmatpush1.bf16.msra.mxu0 %v5251
        %5262 = vmatprep.subr.bf16.mxu0 0
        %5263 = vmatpush1.bf16.msra.mxu0 %v5250
        %5264 = vmatprep.subr.bf16.mxu0 0
        %5265 = vmatpush1.bf16.msra.mxu0 %v5249
        %5266 = vmatprep.subr.bf16.mxu0 0
        %5267 = vmatpush1.bf16.msra.mxu0 %v5248
        %5268 = vmatprep.subr.bf16.mxu0 0
        %5269 = vmatpush1.bf16.msra.mxu0 %v5247
        %5270 = vmatprep.subr.bf16.mxu0 0
        %5271 = vmatpush1.bf16.msra.mxu0 %v5246
        %5272 = vmatprep.subr.bf16.mxu0 0
        %5273 = vmatpush1.bf16.msra.mxu0 %v5245
        %5274 = vmatprep.subr.bf16.mxu0 0
        %5275 = vmatpush1.bf16.msra.mxu0 %v5244
        %5276 = vmatprep.subr.bf16.mxu0 0
        %5277 = vmatpush2.bf16.msra.mxu0 0
        %5278 = vmatprep.subr.bf16.mxu0 0
        %5279 = vmatpush2.bf16.msra.mxu0 0
        %5280 = vmatprep.subr.bf16.mxu0 0
        %5281 = vmatpush2.bf16.msra.mxu0 0
        %5282 = vmatprep.subr.bf16.mxu0 0
        %5283 = vmatpush2.bf16.msra.mxu0 0
        %5284 = vmatprep.subr.bf16.mxu0 0
        %5285 = vmatpush2.bf16.msra.mxu0 0
        %5286 = vmatprep.subr.bf16.mxu0 0
        %5287 = vmatpush2.bf16.msra.mxu0 0
        %5288 = vmatprep.subr.bf16.mxu0 0
        %5289 = vmatpush2.bf16.msra.mxu0 0
        %5290 = vmatprep.subr.bf16.mxu0 0
        %5291 = vmatpush2.bf16.msra.mxu0 0
        %5292 = vmatprep.mubr.bf16.mxu0 0
        %5293 = vmatmul.mubr.bf16.gmra.mxu0 %v5111
        %v5294 = vpop.f32.mrf.mxu0
        %v5295 = vadd.f32 %v5210, %v5294
        %v5296 = vpop.f32.mrf.mxu0
        %v5297 = vpop.f32.mrf.mxu0
        %v5298 = vpop.f32.mrf.mxu0
        %5299 = vdwg.mxu0
        %v5300 = vpack.c.bf16 %v5201, %v5201
        %v5301 = vpack.c.bf16 %v5295, %v5295
        %v5303 = vsel %vm1123, %v5300, 0
        %v5306 = vsel %vm1123, %v5301, 0
        %5308 = vmatprep.subr.bf16.mxu0 0
        %5309 = vmatpush1.bf16.xpose.msra.mxu0 0
        %5310 = vmatprep.subr.bf16.mxu0 0
        %5311 = vmatpush1.bf16.xpose.msra.mxu0 0
        %5312 = vmatprep.subr.bf16.mxu0 0
        %5313 = vmatpush1.bf16.xpose.msra.mxu0 0
        %5314 = vmatprep.subr.bf16.mxu0 0
        %5315 = vmatpush1.bf16.xpose.msra.mxu0 0
        %5316 = vmatprep.subr.bf16.mxu0 0
        %5317 = vmatpush1.bf16.xpose.msra.mxu0 0
        %5318 = vmatprep.subr.bf16.mxu0 0
        %5319 = vmatpush1.bf16.xpose.msra.mxu0 0
        %5320 = vmatprep.subr.bf16.mxu0 0
        %5321 = vmatpush1.bf16.xpose.msra.mxu0 0
        %5322 = vmatprep.subr.bf16.mxu0 0
        %5323 = vmatpush1.bf16.xpose.msra.mxu0 %v5306
        %5324 = vmatprep.subr.bf16.mxu0 0
        %5325 = vmatpush2.bf16.xpose.msra.mxu0 0
        %5326 = vmatprep.subr.bf16.mxu0 0
        %5327 = vmatpush2.bf16.xpose.msra.mxu0 0
        %5328 = vmatprep.subr.bf16.mxu0 0
        %5329 = vmatpush2.bf16.xpose.msra.mxu0 0
        %5330 = vmatprep.subr.bf16.mxu0 0
        %5331 = vmatpush2.bf16.xpose.msra.mxu0 0
        %5332 = vmatprep.subr.bf16.mxu0 0
        %5333 = vmatpush2.bf16.xpose.msra.mxu0 0
        %5334 = vmatprep.subr.bf16.mxu0 0
        %5335 = vmatpush2.bf16.xpose.msra.mxu0 0
        %5336 = vmatprep.subr.bf16.mxu0 0
        %5337 = vmatpush2.bf16.xpose.msra.mxu0 0
        %5338 = vmatprep.subr.bf16.mxu0 0
        %5339 = vmatpush2.bf16.xpose.msra.mxu0 0
        %5340 = vmatprep.mubr.bf16.mxu0 0
        %5341 = vmatmul.mubr.bf16.gmra.mxu0 %v5303
        %v5342 = vpop.f32.mrf.mxu0
        %v5343 = vadd.f32 %v891, %v5342
        %v5344 = vpop.f32.mrf.mxu0
        %v5345 = vpop.f32.mrf.mxu0
        %v5346 = vpop.f32.mrf.mxu0
        %5347 = vdwg.mxu0
        %v5348 = vsel %vm1123, %v5343, -inf
        %5349 = vmax.xlane.f32.xlu0 %v5348
        %v5350 = vpop.xlane.xlu0 %5349
        %v5351 = vsub.f32 %v5343, %v5350
        %v5352 = vmul.f32 %v5351, 1.442695
        %v5353 = vpow.pop %v5352
        %v5354 = vsel %vm1123, %v5353, 0.0
        %5355 = vadd.xlane.f32.xlu0 %v5354
        %v5356 = vpop.xlane.xlu0 %5355
        %v5357 = vpack.c.bf16 %v5353, %v5353
        %5359 = vrot.lane.b32.xlu0 %v5301, 96
        %v5360 = vpop.permute.xlu0 %5359
        %v5362 = vsel %vm1123, %v5357, 0
        %v5365 = vsel %vm1186, %v5360, 0
        %5367 = vmatprep.subr.bf16.mxu0 0
        %5368 = vmatpush1.bf16.msra.mxu0 0
        %5369 = vmatprep.subr.bf16.mxu0 0
        %5370 = vmatpush1.bf16.msra.mxu0 0
        %5371 = vmatprep.subr.bf16.mxu0 0
        %5372 = vmatpush1.bf16.msra.mxu0 0
        %5373 = vmatprep.subr.bf16.mxu0 0
        %5374 = vmatpush1.bf16.msra.mxu0 0
        %5375 = vmatprep.subr.bf16.mxu0 0
        %5376 = vmatpush1.bf16.msra.mxu0 0
        %5377 = vmatprep.subr.bf16.mxu0 0
        %5378 = vmatpush1.bf16.msra.mxu0 0
        %5379 = vmatprep.subr.bf16.mxu0 0
        %5380 = vmatpush1.bf16.msra.mxu0 0
        %5381 = vmatprep.subr.bf16.mxu0 0
        %5382 = vmatpush1.bf16.msra.mxu0 %v5365
        %5383 = vmatprep.subr.bf16.mxu0 0
        %5384 = vmatpush2.bf16.msra.mxu0 0
        %5385 = vmatprep.subr.bf16.mxu0 0
        %5386 = vmatpush2.bf16.msra.mxu0 0
        %5387 = vmatprep.subr.bf16.mxu0 0
        %5388 = vmatpush2.bf16.msra.mxu0 0
        %5389 = vmatprep.subr.bf16.mxu0 0
        %5390 = vmatpush2.bf16.msra.mxu0 0
        %5391 = vmatprep.subr.bf16.mxu0 0
        %5392 = vmatpush2.bf16.msra.mxu0 0
        %5393 = vmatprep.subr.bf16.mxu0 0
        %5394 = vmatpush2.bf16.msra.mxu0 0
        %5395 = vmatprep.subr.bf16.mxu0 0
        %5396 = vmatpush2.bf16.msra.mxu0 0
        %5397 = vmatprep.subr.bf16.mxu0 0
        %5398 = vmatpush2.bf16.msra.mxu0 0
        %5399 = vmatprep.mubr.bf16.mxu0 0
        %5400 = vmatmul.mubr.bf16.gmra.mxu0 %v5362
        %v5401 = vpop.f32.mrf.mxu0
        %v5402 = vadd.f32 0.0, %v5401
        %v5403 = vpop.f32.mrf.mxu0
        %v5404 = vpop.f32.mrf.mxu0
        %v5405 = vpop.f32.mrf.mxu0
        %5406 = vdwg.mxu0
        %v5407 = vrcp.pop %v5356
        %v5408 = vmul.f32 %v5402, %v5407
        %5410 = vrot.lane.b32.xlu0 %v5300, 120
        %v5411 = vpop.permute.xlu0 %5410
        %5412 = vrot.lane.b32.xlu0 %v5301, 120
        %v5413 = vpop.permute.xlu0 %5412
        %v5415 = vsel %vm1123, %v5411, 0
        %v5418 = vsel %vm1123, %v5413, 0
        %5420 = vmatprep.subr.bf16.mxu0 0
        %5421 = vmatpush1.bf16.xpose.msra.mxu0 0
        %5422 = vmatprep.subr.bf16.mxu0 0
        %5423 = vmatpush1.bf16.xpose.msra.mxu0 0
        %5424 = vmatprep.subr.bf16.mxu0 0
        %5425 = vmatpush1.bf16.xpose.msra.mxu0 0
        %5426 = vmatprep.subr.bf16.mxu0 0
        %5427 = vmatpush1.bf16.xpose.msra.mxu0 0
        %5428 = vmatprep.subr.bf16.mxu0 0
        %5429 = vmatpush1.bf16.xpose.msra.mxu0 0
        %5430 = vmatprep.subr.bf16.mxu0 0
        %5431 = vmatpush1.bf16.xpose.msra.mxu0 0
        %5432 = vmatprep.subr.bf16.mxu0 0
        %5433 = vmatpush1.bf16.xpose.msra.mxu0 0
        %5434 = vmatprep.subr.bf16.mxu0 0
        %5435 = vmatpush1.bf16.xpose.msra.mxu0 %v5418
        %5436 = vmatprep.subr.bf16.mxu0 0
        %5437 = vmatpush2.bf16.xpose.msra.mxu0 0
        %5438 = vmatprep.subr.bf16.mxu0 0
        %5439 = vmatpush2.bf16.xpose.msra.mxu0 0
        %5440 = vmatprep.subr.bf16.mxu0 0
        %5441 = vmatpush2.bf16.xpose.msra.mxu0 0
        %5442 = vmatprep.subr.bf16.mxu0 0
        %5443 = vmatpush2.bf16.xpose.msra.mxu0 0
        %5444 = vmatprep.subr.bf16.mxu0 0
        %5445 = vmatpush2.bf16.xpose.msra.mxu0 0
        %5446 = vmatprep.subr.bf16.mxu0 0
        %5447 = vmatpush2.bf16.xpose.msra.mxu0 0
        %5448 = vmatprep.subr.bf16.mxu0 0
        %5449 = vmatpush2.bf16.xpose.msra.mxu0 0
        %5450 = vmatprep.subr.bf16.mxu0 0
        %5451 = vmatpush2.bf16.xpose.msra.mxu0 0
        %5452 = vmatprep.mubr.bf16.mxu0 0
        %5453 = vmatmul.mubr.bf16.gmra.mxu0 %v5415
        %v5454 = vpop.f32.mrf.mxu0
        %v5455 = vadd.f32 %v891, %v5454
        %v5456 = vpop.f32.mrf.mxu0
        %v5457 = vpop.f32.mrf.mxu0
        %v5458 = vpop.f32.mrf.mxu0
        %5459 = vdwg.mxu0
        %v5460 = vsel %vm1123, %v5455, -inf
        %5461 = vmax.xlane.f32.xlu0 %v5460
        %v5462 = vpop.xlane.xlu0 %5461
        %v5463 = vsub.f32 %v5455, %v5462
        %v5464 = vmul.f32 %v5463, 1.442695
        %v5465 = vpow.pop %v5464
        %v5466 = vsel %vm1123, %v5465, 0.0
        %5467 = vadd.xlane.f32.xlu0 %v5466
        %v5468 = vpop.xlane.xlu0 %5467
        %v5469 = vpack.c.bf16 %v5465, %v5465
        %5470 = vrot.lane.b32.xlu0 %v5301, 88
        %v5471 = vpop.permute.xlu0 %5470
        %v5473 = vsel %vm1123, %v5469, 0
        %v5476 = vsel %vm1186, %v5471, 0
        %5478 = vmatprep.subr.bf16.mxu0 0
        %5479 = vmatpush1.bf16.msra.mxu0 0
        %5480 = vmatprep.subr.bf16.mxu0 0
        %5481 = vmatpush1.bf16.msra.mxu0 0
        %5482 = vmatprep.subr.bf16.mxu0 0
        %5483 = vmatpush1.bf16.msra.mxu0 0
        %5484 = vmatprep.subr.bf16.mxu0 0
        %5485 = vmatpush1.bf16.msra.mxu0 0
        %5486 = vmatprep.subr.bf16.mxu0 0
        %5487 = vmatpush1.bf16.msra.mxu0 0
        %5488 = vmatprep.subr.bf16.mxu0 0
        %5489 = vmatpush1.bf16.msra.mxu0 0
        %5490 = vmatprep.subr.bf16.mxu0 0
        %5491 = vmatpush1.bf16.msra.mxu0 0
        %5492 = vmatprep.subr.bf16.mxu0 0
        %5493 = vmatpush1.bf16.msra.mxu0 %v5476
        %5494 = vmatprep.subr.bf16.mxu0 0
        %5495 = vmatpush2.bf16.msra.mxu0 0
        %5496 = vmatprep.subr.bf16.mxu0 0
        %5497 = vmatpush2.bf16.msra.mxu0 0
        %5498 = vmatprep.subr.bf16.mxu0 0
        %5499 = vmatpush2.bf16.msra.mxu0 0
        %5500 = vmatprep.subr.bf16.mxu0 0
        %5501 = vmatpush2.bf16.msra.mxu0 0
        %5502 = vmatprep.subr.bf16.mxu0 0
        %5503 = vmatpush2.bf16.msra.mxu0 0
        %5504 = vmatprep.subr.bf16.mxu0 0
        %5505 = vmatpush2.bf16.msra.mxu0 0
        %5506 = vmatprep.subr.bf16.mxu0 0
        %5507 = vmatpush2.bf16.msra.mxu0 0
        %5508 = vmatprep.subr.bf16.mxu0 0
        %5509 = vmatpush2.bf16.msra.mxu0 0
        %5510 = vmatprep.mubr.bf16.mxu0 0
        %5511 = vmatmul.mubr.bf16.gmra.mxu0 %v5473
        %v5512 = vpop.f32.mrf.mxu0
        %v5513 = vadd.f32 0.0, %v5512
        %v5514 = vpop.f32.mrf.mxu0
        %v5515 = vpop.f32.mrf.mxu0
        %v5516 = vpop.f32.mrf.mxu0
        %5517 = vdwg.mxu0
        %v5518 = vrcp.pop %v5468
        %v5519 = vmul.f32 %v5513, %v5518
        %5520 = vrot.lane.b32.xlu0 %v5300, 112
        %v5521 = vpop.permute.xlu0 %5520
        %5522 = vrot.lane.b32.xlu0 %v5301, 112
        %v5523 = vpop.permute.xlu0 %5522
        %v5525 = vsel %vm1123, %v5521, 0
        %v5528 = vsel %vm1123, %v5523, 0
        %5530 = vmatprep.subr.bf16.mxu0 0
        %5531 = vmatpush1.bf16.xpose.msra.mxu0 0
        %5532 = vmatprep.subr.bf16.mxu0 0
        %5533 = vmatpush1.bf16.xpose.msra.mxu0 0
        %5534 = vmatprep.subr.bf16.mxu0 0
        %5535 = vmatpush1.bf16.xpose.msra.mxu0 0
        %5536 = vmatprep.subr.bf16.mxu0 0
        %5537 = vmatpush1.bf16.xpose.msra.mxu0 0
        %5538 = vmatprep.subr.bf16.mxu0 0
        %5539 = vmatpush1.bf16.xpose.msra.mxu0 0
        %5540 = vmatprep.subr.bf16.mxu0 0
        %5541 = vmatpush1.bf16.xpose.msra.mxu0 0
        %5542 = vmatprep.subr.bf16.mxu0 0
        %5543 = vmatpush1.bf16.xpose.msra.mxu0 0
        %5544 = vmatprep.subr.bf16.mxu0 0
        %5545 = vmatpush1.bf16.xpose.msra.mxu0 %v5528
        %5546 = vmatprep.subr.bf16.mxu0 0
        %5547 = vmatpush2.bf16.xpose.msra.mxu0 0
        %5548 = vmatprep.subr.bf16.mxu0 0
        %5549 = vmatpush2.bf16.xpose.msra.mxu0 0
        %5550 = vmatprep.subr.bf16.mxu0 0
        %5551 = vmatpush2.bf16.xpose.msra.mxu0 0
        %5552 = vmatprep.subr.bf16.mxu0 0
        %5553 = vmatpush2.bf16.xpose.msra.mxu0 0
        %5554 = vmatprep.subr.bf16.mxu0 0
        %5555 = vmatpush2.bf16.xpose.msra.mxu0 0
        %5556 = vmatprep.subr.bf16.mxu0 0
        %5557 = vmatpush2.bf16.xpose.msra.mxu0 0
        %5558 = vmatprep.subr.bf16.mxu0 0
        %5559 = vmatpush2.bf16.xpose.msra.mxu0 0
        %5560 = vmatprep.subr.bf16.mxu0 0
        %5561 = vmatpush2.bf16.xpose.msra.mxu0 0
        %5562 = vmatprep.mubr.bf16.mxu0 0
        %5563 = vmatmul.mubr.bf16.gmra.mxu0 %v5525
        %v5564 = vpop.f32.mrf.mxu0
        %v5565 = vadd.f32 %v891, %v5564
        %v5566 = vpop.f32.mrf.mxu0
        %v5567 = vpop.f32.mrf.mxu0
        %v5568 = vpop.f32.mrf.mxu0
        %5569 = vdwg.mxu0
        %v5570 = vsel %vm1123, %v5565, -inf
        %5571 = vmax.xlane.f32.xlu0 %v5570
        %v5572 = vpop.xlane.xlu0 %5571
        %v5573 = vsub.f32 %v5565, %v5572
        %v5574 = vmul.f32 %v5573, 1.442695
        %v5575 = vpow.pop %v5574
        %v5576 = vsel %vm1123, %v5575, 0.0
        %5577 = vadd.xlane.f32.xlu0 %v5576
        %v5578 = vpop.xlane.xlu0 %5577
        %v5579 = vpack.c.bf16 %v5575, %v5575
        %5580 = vrot.lane.b32.xlu0 %v5301, 80
        %v5581 = vpop.permute.xlu0 %5580
        %v5583 = vsel %vm1123, %v5579, 0
        %v5586 = vsel %vm1186, %v5581, 0
        %5588 = vmatprep.subr.bf16.mxu0 0
        %5589 = vmatpush1.bf16.msra.mxu0 0
        %5590 = vmatprep.subr.bf16.mxu0 0
        %5591 = vmatpush1.bf16.msra.mxu0 0
        %5592 = vmatprep.subr.bf16.mxu0 0
        %5593 = vmatpush1.bf16.msra.mxu0 0
        %5594 = vmatprep.subr.bf16.mxu0 0
        %5595 = vmatpush1.bf16.msra.mxu0 0
        %5596 = vmatprep.subr.bf16.mxu0 0
        %5597 = vmatpush1.bf16.msra.mxu0 0
        %5598 = vmatprep.subr.bf16.mxu0 0
        %5599 = vmatpush1.bf16.msra.mxu0 0
        %5600 = vmatprep.subr.bf16.mxu0 0
        %5601 = vmatpush1.bf16.msra.mxu0 0
        %5602 = vmatprep.subr.bf16.mxu0 0
        %5603 = vmatpush1.bf16.msra.mxu0 %v5586
        %5604 = vmatprep.subr.bf16.mxu0 0
        %5605 = vmatpush2.bf16.msra.mxu0 0
        %5606 = vmatprep.subr.bf16.mxu0 0
        %5607 = vmatpush2.bf16.msra.mxu0 0
        %5608 = vmatprep.subr.bf16.mxu0 0
        %5609 = vmatpush2.bf16.msra.mxu0 0
        %5610 = vmatprep.subr.bf16.mxu0 0
        %5611 = vmatpush2.bf16.msra.mxu0 0
        %5612 = vmatprep.subr.bf16.mxu0 0
        %5613 = vmatpush2.bf16.msra.mxu0 0
        %5614 = vmatprep.subr.bf16.mxu0 0
        %5615 = vmatpush2.bf16.msra.mxu0 0
        %5616 = vmatprep.subr.bf16.mxu0 0
        %5617 = vmatpush2.bf16.msra.mxu0 0
        %5618 = vmatprep.subr.bf16.mxu0 0
        %5619 = vmatpush2.bf16.msra.mxu0 0
        %5620 = vmatprep.mubr.bf16.mxu0 0
        %5621 = vmatmul.mubr.bf16.gmra.mxu0 %v5583
        %v5622 = vpop.f32.mrf.mxu0
        %v5623 = vadd.f32 0.0, %v5622
        %v5624 = vpop.f32.mrf.mxu0
        %v5625 = vpop.f32.mrf.mxu0
        %v5626 = vpop.f32.mrf.mxu0
        %5627 = vdwg.mxu0
        %v5628 = vrcp.pop %v5578
        %v5629 = vmul.f32 %v5623, %v5628
        %5630 = vrot.lane.b32.xlu0 %v5300, 104
        %v5631 = vpop.permute.xlu0 %5630
        %5632 = vrot.lane.b32.xlu0 %v5301, 104
        %v5633 = vpop.permute.xlu0 %5632
        %v5635 = vsel %vm1123, %v5631, 0
        %v5638 = vsel %vm1123, %v5633, 0
        %5640 = vmatprep.subr.bf16.mxu0 0
        %5641 = vmatpush1.bf16.xpose.msra.mxu0 0
        %5642 = vmatprep.subr.bf16.mxu0 0
        %5643 = vmatpush1.bf16.xpose.msra.mxu0 0
        %5644 = vmatprep.subr.bf16.mxu0 0
        %5645 = vmatpush1.bf16.xpose.msra.mxu0 0
        %5646 = vmatprep.subr.bf16.mxu0 0
        %5647 = vmatpush1.bf16.xpose.msra.mxu0 0
        %5648 = vmatprep.subr.bf16.mxu0 0
        %5649 = vmatpush1.bf16.xpose.msra.mxu0 0
        %5650 = vmatprep.subr.bf16.mxu0 0
        %5651 = vmatpush1.bf16.xpose.msra.mxu0 0
        %5652 = vmatprep.subr.bf16.mxu0 0
        %5653 = vmatpush1.bf16.xpose.msra.mxu0 0
        %5654 = vmatprep.subr.bf16.mxu0 0
        %5655 = vmatpush1.bf16.xpose.msra.mxu0 %v5638
        %5656 = vmatprep.subr.bf16.mxu0 0
        %5657 = vmatpush2.bf16.xpose.msra.mxu0 0
        %5658 = vmatprep.subr.bf16.mxu0 0
        %5659 = vmatpush2.bf16.xpose.msra.mxu0 0
        %5660 = vmatprep.subr.bf16.mxu0 0
        %5661 = vmatpush2.bf16.xpose.msra.mxu0 0
        %5662 = vmatprep.subr.bf16.mxu0 0
        %5663 = vmatpush2.bf16.xpose.msra.mxu0 0
        %5664 = vmatprep.subr.bf16.mxu0 0
        %5665 = vmatpush2.bf16.xpose.msra.mxu0 0
        %5666 = vmatprep.subr.bf16.mxu0 0
        %5667 = vmatpush2.bf16.xpose.msra.mxu0 0
        %5668 = vmatprep.subr.bf16.mxu0 0
        %5669 = vmatpush2.bf16.xpose.msra.mxu0 0
        %5670 = vmatprep.subr.bf16.mxu0 0
        %5671 = vmatpush2.bf16.xpose.msra.mxu0 0
        %5672 = vmatprep.mubr.bf16.mxu0 0
        %5673 = vmatmul.mubr.bf16.gmra.mxu0 %v5635
        %v5674 = vpop.f32.mrf.mxu0
        %v5675 = vadd.f32 %v891, %v5674
        %v5676 = vpop.f32.mrf.mxu0
        %v5677 = vpop.f32.mrf.mxu0
        %v5678 = vpop.f32.mrf.mxu0
        %5679 = vdwg.mxu0
        %v5680 = vsel %vm1123, %v5675, -inf
        %5681 = vmax.xlane.f32.xlu0 %v5680
        %v5682 = vpop.xlane.xlu0 %5681
        %v5683 = vsub.f32 %v5675, %v5682
        %v5684 = vmul.f32 %v5683, 1.442695
        %v5685 = vpow.pop %v5684
        %v5686 = vsel %vm1123, %v5685, 0.0
        %5687 = vadd.xlane.f32.xlu0 %v5686
        %v5688 = vpop.xlane.xlu0 %5687
        %v5689 = vpack.c.bf16 %v5685, %v5685
        %5690 = vrot.lane.b32.xlu0 %v5301, 72
        %v5691 = vpop.permute.xlu0 %5690
        %v5693 = vsel %vm1123, %v5689, 0
        %v5696 = vsel %vm1186, %v5691, 0
        %5698 = vmatprep.subr.bf16.mxu0 0
        %5699 = vmatpush1.bf16.msra.mxu0 0
        %5700 = vmatprep.subr.bf16.mxu0 0
        %5701 = vmatpush1.bf16.msra.mxu0 0
        %5702 = vmatprep.subr.bf16.mxu0 0
        %5703 = vmatpush1.bf16.msra.mxu0 0
        %5704 = vmatprep.subr.bf16.mxu0 0
        %5705 = vmatpush1.bf16.msra.mxu0 0
        %5706 = vmatprep.subr.bf16.mxu0 0
        %5707 = vmatpush1.bf16.msra.mxu0 0
        %5708 = vmatprep.subr.bf16.mxu0 0
        %5709 = vmatpush1.bf16.msra.mxu0 0
        %5710 = vmatprep.subr.bf16.mxu0 0
        %5711 = vmatpush1.bf16.msra.mxu0 0
        %5712 = vmatprep.subr.bf16.mxu0 0
        %5713 = vmatpush1.bf16.msra.mxu0 %v5696
        %5714 = vmatprep.subr.bf16.mxu0 0
        %5715 = vmatpush2.bf16.msra.mxu0 0
        %5716 = vmatprep.subr.bf16.mxu0 0
        %5717 = vmatpush2.bf16.msra.mxu0 0
        %5718 = vmatprep.subr.bf16.mxu0 0
        %5719 = vmatpush2.bf16.msra.mxu0 0
        %5720 = vmatprep.subr.bf16.mxu0 0
        %5721 = vmatpush2.bf16.msra.mxu0 0
        %5722 = vmatprep.subr.bf16.mxu0 0
        %5723 = vmatpush2.bf16.msra.mxu0 0
        %5724 = vmatprep.subr.bf16.mxu0 0
        %5725 = vmatpush2.bf16.msra.mxu0 0
        %5726 = vmatprep.subr.bf16.mxu0 0
        %5727 = vmatpush2.bf16.msra.mxu0 0
        %5728 = vmatprep.subr.bf16.mxu0 0
        %5729 = vmatpush2.bf16.msra.mxu0 0
        %5730 = vmatprep.mubr.bf16.mxu0 0
        %5731 = vmatmul.mubr.bf16.gmra.mxu0 %v5693
        %v5732 = vpop.f32.mrf.mxu0
        %v5733 = vadd.f32 0.0, %v5732
        %v5734 = vpop.f32.mrf.mxu0
        %v5735 = vpop.f32.mrf.mxu0
        %v5736 = vpop.f32.mrf.mxu0
        %5737 = vdwg.mxu0
        %v5738 = vrcp.pop %v5688
        %v5739 = vmul.f32 %v5733, %v5738
        %5741 = vrot.lane.b32.xlu0 %v5519, 8
        %v5742 = vpop.permute.xlu0 %5741
        %5745 = vrot.lane.b32.xlu0 %v5629, 16
        %v5746 = vpop.permute.xlu0 %5745
        %5749 = vrot.lane.b32.xlu0 %v5739, 24
        %v5750 = vpop.permute.xlu0 %5749
        %v5752 = vsel %vm1123, %v5408, %v5742
        %v5753 = vsel %vm1576, %v5752, %v5746
        %v5754 = vsel %vm1578, %v5753, %v5750
        %v5755 = vpack.c.bf16 %v5754, %v5754
        %v5757 = vlaneseq
        %v5758 = vshrl.u32 %v5757, 7
        %v5759 = vsub.s32 0, %v5758
        %v5760 = vrot.slane %v5110, %v5759
        %v5766 = vunpack.c.l.b16 %v5105
        %v5767 = vunpack.c.l.b16 %v5106
        %v5768 = vunpack.c.l.b16 %v5107
        %v5769 = vunpack.c.l.b16 %v5108
        %v5770 = vpack.c.b16 %v5767, %v5766
        %v5771 = vpack.c.b16 %v5769, %v5768
        %v5775 = vsel %vm1599, %v5755, 0
        %5777 = vmatprep.subr.bf16.mxu0 0
        %5778 = vmatpush1.bf16.msra.mxu0 0
        %5779 = vmatprep.subr.bf16.mxu0 0
        %5780 = vmatpush1.bf16.msra.mxu0 0
        %5781 = vmatprep.subr.bf16.mxu0 0
        %5782 = vmatpush1.bf16.msra.mxu0 0
        %5783 = vmatprep.subr.bf16.mxu0 0
        %5784 = vmatpush1.bf16.msra.mxu0 0
        %5785 = vmatprep.subr.bf16.mxu0 0
        %5786 = vmatpush1.bf16.msra.mxu0 0
        %5787 = vmatprep.subr.bf16.mxu0 0
        %5788 = vmatpush1.bf16.msra.mxu0 0
        %5789 = vmatprep.subr.bf16.mxu0 0
        %5790 = vmatpush1.bf16.msra.mxu0 %v5771
        %5791 = vmatprep.subr.bf16.mxu0 0
        %5792 = vmatpush1.bf16.msra.mxu0 %v5770
        %5793 = vmatprep.subr.bf16.mxu0 0
        %5794 = vmatpush2.bf16.msra.mxu0 0
        %5795 = vmatprep.subr.bf16.mxu0 0
        %5796 = vmatpush2.bf16.msra.mxu0 0
        %5797 = vmatprep.subr.bf16.mxu0 0
        %5798 = vmatpush2.bf16.msra.mxu0 0
        %5799 = vmatprep.subr.bf16.mxu0 0
        %5800 = vmatpush2.bf16.msra.mxu0 0
        %5801 = vmatprep.subr.bf16.mxu0 0
        %5802 = vmatpush2.bf16.msra.mxu0 0
        %5803 = vmatprep.subr.bf16.mxu0 0
        %5804 = vmatpush2.bf16.msra.mxu0 0
        %5805 = vmatprep.subr.bf16.mxu0 0
        %5806 = vmatpush2.bf16.msra.mxu0 0
        %5807 = vmatprep.subr.bf16.mxu0 0
        %5808 = vmatpush2.bf16.msra.mxu0 0
        %5809 = vmatprep.mubr.bf16.mxu0 0
        %5810 = vmatmul.mubr.bf16.gmra.mxu0 %v5775
        %v5811 = vpop.f32.mrf.mxu0
        %v5812 = vadd.f32 %v5760, %v5811
        %v5813 = vpop.f32.mrf.mxu0
        %v5814 = vpop.f32.mrf.mxu0
        %v5815 = vpop.f32.mrf.mxu0
        %5816 = vdwg.mxu0
        %s5817 = scalar_lea.vmem %s10, 1
        %v5818 = vld [vmem:[%s5817] sm:$0x1]
        %s5819 = scalar_lea.vmem %s11, 1
        %v5820 = vld [vmem:[%s5819] sm:$0x1]
        %5821 = vadd.xlane.f32.xlu0 %v5812
        %v5822 = vpop.xlane.xlu0 %5821
        %v5823 = vmul.f32 %v5822, 0.03125
        %v5824 = vsub.f32 %v5812, %v5823
        %v5825 = vmul.f32 %v5824, %v1649
        %v5826 = vmul.f32 %v5825, %v5825
        %5827 = vadd.xlane.f32.xlu0 %v5826
        %v5828 = vpop.xlane.xlu0 %5827
        %v5829 = vmul.f32 %v5828, 0.032258064
        %v5830 = vrsqrt.pop %v5829
        %v5831 = vmul.f32 %v5829, %v5830
        %vm5832 = vcmp.eq.f32.partialorder %v5829, inf
        %v5833 = vsel %vm5832, %v5829, %v5831
        %vm5834 = vcmp.eq.f32.partialorder %v5829, 0.0
        %v5835 = vand.u32 %v5829, 2147483648
        %v5836 = vsel %vm5834, %v5835, %v5833
        %v5837 = vadd.f32 %v5836, 1e-06
        %v5838 = vrcp.pop %v5837
        %v5839 = vmul.f32 %v5825, %v5838
        %v5841 = vlaneseq
        %v5842 = vshrl.u32 %v5841, 7
        %v5843 = vsub.s32 0, %v5842
        %v5844 = vrot.slane %v5818, %v5843
        %v5846 = vmul.f32 %v5844, %v5839
        %v5848 = vlaneseq
        %v5849 = vshrl.u32 %v5848, 7
        %v5850 = vsub.s32 0, %v5849
        %v5851 = vrot.slane %v5820, %v5850
        %v5853 = vadd.f32 %v5846, %v5851
        %v5854 = vadd.f32 %v5812, %v5853
        %s5855 = scalar_lea.vmem %s12, 64
        %v5856 = vld [vmem:[%s5855] sm:$0xf]
        %v5857 = vld [vmem:[%s5855 + $0x4] sm:$0xf]
        %v5858 = vld [vmem:[%s5855 + $0x8] sm:$0xf]
        %v5859 = vld [vmem:[%s5855 + $0xc] sm:$0xf]
        %v5860 = vld [vmem:[%s5855 + $0x10] sm:$0xf]
        %v5861 = vld [vmem:[%s5855 + $0x14] sm:$0xf]
        %v5862 = vld [vmem:[%s5855 + $0x18] sm:$0xf]
        %v5863 = vld [vmem:[%s5855 + $0x1c] sm:$0xf]
        %v5864 = vld [vmem:[%s5855 + $0x20] sm:$0xf]
        %v5865 = vld [vmem:[%s5855 + $0x24] sm:$0xf]
        %v5866 = vld [vmem:[%s5855 + $0x28] sm:$0xf]
        %v5867 = vld [vmem:[%s5855 + $0x2c] sm:$0xf]
        %v5868 = vld [vmem:[%s5855 + $0x30] sm:$0xf]
        %v5869 = vld [vmem:[%s5855 + $0x34] sm:$0xf]
        %v5870 = vld [vmem:[%s5855 + $0x38] sm:$0xf]
        %v5871 = vld [vmem:[%s5855 + $0x3c] sm:$0xf]
        %s5872 = scalar_lea.vmem %s13, 1
        %v5873 = vld [vmem:[%s5872] sm:$0x1]
        %s5874 = scalar_lea.vmem %s14, 64
        %v5875 = vld [vmem:[%s5874] sm:$0xf]
        %v5876 = vld [vmem:[%s5874 + $0x4] sm:$0xf]
        %v5877 = vld [vmem:[%s5874 + $0x8] sm:$0xf]
        %v5878 = vld [vmem:[%s5874 + $0xc] sm:$0xf]
        %v5879 = vld [vmem:[%s5874 + $0x10] sm:$0xf]
        %v5880 = vld [vmem:[%s5874 + $0x14] sm:$0xf]
        %v5881 = vld [vmem:[%s5874 + $0x18] sm:$0xf]
        %v5882 = vld [vmem:[%s5874 + $0x1c] sm:$0xf]
        %v5883 = vld [vmem:[%s5874 + $0x20] sm:$0xf]
        %v5884 = vld [vmem:[%s5874 + $0x24] sm:$0xf]
        %v5885 = vld [vmem:[%s5874 + $0x28] sm:$0xf]
        %v5886 = vld [vmem:[%s5874 + $0x2c] sm:$0xf]
        %v5887 = vld [vmem:[%s5874 + $0x30] sm:$0xf]
        %v5888 = vld [vmem:[%s5874 + $0x34] sm:$0xf]
        %v5889 = vld [vmem:[%s5874 + $0x38] sm:$0xf]
        %v5890 = vld [vmem:[%s5874 + $0x3c] sm:$0xf]
        %s5891 = scalar_lea.vmem %s15, 1
        %v5892 = vld [vmem:[%s5891] sm:$0x1]
        %s5893 = scalar_lea.vmem %s16, 16
        %v5894 = vld [vmem:[%s5893] sm:$0xf]
        %v5895 = vld [vmem:[%s5893 + $0x4] sm:$0xf]
        %v5896 = vld [vmem:[%s5893 + $0x8] sm:$0xf]
        %v5897 = vld [vmem:[%s5893 + $0xc] sm:$0xf]
        %s5898 = scalar_lea.vmem %s17, 1
        %v5899 = vld [vmem:[%s5898] sm:$0x1]
        %v5900 = vpack.c.bf16 %v5854, %v5854
        %v5902 = vlaneseq
        %v5903 = vshrl.u32 %v5902, 7
        %v5904 = vsub.s32 0, %v5903
        %v5905 = vrot.slane %v5873, %v5904
        %v5923 = vunpack.c.l.b16 %v5856
        %v5924 = vunpack.c.l.b16 %v5857
        %v5925 = vunpack.c.l.b16 %v5858
        %v5926 = vunpack.c.l.b16 %v5859
        %v5927 = vunpack.c.l.b16 %v5860
        %v5928 = vunpack.c.l.b16 %v5861
        %v5929 = vunpack.c.l.b16 %v5862
        %v5930 = vunpack.c.l.b16 %v5863
        %v5931 = vunpack.c.l.b16 %v5864
        %v5932 = vunpack.c.l.b16 %v5865
        %v5933 = vunpack.c.l.b16 %v5866
        %v5934 = vunpack.c.l.b16 %v5867
        %v5935 = vunpack.c.l.b16 %v5868
        %v5936 = vunpack.c.l.b16 %v5869
        %v5937 = vunpack.c.l.b16 %v5870
        %v5938 = vunpack.c.l.b16 %v5871
        %v5939 = vpack.c.b16 %v5924, %v5923
        %v5940 = vpack.c.b16 %v5926, %v5925
        %v5941 = vpack.c.b16 %v5928, %v5927
        %v5942 = vpack.c.b16 %v5930, %v5929
        %v5943 = vpack.c.b16 %v5932, %v5931
        %v5944 = vpack.c.b16 %v5934, %v5933
        %v5945 = vpack.c.b16 %v5936, %v5935
        %v5946 = vpack.c.b16 %v5938, %v5937
        %5955 = vmatprep.subr.bf16.mxu0 0
        %5956 = vmatpush1.bf16.msra.mxu0 %v5946
        %5957 = vmatprep.subr.bf16.mxu0 0
        %5958 = vmatpush1.bf16.msra.mxu0 %v5945
        %5959 = vmatprep.subr.bf16.mxu0 0
        %5960 = vmatpush1.bf16.msra.mxu0 %v5944
        %5961 = vmatprep.subr.bf16.mxu0 0
        %5962 = vmatpush1.bf16.msra.mxu0 %v5943
        %5963 = vmatprep.subr.bf16.mxu0 0
        %5964 = vmatpush1.bf16.msra.mxu0 %v5942
        %5965 = vmatprep.subr.bf16.mxu0 0
        %5966 = vmatpush1.bf16.msra.mxu0 %v5941
        %5967 = vmatprep.subr.bf16.mxu0 0
        %5968 = vmatpush1.bf16.msra.mxu0 %v5940
        %5969 = vmatprep.subr.bf16.mxu0 0
        %5970 = vmatpush1.bf16.msra.mxu0 %v5939
        %5971 = vmatprep.subr.bf16.mxu0 0
        %5972 = vmatpush2.bf16.msra.mxu0 0
        %5973 = vmatprep.subr.bf16.mxu0 0
        %5974 = vmatpush2.bf16.msra.mxu0 0
        %5975 = vmatprep.subr.bf16.mxu0 0
        %5976 = vmatpush2.bf16.msra.mxu0 0
        %5977 = vmatprep.subr.bf16.mxu0 0
        %5978 = vmatpush2.bf16.msra.mxu0 0
        %5979 = vmatprep.subr.bf16.mxu0 0
        %5980 = vmatpush2.bf16.msra.mxu0 0
        %5981 = vmatprep.subr.bf16.mxu0 0
        %5982 = vmatpush2.bf16.msra.mxu0 0
        %5983 = vmatprep.subr.bf16.mxu0 0
        %5984 = vmatpush2.bf16.msra.mxu0 0
        %5985 = vmatprep.subr.bf16.mxu0 0
        %5986 = vmatpush2.bf16.msra.mxu0 0
        %5987 = vmatprep.mubr.bf16.mxu0 0
        %5988 = vmatmul.mubr.bf16.gmra.mxu0 %v5900
        %v5989 = vpop.f32.mrf.mxu0
        %v5990 = vadd.f32 %v5905, %v5989
        %v5991 = vpop.f32.mrf.mxu0
        %v5992 = vpop.f32.mrf.mxu0
        %v5993 = vpop.f32.mrf.mxu0
        %5994 = vdwg.mxu0
        %v5996 = vlaneseq
        %v5997 = vshrl.u32 %v5996, 7
        %v5998 = vsub.s32 0, %v5997
        %v5999 = vrot.slane %v5892, %v5998
        %v6017 = vunpack.c.l.b16 %v5875
        %v6018 = vunpack.c.l.b16 %v5876
        %v6019 = vunpack.c.l.b16 %v5877
        %v6020 = vunpack.c.l.b16 %v5878
        %v6021 = vunpack.c.l.b16 %v5879
        %v6022 = vunpack.c.l.b16 %v5880
        %v6023 = vunpack.c.l.b16 %v5881
        %v6024 = vunpack.c.l.b16 %v5882
        %v6025 = vunpack.c.l.b16 %v5883
        %v6026 = vunpack.c.l.b16 %v5884
        %v6027 = vunpack.c.l.b16 %v5885
        %v6028 = vunpack.c.l.b16 %v5886
        %v6029 = vunpack.c.l.b16 %v5887
        %v6030 = vunpack.c.l.b16 %v5888
        %v6031 = vunpack.c.l.b16 %v5889
        %v6032 = vunpack.c.l.b16 %v5890
        %v6033 = vpack.c.b16 %v6018, %v6017
        %v6034 = vpack.c.b16 %v6020, %v6019
        %v6035 = vpack.c.b16 %v6022, %v6021
        %v6036 = vpack.c.b16 %v6024, %v6023
        %v6037 = vpack.c.b16 %v6026, %v6025
        %v6038 = vpack.c.b16 %v6028, %v6027
        %v6039 = vpack.c.b16 %v6030, %v6029
        %v6040 = vpack.c.b16 %v6032, %v6031
        %6049 = vmatprep.subr.bf16.mxu0 0
        %6050 = vmatpush1.bf16.msra.mxu0 %v6040
        %6051 = vmatprep.subr.bf16.mxu0 0
        %6052 = vmatpush1.bf16.msra.mxu0 %v6039
        %6053 = vmatprep.subr.bf16.mxu0 0
        %6054 = vmatpush1.bf16.msra.mxu0 %v6038
        %6055 = vmatprep.subr.bf16.mxu0 0
        %6056 = vmatpush1.bf16.msra.mxu0 %v6037
        %6057 = vmatprep.subr.bf16.mxu0 0
        %6058 = vmatpush1.bf16.msra.mxu0 %v6036
        %6059 = vmatprep.subr.bf16.mxu0 0
        %6060 = vmatpush1.bf16.msra.mxu0 %v6035
        %6061 = vmatprep.subr.bf16.mxu0 0
        %6062 = vmatpush1.bf16.msra.mxu0 %v6034
        %6063 = vmatprep.subr.bf16.mxu0 0
        %6064 = vmatpush1.bf16.msra.mxu0 %v6033
        %6065 = vmatprep.subr.bf16.mxu0 0
        %6066 = vmatpush2.bf16.msra.mxu0 0
        %6067 = vmatprep.subr.bf16.mxu0 0
        %6068 = vmatpush2.bf16.msra.mxu0 0
        %6069 = vmatprep.subr.bf16.mxu0 0
        %6070 = vmatpush2.bf16.msra.mxu0 0
        %6071 = vmatprep.subr.bf16.mxu0 0
        %6072 = vmatpush2.bf16.msra.mxu0 0
        %6073 = vmatprep.subr.bf16.mxu0 0
        %6074 = vmatpush2.bf16.msra.mxu0 0
        %6075 = vmatprep.subr.bf16.mxu0 0
        %6076 = vmatpush2.bf16.msra.mxu0 0
        %6077 = vmatprep.subr.bf16.mxu0 0
        %6078 = vmatpush2.bf16.msra.mxu0 0
        %6079 = vmatprep.subr.bf16.mxu0 0
        %6080 = vmatpush2.bf16.msra.mxu0 0
        %6081 = vmatprep.mubr.bf16.mxu0 0
        %6082 = vmatmul.mubr.bf16.gmra.mxu0 %v1818
        %v6083 = vpop.f32.mrf.mxu0
        %v6084 = vadd.f32 %v5999, %v6083
        %v6085 = vpop.f32.mrf.mxu0
        %v6086 = vpop.f32.mrf.mxu0
        %v6087 = vpop.f32.mrf.mxu0
        %6088 = vdwg.mxu0
        %v6089 = vpack.c.bf16 %v5990, %v5990
        %v6090 = vpack.c.bf16 %v6084, %v6084
        %v6092 = vsel %vm1123, %v6089, 0
        %v6095 = vsel %vm1123, %v6090, 0
        %6097 = vmatprep.subr.bf16.mxu0 0
        %6098 = vmatpush1.bf16.xpose.msra.mxu0 0
        %6099 = vmatprep.subr.bf16.mxu0 0
        %6100 = vmatpush1.bf16.xpose.msra.mxu0 0
        %6101 = vmatprep.subr.bf16.mxu0 0
        %6102 = vmatpush1.bf16.xpose.msra.mxu0 0
        %6103 = vmatprep.subr.bf16.mxu0 0
        %6104 = vmatpush1.bf16.xpose.msra.mxu0 0
        %6105 = vmatprep.subr.bf16.mxu0 0
        %6106 = vmatpush1.bf16.xpose.msra.mxu0 0
        %6107 = vmatprep.subr.bf16.mxu0 0
        %6108 = vmatpush1.bf16.xpose.msra.mxu0 0
        %6109 = vmatprep.subr.bf16.mxu0 0
        %6110 = vmatpush1.bf16.xpose.msra.mxu0 0
        %6111 = vmatprep.subr.bf16.mxu0 0
        %6112 = vmatpush1.bf16.xpose.msra.mxu0 %v6095
        %6113 = vmatprep.subr.bf16.mxu0 0
        %6114 = vmatpush2.bf16.xpose.msra.mxu0 0
        %6115 = vmatprep.subr.bf16.mxu0 0
        %6116 = vmatpush2.bf16.xpose.msra.mxu0 0
        %6117 = vmatprep.subr.bf16.mxu0 0
        %6118 = vmatpush2.bf16.xpose.msra.mxu0 0
        %6119 = vmatprep.subr.bf16.mxu0 0
        %6120 = vmatpush2.bf16.xpose.msra.mxu0 0
        %6121 = vmatprep.subr.bf16.mxu0 0
        %6122 = vmatpush2.bf16.xpose.msra.mxu0 0
        %6123 = vmatprep.subr.bf16.mxu0 0
        %6124 = vmatpush2.bf16.xpose.msra.mxu0 0
        %6125 = vmatprep.subr.bf16.mxu0 0
        %6126 = vmatpush2.bf16.xpose.msra.mxu0 0
        %6127 = vmatprep.subr.bf16.mxu0 0
        %6128 = vmatpush2.bf16.xpose.msra.mxu0 0
        %6129 = vmatprep.mubr.bf16.mxu0 0
        %6130 = vmatmul.mubr.bf16.gmra.mxu0 %v6092
        %v6131 = vpop.f32.mrf.mxu0
        %v6132 = vadd.f32 %v892, %v6131
        %v6133 = vpop.f32.mrf.mxu0
        %v6134 = vpop.f32.mrf.mxu0
        %v6135 = vpop.f32.mrf.mxu0
        %6136 = vdwg.mxu0
        %v6137 = vsel %vm1123, %v6132, -inf
        %6138 = vmax.xlane.f32.xlu0 %v6137
        %v6139 = vpop.xlane.xlu0 %6138
        %v6140 = vsub.f32 %v6132, %v6139
        %v6141 = vmul.f32 %v6140, 1.442695
        %v6142 = vpow.pop %v6141
        %v6143 = vsel %vm1123, %v6142, 0.0
        %6144 = vadd.xlane.f32.xlu0 %v6143
        %v6145 = vpop.xlane.xlu0 %6144
        %v6146 = vpack.c.bf16 %v6142, %v6142
        %6148 = vrot.lane.b32.xlu0 %v6090, 96
        %v6149 = vpop.permute.xlu0 %6148
        %v6151 = vsel %vm1123, %v6146, 0
        %v6154 = vsel %vm1186, %v6149, 0
        %6156 = vmatprep.subr.bf16.mxu0 0
        %6157 = vmatpush1.bf16.msra.mxu0 0
        %6158 = vmatprep.subr.bf16.mxu0 0
        %6159 = vmatpush1.bf16.msra.mxu0 0
        %6160 = vmatprep.subr.bf16.mxu0 0
        %6161 = vmatpush1.bf16.msra.mxu0 0
        %6162 = vmatprep.subr.bf16.mxu0 0
        %6163 = vmatpush1.bf16.msra.mxu0 0
        %6164 = vmatprep.subr.bf16.mxu0 0
        %6165 = vmatpush1.bf16.msra.mxu0 0
        %6166 = vmatprep.subr.bf16.mxu0 0
        %6167 = vmatpush1.bf16.msra.mxu0 0
        %6168 = vmatprep.subr.bf16.mxu0 0
        %6169 = vmatpush1.bf16.msra.mxu0 0
        %6170 = vmatprep.subr.bf16.mxu0 0
        %6171 = vmatpush1.bf16.msra.mxu0 %v6154
        %6172 = vmatprep.subr.bf16.mxu0 0
        %6173 = vmatpush2.bf16.msra.mxu0 0
        %6174 = vmatprep.subr.bf16.mxu0 0
        %6175 = vmatpush2.bf16.msra.mxu0 0
        %6176 = vmatprep.subr.bf16.mxu0 0
        %6177 = vmatpush2.bf16.msra.mxu0 0
        %6178 = vmatprep.subr.bf16.mxu0 0
        %6179 = vmatpush2.bf16.msra.mxu0 0
        %6180 = vmatprep.subr.bf16.mxu0 0
        %6181 = vmatpush2.bf16.msra.mxu0 0
        %6182 = vmatprep.subr.bf16.mxu0 0
        %6183 = vmatpush2.bf16.msra.mxu0 0
        %6184 = vmatprep.subr.bf16.mxu0 0
        %6185 = vmatpush2.bf16.msra.mxu0 0
        %6186 = vmatprep.subr.bf16.mxu0 0
        %6187 = vmatpush2.bf16.msra.mxu0 0
        %6188 = vmatprep.mubr.bf16.mxu0 0
        %6189 = vmatmul.mubr.bf16.gmra.mxu0 %v6151
        %v6190 = vpop.f32.mrf.mxu0
        %v6191 = vadd.f32 0.0, %v6190
        %v6192 = vpop.f32.mrf.mxu0
        %v6193 = vpop.f32.mrf.mxu0
        %v6194 = vpop.f32.mrf.mxu0
        %6195 = vdwg.mxu0
        %v6196 = vrcp.pop %v6145
        %v6197 = vmul.f32 %v6191, %v6196
        %6199 = vrot.lane.b32.xlu0 %v6089, 120
        %v6200 = vpop.permute.xlu0 %6199
        %6201 = vrot.lane.b32.xlu0 %v6090, 120
        %v6202 = vpop.permute.xlu0 %6201
        %v6204 = vsel %vm1123, %v6200, 0
        %v6207 = vsel %vm1123, %v6202, 0
        %6209 = vmatprep.subr.bf16.mxu0 0
        %6210 = vmatpush1.bf16.xpose.msra.mxu0 0
        %6211 = vmatprep.subr.bf16.mxu0 0
        %6212 = vmatpush1.bf16.xpose.msra.mxu0 0
        %6213 = vmatprep.subr.bf16.mxu0 0
        %6214 = vmatpush1.bf16.xpose.msra.mxu0 0
        %6215 = vmatprep.subr.bf16.mxu0 0
        %6216 = vmatpush1.bf16.xpose.msra.mxu0 0
        %6217 = vmatprep.subr.bf16.mxu0 0
        %6218 = vmatpush1.bf16.xpose.msra.mxu0 0
        %6219 = vmatprep.subr.bf16.mxu0 0
        %6220 = vmatpush1.bf16.xpose.msra.mxu0 0
        %6221 = vmatprep.subr.bf16.mxu0 0
        %6222 = vmatpush1.bf16.xpose.msra.mxu0 0
        %6223 = vmatprep.subr.bf16.mxu0 0
        %6224 = vmatpush1.bf16.xpose.msra.mxu0 %v6207
        %6225 = vmatprep.subr.bf16.mxu0 0
        %6226 = vmatpush2.bf16.xpose.msra.mxu0 0
        %6227 = vmatprep.subr.bf16.mxu0 0
        %6228 = vmatpush2.bf16.xpose.msra.mxu0 0
        %6229 = vmatprep.subr.bf16.mxu0 0
        %6230 = vmatpush2.bf16.xpose.msra.mxu0 0
        %6231 = vmatprep.subr.bf16.mxu0 0
        %6232 = vmatpush2.bf16.xpose.msra.mxu0 0
        %6233 = vmatprep.subr.bf16.mxu0 0
        %6234 = vmatpush2.bf16.xpose.msra.mxu0 0
        %6235 = vmatprep.subr.bf16.mxu0 0
        %6236 = vmatpush2.bf16.xpose.msra.mxu0 0
        %6237 = vmatprep.subr.bf16.mxu0 0
        %6238 = vmatpush2.bf16.xpose.msra.mxu0 0
        %6239 = vmatprep.subr.bf16.mxu0 0
        %6240 = vmatpush2.bf16.xpose.msra.mxu0 0
        %6241 = vmatprep.mubr.bf16.mxu0 0
        %6242 = vmatmul.mubr.bf16.gmra.mxu0 %v6204
        %v6243 = vpop.f32.mrf.mxu0
        %v6244 = vadd.f32 %v892, %v6243
        %v6245 = vpop.f32.mrf.mxu0
        %v6246 = vpop.f32.mrf.mxu0
        %v6247 = vpop.f32.mrf.mxu0
        %6248 = vdwg.mxu0
        %v6249 = vsel %vm1123, %v6244, -inf
        %6250 = vmax.xlane.f32.xlu0 %v6249
        %v6251 = vpop.xlane.xlu0 %6250
        %v6252 = vsub.f32 %v6244, %v6251
        %v6253 = vmul.f32 %v6252, 1.442695
        %v6254 = vpow.pop %v6253
        %v6255 = vsel %vm1123, %v6254, 0.0
        %6256 = vadd.xlane.f32.xlu0 %v6255
        %v6257 = vpop.xlane.xlu0 %6256
        %v6258 = vpack.c.bf16 %v6254, %v6254
        %6259 = vrot.lane.b32.xlu0 %v6090, 88
        %v6260 = vpop.permute.xlu0 %6259
        %v6262 = vsel %vm1123, %v6258, 0
        %v6265 = vsel %vm1186, %v6260, 0
        %6267 = vmatprep.subr.bf16.mxu0 0
        %6268 = vmatpush1.bf16.msra.mxu0 0
        %6269 = vmatprep.subr.bf16.mxu0 0
        %6270 = vmatpush1.bf16.msra.mxu0 0
        %6271 = vmatprep.subr.bf16.mxu0 0
        %6272 = vmatpush1.bf16.msra.mxu0 0
        %6273 = vmatprep.subr.bf16.mxu0 0
        %6274 = vmatpush1.bf16.msra.mxu0 0
        %6275 = vmatprep.subr.bf16.mxu0 0
        %6276 = vmatpush1.bf16.msra.mxu0 0
        %6277 = vmatprep.subr.bf16.mxu0 0
        %6278 = vmatpush1.bf16.msra.mxu0 0
        %6279 = vmatprep.subr.bf16.mxu0 0
        %6280 = vmatpush1.bf16.msra.mxu0 0
        %6281 = vmatprep.subr.bf16.mxu0 0
        %6282 = vmatpush1.bf16.msra.mxu0 %v6265
        %6283 = vmatprep.subr.bf16.mxu0 0
        %6284 = vmatpush2.bf16.msra.mxu0 0
        %6285 = vmatprep.subr.bf16.mxu0 0
        %6286 = vmatpush2.bf16.msra.mxu0 0
        %6287 = vmatprep.subr.bf16.mxu0 0
        %6288 = vmatpush2.bf16.msra.mxu0 0
        %6289 = vmatprep.subr.bf16.mxu0 0
        %6290 = vmatpush2.bf16.msra.mxu0 0
        %6291 = vmatprep.subr.bf16.mxu0 0
        %6292 = vmatpush2.bf16.msra.mxu0 0
        %6293 = vmatprep.subr.bf16.mxu0 0
        %6294 = vmatpush2.bf16.msra.mxu0 0
        %6295 = vmatprep.subr.bf16.mxu0 0
        %6296 = vmatpush2.bf16.msra.mxu0 0
        %6297 = vmatprep.subr.bf16.mxu0 0
        %6298 = vmatpush2.bf16.msra.mxu0 0
        %6299 = vmatprep.mubr.bf16.mxu0 0
        %6300 = vmatmul.mubr.bf16.gmra.mxu0 %v6262
        %v6301 = vpop.f32.mrf.mxu0
        %v6302 = vadd.f32 0.0, %v6301
        %v6303 = vpop.f32.mrf.mxu0
        %v6304 = vpop.f32.mrf.mxu0
        %v6305 = vpop.f32.mrf.mxu0
        %6306 = vdwg.mxu0
        %v6307 = vrcp.pop %v6257
        %v6308 = vmul.f32 %v6302, %v6307
        %6309 = vrot.lane.b32.xlu0 %v6089, 112
        %v6310 = vpop.permute.xlu0 %6309
        %6311 = vrot.lane.b32.xlu0 %v6090, 112
        %v6312 = vpop.permute.xlu0 %6311
        %v6314 = vsel %vm1123, %v6310, 0
        %v6317 = vsel %vm1123, %v6312, 0
        %6319 = vmatprep.subr.bf16.mxu0 0
        %6320 = vmatpush1.bf16.xpose.msra.mxu0 0
        %6321 = vmatprep.subr.bf16.mxu0 0
        %6322 = vmatpush1.bf16.xpose.msra.mxu0 0
        %6323 = vmatprep.subr.bf16.mxu0 0
        %6324 = vmatpush1.bf16.xpose.msra.mxu0 0
        %6325 = vmatprep.subr.bf16.mxu0 0
        %6326 = vmatpush1.bf16.xpose.msra.mxu0 0
        %6327 = vmatprep.subr.bf16.mxu0 0
        %6328 = vmatpush1.bf16.xpose.msra.mxu0 0
        %6329 = vmatprep.subr.bf16.mxu0 0
        %6330 = vmatpush1.bf16.xpose.msra.mxu0 0
        %6331 = vmatprep.subr.bf16.mxu0 0
        %6332 = vmatpush1.bf16.xpose.msra.mxu0 0
        %6333 = vmatprep.subr.bf16.mxu0 0
        %6334 = vmatpush1.bf16.xpose.msra.mxu0 %v6317
        %6335 = vmatprep.subr.bf16.mxu0 0
        %6336 = vmatpush2.bf16.xpose.msra.mxu0 0
        %6337 = vmatprep.subr.bf16.mxu0 0
        %6338 = vmatpush2.bf16.xpose.msra.mxu0 0
        %6339 = vmatprep.subr.bf16.mxu0 0
        %6340 = vmatpush2.bf16.xpose.msra.mxu0 0
        %6341 = vmatprep.subr.bf16.mxu0 0
        %6342 = vmatpush2.bf16.xpose.msra.mxu0 0
        %6343 = vmatprep.subr.bf16.mxu0 0
        %6344 = vmatpush2.bf16.xpose.msra.mxu0 0
        %6345 = vmatprep.subr.bf16.mxu0 0
        %6346 = vmatpush2.bf16.xpose.msra.mxu0 0
        %6347 = vmatprep.subr.bf16.mxu0 0
        %6348 = vmatpush2.bf16.xpose.msra.mxu0 0
        %6349 = vmatprep.subr.bf16.mxu0 0
        %6350 = vmatpush2.bf16.xpose.msra.mxu0 0
        %6351 = vmatprep.mubr.bf16.mxu0 0
        %6352 = vmatmul.mubr.bf16.gmra.mxu0 %v6314
        %v6353 = vpop.f32.mrf.mxu0
        %v6354 = vadd.f32 %v892, %v6353
        %v6355 = vpop.f32.mrf.mxu0
        %v6356 = vpop.f32.mrf.mxu0
        %v6357 = vpop.f32.mrf.mxu0
        %6358 = vdwg.mxu0
        %v6359 = vsel %vm1123, %v6354, -inf
        %6360 = vmax.xlane.f32.xlu0 %v6359
        %v6361 = vpop.xlane.xlu0 %6360
        %v6362 = vsub.f32 %v6354, %v6361
        %v6363 = vmul.f32 %v6362, 1.442695
        %v6364 = vpow.pop %v6363
        %v6365 = vsel %vm1123, %v6364, 0.0
        %6366 = vadd.xlane.f32.xlu0 %v6365
        %v6367 = vpop.xlane.xlu0 %6366
        %v6368 = vpack.c.bf16 %v6364, %v6364
        %6369 = vrot.lane.b32.xlu0 %v6090, 80
        %v6370 = vpop.permute.xlu0 %6369
        %v6372 = vsel %vm1123, %v6368, 0
        %v6375 = vsel %vm1186, %v6370, 0
        %6377 = vmatprep.subr.bf16.mxu0 0
        %6378 = vmatpush1.bf16.msra.mxu0 0
        %6379 = vmatprep.subr.bf16.mxu0 0
        %6380 = vmatpush1.bf16.msra.mxu0 0
        %6381 = vmatprep.subr.bf16.mxu0 0
        %6382 = vmatpush1.bf16.msra.mxu0 0
        %6383 = vmatprep.subr.bf16.mxu0 0
        %6384 = vmatpush1.bf16.msra.mxu0 0
        %6385 = vmatprep.subr.bf16.mxu0 0
        %6386 = vmatpush1.bf16.msra.mxu0 0
        %6387 = vmatprep.subr.bf16.mxu0 0
        %6388 = vmatpush1.bf16.msra.mxu0 0
        %6389 = vmatprep.subr.bf16.mxu0 0
        %6390 = vmatpush1.bf16.msra.mxu0 0
        %6391 = vmatprep.subr.bf16.mxu0 0
        %6392 = vmatpush1.bf16.msra.mxu0 %v6375
        %6393 = vmatprep.subr.bf16.mxu0 0
        %6394 = vmatpush2.bf16.msra.mxu0 0
        %6395 = vmatprep.subr.bf16.mxu0 0
        %6396 = vmatpush2.bf16.msra.mxu0 0
        %6397 = vmatprep.subr.bf16.mxu0 0
        %6398 = vmatpush2.bf16.msra.mxu0 0
        %6399 = vmatprep.subr.bf16.mxu0 0
        %6400 = vmatpush2.bf16.msra.mxu0 0
        %6401 = vmatprep.subr.bf16.mxu0 0
        %6402 = vmatpush2.bf16.msra.mxu0 0
        %6403 = vmatprep.subr.bf16.mxu0 0
        %6404 = vmatpush2.bf16.msra.mxu0 0
        %6405 = vmatprep.subr.bf16.mxu0 0
        %6406 = vmatpush2.bf16.msra.mxu0 0
        %6407 = vmatprep.subr.bf16.mxu0 0
        %6408 = vmatpush2.bf16.msra.mxu0 0
        %6409 = vmatprep.mubr.bf16.mxu0 0
        %6410 = vmatmul.mubr.bf16.gmra.mxu0 %v6372
        %v6411 = vpop.f32.mrf.mxu0
        %v6412 = vadd.f32 0.0, %v6411
        %v6413 = vpop.f32.mrf.mxu0
        %v6414 = vpop.f32.mrf.mxu0
        %v6415 = vpop.f32.mrf.mxu0
        %6416 = vdwg.mxu0
        %v6417 = vrcp.pop %v6367
        %v6418 = vmul.f32 %v6412, %v6417
        %6419 = vrot.lane.b32.xlu0 %v6089, 104
        %v6420 = vpop.permute.xlu0 %6419
        %6421 = vrot.lane.b32.xlu0 %v6090, 104
        %v6422 = vpop.permute.xlu0 %6421
        %v6424 = vsel %vm1123, %v6420, 0
        %v6427 = vsel %vm1123, %v6422, 0
        %6429 = vmatprep.subr.bf16.mxu0 0
        %6430 = vmatpush1.bf16.xpose.msra.mxu0 0
        %6431 = vmatprep.subr.bf16.mxu0 0
        %6432 = vmatpush1.bf16.xpose.msra.mxu0 0
        %6433 = vmatprep.subr.bf16.mxu0 0
        %6434 = vmatpush1.bf16.xpose.msra.mxu0 0
        %6435 = vmatprep.subr.bf16.mxu0 0
        %6436 = vmatpush1.bf16.xpose.msra.mxu0 0
        %6437 = vmatprep.subr.bf16.mxu0 0
        %6438 = vmatpush1.bf16.xpose.msra.mxu0 0
        %6439 = vmatprep.subr.bf16.mxu0 0
        %6440 = vmatpush1.bf16.xpose.msra.mxu0 0
        %6441 = vmatprep.subr.bf16.mxu0 0
        %6442 = vmatpush1.bf16.xpose.msra.mxu0 0
        %6443 = vmatprep.subr.bf16.mxu0 0
        %6444 = vmatpush1.bf16.xpose.msra.mxu0 %v6427
        %6445 = vmatprep.subr.bf16.mxu0 0
        %6446 = vmatpush2.bf16.xpose.msra.mxu0 0
        %6447 = vmatprep.subr.bf16.mxu0 0
        %6448 = vmatpush2.bf16.xpose.msra.mxu0 0
        %6449 = vmatprep.subr.bf16.mxu0 0
        %6450 = vmatpush2.bf16.xpose.msra.mxu0 0
        %6451 = vmatprep.subr.bf16.mxu0 0
        %6452 = vmatpush2.bf16.xpose.msra.mxu0 0
        %6453 = vmatprep.subr.bf16.mxu0 0
        %6454 = vmatpush2.bf16.xpose.msra.mxu0 0
        %6455 = vmatprep.subr.bf16.mxu0 0
        %6456 = vmatpush2.bf16.xpose.msra.mxu0 0
        %6457 = vmatprep.subr.bf16.mxu0 0
        %6458 = vmatpush2.bf16.xpose.msra.mxu0 0
        %6459 = vmatprep.subr.bf16.mxu0 0
        %6460 = vmatpush2.bf16.xpose.msra.mxu0 0
        %6461 = vmatprep.mubr.bf16.mxu0 0
        %6462 = vmatmul.mubr.bf16.gmra.mxu0 %v6424
        %v6463 = vpop.f32.mrf.mxu0
        %v6464 = vadd.f32 %v892, %v6463
        %v6465 = vpop.f32.mrf.mxu0
        %v6466 = vpop.f32.mrf.mxu0
        %v6467 = vpop.f32.mrf.mxu0
        %6468 = vdwg.mxu0
        %v6469 = vsel %vm1123, %v6464, -inf
        %6470 = vmax.xlane.f32.xlu0 %v6469
        %v6471 = vpop.xlane.xlu0 %6470
        %v6472 = vsub.f32 %v6464, %v6471
        %v6473 = vmul.f32 %v6472, 1.442695
        %v6474 = vpow.pop %v6473
        %v6475 = vsel %vm1123, %v6474, 0.0
        %6476 = vadd.xlane.f32.xlu0 %v6475
        %v6477 = vpop.xlane.xlu0 %6476
        %v6478 = vpack.c.bf16 %v6474, %v6474
        %6479 = vrot.lane.b32.xlu0 %v6090, 72
        %v6480 = vpop.permute.xlu0 %6479
        %v6482 = vsel %vm1123, %v6478, 0
        %v6485 = vsel %vm1186, %v6480, 0
        %6487 = vmatprep.subr.bf16.mxu0 0
        %6488 = vmatpush1.bf16.msra.mxu0 0
        %6489 = vmatprep.subr.bf16.mxu0 0
        %6490 = vmatpush1.bf16.msra.mxu0 0
        %6491 = vmatprep.subr.bf16.mxu0 0
        %6492 = vmatpush1.bf16.msra.mxu0 0
        %6493 = vmatprep.subr.bf16.mxu0 0
        %6494 = vmatpush1.bf16.msra.mxu0 0
        %6495 = vmatprep.subr.bf16.mxu0 0
        %6496 = vmatpush1.bf16.msra.mxu0 0
        %6497 = vmatprep.subr.bf16.mxu0 0
        %6498 = vmatpush1.bf16.msra.mxu0 0
        %6499 = vmatprep.subr.bf16.mxu0 0
        %6500 = vmatpush1.bf16.msra.mxu0 0
        %6501 = vmatprep.subr.bf16.mxu0 0
        %6502 = vmatpush1.bf16.msra.mxu0 %v6485
        %6503 = vmatprep.subr.bf16.mxu0 0
        %6504 = vmatpush2.bf16.msra.mxu0 0
        %6505 = vmatprep.subr.bf16.mxu0 0
        %6506 = vmatpush2.bf16.msra.mxu0 0
        %6507 = vmatprep.subr.bf16.mxu0 0
        %6508 = vmatpush2.bf16.msra.mxu0 0
        %6509 = vmatprep.subr.bf16.mxu0 0
        %6510 = vmatpush2.bf16.msra.mxu0 0
        %6511 = vmatprep.subr.bf16.mxu0 0
        %6512 = vmatpush2.bf16.msra.mxu0 0
        %6513 = vmatprep.subr.bf16.mxu0 0
        %6514 = vmatpush2.bf16.msra.mxu0 0
        %6515 = vmatprep.subr.bf16.mxu0 0
        %6516 = vmatpush2.bf16.msra.mxu0 0
        %6517 = vmatprep.subr.bf16.mxu0 0
        %6518 = vmatpush2.bf16.msra.mxu0 0
        %6519 = vmatprep.mubr.bf16.mxu0 0
        %6520 = vmatmul.mubr.bf16.gmra.mxu0 %v6482
        %v6521 = vpop.f32.mrf.mxu0
        %v6522 = vadd.f32 0.0, %v6521
        %v6523 = vpop.f32.mrf.mxu0
        %v6524 = vpop.f32.mrf.mxu0
        %v6525 = vpop.f32.mrf.mxu0
        %6526 = vdwg.mxu0
        %v6527 = vrcp.pop %v6477
        %v6528 = vmul.f32 %v6522, %v6527
        %6530 = vrot.lane.b32.xlu0 %v6308, 8
        %v6531 = vpop.permute.xlu0 %6530
        %6534 = vrot.lane.b32.xlu0 %v6418, 16
        %v6535 = vpop.permute.xlu0 %6534
        %6538 = vrot.lane.b32.xlu0 %v6528, 24
        %v6539 = vpop.permute.xlu0 %6538
        %v6541 = vsel %vm1123, %v6197, %v6531
        %v6542 = vsel %vm1576, %v6541, %v6535
        %v6543 = vsel %vm1578, %v6542, %v6539
        %v6544 = vpack.c.bf16 %v6543, %v6543
        %v6546 = vlaneseq
        %v6547 = vshrl.u32 %v6546, 7
        %v6548 = vsub.s32 0, %v6547
        %v6549 = vrot.slane %v5899, %v6548
        %v6555 = vunpack.c.l.b16 %v5894
        %v6556 = vunpack.c.l.b16 %v5895
        %v6557 = vunpack.c.l.b16 %v5896
        %v6558 = vunpack.c.l.b16 %v5897
        %v6559 = vpack.c.b16 %v6556, %v6555
        %v6560 = vpack.c.b16 %v6558, %v6557
        %v6564 = vsel %vm1599, %v6544, 0
        %6566 = vmatprep.subr.bf16.mxu0 0
        %6567 = vmatpush1.bf16.msra.mxu0 0
        %6568 = vmatprep.subr.bf16.mxu0 0
        %6569 = vmatpush1.bf16.msra.mxu0 0
        %6570 = vmatprep.subr.bf16.mxu0 0
        %6571 = vmatpush1.bf16.msra.mxu0 0
        %6572 = vmatprep.subr.bf16.mxu0 0
        %6573 = vmatpush1.bf16.msra.mxu0 0
        %6574 = vmatprep.subr.bf16.mxu0 0
        %6575 = vmatpush1.bf16.msra.mxu0 0
        %6576 = vmatprep.subr.bf16.mxu0 0
        %6577 = vmatpush1.bf16.msra.mxu0 0
        %6578 = vmatprep.subr.bf16.mxu0 0
        %6579 = vmatpush1.bf16.msra.mxu0 %v6560
        %6580 = vmatprep.subr.bf16.mxu0 0
        %6581 = vmatpush1.bf16.msra.mxu0 %v6559
        %6582 = vmatprep.subr.bf16.mxu0 0
        %6583 = vmatpush2.bf16.msra.mxu0 0
        %6584 = vmatprep.subr.bf16.mxu0 0
        %6585 = vmatpush2.bf16.msra.mxu0 0
        %6586 = vmatprep.subr.bf16.mxu0 0
        %6587 = vmatpush2.bf16.msra.mxu0 0
        %6588 = vmatprep.subr.bf16.mxu0 0
        %6589 = vmatpush2.bf16.msra.mxu0 0
        %6590 = vmatprep.subr.bf16.mxu0 0
        %6591 = vmatpush2.bf16.msra.mxu0 0
        %6592 = vmatprep.subr.bf16.mxu0 0
        %6593 = vmatpush2.bf16.msra.mxu0 0
        %6594 = vmatprep.subr.bf16.mxu0 0
        %6595 = vmatpush2.bf16.msra.mxu0 0
        %6596 = vmatprep.subr.bf16.mxu0 0
        %6597 = vmatpush2.bf16.msra.mxu0 0
        %6598 = vmatprep.mubr.bf16.mxu0 0
        %6599 = vmatmul.mubr.bf16.gmra.mxu0 %v6564
        %v6600 = vpop.f32.mrf.mxu0
        %v6601 = vadd.f32 %v6549, %v6600
        %v6602 = vpop.f32.mrf.mxu0
        %v6603 = vpop.f32.mrf.mxu0
        %v6604 = vpop.f32.mrf.mxu0
        %6605 = vdwg.mxu0
        %s6606 = scalar_lea.vmem %s18, 1
        %v6607 = vld [vmem:[%s6606] sm:$0x1]
        %s6608 = scalar_lea.vmem %s19, 1
        %v6609 = vld [vmem:[%s6608] sm:$0x1]
        %6610 = vadd.xlane.f32.xlu0 %v6601
        %v6611 = vpop.xlane.xlu0 %6610
        %v6612 = vmul.f32 %v6611, 0.03125
        %v6613 = vsub.f32 %v6601, %v6612
        %v6614 = vmul.f32 %v6613, %v1649
        %v6615 = vmul.f32 %v6614, %v6614
        %6616 = vadd.xlane.f32.xlu0 %v6615
        %v6617 = vpop.xlane.xlu0 %6616
        %v6618 = vmul.f32 %v6617, 0.032258064
        %v6619 = vrsqrt.pop %v6618
        %v6620 = vmul.f32 %v6618, %v6619
        %vm6621 = vcmp.eq.f32.partialorder %v6618, inf
        %v6622 = vsel %vm6621, %v6618, %v6620
        %vm6623 = vcmp.eq.f32.partialorder %v6618, 0.0
        %v6624 = vand.u32 %v6618, 2147483648
        %v6625 = vsel %vm6623, %v6624, %v6622
        %v6626 = vadd.f32 %v6625, 1e-06
        %v6627 = vrcp.pop %v6626
        %v6628 = vmul.f32 %v6614, %v6627
        %v6630 = vlaneseq
        %v6631 = vshrl.u32 %v6630, 7
        %v6632 = vsub.s32 0, %v6631
        %v6633 = vrot.slane %v6607, %v6632
        %v6635 = vmul.f32 %v6633, %v6628
        %v6637 = vlaneseq
        %v6638 = vshrl.u32 %v6637, 7
        %v6639 = vsub.s32 0, %v6638
        %v6640 = vrot.slane %v6609, %v6639
        %v6642 = vadd.f32 %v6635, %v6640
        %v6643 = vadd.f32 %v6601, %v6642
        %v6644 = vpack.c.bf16 %v6643, %v6643
        %s6645 = scalar_lea.vmem [#allocation2], 1024
        %v6646 = vld [vmem:[%s6645] sm:$0xff]
        %v6647 = vld [vmem:[%s6645 + $0x8] sm:$0xff]
        %v6648 = vld [vmem:[%s6645 + $0x10] sm:$0xff]
        %v6649 = vld [vmem:[%s6645 + $0x18] sm:$0xff]
        %v6650 = vld [vmem:[%s6645 + $0x20] sm:$0xff]
        %v6651 = vld [vmem:[%s6645 + $0x28] sm:$0xff]
        %v6652 = vld [vmem:[%s6645 + $0x30] sm:$0xff]
        %v6653 = vld [vmem:[%s6645 + $0x38] sm:$0xff]
        %v6654 = vld [vmem:[%s6645 + $0x40] sm:$0xff]
        %v6655 = vld [vmem:[%s6645 + $0x48] sm:$0xff]
        %v6656 = vld [vmem:[%s6645 + $0x50] sm:$0xff]
        %v6657 = vld [vmem:[%s6645 + $0x58] sm:$0xff]
        %v6658 = vld [vmem:[%s6645 + $0x60] sm:$0xff]
        %v6659 = vld [vmem:[%s6645 + $0x68] sm:$0xff]
        %v6660 = vld [vmem:[%s6645 + $0x70] sm:$0xff]
        %v6661 = vld [vmem:[%s6645 + $0x78] sm:$0xff]
        %v6662 = vld [vmem:[%s6645 + $0x80] sm:$0xff]
        %v6663 = vld [vmem:[%s6645 + $0x88] sm:$0xff]
        %v6664 = vld [vmem:[%s6645 + $0x90] sm:$0xff]
        %v6665 = vld [vmem:[%s6645 + $0x98] sm:$0xff]
        %v6666 = vld [vmem:[%s6645 + $0xa0] sm:$0xff]
        %v6667 = vld [vmem:[%s6645 + $0xa8] sm:$0xff]
        %v6668 = vld [vmem:[%s6645 + $0xb0] sm:$0xff]
        %v6669 = vld [vmem:[%s6645 + $0xb8] sm:$0xff]
        %v6670 = vld [vmem:[%s6645 + $0xc0] sm:$0xff]
        %v6671 = vld [vmem:[%s6645 + $0xc8] sm:$0xff]
        %v6672 = vld [vmem:[%s6645 + $0xd0] sm:$0xff]
        %v6673 = vld [vmem:[%s6645 + $0xd8] sm:$0xff]
        %v6674 = vld [vmem:[%s6645 + $0xe0] sm:$0xff]
        %v6675 = vld [vmem:[%s6645 + $0xe8] sm:$0xff]
        %v6676 = vld [vmem:[%s6645 + $0xf0] sm:$0xff]
        %v6677 = vld [vmem:[%s6645 + $0xf8] sm:$0xff]
        %v6678 = vld [vmem:[%s6645 + $0x100] sm:$0xff]
        %v6679 = vld [vmem:[%s6645 + $0x108] sm:$0xff]
        %v6680 = vld [vmem:[%s6645 + $0x110] sm:$0xff]
        %v6681 = vld [vmem:[%s6645 + $0x118] sm:$0xff]
        %v6682 = vld [vmem:[%s6645 + $0x120] sm:$0xff]
        %v6683 = vld [vmem:[%s6645 + $0x128] sm:$0xff]
        %v6684 = vld [vmem:[%s6645 + $0x130] sm:$0xff]
        %v6685 = vld [vmem:[%s6645 + $0x138] sm:$0xff]
        %v6686 = vld [vmem:[%s6645 + $0x140] sm:$0xff]
        %v6687 = vld [vmem:[%s6645 + $0x148] sm:$0xff]
        %v6688 = vld [vmem:[%s6645 + $0x150] sm:$0xff]
        %v6689 = vld [vmem:[%s6645 + $0x158] sm:$0xff]
        %v6690 = vld [vmem:[%s6645 + $0x160] sm:$0xff]
        %v6691 = vld [vmem:[%s6645 + $0x168] sm:$0xff]
        %v6692 = vld [vmem:[%s6645 + $0x170] sm:$0xff]
        %v6693 = vld [vmem:[%s6645 + $0x178] sm:$0xff]
        %v6694 = vld [vmem:[%s6645 + $0x180] sm:$0xff]
        %v6695 = vld [vmem:[%s6645 + $0x188] sm:$0xff]
        %v6696 = vld [vmem:[%s6645 + $0x190] sm:$0xff]
        %v6697 = vld [vmem:[%s6645 + $0x198] sm:$0xff]
        %v6698 = vld [vmem:[%s6645 + $0x1a0] sm:$0xff]
        %v6699 = vld [vmem:[%s6645 + $0x1a8] sm:$0xff]
        %v6700 = vld [vmem:[%s6645 + $0x1b0] sm:$0xff]
        %v6701 = vld [vmem:[%s6645 + $0x1b8] sm:$0xff]
        %v6702 = vld [vmem:[%s6645 + $0x1c0] sm:$0xff]
        %v6703 = vld [vmem:[%s6645 + $0x1c8] sm:$0xff]
        %v6704 = vld [vmem:[%s6645 + $0x1d0] sm:$0xff]
        %v6705 = vld [vmem:[%s6645 + $0x1d8] sm:$0xff]
        %v6706 = vld [vmem:[%s6645 + $0x1e0] sm:$0xff]
        %v6707 = vld [vmem:[%s6645 + $0x1e8] sm:$0xff]
        %v6708 = vld [vmem:[%s6645 + $0x1f0] sm:$0xff]
        %v6709 = vld [vmem:[%s6645 + $0x1f8] sm:$0xff]
        %v6710 = vld [vmem:[%s6645 + $0x200] sm:$0xff]
        %v6711 = vld [vmem:[%s6645 + $0x208] sm:$0xff]
        %v6712 = vld [vmem:[%s6645 + $0x210] sm:$0xff]
        %v6713 = vld [vmem:[%s6645 + $0x218] sm:$0xff]
        %v6714 = vld [vmem:[%s6645 + $0x220] sm:$0xff]
        %v6715 = vld [vmem:[%s6645 + $0x228] sm:$0xff]
        %v6716 = vld [vmem:[%s6645 + $0x230] sm:$0xff]
        %v6717 = vld [vmem:[%s6645 + $0x238] sm:$0xff]
        %v6718 = vld [vmem:[%s6645 + $0x240] sm:$0xff]
        %v6719 = vld [vmem:[%s6645 + $0x248] sm:$0xff]
        %v6720 = vld [vmem:[%s6645 + $0x250] sm:$0xff]
        %v6721 = vld [vmem:[%s6645 + $0x258] sm:$0xff]
        %v6722 = vld [vmem:[%s6645 + $0x260] sm:$0xff]
        %v6723 = vld [vmem:[%s6645 + $0x268] sm:$0xff]
        %v6724 = vld [vmem:[%s6645 + $0x270] sm:$0xff]
        %v6725 = vld [vmem:[%s6645 + $0x278] sm:$0xff]
        %v6726 = vld [vmem:[%s6645 + $0x280] sm:$0xff]
        %v6727 = vld [vmem:[%s6645 + $0x288] sm:$0xff]
        %v6728 = vld [vmem:[%s6645 + $0x290] sm:$0xff]
        %v6729 = vld [vmem:[%s6645 + $0x298] sm:$0xff]
        %v6730 = vld [vmem:[%s6645 + $0x2a0] sm:$0xff]
        %v6731 = vld [vmem:[%s6645 + $0x2a8] sm:$0xff]
        %v6732 = vld [vmem:[%s6645 + $0x2b0] sm:$0xff]
        %v6733 = vld [vmem:[%s6645 + $0x2b8] sm:$0xff]
        %v6734 = vld [vmem:[%s6645 + $0x2c0] sm:$0xff]
        %v6735 = vld [vmem:[%s6645 + $0x2c8] sm:$0xff]
        %v6736 = vld [vmem:[%s6645 + $0x2d0] sm:$0xff]
        %v6737 = vld [vmem:[%s6645 + $0x2d8] sm:$0xff]
        %v6738 = vld [vmem:[%s6645 + $0x2e0] sm:$0xff]
        %v6739 = vld [vmem:[%s6645 + $0x2e8] sm:$0xff]
        %v6740 = vld [vmem:[%s6645 + $0x2f0] sm:$0xff]
        %v6741 = vld [vmem:[%s6645 + $0x2f8] sm:$0xff]
        %v6742 = vld [vmem:[%s6645 + $0x300] sm:$0xff]
        %v6743 = vld [vmem:[%s6645 + $0x308] sm:$0xff]
        %v6744 = vld [vmem:[%s6645 + $0x310] sm:$0xff]
        %v6745 = vld [vmem:[%s6645 + $0x318] sm:$0xff]
        %v6746 = vld [vmem:[%s6645 + $0x320] sm:$0xff]
        %v6747 = vld [vmem:[%s6645 + $0x328] sm:$0xff]
        %v6748 = vld [vmem:[%s6645 + $0x330] sm:$0xff]
        %v6749 = vld [vmem:[%s6645 + $0x338] sm:$0xff]
        %v6750 = vld [vmem:[%s6645 + $0x340] sm:$0xff]
        %v6751 = vld [vmem:[%s6645 + $0x348] sm:$0xff]
        %v6752 = vld [vmem:[%s6645 + $0x350] sm:$0xff]
        %v6753 = vld [vmem:[%s6645 + $0x358] sm:$0xff]
        %v6754 = vld [vmem:[%s6645 + $0x360] sm:$0xff]
        %v6755 = vld [vmem:[%s6645 + $0x368] sm:$0xff]
        %v6756 = vld [vmem:[%s6645 + $0x370] sm:$0xff]
        %v6757 = vld [vmem:[%s6645 + $0x378] sm:$0xff]
        %v6758 = vld [vmem:[%s6645 + $0x380] sm:$0xff]
        %v6759 = vld [vmem:[%s6645 + $0x388] sm:$0xff]
        %v6760 = vld [vmem:[%s6645 + $0x390] sm:$0xff]
        %v6761 = vld [vmem:[%s6645 + $0x398] sm:$0xff]
        %v6762 = vld [vmem:[%s6645 + $0x3a0] sm:$0xff]
        %v6763 = vld [vmem:[%s6645 + $0x3a8] sm:$0xff]
        %v6764 = vld [vmem:[%s6645 + $0x3b0] sm:$0xff]
        %v6765 = vld [vmem:[%s6645 + $0x3b8] sm:$0xff]
        %v6766 = vld [vmem:[%s6645 + $0x3c0] sm:$0xff]
        %v6767 = vld [vmem:[%s6645 + $0x3c8] sm:$0xff]
        %v6768 = vld [vmem:[%s6645 + $0x3d0] sm:$0xff]
        %v6769 = vld [vmem:[%s6645 + $0x3d8] sm:$0xff]
        %v6770 = vld [vmem:[%s6645 + $0x3e0] sm:$0xff]
        %v6771 = vld [vmem:[%s6645 + $0x3e8] sm:$0xff]
        %v6772 = vld [vmem:[%s6645 + $0x3f0] sm:$0xff]
        %v6773 = vld [vmem:[%s6645 + $0x3f8] sm:$0xff]
        %s6774 = scalar_lea.vmem %s21, 16
        %v6775 = vld [vmem:[%s6774] sm:$0xff]
        %v6776 = vld [vmem:[%s6774 + $0x8] sm:$0xff]
        %v6779 = vlaneseq
        %v6780 = vshrl.u32 %v6779, 7
        %v6781 = vsub.s32 0, %v6780
        %v6782 = vrot.slane %v6775, %v6781
        %v6783 = vlaneseq
        %v6784 = vshrl.u32 %v6783, 7
        %v6785 = vsub.s32 1, %v6784
        %v6786 = vrot.slane %v6775, %v6785
        %v6787 = vlaneseq
        %v6788 = vshrl.u32 %v6787, 7
        %v6789 = vsub.s32 2, %v6788
        %v6790 = vrot.slane %v6775, %v6789
        %v6791 = vlaneseq
        %v6792 = vshrl.u32 %v6791, 7
        %v6793 = vsub.s32 3, %v6792
        %v6794 = vrot.slane %v6775, %v6793
        %v6795 = vlaneseq
        %v6796 = vshrl.u32 %v6795, 7
        %v6797 = vsub.s32 4, %v6796
        %v6798 = vrot.slane %v6775, %v6797
        %v6799 = vlaneseq
        %v6800 = vshrl.u32 %v6799, 7
        %v6801 = vsub.s32 5, %v6800
        %v6802 = vrot.slane %v6775, %v6801
        %v6803 = vlaneseq
        %v6804 = vshrl.u32 %v6803, 7
        %v6805 = vsub.s32 6, %v6804
        %v6806 = vrot.slane %v6775, %v6805
        %v6807 = vlaneseq
        %v6808 = vshrl.u32 %v6807, 7
        %v6809 = vsub.s32 7, %v6808
        %v6810 = vrot.slane %v6775, %v6809
        %v6811 = vlaneseq
        %v6812 = vshrl.u32 %v6811, 7
        %v6813 = vsub.s32 0, %v6812
        %v6814 = vrot.slane %v6776, %v6813
        %v6815 = vlaneseq
        %v6816 = vshrl.u32 %v6815, 7
        %v6817 = vsub.s32 1, %v6816
        %v6818 = vrot.slane %v6776, %v6817
        %v6819 = vlaneseq
        %v6820 = vshrl.u32 %v6819, 7
        %v6821 = vsub.s32 2, %v6820
        %v6822 = vrot.slane %v6776, %v6821
        %v6823 = vlaneseq
        %v6824 = vshrl.u32 %v6823, 7
        %v6825 = vsub.s32 3, %v6824
        %v6826 = vrot.slane %v6776, %v6825
        %v6827 = vlaneseq
        %v6828 = vshrl.u32 %v6827, 7
        %v6829 = vsub.s32 4, %v6828
        %v6830 = vrot.slane %v6776, %v6829
        %v6831 = vlaneseq
        %v6832 = vshrl.u32 %v6831, 7
        %v6833 = vsub.s32 5, %v6832
        %v6834 = vrot.slane %v6776, %v6833
        %v6835 = vlaneseq
        %v6836 = vshrl.u32 %v6835, 7
        %v6837 = vsub.s32 6, %v6836
        %v6838 = vrot.slane %v6776, %v6837
        %v6839 = vlaneseq
        %v6840 = vshrl.u32 %v6839, 7
        %v6841 = vsub.s32 7, %v6840
        %v6842 = vrot.slane %v6776, %v6841
        %v6987 = vunpack.c.l.b16 %v6646
        %v6988 = vunpack.c.h.b16 %v6646
        %v6989 = vunpack.c.l.b16 %v6647
        %v6990 = vunpack.c.h.b16 %v6647
        %v6991 = vunpack.c.l.b16 %v6648
        %v6992 = vunpack.c.h.b16 %v6648
        %v6993 = vunpack.c.l.b16 %v6649
        %v6994 = vunpack.c.h.b16 %v6649
        %v6995 = vunpack.c.l.b16 %v6650
        %v6996 = vunpack.c.h.b16 %v6650
        %v6997 = vunpack.c.l.b16 %v6651
        %v6998 = vunpack.c.h.b16 %v6651
        %v6999 = vunpack.c.l.b16 %v6652
        %v7000 = vunpack.c.h.b16 %v6652
        %v7001 = vunpack.c.l.b16 %v6653
        %v7002 = vunpack.c.h.b16 %v6653
        %v7003 = vunpack.c.l.b16 %v6654
        %v7004 = vunpack.c.h.b16 %v6654
        %v7005 = vunpack.c.l.b16 %v6655
        %v7006 = vunpack.c.h.b16 %v6655
        %v7007 = vunpack.c.l.b16 %v6656
        %v7008 = vunpack.c.h.b16 %v6656
        %v7009 = vunpack.c.l.b16 %v6657
        %v7010 = vunpack.c.h.b16 %v6657
        %v7011 = vunpack.c.l.b16 %v6658
        %v7012 = vunpack.c.h.b16 %v6658
        %v7013 = vunpack.c.l.b16 %v6659
        %v7014 = vunpack.c.h.b16 %v6659
        %v7015 = vunpack.c.l.b16 %v6660
        %v7016 = vunpack.c.h.b16 %v6660
        %v7017 = vunpack.c.l.b16 %v6661
        %v7018 = vunpack.c.h.b16 %v6661
        %v7019 = vunpack.c.l.b16 %v6662
        %v7020 = vunpack.c.h.b16 %v6662
        %v7021 = vunpack.c.l.b16 %v6663
        %v7022 = vunpack.c.h.b16 %v6663
        %v7023 = vunpack.c.l.b16 %v6664
        %v7024 = vunpack.c.h.b16 %v6664
        %v7025 = vunpack.c.l.b16 %v6665
        %v7026 = vunpack.c.h.b16 %v6665
        %v7027 = vunpack.c.l.b16 %v6666
        %v7028 = vunpack.c.h.b16 %v6666
        %v7029 = vunpack.c.l.b16 %v6667
        %v7030 = vunpack.c.h.b16 %v6667
        %v7031 = vunpack.c.l.b16 %v6668
        %v7032 = vunpack.c.h.b16 %v6668
        %v7033 = vunpack.c.l.b16 %v6669
        %v7034 = vunpack.c.h.b16 %v6669
        %v7035 = vunpack.c.l.b16 %v6670
        %v7036 = vunpack.c.h.b16 %v6670
        %v7037 = vunpack.c.l.b16 %v6671
        %v7038 = vunpack.c.h.b16 %v6671
        %v7039 = vunpack.c.l.b16 %v6672
        %v7040 = vunpack.c.h.b16 %v6672
        %v7041 = vunpack.c.l.b16 %v6673
        %v7042 = vunpack.c.h.b16 %v6673
        %v7043 = vunpack.c.l.b16 %v6674
        %v7044 = vunpack.c.h.b16 %v6674
        %v7045 = vunpack.c.l.b16 %v6675
        %v7046 = vunpack.c.h.b16 %v6675
        %v7047 = vunpack.c.l.b16 %v6676
        %v7048 = vunpack.c.h.b16 %v6676
        %v7049 = vunpack.c.l.b16 %v6677
        %v7050 = vunpack.c.h.b16 %v6677
        %v7051 = vunpack.c.l.b16 %v6678
        %v7052 = vunpack.c.h.b16 %v6678
        %v7053 = vunpack.c.l.b16 %v6679
        %v7054 = vunpack.c.h.b16 %v6679
        %v7055 = vunpack.c.l.b16 %v6680
        %v7056 = vunpack.c.h.b16 %v6680
        %v7057 = vunpack.c.l.b16 %v6681
        %v7058 = vunpack.c.h.b16 %v6681
        %v7059 = vunpack.c.l.b16 %v6682
        %v7060 = vunpack.c.h.b16 %v6682
        %v7061 = vunpack.c.l.b16 %v6683
        %v7062 = vunpack.c.h.b16 %v6683
        %v7063 = vunpack.c.l.b16 %v6684
        %v7064 = vunpack.c.h.b16 %v6684
        %v7065 = vunpack.c.l.b16 %v6685
        %v7066 = vunpack.c.h.b16 %v6685
        %v7067 = vunpack.c.l.b16 %v6686
        %v7068 = vunpack.c.h.b16 %v6686
        %v7069 = vunpack.c.l.b16 %v6687
        %v7070 = vunpack.c.h.b16 %v6687
        %v7071 = vunpack.c.l.b16 %v6688
        %v7072 = vunpack.c.h.b16 %v6688
        %v7073 = vunpack.c.l.b16 %v6689
        %v7074 = vunpack.c.h.b16 %v6689
        %v7075 = vunpack.c.l.b16 %v6690
        %v7076 = vunpack.c.h.b16 %v6690
        %v7077 = vunpack.c.l.b16 %v6691
        %v7078 = vunpack.c.h.b16 %v6691
        %v7079 = vunpack.c.l.b16 %v6692
        %v7080 = vunpack.c.h.b16 %v6692
        %v7081 = vunpack.c.l.b16 %v6693
        %v7082 = vunpack.c.h.b16 %v6693
        %v7083 = vunpack.c.l.b16 %v6694
        %v7084 = vunpack.c.h.b16 %v6694
        %v7085 = vunpack.c.l.b16 %v6695
        %v7086 = vunpack.c.h.b16 %v6695
        %v7087 = vunpack.c.l.b16 %v6696
        %v7088 = vunpack.c.h.b16 %v6696
        %v7089 = vunpack.c.l.b16 %v6697
        %v7090 = vunpack.c.h.b16 %v6697
        %v7091 = vunpack.c.l.b16 %v6698
        %v7092 = vunpack.c.h.b16 %v6698
        %v7093 = vunpack.c.l.b16 %v6699
        %v7094 = vunpack.c.h.b16 %v6699
        %v7095 = vunpack.c.l.b16 %v6700
        %v7096 = vunpack.c.h.b16 %v6700
        %v7097 = vunpack.c.l.b16 %v6701
        %v7098 = vunpack.c.h.b16 %v6701
        %v7099 = vunpack.c.l.b16 %v6702
        %v7100 = vunpack.c.h.b16 %v6702
        %v7101 = vunpack.c.l.b16 %v6703
        %v7102 = vunpack.c.h.b16 %v6703
        %v7103 = vunpack.c.l.b16 %v6704
        %v7104 = vunpack.c.h.b16 %v6704
        %v7105 = vunpack.c.l.b16 %v6705
        %v7106 = vunpack.c.h.b16 %v6705
        %v7107 = vunpack.c.l.b16 %v6706
        %v7108 = vunpack.c.h.b16 %v6706
        %v7109 = vunpack.c.l.b16 %v6707
        %v7110 = vunpack.c.h.b16 %v6707
        %v7111 = vunpack.c.l.b16 %v6708
        %v7112 = vunpack.c.h.b16 %v6708
        %v7113 = vunpack.c.l.b16 %v6709
        %v7114 = vunpack.c.h.b16 %v6709
        %v7115 = vunpack.c.l.b16 %v6710
        %v7116 = vunpack.c.h.b16 %v6710
        %v7117 = vunpack.c.l.b16 %v6711
        %v7118 = vunpack.c.h.b16 %v6711
        %v7119 = vunpack.c.l.b16 %v6712
        %v7120 = vunpack.c.h.b16 %v6712
        %v7121 = vunpack.c.l.b16 %v6713
        %v7122 = vunpack.c.h.b16 %v6713
        %v7123 = vunpack.c.l.b16 %v6714
        %v7124 = vunpack.c.h.b16 %v6714
        %v7125 = vunpack.c.l.b16 %v6715
        %v7126 = vunpack.c.h.b16 %v6715
        %v7127 = vunpack.c.l.b16 %v6716
        %v7128 = vunpack.c.h.b16 %v6716
        %v7129 = vunpack.c.l.b16 %v6717
        %v7130 = vunpack.c.h.b16 %v6717
        %v7131 = vunpack.c.l.b16 %v6718
        %v7132 = vunpack.c.h.b16 %v6718
        %v7133 = vunpack.c.l.b16 %v6719
        %v7134 = vunpack.c.h.b16 %v6719
        %v7135 = vunpack.c.l.b16 %v6720
        %v7136 = vunpack.c.h.b16 %v6720
        %v7137 = vunpack.c.l.b16 %v6721
        %v7138 = vunpack.c.h.b16 %v6721
        %v7139 = vunpack.c.l.b16 %v6722
        %v7140 = vunpack.c.h.b16 %v6722
        %v7141 = vunpack.c.l.b16 %v6723
        %v7142 = vunpack.c.h.b16 %v6723
        %v7143 = vunpack.c.l.b16 %v6724
        %v7144 = vunpack.c.h.b16 %v6724
        %v7145 = vunpack.c.l.b16 %v6725
        %v7146 = vunpack.c.h.b16 %v6725
        %v7147 = vunpack.c.l.b16 %v6726
        %v7148 = vunpack.c.h.b16 %v6726
        %v7149 = vunpack.c.l.b16 %v6727
        %v7150 = vunpack.c.h.b16 %v6727
        %v7151 = vunpack.c.l.b16 %v6728
        %v7152 = vunpack.c.h.b16 %v6728
        %v7153 = vunpack.c.l.b16 %v6729
        %v7154 = vunpack.c.h.b16 %v6729
        %v7155 = vunpack.c.l.b16 %v6730
        %v7156 = vunpack.c.h.b16 %v6730
        %v7157 = vunpack.c.l.b16 %v6731
        %v7158 = vunpack.c.h.b16 %v6731
        %v7159 = vunpack.c.l.b16 %v6732
        %v7160 = vunpack.c.h.b16 %v6732
        %v7161 = vunpack.c.l.b16 %v6733
        %v7162 = vunpack.c.h.b16 %v6733
        %v7163 = vunpack.c.l.b16 %v6734
        %v7164 = vunpack.c.h.b16 %v6734
        %v7165 = vunpack.c.l.b16 %v6735
        %v7166 = vunpack.c.h.b16 %v6735
        %v7167 = vunpack.c.l.b16 %v6736
        %v7168 = vunpack.c.h.b16 %v6736
        %v7169 = vunpack.c.l.b16 %v6737
        %v7170 = vunpack.c.h.b16 %v6737
        %v7171 = vunpack.c.l.b16 %v6738
        %v7172 = vunpack.c.h.b16 %v6738
        %v7173 = vunpack.c.l.b16 %v6739
        %v7174 = vunpack.c.h.b16 %v6739
        %v7175 = vunpack.c.l.b16 %v6740
        %v7176 = vunpack.c.h.b16 %v6740
        %v7177 = vunpack.c.l.b16 %v6741
        %v7178 = vunpack.c.h.b16 %v6741
        %v7179 = vunpack.c.l.b16 %v6742
        %v7180 = vunpack.c.h.b16 %v6742
        %v7181 = vunpack.c.l.b16 %v6743
        %v7182 = vunpack.c.h.b16 %v6743
        %v7183 = vunpack.c.l.b16 %v6744
        %v7184 = vunpack.c.h.b16 %v6744
        %v7185 = vunpack.c.l.b16 %v6745
        %v7186 = vunpack.c.h.b16 %v6745
        %v7187 = vunpack.c.l.b16 %v6746
        %v7188 = vunpack.c.h.b16 %v6746
        %v7189 = vunpack.c.l.b16 %v6747
        %v7190 = vunpack.c.h.b16 %v6747
        %v7191 = vunpack.c.l.b16 %v6748
        %v7192 = vunpack.c.h.b16 %v6748
        %v7193 = vunpack.c.l.b16 %v6749
        %v7194 = vunpack.c.h.b16 %v6749
        %v7195 = vunpack.c.l.b16 %v6750
        %v7196 = vunpack.c.h.b16 %v6750
        %v7197 = vunpack.c.l.b16 %v6751
        %v7198 = vunpack.c.h.b16 %v6751
        %v7199 = vunpack.c.l.b16 %v6752
        %v7200 = vunpack.c.h.b16 %v6752
        %v7201 = vunpack.c.l.b16 %v6753
        %v7202 = vunpack.c.h.b16 %v6753
        %v7203 = vunpack.c.l.b16 %v6754
        %v7204 = vunpack.c.h.b16 %v6754
        %v7205 = vunpack.c.l.b16 %v6755
        %v7206 = vunpack.c.h.b16 %v6755
        %v7207 = vunpack.c.l.b16 %v6756
        %v7208 = vunpack.c.h.b16 %v6756
        %v7209 = vunpack.c.l.b16 %v6757
        %v7210 = vunpack.c.h.b16 %v6757
        %v7211 = vunpack.c.l.b16 %v6758
        %v7212 = vunpack.c.h.b16 %v6758
        %v7213 = vunpack.c.l.b16 %v6759
        %v7214 = vunpack.c.h.b16 %v6759
        %v7215 = vunpack.c.l.b16 %v6760
        %v7216 = vunpack.c.h.b16 %v6760
        %v7217 = vunpack.c.l.b16 %v6761
        %v7218 = vunpack.c.h.b16 %v6761
        %v7219 = vunpack.c.l.b16 %v6762
        %v7220 = vunpack.c.h.b16 %v6762
        %v7221 = vunpack.c.l.b16 %v6763
        %v7222 = vunpack.c.h.b16 %v6763
        %v7223 = vunpack.c.l.b16 %v6764
        %v7224 = vunpack.c.h.b16 %v6764
        %v7225 = vunpack.c.l.b16 %v6765
        %v7226 = vunpack.c.h.b16 %v6765
        %v7227 = vunpack.c.l.b16 %v6766
        %v7228 = vunpack.c.h.b16 %v6766
        %v7229 = vunpack.c.l.b16 %v6767
        %v7230 = vunpack.c.h.b16 %v6767
        %v7231 = vunpack.c.l.b16 %v6768
        %v7232 = vunpack.c.h.b16 %v6768
        %v7233 = vunpack.c.l.b16 %v6769
        %v7234 = vunpack.c.h.b16 %v6769
        %v7235 = vunpack.c.l.b16 %v6770
        %v7236 = vunpack.c.h.b16 %v6770
        %v7237 = vunpack.c.l.b16 %v6771
        %v7238 = vunpack.c.h.b16 %v6771
        %v7239 = vunpack.c.l.b16 %v6772
        %v7240 = vunpack.c.h.b16 %v6772
        %v7241 = vunpack.c.l.b16 %v6773
        %v7242 = vunpack.c.h.b16 %v6773
        %v7243 = vpack.c.b16 %v7003, %v6987
        %v7244 = vpack.c.b16 %v7004, %v6988
        %v7245 = vpack.c.b16 %v7005, %v6989
        %v7246 = vpack.c.b16 %v7006, %v6990
        %v7247 = vpack.c.b16 %v7007, %v6991
        %v7248 = vpack.c.b16 %v7008, %v6992
        %v7249 = vpack.c.b16 %v7009, %v6993
        %v7250 = vpack.c.b16 %v7010, %v6994
        %v7251 = vpack.c.b16 %v7011, %v6995
        %v7252 = vpack.c.b16 %v7012, %v6996
        %v7253 = vpack.c.b16 %v7013, %v6997
        %v7254 = vpack.c.b16 %v7014, %v6998
        %v7255 = vpack.c.b16 %v7015, %v6999
        %v7256 = vpack.c.b16 %v7016, %v7000
        %v7257 = vpack.c.b16 %v7017, %v7001
        %v7258 = vpack.c.b16 %v7018, %v7002
        %v7259 = vpack.c.b16 %v7035, %v7019
        %v7260 = vpack.c.b16 %v7036, %v7020
        %v7261 = vpack.c.b16 %v7037, %v7021
        %v7262 = vpack.c.b16 %v7038, %v7022
        %v7263 = vpack.c.b16 %v7039, %v7023
        %v7264 = vpack.c.b16 %v7040, %v7024
        %v7265 = vpack.c.b16 %v7041, %v7025
        %v7266 = vpack.c.b16 %v7042, %v7026
        %v7267 = vpack.c.b16 %v7043, %v7027
        %v7268 = vpack.c.b16 %v7044, %v7028
        %v7269 = vpack.c.b16 %v7045, %v7029
        %v7270 = vpack.c.b16 %v7046, %v7030
        %v7271 = vpack.c.b16 %v7047, %v7031
        %v7272 = vpack.c.b16 %v7048, %v7032
        %v7273 = vpack.c.b16 %v7049, %v7033
        %v7274 = vpack.c.b16 %v7050, %v7034
        %v7275 = vpack.c.b16 %v7067, %v7051
        %v7276 = vpack.c.b16 %v7068, %v7052
        %v7277 = vpack.c.b16 %v7069, %v7053
        %v7278 = vpack.c.b16 %v7070, %v7054
        %v7279 = vpack.c.b16 %v7071, %v7055
        %v7280 = vpack.c.b16 %v7072, %v7056
        %v7281 = vpack.c.b16 %v7073, %v7057
        %v7282 = vpack.c.b16 %v7074, %v7058
        %v7283 = vpack.c.b16 %v7075, %v7059
        %v7284 = vpack.c.b16 %v7076, %v7060
        %v7285 = vpack.c.b16 %v7077, %v7061
        %v7286 = vpack.c.b16 %v7078, %v7062
        %v7287 = vpack.c.b16 %v7079, %v7063
        %v7288 = vpack.c.b16 %v7080, %v7064
        %v7289 = vpack.c.b16 %v7081, %v7065
        %v7290 = vpack.c.b16 %v7082, %v7066
        %v7291 = vpack.c.b16 %v7099, %v7083
        %v7292 = vpack.c.b16 %v7100, %v7084
        %v7293 = vpack.c.b16 %v7101, %v7085
        %v7294 = vpack.c.b16 %v7102, %v7086
        %v7295 = vpack.c.b16 %v7103, %v7087
        %v7296 = vpack.c.b16 %v7104, %v7088
        %v7297 = vpack.c.b16 %v7105, %v7089
        %v7298 = vpack.c.b16 %v7106, %v7090
        %v7299 = vpack.c.b16 %v7107, %v7091
        %v7300 = vpack.c.b16 %v7108, %v7092
        %v7301 = vpack.c.b16 %v7109, %v7093
        %v7302 = vpack.c.b16 %v7110, %v7094
        %v7303 = vpack.c.b16 %v7111, %v7095
        %v7304 = vpack.c.b16 %v7112, %v7096
        %v7305 = vpack.c.b16 %v7113, %v7097
        %v7306 = vpack.c.b16 %v7114, %v7098
        %v7307 = vpack.c.b16 %v7131, %v7115
        %v7308 = vpack.c.b16 %v7132, %v7116
        %v7309 = vpack.c.b16 %v7133, %v7117
        %v7310 = vpack.c.b16 %v7134, %v7118
        %v7311 = vpack.c.b16 %v7135, %v7119
        %v7312 = vpack.c.b16 %v7136, %v7120
        %v7313 = vpack.c.b16 %v7137, %v7121
        %v7314 = vpack.c.b16 %v7138, %v7122
        %v7315 = vpack.c.b16 %v7139, %v7123
        %v7316 = vpack.c.b16 %v7140, %v7124
        %v7317 = vpack.c.b16 %v7141, %v7125
        %v7318 = vpack.c.b16 %v7142, %v7126
        %v7319 = vpack.c.b16 %v7143, %v7127
        %v7320 = vpack.c.b16 %v7144, %v7128
        %v7321 = vpack.c.b16 %v7145, %v7129
        %v7322 = vpack.c.b16 %v7146, %v7130
        %v7323 = vpack.c.b16 %v7163, %v7147
        %v7324 = vpack.c.b16 %v7164, %v7148
        %v7325 = vpack.c.b16 %v7165, %v7149
        %v7326 = vpack.c.b16 %v7166, %v7150
        %v7327 = vpack.c.b16 %v7167, %v7151
        %v7328 = vpack.c.b16 %v7168, %v7152
        %v7329 = vpack.c.b16 %v7169, %v7153
        %v7330 = vpack.c.b16 %v7170, %v7154
        %v7331 = vpack.c.b16 %v7171, %v7155
        %v7332 = vpack.c.b16 %v7172, %v7156
        %v7333 = vpack.c.b16 %v7173, %v7157
        %v7334 = vpack.c.b16 %v7174, %v7158
        %v7335 = vpack.c.b16 %v7175, %v7159
        %v7336 = vpack.c.b16 %v7176, %v7160
        %v7337 = vpack.c.b16 %v7177, %v7161
        %v7338 = vpack.c.b16 %v7178, %v7162
        %v7339 = vpack.c.b16 %v7195, %v7179
        %v7340 = vpack.c.b16 %v7196, %v7180
        %v7341 = vpack.c.b16 %v7197, %v7181
        %v7342 = vpack.c.b16 %v7198, %v7182
        %v7343 = vpack.c.b16 %v7199, %v7183
        %v7344 = vpack.c.b16 %v7200, %v7184
        %v7345 = vpack.c.b16 %v7201, %v7185
        %v7346 = vpack.c.b16 %v7202, %v7186
        %v7347 = vpack.c.b16 %v7203, %v7187
        %v7348 = vpack.c.b16 %v7204, %v7188
        %v7349 = vpack.c.b16 %v7205, %v7189
        %v7350 = vpack.c.b16 %v7206, %v7190
        %v7351 = vpack.c.b16 %v7207, %v7191
        %v7352 = vpack.c.b16 %v7208, %v7192
        %v7353 = vpack.c.b16 %v7209, %v7193
        %v7354 = vpack.c.b16 %v7210, %v7194
        %v7355 = vpack.c.b16 %v7227, %v7211
        %v7356 = vpack.c.b16 %v7228, %v7212
        %v7357 = vpack.c.b16 %v7229, %v7213
        %v7358 = vpack.c.b16 %v7230, %v7214
        %v7359 = vpack.c.b16 %v7231, %v7215
        %v7360 = vpack.c.b16 %v7232, %v7216
        %v7361 = vpack.c.b16 %v7233, %v7217
        %v7362 = vpack.c.b16 %v7234, %v7218
        %v7363 = vpack.c.b16 %v7235, %v7219
        %v7364 = vpack.c.b16 %v7236, %v7220
        %v7365 = vpack.c.b16 %v7237, %v7221
        %v7366 = vpack.c.b16 %v7238, %v7222
        %v7367 = vpack.c.b16 %v7239, %v7223
        %v7368 = vpack.c.b16 %v7240, %v7224
        %v7369 = vpack.c.b16 %v7241, %v7225
        %v7370 = vpack.c.b16 %v7242, %v7226
        %7499 = vmatprep.subr.bf16.mxu0 %v7356
        %7500 = vmatpush1.bf16.msra.mxu0 %v7355
        %7501 = vmatprep.subr.bf16.mxu0 %v7340
        %7502 = vmatpush1.bf16.msra.mxu0 %v7339
        %7503 = vmatprep.subr.bf16.mxu0 %v7324
        %7504 = vmatpush1.bf16.msra.mxu0 %v7323
        %7505 = vmatprep.subr.bf16.mxu0 %v7308
        %7506 = vmatpush1.bf16.msra.mxu0 %v7307
        %7507 = vmatprep.subr.bf16.mxu0 %v7292
        %7508 = vmatpush1.bf16.msra.mxu0 %v7291
        %7509 = vmatprep.subr.bf16.mxu0 %v7276
        %7510 = vmatpush1.bf16.msra.mxu0 %v7275
        %7511 = vmatprep.subr.bf16.mxu0 %v7260
        %7512 = vmatpush1.bf16.msra.mxu0 %v7259
        %7513 = vmatprep.subr.bf16.mxu0 %v7244
        %7514 = vmatpush1.bf16.msra.mxu0 %v7243
        %7515 = vmatprep.subr.bf16.mxu0 0
        %7516 = vmatpush2.bf16.msra.mxu0 0
        %7517 = vmatprep.subr.bf16.mxu0 0
        %7518 = vmatpush2.bf16.msra.mxu0 0
        %7519 = vmatprep.subr.bf16.mxu0 0
        %7520 = vmatpush2.bf16.msra.mxu0 0
        %7521 = vmatprep.subr.bf16.mxu0 0
        %7522 = vmatpush2.bf16.msra.mxu0 0
        %7523 = vmatprep.subr.bf16.mxu0 0
        %7524 = vmatpush2.bf16.msra.mxu0 0
        %7525 = vmatprep.subr.bf16.mxu0 0
        %7526 = vmatpush2.bf16.msra.mxu0 0
        %7527 = vmatprep.subr.bf16.mxu0 0
        %7528 = vmatpush2.bf16.msra.mxu0 0
        %7529 = vmatprep.subr.bf16.mxu0 0
        %7530 = vmatpush2.bf16.msra.mxu0 0
        %7531 = vmatprep.mubr.bf16.mxu0 0
        %7532 = vmatmul.mubr.bf16.gmra.mxu0 %v6644
        %v7533 = vpop.f32.mrf.mxu0
        %v7534 = vadd.f32 %v6782, %v7533
        %v7535 = vpop.f32.mrf.mxu0
        %v7536 = vadd.f32 %v6786, %v7535
        %v7537 = vpop.f32.mrf.mxu0
        %v7538 = vpop.f32.mrf.mxu0
        %7539 = vdwg.mxu0
        %7540 = vmatprep.subr.bf16.mxu0 %v7358
        %7541 = vmatpush1.bf16.msra.mxu0 %v7357
        %7542 = vmatprep.subr.bf16.mxu0 %v7342
        %7543 = vmatpush1.bf16.msra.mxu0 %v7341
        %7544 = vmatprep.subr.bf16.mxu0 %v7326
        %7545 = vmatpush1.bf16.msra.mxu0 %v7325
        %7546 = vmatprep.subr.bf16.mxu0 %v7310
        %7547 = vmatpush1.bf16.msra.mxu0 %v7309
        %7548 = vmatprep.subr.bf16.mxu0 %v7294
        %7549 = vmatpush1.bf16.msra.mxu0 %v7293
        %7550 = vmatprep.subr.bf16.mxu0 %v7278
        %7551 = vmatpush1.bf16.msra.mxu0 %v7277
        %7552 = vmatprep.subr.bf16.mxu0 %v7262
        %7553 = vmatpush1.bf16.msra.mxu0 %v7261
        %7554 = vmatprep.subr.bf16.mxu0 %v7246
        %7555 = vmatpush1.bf16.msra.mxu0 %v7245
        %7556 = vmatprep.subr.bf16.mxu0 0
        %7557 = vmatpush2.bf16.msra.mxu0 0
        %7558 = vmatprep.subr.bf16.mxu0 0
        %7559 = vmatpush2.bf16.msra.mxu0 0
        %7560 = vmatprep.subr.bf16.mxu0 0
        %7561 = vmatpush2.bf16.msra.mxu0 0
        %7562 = vmatprep.subr.bf16.mxu0 0
        %7563 = vmatpush2.bf16.msra.mxu0 0
        %7564 = vmatprep.subr.bf16.mxu0 0
        %7565 = vmatpush2.bf16.msra.mxu0 0
        %7566 = vmatprep.subr.bf16.mxu0 0
        %7567 = vmatpush2.bf16.msra.mxu0 0
        %7568 = vmatprep.subr.bf16.mxu0 0
        %7569 = vmatpush2.bf16.msra.mxu0 0
        %7570 = vmatprep.subr.bf16.mxu0 0
        %7571 = vmatpush2.bf16.msra.mxu0 0
        %7572 = vmatprep.mubr.bf16.mxu0 0
        %7573 = vmatmul.mubr.bf16.gmra.mxu0 %v6644
        %v7574 = vpop.f32.mrf.mxu0
        %v7575 = vadd.f32 %v6790, %v7574
        %v7576 = vpop.f32.mrf.mxu0
        %v7577 = vadd.f32 %v6794, %v7576
        %v7578 = vpop.f32.mrf.mxu0
        %v7579 = vpop.f32.mrf.mxu0
        %7580 = vdwg.mxu0
        %7581 = vmatprep.subr.bf16.mxu0 %v7360
        %7582 = vmatpush1.bf16.msra.mxu0 %v7359
        %7583 = vmatprep.subr.bf16.mxu0 %v7344
        %7584 = vmatpush1.bf16.msra.mxu0 %v7343
        %7585 = vmatprep.subr.bf16.mxu0 %v7328
        %7586 = vmatpush1.bf16.msra.mxu0 %v7327
        %7587 = vmatprep.subr.bf16.mxu0 %v7312
        %7588 = vmatpush1.bf16.msra.mxu0 %v7311
        %7589 = vmatprep.subr.bf16.mxu0 %v7296
        %7590 = vmatpush1.bf16.msra.mxu0 %v7295
        %7591 = vmatprep.subr.bf16.mxu0 %v7280
        %7592 = vmatpush1.bf16.msra.mxu0 %v7279
        %7593 = vmatprep.subr.bf16.mxu0 %v7264
        %7594 = vmatpush1.bf16.msra.mxu0 %v7263
        %7595 = vmatprep.subr.bf16.mxu0 %v7248
        %7596 = vmatpush1.bf16.msra.mxu0 %v7247
        %7597 = vmatprep.subr.bf16.mxu0 0
        %7598 = vmatpush2.bf16.msra.mxu0 0
        %7599 = vmatprep.subr.bf16.mxu0 0
        %7600 = vmatpush2.bf16.msra.mxu0 0
        %7601 = vmatprep.subr.bf16.mxu0 0
        %7602 = vmatpush2.bf16.msra.mxu0 0
        %7603 = vmatprep.subr.bf16.mxu0 0
        %7604 = vmatpush2.bf16.msra.mxu0 0
        %7605 = vmatprep.subr.bf16.mxu0 0
        %7606 = vmatpush2.bf16.msra.mxu0 0
        %7607 = vmatprep.subr.bf16.mxu0 0
        %7608 = vmatpush2.bf16.msra.mxu0 0
        %7609 = vmatprep.subr.bf16.mxu0 0
        %7610 = vmatpush2.bf16.msra.mxu0 0
        %7611 = vmatprep.subr.bf16.mxu0 0
        %7612 = vmatpush2.bf16.msra.mxu0 0
        %7613 = vmatprep.mubr.bf16.mxu0 0
        %7614 = vmatmul.mubr.bf16.gmra.mxu0 %v6644
        %v7615 = vpop.f32.mrf.mxu0
        %v7616 = vadd.f32 %v6798, %v7615
        %v7617 = vpop.f32.mrf.mxu0
        %v7618 = vadd.f32 %v6802, %v7617
        %v7619 = vpop.f32.mrf.mxu0
        %v7620 = vpop.f32.mrf.mxu0
        %7621 = vdwg.mxu0
        %7622 = vmatprep.subr.bf16.mxu0 %v7362
        %7623 = vmatpush1.bf16.msra.mxu0 %v7361
        %7624 = vmatprep.subr.bf16.mxu0 %v7346
        %7625 = vmatpush1.bf16.msra.mxu0 %v7345
        %7626 = vmatprep.subr.bf16.mxu0 %v7330
        %7627 = vmatpush1.bf16.msra.mxu0 %v7329
        %7628 = vmatprep.subr.bf16.mxu0 %v7314
        %7629 = vmatpush1.bf16.msra.mxu0 %v7313
        %7630 = vmatprep.subr.bf16.mxu0 %v7298
        %7631 = vmatpush1.bf16.msra.mxu0 %v7297
        %7632 = vmatprep.subr.bf16.mxu0 %v7282
        %7633 = vmatpush1.bf16.msra.mxu0 %v7281
        %7634 = vmatprep.subr.bf16.mxu0 %v7266
        %7635 = vmatpush1.bf16.msra.mxu0 %v7265
        %7636 = vmatprep.subr.bf16.mxu0 %v7250
        %7637 = vmatpush1.bf16.msra.mxu0 %v7249
        %7638 = vmatprep.subr.bf16.mxu0 0
        %7639 = vmatpush2.bf16.msra.mxu0 0
        %7640 = vmatprep.subr.bf16.mxu0 0
        %7641 = vmatpush2.bf16.msra.mxu0 0
        %7642 = vmatprep.subr.bf16.mxu0 0
        %7643 = vmatpush2.bf16.msra.mxu0 0
        %7644 = vmatprep.subr.bf16.mxu0 0
        %7645 = vmatpush2.bf16.msra.mxu0 0
        %7646 = vmatprep.subr.bf16.mxu0 0
        %7647 = vmatpush2.bf16.msra.mxu0 0
        %7648 = vmatprep.subr.bf16.mxu0 0
        %7649 = vmatpush2.bf16.msra.mxu0 0
        %7650 = vmatprep.subr.bf16.mxu0 0
        %7651 = vmatpush2.bf16.msra.mxu0 0
        %7652 = vmatprep.subr.bf16.mxu0 0
        %7653 = vmatpush2.bf16.msra.mxu0 0
        %7654 = vmatprep.mubr.bf16.mxu0 0
        %7655 = vmatmul.mubr.bf16.gmra.mxu0 %v6644
        %v7656 = vpop.f32.mrf.mxu0
        %v7657 = vadd.f32 %v6806, %v7656
        %v7658 = vpop.f32.mrf.mxu0
        %v7659 = vadd.f32 %v6810, %v7658
        %v7660 = vpop.f32.mrf.mxu0
        %v7661 = vpop.f32.mrf.mxu0
        %7662 = vdwg.mxu0
        %7663 = vmatprep.subr.bf16.mxu0 %v7364
        %7664 = vmatpush1.bf16.msra.mxu0 %v7363
        %7665 = vmatprep.subr.bf16.mxu0 %v7348
        %7666 = vmatpush1.bf16.msra.mxu0 %v7347
        %7667 = vmatprep.subr.bf16.mxu0 %v7332
        %7668 = vmatpush1.bf16.msra.mxu0 %v7331
        %7669 = vmatprep.subr.bf16.mxu0 %v7316
        %7670 = vmatpush1.bf16.msra.mxu0 %v7315
        %7671 = vmatprep.subr.bf16.mxu0 %v7300
        %7672 = vmatpush1.bf16.msra.mxu0 %v7299
        %7673 = vmatprep.subr.bf16.mxu0 %v7284
        %7674 = vmatpush1.bf16.msra.mxu0 %v7283
        %7675 = vmatprep.subr.bf16.mxu0 %v7268
        %7676 = vmatpush1.bf16.msra.mxu0 %v7267
        %7677 = vmatprep.subr.bf16.mxu0 %v7252
        %7678 = vmatpush1.bf16.msra.mxu0 %v7251
        %7679 = vmatprep.subr.bf16.mxu0 0
        %7680 = vmatpush2.bf16.msra.mxu0 0
        %7681 = vmatprep.subr.bf16.mxu0 0
        %7682 = vmatpush2.bf16.msra.mxu0 0
        %7683 = vmatprep.subr.bf16.mxu0 0
        %7684 = vmatpush2.bf16.msra.mxu0 0
        %7685 = vmatprep.subr.bf16.mxu0 0
        %7686 = vmatpush2.bf16.msra.mxu0 0
        %7687 = vmatprep.subr.bf16.mxu0 0
        %7688 = vmatpush2.bf16.msra.mxu0 0
        %7689 = vmatprep.subr.bf16.mxu0 0
        %7690 = vmatpush2.bf16.msra.mxu0 0
        %7691 = vmatprep.subr.bf16.mxu0 0
        %7692 = vmatpush2.bf16.msra.mxu0 0
        %7693 = vmatprep.subr.bf16.mxu0 0
        %7694 = vmatpush2.bf16.msra.mxu0 0
        %7695 = vmatprep.mubr.bf16.mxu0 0
        %7696 = vmatmul.mubr.bf16.gmra.mxu0 %v6644
        %v7697 = vpop.f32.mrf.mxu0
        %v7698 = vadd.f32 %v6814, %v7697
        %v7699 = vpop.f32.mrf.mxu0
        %v7700 = vadd.f32 %v6818, %v7699
        %v7701 = vpop.f32.mrf.mxu0
        %v7702 = vpop.f32.mrf.mxu0
        %7703 = vdwg.mxu0
        %7704 = vmatprep.subr.bf16.mxu0 %v7366
        %7705 = vmatpush1.bf16.msra.mxu0 %v7365
        %7706 = vmatprep.subr.bf16.mxu0 %v7350
        %7707 = vmatpush1.bf16.msra.mxu0 %v7349
        %7708 = vmatprep.subr.bf16.mxu0 %v7334
        %7709 = vmatpush1.bf16.msra.mxu0 %v7333
        %7710 = vmatprep.subr.bf16.mxu0 %v7318
        %7711 = vmatpush1.bf16.msra.mxu0 %v7317
        %7712 = vmatprep.subr.bf16.mxu0 %v7302
        %7713 = vmatpush1.bf16.msra.mxu0 %v7301
        %7714 = vmatprep.subr.bf16.mxu0 %v7286
        %7715 = vmatpush1.bf16.msra.mxu0 %v7285
        %7716 = vmatprep.subr.bf16.mxu0 %v7270
        %7717 = vmatpush1.bf16.msra.mxu0 %v7269
        %7718 = vmatprep.subr.bf16.mxu0 %v7254
        %7719 = vmatpush1.bf16.msra.mxu0 %v7253
        %7720 = vmatprep.subr.bf16.mxu0 0
        %7721 = vmatpush2.bf16.msra.mxu0 0
        %7722 = vmatprep.subr.bf16.mxu0 0
        %7723 = vmatpush2.bf16.msra.mxu0 0
        %7724 = vmatprep.subr.bf16.mxu0 0
        %7725 = vmatpush2.bf16.msra.mxu0 0
        %7726 = vmatprep.subr.bf16.mxu0 0
        %7727 = vmatpush2.bf16.msra.mxu0 0
        %7728 = vmatprep.subr.bf16.mxu0 0
        %7729 = vmatpush2.bf16.msra.mxu0 0
        %7730 = vmatprep.subr.bf16.mxu0 0
        %7731 = vmatpush2.bf16.msra.mxu0 0
        %7732 = vmatprep.subr.bf16.mxu0 0
        %7733 = vmatpush2.bf16.msra.mxu0 0
        %7734 = vmatprep.subr.bf16.mxu0 0
        %7735 = vmatpush2.bf16.msra.mxu0 0
        %7736 = vmatprep.mubr.bf16.mxu0 0
        %7737 = vmatmul.mubr.bf16.gmra.mxu0 %v6644
        %v7738 = vpop.f32.mrf.mxu0
        %v7739 = vadd.f32 %v6822, %v7738
        %v7740 = vpop.f32.mrf.mxu0
        %v7741 = vadd.f32 %v6826, %v7740
        %v7742 = vpop.f32.mrf.mxu0
        %v7743 = vpop.f32.mrf.mxu0
        %7744 = vdwg.mxu0
        %7745 = vmatprep.subr.bf16.mxu0 %v7368
        %7746 = vmatpush1.bf16.msra.mxu0 %v7367
        %7747 = vmatprep.subr.bf16.mxu0 %v7352
        %7748 = vmatpush1.bf16.msra.mxu0 %v7351
        %7749 = vmatprep.subr.bf16.mxu0 %v7336
        %7750 = vmatpush1.bf16.msra.mxu0 %v7335
        %7751 = vmatprep.subr.bf16.mxu0 %v7320
        %7752 = vmatpush1.bf16.msra.mxu0 %v7319
        %7753 = vmatprep.subr.bf16.mxu0 %v7304
        %7754 = vmatpush1.bf16.msra.mxu0 %v7303
        %7755 = vmatprep.subr.bf16.mxu0 %v7288
        %7756 = vmatpush1.bf16.msra.mxu0 %v7287
        %7757 = vmatprep.subr.bf16.mxu0 %v7272
        %7758 = vmatpush1.bf16.msra.mxu0 %v7271
        %7759 = vmatprep.subr.bf16.mxu0 %v7256
        %7760 = vmatpush1.bf16.msra.mxu0 %v7255
        %7761 = vmatprep.subr.bf16.mxu0 0
        %7762 = vmatpush2.bf16.msra.mxu0 0
        %7763 = vmatprep.subr.bf16.mxu0 0
        %7764 = vmatpush2.bf16.msra.mxu0 0
        %7765 = vmatprep.subr.bf16.mxu0 0
        %7766 = vmatpush2.bf16.msra.mxu0 0
        %7767 = vmatprep.subr.bf16.mxu0 0
        %7768 = vmatpush2.bf16.msra.mxu0 0
        %7769 = vmatprep.subr.bf16.mxu0 0
        %7770 = vmatpush2.bf16.msra.mxu0 0
        %7771 = vmatprep.subr.bf16.mxu0 0
        %7772 = vmatpush2.bf16.msra.mxu0 0
        %7773 = vmatprep.subr.bf16.mxu0 0
        %7774 = vmatpush2.bf16.msra.mxu0 0
        %7775 = vmatprep.subr.bf16.mxu0 0
        %7776 = vmatpush2.bf16.msra.mxu0 0
        %7777 = vmatprep.mubr.bf16.mxu0 0
        %7778 = vmatmul.mubr.bf16.gmra.mxu0 %v6644
        %v7779 = vpop.f32.mrf.mxu0
        %v7780 = vadd.f32 %v6830, %v7779
        %v7781 = vpop.f32.mrf.mxu0
        %v7782 = vadd.f32 %v6834, %v7781
        %v7783 = vpop.f32.mrf.mxu0
        %v7784 = vpop.f32.mrf.mxu0
        %7785 = vdwg.mxu0
        %7786 = vmatprep.subr.bf16.mxu0 %v7370
        %7787 = vmatpush1.bf16.msra.mxu0 %v7369
        %7788 = vmatprep.subr.bf16.mxu0 %v7354
        %7789 = vmatpush1.bf16.msra.mxu0 %v7353
        %7790 = vmatprep.subr.bf16.mxu0 %v7338
        %7791 = vmatpush1.bf16.msra.mxu0 %v7337
        %7792 = vmatprep.subr.bf16.mxu0 %v7322
        %7793 = vmatpush1.bf16.msra.mxu0 %v7321
        %7794 = vmatprep.subr.bf16.mxu0 %v7306
        %7795 = vmatpush1.bf16.msra.mxu0 %v7305
        %7796 = vmatprep.subr.bf16.mxu0 %v7290
        %7797 = vmatpush1.bf16.msra.mxu0 %v7289
        %7798 = vmatprep.subr.bf16.mxu0 %v7274
        %7799 = vmatpush1.bf16.msra.mxu0 %v7273
        %7800 = vmatprep.subr.bf16.mxu0 %v7258
        %7801 = vmatpush1.bf16.msra.mxu0 %v7257
        %7802 = vmatprep.subr.bf16.mxu0 0
        %7803 = vmatpush2.bf16.msra.mxu0 0
        %7804 = vmatprep.subr.bf16.mxu0 0
        %7805 = vmatpush2.bf16.msra.mxu0 0
        %7806 = vmatprep.subr.bf16.mxu0 0
        %7807 = vmatpush2.bf16.msra.mxu0 0
        %7808 = vmatprep.subr.bf16.mxu0 0
        %7809 = vmatpush2.bf16.msra.mxu0 0
        %7810 = vmatprep.subr.bf16.mxu0 0
        %7811 = vmatpush2.bf16.msra.mxu0 0
        %7812 = vmatprep.subr.bf16.mxu0 0
        %7813 = vmatpush2.bf16.msra.mxu0 0
        %7814 = vmatprep.subr.bf16.mxu0 0
        %7815 = vmatpush2.bf16.msra.mxu0 0
        %7816 = vmatprep.subr.bf16.mxu0 0
        %7817 = vmatpush2.bf16.msra.mxu0 0
        %7818 = vmatprep.mubr.bf16.mxu0 0
        %7819 = vmatmul.mubr.bf16.gmra.mxu0 %v6644
        %v7820 = vpop.f32.mrf.mxu0
        %v7821 = vadd.f32 %v6838, %v7820
        %v7822 = vpop.f32.mrf.mxu0
        %v7823 = vadd.f32 %v6842, %v7822
        %v7824 = vpop.f32.mrf.mxu0
        %v7825 = vpop.f32.mrf.mxu0
        %7826 = vdwg.mxu0
        %v7827 = vmax.f32 %v7534, 0.0
        %v7828 = vmax.f32 %v7536, 0.0
        %v7829 = vmax.f32 %v7575, 0.0
        %v7830 = vmax.f32 %v7577, 0.0
        %v7831 = vmax.f32 %v7616, 0.0
        %v7832 = vmax.f32 %v7618, 0.0
        %v7833 = vmax.f32 %v7657, 0.0
        %v7834 = vmax.f32 %v7659, 0.0
        %v7835 = vmax.f32 %v7698, 0.0
        %v7836 = vmax.f32 %v7700, 0.0
        %v7837 = vmax.f32 %v7739, 0.0
        %v7838 = vmax.f32 %v7741, 0.0
        %v7839 = vmax.f32 %v7780, 0.0
        %v7840 = vmax.f32 %v7782, 0.0
        %v7841 = vmax.f32 %v7821, 0.0
        %v7842 = vmax.f32 %v7823, 0.0
        %v7843 = vpack.c.bf16 %v7827, %v7827
        %v7844 = vpack.c.bf16 %v7828, %v7828
        %v7845 = vpack.c.bf16 %v7829, %v7829
        %v7846 = vpack.c.bf16 %v7830, %v7830
        %v7847 = vpack.c.bf16 %v7831, %v7831
        %v7848 = vpack.c.bf16 %v7832, %v7832
        %v7849 = vpack.c.bf16 %v7833, %v7833
        %v7850 = vpack.c.bf16 %v7834, %v7834
        %v7851 = vpack.c.bf16 %v7835, %v7835
        %v7852 = vpack.c.bf16 %v7836, %v7836
        %v7853 = vpack.c.bf16 %v7837, %v7837
        %v7854 = vpack.c.bf16 %v7838, %v7838
        %v7855 = vpack.c.bf16 %v7839, %v7839
        %v7856 = vpack.c.bf16 %v7840, %v7840
        %v7857 = vpack.c.bf16 %v7841, %v7841
        %v7858 = vpack.c.bf16 %v7842, %v7842
        %s7859 = scalar_lea.vmem [#allocation5], 1024
        %v7860 = vld [vmem:[%s7859] sm:$0xf]
        %v7861 = vld [vmem:[%s7859 + $0x4] sm:$0xf]
        %v7862 = vld [vmem:[%s7859 + $0x8] sm:$0xf]
        %v7863 = vld [vmem:[%s7859 + $0xc] sm:$0xf]
        %v7864 = vld [vmem:[%s7859 + $0x10] sm:$0xf]
        %v7865 = vld [vmem:[%s7859 + $0x14] sm:$0xf]
        %v7866 = vld [vmem:[%s7859 + $0x18] sm:$0xf]
        %v7867 = vld [vmem:[%s7859 + $0x1c] sm:$0xf]
        %v7868 = vld [vmem:[%s7859 + $0x20] sm:$0xf]
        %v7869 = vld [vmem:[%s7859 + $0x24] sm:$0xf]
        %v7870 = vld [vmem:[%s7859 + $0x28] sm:$0xf]
        %v7871 = vld [vmem:[%s7859 + $0x2c] sm:$0xf]
        %v7872 = vld [vmem:[%s7859 + $0x30] sm:$0xf]
        %v7873 = vld [vmem:[%s7859 + $0x34] sm:$0xf]
        %v7874 = vld [vmem:[%s7859 + $0x38] sm:$0xf]
        %v7875 = vld [vmem:[%s7859 + $0x3c] sm:$0xf]
        %v7876 = vld [vmem:[%s7859 + $0x40] sm:$0xf]
        %v7877 = vld [vmem:[%s7859 + $0x44] sm:$0xf]
        %v7878 = vld [vmem:[%s7859 + $0x48] sm:$0xf]
        %v7879 = vld [vmem:[%s7859 + $0x4c] sm:$0xf]
        %v7880 = vld [vmem:[%s7859 + $0x50] sm:$0xf]
        %v7881 = vld [vmem:[%s7859 + $0x54] sm:$0xf]
        %v7882 = vld [vmem:[%s7859 + $0x58] sm:$0xf]
        %v7883 = vld [vmem:[%s7859 + $0x5c] sm:$0xf]
        %v7884 = vld [vmem:[%s7859 + $0x60] sm:$0xf]
        %v7885 = vld [vmem:[%s7859 + $0x64] sm:$0xf]
        %v7886 = vld [vmem:[%s7859 + $0x68] sm:$0xf]
        %v7887 = vld [vmem:[%s7859 + $0x6c] sm:$0xf]
        %v7888 = vld [vmem:[%s7859 + $0x70] sm:$0xf]
        %v7889 = vld [vmem:[%s7859 + $0x74] sm:$0xf]
        %v7890 = vld [vmem:[%s7859 + $0x78] sm:$0xf]
        %v7891 = vld [vmem:[%s7859 + $0x7c] sm:$0xf]
        %v7892 = vld [vmem:[%s7859 + $0x80] sm:$0xf]
        %v7893 = vld [vmem:[%s7859 + $0x84] sm:$0xf]
        %v7894 = vld [vmem:[%s7859 + $0x88] sm:$0xf]
        %v7895 = vld [vmem:[%s7859 + $0x8c] sm:$0xf]
        %v7896 = vld [vmem:[%s7859 + $0x90] sm:$0xf]
        %v7897 = vld [vmem:[%s7859 + $0x94] sm:$0xf]
        %v7898 = vld [vmem:[%s7859 + $0x98] sm:$0xf]
        %v7899 = vld [vmem:[%s7859 + $0x9c] sm:$0xf]
        %v7900 = vld [vmem:[%s7859 + $0xa0] sm:$0xf]
        %v7901 = vld [vmem:[%s7859 + $0xa4] sm:$0xf]
        %v7902 = vld [vmem:[%s7859 + $0xa8] sm:$0xf]
        %v7903 = vld [vmem:[%s7859 + $0xac] sm:$0xf]
        %v7904 = vld [vmem:[%s7859 + $0xb0] sm:$0xf]
        %v7905 = vld [vmem:[%s7859 + $0xb4] sm:$0xf]
        %v7906 = vld [vmem:[%s7859 + $0xb8] sm:$0xf]
        %v7907 = vld [vmem:[%s7859 + $0xbc] sm:$0xf]
        %v7908 = vld [vmem:[%s7859 + $0xc0] sm:$0xf]
        %v7909 = vld [vmem:[%s7859 + $0xc4] sm:$0xf]
        %v7910 = vld [vmem:[%s7859 + $0xc8] sm:$0xf]
        %v7911 = vld [vmem:[%s7859 + $0xcc] sm:$0xf]
        %v7912 = vld [vmem:[%s7859 + $0xd0] sm:$0xf]
        %v7913 = vld [vmem:[%s7859 + $0xd4] sm:$0xf]
        %v7914 = vld [vmem:[%s7859 + $0xd8] sm:$0xf]
        %v7915 = vld [vmem:[%s7859 + $0xdc] sm:$0xf]
        %v7916 = vld [vmem:[%s7859 + $0xe0] sm:$0xf]
        %v7917 = vld [vmem:[%s7859 + $0xe4] sm:$0xf]
        %v7918 = vld [vmem:[%s7859 + $0xe8] sm:$0xf]
        %v7919 = vld [vmem:[%s7859 + $0xec] sm:$0xf]
        %v7920 = vld [vmem:[%s7859 + $0xf0] sm:$0xf]
        %v7921 = vld [vmem:[%s7859 + $0xf4] sm:$0xf]
        %v7922 = vld [vmem:[%s7859 + $0xf8] sm:$0xf]
        %v7923 = vld [vmem:[%s7859 + $0xfc] sm:$0xf]
        %v7924 = vld [vmem:[%s7859 + $0x100] sm:$0xf]
        %v7925 = vld [vmem:[%s7859 + $0x104] sm:$0xf]
        %v7926 = vld [vmem:[%s7859 + $0x108] sm:$0xf]
        %v7927 = vld [vmem:[%s7859 + $0x10c] sm:$0xf]
        %v7928 = vld [vmem:[%s7859 + $0x110] sm:$0xf]
        %v7929 = vld [vmem:[%s7859 + $0x114] sm:$0xf]
        %v7930 = vld [vmem:[%s7859 + $0x118] sm:$0xf]
        %v7931 = vld [vmem:[%s7859 + $0x11c] sm:$0xf]
        %v7932 = vld [vmem:[%s7859 + $0x120] sm:$0xf]
        %v7933 = vld [vmem:[%s7859 + $0x124] sm:$0xf]
        %v7934 = vld [vmem:[%s7859 + $0x128] sm:$0xf]
        %v7935 = vld [vmem:[%s7859 + $0x12c] sm:$0xf]
        %v7936 = vld [vmem:[%s7859 + $0x130] sm:$0xf]
        %v7937 = vld [vmem:[%s7859 + $0x134] sm:$0xf]
        %v7938 = vld [vmem:[%s7859 + $0x138] sm:$0xf]
        %v7939 = vld [vmem:[%s7859 + $0x13c] sm:$0xf]
        %v7940 = vld [vmem:[%s7859 + $0x140] sm:$0xf]
        %v7941 = vld [vmem:[%s7859 + $0x144] sm:$0xf]
        %v7942 = vld [vmem:[%s7859 + $0x148] sm:$0xf]
        %v7943 = vld [vmem:[%s7859 + $0x14c] sm:$0xf]
        %v7944 = vld [vmem:[%s7859 + $0x150] sm:$0xf]
        %v7945 = vld [vmem:[%s7859 + $0x154] sm:$0xf]
        %v7946 = vld [vmem:[%s7859 + $0x158] sm:$0xf]
        %v7947 = vld [vmem:[%s7859 + $0x15c] sm:$0xf]
        %v7948 = vld [vmem:[%s7859 + $0x160] sm:$0xf]
        %v7949 = vld [vmem:[%s7859 + $0x164] sm:$0xf]
        %v7950 = vld [vmem:[%s7859 + $0x168] sm:$0xf]
        %v7951 = vld [vmem:[%s7859 + $0x16c] sm:$0xf]
        %v7952 = vld [vmem:[%s7859 + $0x170] sm:$0xf]
        %v7953 = vld [vmem:[%s7859 + $0x174] sm:$0xf]
        %v7954 = vld [vmem:[%s7859 + $0x178] sm:$0xf]
        %v7955 = vld [vmem:[%s7859 + $0x17c] sm:$0xf]
        %v7956 = vld [vmem:[%s7859 + $0x180] sm:$0xf]
        %v7957 = vld [vmem:[%s7859 + $0x184] sm:$0xf]
        %v7958 = vld [vmem:[%s7859 + $0x188] sm:$0xf]
        %v7959 = vld [vmem:[%s7859 + $0x18c] sm:$0xf]
        %v7960 = vld [vmem:[%s7859 + $0x190] sm:$0xf]
        %v7961 = vld [vmem:[%s7859 + $0x194] sm:$0xf]
        %v7962 = vld [vmem:[%s7859 + $0x198] sm:$0xf]
        %v7963 = vld [vmem:[%s7859 + $0x19c] sm:$0xf]
        %v7964 = vld [vmem:[%s7859 + $0x1a0] sm:$0xf]
        %v7965 = vld [vmem:[%s7859 + $0x1a4] sm:$0xf]
        %v7966 = vld [vmem:[%s7859 + $0x1a8] sm:$0xf]
        %v7967 = vld [vmem:[%s7859 + $0x1ac] sm:$0xf]
        %v7968 = vld [vmem:[%s7859 + $0x1b0] sm:$0xf]
        %v7969 = vld [vmem:[%s7859 + $0x1b4] sm:$0xf]
        %v7970 = vld [vmem:[%s7859 + $0x1b8] sm:$0xf]
        %v7971 = vld [vmem:[%s7859 + $0x1bc] sm:$0xf]
        %v7972 = vld [vmem:[%s7859 + $0x1c0] sm:$0xf]
        %v7973 = vld [vmem:[%s7859 + $0x1c4] sm:$0xf]
        %v7974 = vld [vmem:[%s7859 + $0x1c8] sm:$0xf]
        %v7975 = vld [vmem:[%s7859 + $0x1cc] sm:$0xf]
        %v7976 = vld [vmem:[%s7859 + $0x1d0] sm:$0xf]
        %v7977 = vld [vmem:[%s7859 + $0x1d4] sm:$0xf]
        %v7978 = vld [vmem:[%s7859 + $0x1d8] sm:$0xf]
        %v7979 = vld [vmem:[%s7859 + $0x1dc] sm:$0xf]
        %v7980 = vld [vmem:[%s7859 + $0x1e0] sm:$0xf]
        %v7981 = vld [vmem:[%s7859 + $0x1e4] sm:$0xf]
        %v7982 = vld [vmem:[%s7859 + $0x1e8] sm:$0xf]
        %v7983 = vld [vmem:[%s7859 + $0x1ec] sm:$0xf]
        %v7984 = vld [vmem:[%s7859 + $0x1f0] sm:$0xf]
        %v7985 = vld [vmem:[%s7859 + $0x1f4] sm:$0xf]
        %v7986 = vld [vmem:[%s7859 + $0x1f8] sm:$0xf]
        %v7987 = vld [vmem:[%s7859 + $0x1fc] sm:$0xf]
        %v7988 = vld [vmem:[%s7859 + $0x200] sm:$0xf]
        %v7989 = vld [vmem:[%s7859 + $0x204] sm:$0xf]
        %v7990 = vld [vmem:[%s7859 + $0x208] sm:$0xf]
        %v7991 = vld [vmem:[%s7859 + $0x20c] sm:$0xf]
        %v7992 = vld [vmem:[%s7859 + $0x210] sm:$0xf]
        %v7993 = vld [vmem:[%s7859 + $0x214] sm:$0xf]
        %v7994 = vld [vmem:[%s7859 + $0x218] sm:$0xf]
        %v7995 = vld [vmem:[%s7859 + $0x21c] sm:$0xf]
        %v7996 = vld [vmem:[%s7859 + $0x220] sm:$0xf]
        %v7997 = vld [vmem:[%s7859 + $0x224] sm:$0xf]
        %v7998 = vld [vmem:[%s7859 + $0x228] sm:$0xf]
        %v7999 = vld [vmem:[%s7859 + $0x22c] sm:$0xf]
        %v8000 = vld [vmem:[%s7859 + $0x230] sm:$0xf]
        %v8001 = vld [vmem:[%s7859 + $0x234] sm:$0xf]
        %v8002 = vld [vmem:[%s7859 + $0x238] sm:$0xf]
        %v8003 = vld [vmem:[%s7859 + $0x23c] sm:$0xf]
        %v8004 = vld [vmem:[%s7859 + $0x240] sm:$0xf]
        %v8005 = vld [vmem:[%s7859 + $0x244] sm:$0xf]
        %v8006 = vld [vmem:[%s7859 + $0x248] sm:$0xf]
        %v8007 = vld [vmem:[%s7859 + $0x24c] sm:$0xf]
        %v8008 = vld [vmem:[%s7859 + $0x250] sm:$0xf]
        %v8009 = vld [vmem:[%s7859 + $0x254] sm:$0xf]
        %v8010 = vld [vmem:[%s7859 + $0x258] sm:$0xf]
        %v8011 = vld [vmem:[%s7859 + $0x25c] sm:$0xf]
        %v8012 = vld [vmem:[%s7859 + $0x260] sm:$0xf]
        %v8013 = vld [vmem:[%s7859 + $0x264] sm:$0xf]
        %v8014 = vld [vmem:[%s7859 + $0x268] sm:$0xf]
        %v8015 = vld [vmem:[%s7859 + $0x26c] sm:$0xf]
        %v8016 = vld [vmem:[%s7859 + $0x270] sm:$0xf]
        %v8017 = vld [vmem:[%s7859 + $0x274] sm:$0xf]
        %v8018 = vld [vmem:[%s7859 + $0x278] sm:$0xf]
        %v8019 = vld [vmem:[%s7859 + $0x27c] sm:$0xf]
        %v8020 = vld [vmem:[%s7859 + $0x280] sm:$0xf]
        %v8021 = vld [vmem:[%s7859 + $0x284] sm:$0xf]
        %v8022 = vld [vmem:[%s7859 + $0x288] sm:$0xf]
        %v8023 = vld [vmem:[%s7859 + $0x28c] sm:$0xf]
        %v8024 = vld [vmem:[%s7859 + $0x290] sm:$0xf]
        %v8025 = vld [vmem:[%s7859 + $0x294] sm:$0xf]
        %v8026 = vld [vmem:[%s7859 + $0x298] sm:$0xf]
        %v8027 = vld [vmem:[%s7859 + $0x29c] sm:$0xf]
        %v8028 = vld [vmem:[%s7859 + $0x2a0] sm:$0xf]
        %v8029 = vld [vmem:[%s7859 + $0x2a4] sm:$0xf]
        %v8030 = vld [vmem:[%s7859 + $0x2a8] sm:$0xf]
        %v8031 = vld [vmem:[%s7859 + $0x2ac] sm:$0xf]
        %v8032 = vld [vmem:[%s7859 + $0x2b0] sm:$0xf]
        %v8033 = vld [vmem:[%s7859 + $0x2b4] sm:$0xf]
        %v8034 = vld [vmem:[%s7859 + $0x2b8] sm:$0xf]
        %v8035 = vld [vmem:[%s7859 + $0x2bc] sm:$0xf]
        %v8036 = vld [vmem:[%s7859 + $0x2c0] sm:$0xf]
        %v8037 = vld [vmem:[%s7859 + $0x2c4] sm:$0xf]
        %v8038 = vld [vmem:[%s7859 + $0x2c8] sm:$0xf]
        %v8039 = vld [vmem:[%s7859 + $0x2cc] sm:$0xf]
        %v8040 = vld [vmem:[%s7859 + $0x2d0] sm:$0xf]
        %v8041 = vld [vmem:[%s7859 + $0x2d4] sm:$0xf]
        %v8042 = vld [vmem:[%s7859 + $0x2d8] sm:$0xf]
        %v8043 = vld [vmem:[%s7859 + $0x2dc] sm:$0xf]
        %v8044 = vld [vmem:[%s7859 + $0x2e0] sm:$0xf]
        %v8045 = vld [vmem:[%s7859 + $0x2e4] sm:$0xf]
        %v8046 = vld [vmem:[%s7859 + $0x2e8] sm:$0xf]
        %v8047 = vld [vmem:[%s7859 + $0x2ec] sm:$0xf]
        %v8048 = vld [vmem:[%s7859 + $0x2f0] sm:$0xf]
        %v8049 = vld [vmem:[%s7859 + $0x2f4] sm:$0xf]
        %v8050 = vld [vmem:[%s7859 + $0x2f8] sm:$0xf]
        %v8051 = vld [vmem:[%s7859 + $0x2fc] sm:$0xf]
        %v8052 = vld [vmem:[%s7859 + $0x300] sm:$0xf]
        %v8053 = vld [vmem:[%s7859 + $0x304] sm:$0xf]
        %v8054 = vld [vmem:[%s7859 + $0x308] sm:$0xf]
        %v8055 = vld [vmem:[%s7859 + $0x30c] sm:$0xf]
        %v8056 = vld [vmem:[%s7859 + $0x310] sm:$0xf]
        %v8057 = vld [vmem:[%s7859 + $0x314] sm:$0xf]
        %v8058 = vld [vmem:[%s7859 + $0x318] sm:$0xf]
        %v8059 = vld [vmem:[%s7859 + $0x31c] sm:$0xf]
        %v8060 = vld [vmem:[%s7859 + $0x320] sm:$0xf]
        %v8061 = vld [vmem:[%s7859 + $0x324] sm:$0xf]
        %v8062 = vld [vmem:[%s7859 + $0x328] sm:$0xf]
        %v8063 = vld [vmem:[%s7859 + $0x32c] sm:$0xf]
        %v8064 = vld [vmem:[%s7859 + $0x330] sm:$0xf]
        %v8065 = vld [vmem:[%s7859 + $0x334] sm:$0xf]
        %v8066 = vld [vmem:[%s7859 + $0x338] sm:$0xf]
        %v8067 = vld [vmem:[%s7859 + $0x33c] sm:$0xf]
        %v8068 = vld [vmem:[%s7859 + $0x340] sm:$0xf]
        %v8069 = vld [vmem:[%s7859 + $0x344] sm:$0xf]
        %v8070 = vld [vmem:[%s7859 + $0x348] sm:$0xf]
        %v8071 = vld [vmem:[%s7859 + $0x34c] sm:$0xf]
        %v8072 = vld [vmem:[%s7859 + $0x350] sm:$0xf]
        %v8073 = vld [vmem:[%s7859 + $0x354] sm:$0xf]
        %v8074 = vld [vmem:[%s7859 + $0x358] sm:$0xf]
        %v8075 = vld [vmem:[%s7859 + $0x35c] sm:$0xf]
        %v8076 = vld [vmem:[%s7859 + $0x360] sm:$0xf]
        %v8077 = vld [vmem:[%s7859 + $0x364] sm:$0xf]
        %v8078 = vld [vmem:[%s7859 + $0x368] sm:$0xf]
        %v8079 = vld [vmem:[%s7859 + $0x36c] sm:$0xf]
        %v8080 = vld [vmem:[%s7859 + $0x370] sm:$0xf]
        %v8081 = vld [vmem:[%s7859 + $0x374] sm:$0xf]
        %v8082 = vld [vmem:[%s7859 + $0x378] sm:$0xf]
        %v8083 = vld [vmem:[%s7859 + $0x37c] sm:$0xf]
        %v8084 = vld [vmem:[%s7859 + $0x380] sm:$0xf]
        %v8085 = vld [vmem:[%s7859 + $0x384] sm:$0xf]
        %v8086 = vld [vmem:[%s7859 + $0x388] sm:$0xf]
        %v8087 = vld [vmem:[%s7859 + $0x38c] sm:$0xf]
        %v8088 = vld [vmem:[%s7859 + $0x390] sm:$0xf]
        %v8089 = vld [vmem:[%s7859 + $0x394] sm:$0xf]
        %v8090 = vld [vmem:[%s7859 + $0x398] sm:$0xf]
        %v8091 = vld [vmem:[%s7859 + $0x39c] sm:$0xf]
        %v8092 = vld [vmem:[%s7859 + $0x3a0] sm:$0xf]
        %v8093 = vld [vmem:[%s7859 + $0x3a4] sm:$0xf]
        %v8094 = vld [vmem:[%s7859 + $0x3a8] sm:$0xf]
        %v8095 = vld [vmem:[%s7859 + $0x3ac] sm:$0xf]
        %v8096 = vld [vmem:[%s7859 + $0x3b0] sm:$0xf]
        %v8097 = vld [vmem:[%s7859 + $0x3b4] sm:$0xf]
        %v8098 = vld [vmem:[%s7859 + $0x3b8] sm:$0xf]
        %v8099 = vld [vmem:[%s7859 + $0x3bc] sm:$0xf]
        %v8100 = vld [vmem:[%s7859 + $0x3c0] sm:$0xf]
        %v8101 = vld [vmem:[%s7859 + $0x3c4] sm:$0xf]
        %v8102 = vld [vmem:[%s7859 + $0x3c8] sm:$0xf]
        %v8103 = vld [vmem:[%s7859 + $0x3cc] sm:$0xf]
        %v8104 = vld [vmem:[%s7859 + $0x3d0] sm:$0xf]
        %v8105 = vld [vmem:[%s7859 + $0x3d4] sm:$0xf]
        %v8106 = vld [vmem:[%s7859 + $0x3d8] sm:$0xf]
        %v8107 = vld [vmem:[%s7859 + $0x3dc] sm:$0xf]
        %v8108 = vld [vmem:[%s7859 + $0x3e0] sm:$0xf]
        %v8109 = vld [vmem:[%s7859 + $0x3e4] sm:$0xf]
        %v8110 = vld [vmem:[%s7859 + $0x3e8] sm:$0xf]
        %v8111 = vld [vmem:[%s7859 + $0x3ec] sm:$0xf]
        %v8112 = vld [vmem:[%s7859 + $0x3f0] sm:$0xf]
        %v8113 = vld [vmem:[%s7859 + $0x3f4] sm:$0xf]
        %v8114 = vld [vmem:[%s7859 + $0x3f8] sm:$0xf]
        %v8115 = vld [vmem:[%s7859 + $0x3fc] sm:$0xf]
        %s8116 = scalar_lea.vmem %s23, 1
        %v8117 = vld [vmem:[%s8116] sm:$0x1]
        %v8119 = vlaneseq
        %v8120 = vshrl.u32 %v8119, 7
        %v8121 = vsub.s32 0, %v8120
        %v8122 = vrot.slane %v8117, %v8121
        %v8380 = vunpack.c.l.b16 %v7860
        %v8381 = vunpack.c.l.b16 %v7861
        %v8382 = vunpack.c.l.b16 %v7862
        %v8383 = vunpack.c.l.b16 %v7863
        %v8384 = vunpack.c.l.b16 %v7864
        %v8385 = vunpack.c.l.b16 %v7865
        %v8386 = vunpack.c.l.b16 %v7866
        %v8387 = vunpack.c.l.b16 %v7867
        %v8388 = vunpack.c.l.b16 %v7868
        %v8389 = vunpack.c.l.b16 %v7869
        %v8390 = vunpack.c.l.b16 %v7870
        %v8391 = vunpack.c.l.b16 %v7871
        %v8392 = vunpack.c.l.b16 %v7872
        %v8393 = vunpack.c.l.b16 %v7873
        %v8394 = vunpack.c.l.b16 %v7874
        %v8395 = vunpack.c.l.b16 %v7875
        %v8396 = vunpack.c.l.b16 %v7876
        %v8397 = vunpack.c.l.b16 %v7877
        %v8398 = vunpack.c.l.b16 %v7878
        %v8399 = vunpack.c.l.b16 %v7879
        %v8400 = vunpack.c.l.b16 %v7880
        %v8401 = vunpack.c.l.b16 %v7881
        %v8402 = vunpack.c.l.b16 %v7882
        %v8403 = vunpack.c.l.b16 %v7883
        %v8404 = vunpack.c.l.b16 %v7884
        %v8405 = vunpack.c.l.b16 %v7885
        %v8406 = vunpack.c.l.b16 %v7886
        %v8407 = vunpack.c.l.b16 %v7887
        %v8408 = vunpack.c.l.b16 %v7888
        %v8409 = vunpack.c.l.b16 %v7889
        %v8410 = vunpack.c.l.b16 %v7890
        %v8411 = vunpack.c.l.b16 %v7891
        %v8412 = vunpack.c.l.b16 %v7892
        %v8413 = vunpack.c.l.b16 %v7893
        %v8414 = vunpack.c.l.b16 %v7894
        %v8415 = vunpack.c.l.b16 %v7895
        %v8416 = vunpack.c.l.b16 %v7896
        %v8417 = vunpack.c.l.b16 %v7897
        %v8418 = vunpack.c.l.b16 %v7898
        %v8419 = vunpack.c.l.b16 %v7899
        %v8420 = vunpack.c.l.b16 %v7900
        %v8421 = vunpack.c.l.b16 %v7901
        %v8422 = vunpack.c.l.b16 %v7902
        %v8423 = vunpack.c.l.b16 %v7903
        %v8424 = vunpack.c.l.b16 %v7904
        %v8425 = vunpack.c.l.b16 %v7905
        %v8426 = vunpack.c.l.b16 %v7906
        %v8427 = vunpack.c.l.b16 %v7907
        %v8428 = vunpack.c.l.b16 %v7908
        %v8429 = vunpack.c.l.b16 %v7909
        %v8430 = vunpack.c.l.b16 %v7910
        %v8431 = vunpack.c.l.b16 %v7911
        %v8432 = vunpack.c.l.b16 %v7912
        %v8433 = vunpack.c.l.b16 %v7913
        %v8434 = vunpack.c.l.b16 %v7914
        %v8435 = vunpack.c.l.b16 %v7915
        %v8436 = vunpack.c.l.b16 %v7916
        %v8437 = vunpack.c.l.b16 %v7917
        %v8438 = vunpack.c.l.b16 %v7918
        %v8439 = vunpack.c.l.b16 %v7919
        %v8440 = vunpack.c.l.b16 %v7920
        %v8441 = vunpack.c.l.b16 %v7921
        %v8442 = vunpack.c.l.b16 %v7922
        %v8443 = vunpack.c.l.b16 %v7923
        %v8444 = vunpack.c.l.b16 %v7924
        %v8445 = vunpack.c.l.b16 %v7925
        %v8446 = vunpack.c.l.b16 %v7926
        %v8447 = vunpack.c.l.b16 %v7927
        %v8448 = vunpack.c.l.b16 %v7928
        %v8449 = vunpack.c.l.b16 %v7929
        %v8450 = vunpack.c.l.b16 %v7930
        %v8451 = vunpack.c.l.b16 %v7931
        %v8452 = vunpack.c.l.b16 %v7932
        %v8453 = vunpack.c.l.b16 %v7933
        %v8454 = vunpack.c.l.b16 %v7934
        %v8455 = vunpack.c.l.b16 %v7935
        %v8456 = vunpack.c.l.b16 %v7936
        %v8457 = vunpack.c.l.b16 %v7937
        %v8458 = vunpack.c.l.b16 %v7938
        %v8459 = vunpack.c.l.b16 %v7939
        %v8460 = vunpack.c.l.b16 %v7940
        %v8461 = vunpack.c.l.b16 %v7941
        %v8462 = vunpack.c.l.b16 %v7942
        %v8463 = vunpack.c.l.b16 %v7943
        %v8464 = vunpack.c.l.b16 %v7944
        %v8465 = vunpack.c.l.b16 %v7945
        %v8466 = vunpack.c.l.b16 %v7946
        %v8467 = vunpack.c.l.b16 %v7947
        %v8468 = vunpack.c.l.b16 %v7948
        %v8469 = vunpack.c.l.b16 %v7949
        %v8470 = vunpack.c.l.b16 %v7950
        %v8471 = vunpack.c.l.b16 %v7951
        %v8472 = vunpack.c.l.b16 %v7952
        %v8473 = vunpack.c.l.b16 %v7953
        %v8474 = vunpack.c.l.b16 %v7954
        %v8475 = vunpack.c.l.b16 %v7955
        %v8476 = vunpack.c.l.b16 %v7956
        %v8477 = vunpack.c.l.b16 %v7957
        %v8478 = vunpack.c.l.b16 %v7958
        %v8479 = vunpack.c.l.b16 %v7959
        %v8480 = vunpack.c.l.b16 %v7960
        %v8481 = vunpack.c.l.b16 %v7961
        %v8482 = vunpack.c.l.b16 %v7962
        %v8483 = vunpack.c.l.b16 %v7963
        %v8484 = vunpack.c.l.b16 %v7964
        %v8485 = vunpack.c.l.b16 %v7965
        %v8486 = vunpack.c.l.b16 %v7966
        %v8487 = vunpack.c.l.b16 %v7967
        %v8488 = vunpack.c.l.b16 %v7968
        %v8489 = vunpack.c.l.b16 %v7969
        %v8490 = vunpack.c.l.b16 %v7970
        %v8491 = vunpack.c.l.b16 %v7971
        %v8492 = vunpack.c.l.b16 %v7972
        %v8493 = vunpack.c.l.b16 %v7973
        %v8494 = vunpack.c.l.b16 %v7974
        %v8495 = vunpack.c.l.b16 %v7975
        %v8496 = vunpack.c.l.b16 %v7976
        %v8497 = vunpack.c.l.b16 %v7977
        %v8498 = vunpack.c.l.b16 %v7978
        %v8499 = vunpack.c.l.b16 %v7979
        %v8500 = vunpack.c.l.b16 %v7980
        %v8501 = vunpack.c.l.b16 %v7981
        %v8502 = vunpack.c.l.b16 %v7982
        %v8503 = vunpack.c.l.b16 %v7983
        %v8504 = vunpack.c.l.b16 %v7984
        %v8505 = vunpack.c.l.b16 %v7985
        %v8506 = vunpack.c.l.b16 %v7986
        %v8507 = vunpack.c.l.b16 %v7987
        %v8508 = vunpack.c.l.b16 %v7988
        %v8509 = vunpack.c.l.b16 %v7989
        %v8510 = vunpack.c.l.b16 %v7990
        %v8511 = vunpack.c.l.b16 %v7991
        %v8512 = vunpack.c.l.b16 %v7992
        %v8513 = vunpack.c.l.b16 %v7993
        %v8514 = vunpack.c.l.b16 %v7994
        %v8515 = vunpack.c.l.b16 %v7995
        %v8516 = vunpack.c.l.b16 %v7996
        %v8517 = vunpack.c.l.b16 %v7997
        %v8518 = vunpack.c.l.b16 %v7998
        %v8519 = vunpack.c.l.b16 %v7999
        %v8520 = vunpack.c.l.b16 %v8000
        %v8521 = vunpack.c.l.b16 %v8001
        %v8522 = vunpack.c.l.b16 %v8002
        %v8523 = vunpack.c.l.b16 %v8003
        %v8524 = vunpack.c.l.b16 %v8004
        %v8525 = vunpack.c.l.b16 %v8005
        %v8526 = vunpack.c.l.b16 %v8006
        %v8527 = vunpack.c.l.b16 %v8007
        %v8528 = vunpack.c.l.b16 %v8008
        %v8529 = vunpack.c.l.b16 %v8009
        %v8530 = vunpack.c.l.b16 %v8010
        %v8531 = vunpack.c.l.b16 %v8011
        %v8532 = vunpack.c.l.b16 %v8012
        %v8533 = vunpack.c.l.b16 %v8013
        %v8534 = vunpack.c.l.b16 %v8014
        %v8535 = vunpack.c.l.b16 %v8015
        %v8536 = vunpack.c.l.b16 %v8016
        %v8537 = vunpack.c.l.b16 %v8017
        %v8538 = vunpack.c.l.b16 %v8018
        %v8539 = vunpack.c.l.b16 %v8019
        %v8540 = vunpack.c.l.b16 %v8020
        %v8541 = vunpack.c.l.b16 %v8021
        %v8542 = vunpack.c.l.b16 %v8022
        %v8543 = vunpack.c.l.b16 %v8023
        %v8544 = vunpack.c.l.b16 %v8024
        %v8545 = vunpack.c.l.b16 %v8025
        %v8546 = vunpack.c.l.b16 %v8026
        %v8547 = vunpack.c.l.b16 %v8027
        %v8548 = vunpack.c.l.b16 %v8028
        %v8549 = vunpack.c.l.b16 %v8029
        %v8550 = vunpack.c.l.b16 %v8030
        %v8551 = vunpack.c.l.b16 %v8031
        %v8552 = vunpack.c.l.b16 %v8032
        %v8553 = vunpack.c.l.b16 %v8033
        %v8554 = vunpack.c.l.b16 %v8034
        %v8555 = vunpack.c.l.b16 %v8035
        %v8556 = vunpack.c.l.b16 %v8036
        %v8557 = vunpack.c.l.b16 %v8037
        %v8558 = vunpack.c.l.b16 %v8038
        %v8559 = vunpack.c.l.b16 %v8039
        %v8560 = vunpack.c.l.b16 %v8040
        %v8561 = vunpack.c.l.b16 %v8041
        %v8562 = vunpack.c.l.b16 %v8042
        %v8563 = vunpack.c.l.b16 %v8043
        %v8564 = vunpack.c.l.b16 %v8044
        %v8565 = vunpack.c.l.b16 %v8045
        %v8566 = vunpack.c.l.b16 %v8046
        %v8567 = vunpack.c.l.b16 %v8047
        %v8568 = vunpack.c.l.b16 %v8048
        %v8569 = vunpack.c.l.b16 %v8049
        %v8570 = vunpack.c.l.b16 %v8050
        %v8571 = vunpack.c.l.b16 %v8051
        %v8572 = vunpack.c.l.b16 %v8052
        %v8573 = vunpack.c.l.b16 %v8053
        %v8574 = vunpack.c.l.b16 %v8054
        %v8575 = vunpack.c.l.b16 %v8055
        %v8576 = vunpack.c.l.b16 %v8056
        %v8577 = vunpack.c.l.b16 %v8057
        %v8578 = vunpack.c.l.b16 %v8058
        %v8579 = vunpack.c.l.b16 %v8059
        %v8580 = vunpack.c.l.b16 %v8060
        %v8581 = vunpack.c.l.b16 %v8061
        %v8582 = vunpack.c.l.b16 %v8062
        %v8583 = vunpack.c.l.b16 %v8063
        %v8584 = vunpack.c.l.b16 %v8064
        %v8585 = vunpack.c.l.b16 %v8065
        %v8586 = vunpack.c.l.b16 %v8066
        %v8587 = vunpack.c.l.b16 %v8067
        %v8588 = vunpack.c.l.b16 %v8068
        %v8589 = vunpack.c.l.b16 %v8069
        %v8590 = vunpack.c.l.b16 %v8070
        %v8591 = vunpack.c.l.b16 %v8071
        %v8592 = vunpack.c.l.b16 %v8072
        %v8593 = vunpack.c.l.b16 %v8073
        %v8594 = vunpack.c.l.b16 %v8074
        %v8595 = vunpack.c.l.b16 %v8075
        %v8596 = vunpack.c.l.b16 %v8076
        %v8597 = vunpack.c.l.b16 %v8077
        %v8598 = vunpack.c.l.b16 %v8078
        %v8599 = vunpack.c.l.b16 %v8079
        %v8600 = vunpack.c.l.b16 %v8080
        %v8601 = vunpack.c.l.b16 %v8081
        %v8602 = vunpack.c.l.b16 %v8082
        %v8603 = vunpack.c.l.b16 %v8083
        %v8604 = vunpack.c.l.b16 %v8084
        %v8605 = vunpack.c.l.b16 %v8085
        %v8606 = vunpack.c.l.b16 %v8086
        %v8607 = vunpack.c.l.b16 %v8087
        %v8608 = vunpack.c.l.b16 %v8088
        %v8609 = vunpack.c.l.b16 %v8089
        %v8610 = vunpack.c.l.b16 %v8090
        %v8611 = vunpack.c.l.b16 %v8091
        %v8612 = vunpack.c.l.b16 %v8092
        %v8613 = vunpack.c.l.b16 %v8093
        %v8614 = vunpack.c.l.b16 %v8094
        %v8615 = vunpack.c.l.b16 %v8095
        %v8616 = vunpack.c.l.b16 %v8096
        %v8617 = vunpack.c.l.b16 %v8097
        %v8618 = vunpack.c.l.b16 %v8098
        %v8619 = vunpack.c.l.b16 %v8099
        %v8620 = vunpack.c.l.b16 %v8100
        %v8621 = vunpack.c.l.b16 %v8101
        %v8622 = vunpack.c.l.b16 %v8102
        %v8623 = vunpack.c.l.b16 %v8103
        %v8624 = vunpack.c.l.b16 %v8104
        %v8625 = vunpack.c.l.b16 %v8105
        %v8626 = vunpack.c.l.b16 %v8106
        %v8627 = vunpack.c.l.b16 %v8107
        %v8628 = vunpack.c.l.b16 %v8108
        %v8629 = vunpack.c.l.b16 %v8109
        %v8630 = vunpack.c.l.b16 %v8110
        %v8631 = vunpack.c.l.b16 %v8111
        %v8632 = vunpack.c.l.b16 %v8112
        %v8633 = vunpack.c.l.b16 %v8113
        %v8634 = vunpack.c.l.b16 %v8114
        %v8635 = vunpack.c.l.b16 %v8115
        %v8636 = vpack.c.b16 %v8381, %v8380
        %v8637 = vpack.c.b16 %v8383, %v8382
        %v8638 = vpack.c.b16 %v8385, %v8384
        %v8639 = vpack.c.b16 %v8387, %v8386
        %v8640 = vpack.c.b16 %v8389, %v8388
        %v8641 = vpack.c.b16 %v8391, %v8390
        %v8642 = vpack.c.b16 %v8393, %v8392
        %v8643 = vpack.c.b16 %v8395, %v8394
        %v8644 = vpack.c.b16 %v8397, %v8396
        %v8645 = vpack.c.b16 %v8399, %v8398
        %v8646 = vpack.c.b16 %v8401, %v8400
        %v8647 = vpack.c.b16 %v8403, %v8402
        %v8648 = vpack.c.b16 %v8405, %v8404
        %v8649 = vpack.c.b16 %v8407, %v8406
        %v8650 = vpack.c.b16 %v8409, %v8408
        %v8651 = vpack.c.b16 %v8411, %v8410
        %v8652 = vpack.c.b16 %v8413, %v8412
        %v8653 = vpack.c.b16 %v8415, %v8414
        %v8654 = vpack.c.b16 %v8417, %v8416
        %v8655 = vpack.c.b16 %v8419, %v8418
        %v8656 = vpack.c.b16 %v8421, %v8420
        %v8657 = vpack.c.b16 %v8423, %v8422
        %v8658 = vpack.c.b16 %v8425, %v8424
        %v8659 = vpack.c.b16 %v8427, %v8426
        %v8660 = vpack.c.b16 %v8429, %v8428
        %v8661 = vpack.c.b16 %v8431, %v8430
        %v8662 = vpack.c.b16 %v8433, %v8432
        %v8663 = vpack.c.b16 %v8435, %v8434
        %v8664 = vpack.c.b16 %v8437, %v8436
        %v8665 = vpack.c.b16 %v8439, %v8438
        %v8666 = vpack.c.b16 %v8441, %v8440
        %v8667 = vpack.c.b16 %v8443, %v8442
        %v8668 = vpack.c.b16 %v8445, %v8444
        %v8669 = vpack.c.b16 %v8447, %v8446
        %v8670 = vpack.c.b16 %v8449, %v8448
        %v8671 = vpack.c.b16 %v8451, %v8450
        %v8672 = vpack.c.b16 %v8453, %v8452
        %v8673 = vpack.c.b16 %v8455, %v8454
        %v8674 = vpack.c.b16 %v8457, %v8456
        %v8675 = vpack.c.b16 %v8459, %v8458
        %v8676 = vpack.c.b16 %v8461, %v8460
        %v8677 = vpack.c.b16 %v8463, %v8462
        %v8678 = vpack.c.b16 %v8465, %v8464
        %v8679 = vpack.c.b16 %v8467, %v8466
        %v8680 = vpack.c.b16 %v8469, %v8468
        %v8681 = vpack.c.b16 %v8471, %v8470
        %v8682 = vpack.c.b16 %v8473, %v8472
        %v8683 = vpack.c.b16 %v8475, %v8474
        %v8684 = vpack.c.b16 %v8477, %v8476
        %v8685 = vpack.c.b16 %v8479, %v8478
        %v8686 = vpack.c.b16 %v8481, %v8480
        %v8687 = vpack.c.b16 %v8483, %v8482
        %v8688 = vpack.c.b16 %v8485, %v8484
        %v8689 = vpack.c.b16 %v8487, %v8486
        %v8690 = vpack.c.b16 %v8489, %v8488
        %v8691 = vpack.c.b16 %v8491, %v8490
        %v8692 = vpack.c.b16 %v8493, %v8492
        %v8693 = vpack.c.b16 %v8495, %v8494
        %v8694 = vpack.c.b16 %v8497, %v8496
        %v8695 = vpack.c.b16 %v8499, %v8498
        %v8696 = vpack.c.b16 %v8501, %v8500
        %v8697 = vpack.c.b16 %v8503, %v8502
        %v8698 = vpack.c.b16 %v8505, %v8504
        %v8699 = vpack.c.b16 %v8507, %v8506
        %v8700 = vpack.c.b16 %v8509, %v8508
        %v8701 = vpack.c.b16 %v8511, %v8510
        %v8702 = vpack.c.b16 %v8513, %v8512
        %v8703 = vpack.c.b16 %v8515, %v8514
        %v8704 = vpack.c.b16 %v8517, %v8516
        %v8705 = vpack.c.b16 %v8519, %v8518
        %v8706 = vpack.c.b16 %v8521, %v8520
        %v8707 = vpack.c.b16 %v8523, %v8522
        %v8708 = vpack.c.b16 %v8525, %v8524
        %v8709 = vpack.c.b16 %v8527, %v8526
        %v8710 = vpack.c.b16 %v8529, %v8528
        %v8711 = vpack.c.b16 %v8531, %v8530
        %v8712 = vpack.c.b16 %v8533, %v8532
        %v8713 = vpack.c.b16 %v8535, %v8534
        %v8714 = vpack.c.b16 %v8537, %v8536
        %v8715 = vpack.c.b16 %v8539, %v8538
        %v8716 = vpack.c.b16 %v8541, %v8540
        %v8717 = vpack.c.b16 %v8543, %v8542
        %v8718 = vpack.c.b16 %v8545, %v8544
        %v8719 = vpack.c.b16 %v8547, %v8546
        %v8720 = vpack.c.b16 %v8549, %v8548
        %v8721 = vpack.c.b16 %v8551, %v8550
        %v8722 = vpack.c.b16 %v8553, %v8552
        %v8723 = vpack.c.b16 %v8555, %v8554
        %v8724 = vpack.c.b16 %v8557, %v8556
        %v8725 = vpack.c.b16 %v8559, %v8558
        %v8726 = vpack.c.b16 %v8561, %v8560
        %v8727 = vpack.c.b16 %v8563, %v8562
        %v8728 = vpack.c.b16 %v8565, %v8564
        %v8729 = vpack.c.b16 %v8567, %v8566
        %v8730 = vpack.c.b16 %v8569, %v8568
        %v8731 = vpack.c.b16 %v8571, %v8570
        %v8732 = vpack.c.b16 %v8573, %v8572
        %v8733 = vpack.c.b16 %v8575, %v8574
        %v8734 = vpack.c.b16 %v8577, %v8576
        %v8735 = vpack.c.b16 %v8579, %v8578
        %v8736 = vpack.c.b16 %v8581, %v8580
        %v8737 = vpack.c.b16 %v8583, %v8582
        %v8738 = vpack.c.b16 %v8585, %v8584
        %v8739 = vpack.c.b16 %v8587, %v8586
        %v8740 = vpack.c.b16 %v8589, %v8588
        %v8741 = vpack.c.b16 %v8591, %v8590
        %v8742 = vpack.c.b16 %v8593, %v8592
        %v8743 = vpack.c.b16 %v8595, %v8594
        %v8744 = vpack.c.b16 %v8597, %v8596
        %v8745 = vpack.c.b16 %v8599, %v8598
        %v8746 = vpack.c.b16 %v8601, %v8600
        %v8747 = vpack.c.b16 %v8603, %v8602
        %v8748 = vpack.c.b16 %v8605, %v8604
        %v8749 = vpack.c.b16 %v8607, %v8606
        %v8750 = vpack.c.b16 %v8609, %v8608
        %v8751 = vpack.c.b16 %v8611, %v8610
        %v8752 = vpack.c.b16 %v8613, %v8612
        %v8753 = vpack.c.b16 %v8615, %v8614
        %v8754 = vpack.c.b16 %v8617, %v8616
        %v8755 = vpack.c.b16 %v8619, %v8618
        %v8756 = vpack.c.b16 %v8621, %v8620
        %v8757 = vpack.c.b16 %v8623, %v8622
        %v8758 = vpack.c.b16 %v8625, %v8624
        %v8759 = vpack.c.b16 %v8627, %v8626
        %v8760 = vpack.c.b16 %v8629, %v8628
        %v8761 = vpack.c.b16 %v8631, %v8630
        %v8762 = vpack.c.b16 %v8633, %v8632
        %v8763 = vpack.c.b16 %v8635, %v8634
        %8892 = vmatprep.subr.bf16.mxu0 0
        %8893 = vmatpush1.bf16.msra.mxu0 %v8643
        %8894 = vmatprep.subr.bf16.mxu0 0
        %8895 = vmatpush1.bf16.msra.mxu0 %v8642
        %8896 = vmatprep.subr.bf16.mxu0 0
        %8897 = vmatpush1.bf16.msra.mxu0 %v8641
        %8898 = vmatprep.subr.bf16.mxu0 0
        %8899 = vmatpush1.bf16.msra.mxu0 %v8640
        %8900 = vmatprep.subr.bf16.mxu0 0
        %8901 = vmatpush1.bf16.msra.mxu0 %v8639
        %8902 = vmatprep.subr.bf16.mxu0 0
        %8903 = vmatpush1.bf16.msra.mxu0 %v8638
        %8904 = vmatprep.subr.bf16.mxu0 0
        %8905 = vmatpush1.bf16.msra.mxu0 %v8637
        %8906 = vmatprep.subr.bf16.mxu0 0
        %8907 = vmatpush1.bf16.msra.mxu0 %v8636
        %8908 = vmatprep.subr.bf16.mxu0 0
        %8909 = vmatpush2.bf16.msra.mxu0 %v8651
        %8910 = vmatprep.subr.bf16.mxu0 0
        %8911 = vmatpush2.bf16.msra.mxu0 %v8650
        %8912 = vmatprep.subr.bf16.mxu0 0
        %8913 = vmatpush2.bf16.msra.mxu0 %v8649
        %8914 = vmatprep.subr.bf16.mxu0 0
        %8915 = vmatpush2.bf16.msra.mxu0 %v8648
        %8916 = vmatprep.subr.bf16.mxu0 0
        %8917 = vmatpush2.bf16.msra.mxu0 %v8647
        %8918 = vmatprep.subr.bf16.mxu0 0
        %8919 = vmatpush2.bf16.msra.mxu0 %v8646
        %8920 = vmatprep.subr.bf16.mxu0 0
        %8921 = vmatpush2.bf16.msra.mxu0 %v8645
        %8922 = vmatprep.subr.bf16.mxu0 0
        %8923 = vmatpush2.bf16.msra.mxu0 %v8644
        %8924 = vmatprep.mubr.bf16.mxu0 %v7844
        %8925 = vmatmul.mubr.bf16.gmra.mxu0 %v7843
        %v8926 = vpop.f32.mrf.mxu0
        %v8927 = vadd.f32 %v8122, %v8926
        %v8928 = vpop.f32.mrf.mxu0
        %v8929 = vpop.f32.mrf.mxu0
        %v8930 = vpop.f32.mrf.mxu0
        %8931 = vdwg.mxu0
        %8932 = vmatprep.subr.bf16.mxu0 0
        %8933 = vmatpush1.bf16.msra.mxu0 %v8659
        %8934 = vmatprep.subr.bf16.mxu0 0
        %8935 = vmatpush1.bf16.msra.mxu0 %v8658
        %8936 = vmatprep.subr.bf16.mxu0 0
        %8937 = vmatpush1.bf16.msra.mxu0 %v8657
        %8938 = vmatprep.subr.bf16.mxu0 0
        %8939 = vmatpush1.bf16.msra.mxu0 %v8656
        %8940 = vmatprep.subr.bf16.mxu0 0
        %8941 = vmatpush1.bf16.msra.mxu0 %v8655
        %8942 = vmatprep.subr.bf16.mxu0 0
        %8943 = vmatpush1.bf16.msra.mxu0 %v8654
        %8944 = vmatprep.subr.bf16.mxu0 0
        %8945 = vmatpush1.bf16.msra.mxu0 %v8653
        %8946 = vmatprep.subr.bf16.mxu0 0
        %8947 = vmatpush1.bf16.msra.mxu0 %v8652
        %8948 = vmatprep.subr.bf16.mxu0 0
        %8949 = vmatpush2.bf16.msra.mxu0 %v8667
        %8950 = vmatprep.subr.bf16.mxu0 0
        %8951 = vmatpush2.bf16.msra.mxu0 %v8666
        %8952 = vmatprep.subr.bf16.mxu0 0
        %8953 = vmatpush2.bf16.msra.mxu0 %v8665
        %8954 = vmatprep.subr.bf16.mxu0 0
        %8955 = vmatpush2.bf16.msra.mxu0 %v8664
        %8956 = vmatprep.subr.bf16.mxu0 0
        %8957 = vmatpush2.bf16.msra.mxu0 %v8663
        %8958 = vmatprep.subr.bf16.mxu0 0
        %8959 = vmatpush2.bf16.msra.mxu0 %v8662
        %8960 = vmatprep.subr.bf16.mxu0 0
        %8961 = vmatpush2.bf16.msra.mxu0 %v8661
        %8962 = vmatprep.subr.bf16.mxu0 0
        %8963 = vmatpush2.bf16.msra.mxu0 %v8660
        %8964 = vmatprep.mubr.bf16.mxu0 %v7846
        %8965 = vmatmul.mubr.bf16.gmra.mxu0 %v7845
        %v8966 = vpop.f32.mrf.mxu0
        %v8967 = vadd.f32 %v8927, %v8966
        %v8968 = vpop.f32.mrf.mxu0
        %v8969 = vpop.f32.mrf.mxu0
        %v8970 = vpop.f32.mrf.mxu0
        %8971 = vdwg.mxu0
        %8972 = vmatprep.subr.bf16.mxu0 0
        %8973 = vmatpush1.bf16.msra.mxu0 %v8675
        %8974 = vmatprep.subr.bf16.mxu0 0
        %8975 = vmatpush1.bf16.msra.mxu0 %v8674
        %8976 = vmatprep.subr.bf16.mxu0 0
        %8977 = vmatpush1.bf16.msra.mxu0 %v8673
        %8978 = vmatprep.subr.bf16.mxu0 0
        %8979 = vmatpush1.bf16.msra.mxu0 %v8672
        %8980 = vmatprep.subr.bf16.mxu0 0
        %8981 = vmatpush1.bf16.msra.mxu0 %v8671
        %8982 = vmatprep.subr.bf16.mxu0 0
        %8983 = vmatpush1.bf16.msra.mxu0 %v8670
        %8984 = vmatprep.subr.bf16.mxu0 0
        %8985 = vmatpush1.bf16.msra.mxu0 %v8669
        %8986 = vmatprep.subr.bf16.mxu0 0
        %8987 = vmatpush1.bf16.msra.mxu0 %v8668
        %8988 = vmatprep.subr.bf16.mxu0 0
        %8989 = vmatpush2.bf16.msra.mxu0 %v8683
        %8990 = vmatprep.subr.bf16.mxu0 0
        %8991 = vmatpush2.bf16.msra.mxu0 %v8682
        %8992 = vmatprep.subr.bf16.mxu0 0
        %8993 = vmatpush2.bf16.msra.mxu0 %v8681
        %8994 = vmatprep.subr.bf16.mxu0 0
        %8995 = vmatpush2.bf16.msra.mxu0 %v8680
        %8996 = vmatprep.subr.bf16.mxu0 0
        %8997 = vmatpush2.bf16.msra.mxu0 %v8679
        %8998 = vmatprep.subr.bf16.mxu0 0
        %8999 = vmatpush2.bf16.msra.mxu0 %v8678
        %9000 = vmatprep.subr.bf16.mxu0 0
        %9001 = vmatpush2.bf16.msra.mxu0 %v8677
        %9002 = vmatprep.subr.bf16.mxu0 0
        %9003 = vmatpush2.bf16.msra.mxu0 %v8676
        %9004 = vmatprep.mubr.bf16.mxu0 %v7848
        %9005 = vmatmul.mubr.bf16.gmra.mxu0 %v7847
        %v9006 = vpop.f32.mrf.mxu0
        %v9007 = vadd.f32 %v8967, %v9006
        %v9008 = vpop.f32.mrf.mxu0
        %v9009 = vpop.f32.mrf.mxu0
        %v9010 = vpop.f32.mrf.mxu0
        %9011 = vdwg.mxu0
        %9012 = vmatprep.subr.bf16.mxu0 0
        %9013 = vmatpush1.bf16.msra.mxu0 %v8691
        %9014 = vmatprep.subr.bf16.mxu0 0
        %9015 = vmatpush1.bf16.msra.mxu0 %v8690
        %9016 = vmatprep.subr.bf16.mxu0 0
        %9017 = vmatpush1.bf16.msra.mxu0 %v8689
        %9018 = vmatprep.subr.bf16.mxu0 0
        %9019 = vmatpush1.bf16.msra.mxu0 %v8688
        %9020 = vmatprep.subr.bf16.mxu0 0
        %9021 = vmatpush1.bf16.msra.mxu0 %v8687
        %9022 = vmatprep.subr.bf16.mxu0 0
        %9023 = vmatpush1.bf16.msra.mxu0 %v8686
        %9024 = vmatprep.subr.bf16.mxu0 0
        %9025 = vmatpush1.bf16.msra.mxu0 %v8685
        %9026 = vmatprep.subr.bf16.mxu0 0
        %9027 = vmatpush1.bf16.msra.mxu0 %v8684
        %9028 = vmatprep.subr.bf16.mxu0 0
        %9029 = vmatpush2.bf16.msra.mxu0 %v8699
        %9030 = vmatprep.subr.bf16.mxu0 0
        %9031 = vmatpush2.bf16.msra.mxu0 %v8698
        %9032 = vmatprep.subr.bf16.mxu0 0
        %9033 = vmatpush2.bf16.msra.mxu0 %v8697
        %9034 = vmatprep.subr.bf16.mxu0 0
        %9035 = vmatpush2.bf16.msra.mxu0 %v8696
        %9036 = vmatprep.subr.bf16.mxu0 0
        %9037 = vmatpush2.bf16.msra.mxu0 %v8695
        %9038 = vmatprep.subr.bf16.mxu0 0
        %9039 = vmatpush2.bf16.msra.mxu0 %v8694
        %9040 = vmatprep.subr.bf16.mxu0 0
        %9041 = vmatpush2.bf16.msra.mxu0 %v8693
        %9042 = vmatprep.subr.bf16.mxu0 0
        %9043 = vmatpush2.bf16.msra.mxu0 %v8692
        %9044 = vmatprep.mubr.bf16.mxu0 %v7850
        %9045 = vmatmul.mubr.bf16.gmra.mxu0 %v7849
        %v9046 = vpop.f32.mrf.mxu0
        %v9047 = vadd.f32 %v9007, %v9046
        %v9048 = vpop.f32.mrf.mxu0
        %v9049 = vpop.f32.mrf.mxu0
        %v9050 = vpop.f32.mrf.mxu0
        %9051 = vdwg.mxu0
        %9052 = vmatprep.subr.bf16.mxu0 0
        %9053 = vmatpush1.bf16.msra.mxu0 %v8707
        %9054 = vmatprep.subr.bf16.mxu0 0
        %9055 = vmatpush1.bf16.msra.mxu0 %v8706
        %9056 = vmatprep.subr.bf16.mxu0 0
        %9057 = vmatpush1.bf16.msra.mxu0 %v8705
        %9058 = vmatprep.subr.bf16.mxu0 0
        %9059 = vmatpush1.bf16.msra.mxu0 %v8704
        %9060 = vmatprep.subr.bf16.mxu0 0
        %9061 = vmatpush1.bf16.msra.mxu0 %v8703
        %9062 = vmatprep.subr.bf16.mxu0 0
        %9063 = vmatpush1.bf16.msra.mxu0 %v8702
        %9064 = vmatprep.subr.bf16.mxu0 0
        %9065 = vmatpush1.bf16.msra.mxu0 %v8701
        %9066 = vmatprep.subr.bf16.mxu0 0
        %9067 = vmatpush1.bf16.msra.mxu0 %v8700
        %9068 = vmatprep.subr.bf16.mxu0 0
        %9069 = vmatpush2.bf16.msra.mxu0 %v8715
        %9070 = vmatprep.subr.bf16.mxu0 0
        %9071 = vmatpush2.bf16.msra.mxu0 %v8714
        %9072 = vmatprep.subr.bf16.mxu0 0
        %9073 = vmatpush2.bf16.msra.mxu0 %v8713
        %9074 = vmatprep.subr.bf16.mxu0 0
        %9075 = vmatpush2.bf16.msra.mxu0 %v8712
        %9076 = vmatprep.subr.bf16.mxu0 0
        %9077 = vmatpush2.bf16.msra.mxu0 %v8711
        %9078 = vmatprep.subr.bf16.mxu0 0
        %9079 = vmatpush2.bf16.msra.mxu0 %v8710
        %9080 = vmatprep.subr.bf16.mxu0 0
        %9081 = vmatpush2.bf16.msra.mxu0 %v8709
        %9082 = vmatprep.subr.bf16.mxu0 0
        %9083 = vmatpush2.bf16.msra.mxu0 %v8708
        %9084 = vmatprep.mubr.bf16.mxu0 %v7852
        %9085 = vmatmul.mubr.bf16.gmra.mxu0 %v7851
        %v9086 = vpop.f32.mrf.mxu0
        %v9087 = vadd.f32 %v9047, %v9086
        %v9088 = vpop.f32.mrf.mxu0
        %v9089 = vpop.f32.mrf.mxu0
        %v9090 = vpop.f32.mrf.mxu0
        %9091 = vdwg.mxu0
        %9092 = vmatprep.subr.bf16.mxu0 0
        %9093 = vmatpush1.bf16.msra.mxu0 %v8723
        %9094 = vmatprep.subr.bf16.mxu0 0
        %9095 = vmatpush1.bf16.msra.mxu0 %v8722
        %9096 = vmatprep.subr.bf16.mxu0 0
        %9097 = vmatpush1.bf16.msra.mxu0 %v8721
        %9098 = vmatprep.subr.bf16.mxu0 0
        %9099 = vmatpush1.bf16.msra.mxu0 %v8720
        %9100 = vmatprep.subr.bf16.mxu0 0
        %9101 = vmatpush1.bf16.msra.mxu0 %v8719
        %9102 = vmatprep.subr.bf16.mxu0 0
        %9103 = vmatpush1.bf16.msra.mxu0 %v8718
        %9104 = vmatprep.subr.bf16.mxu0 0
        %9105 = vmatpush1.bf16.msra.mxu0 %v8717
        %9106 = vmatprep.subr.bf16.mxu0 0
        %9107 = vmatpush1.bf16.msra.mxu0 %v8716
        %9108 = vmatprep.subr.bf16.mxu0 0
        %9109 = vmatpush2.bf16.msra.mxu0 %v8731
        %9110 = vmatprep.subr.bf16.mxu0 0
        %9111 = vmatpush2.bf16.msra.mxu0 %v8730
        %9112 = vmatprep.subr.bf16.mxu0 0
        %9113 = vmatpush2.bf16.msra.mxu0 %v8729
        %9114 = vmatprep.subr.bf16.mxu0 0
        %9115 = vmatpush2.bf16.msra.mxu0 %v8728
        %9116 = vmatprep.subr.bf16.mxu0 0
        %9117 = vmatpush2.bf16.msra.mxu0 %v8727
        %9118 = vmatprep.subr.bf16.mxu0 0
        %9119 = vmatpush2.bf16.msra.mxu0 %v8726
        %9120 = vmatprep.subr.bf16.mxu0 0
        %9121 = vmatpush2.bf16.msra.mxu0 %v8725
        %9122 = vmatprep.subr.bf16.mxu0 0
        %9123 = vmatpush2.bf16.msra.mxu0 %v8724
        %9124 = vmatprep.mubr.bf16.mxu0 %v7854
        %9125 = vmatmul.mubr.bf16.gmra.mxu0 %v7853
        %v9126 = vpop.f32.mrf.mxu0
        %v9127 = vadd.f32 %v9087, %v9126
        %v9128 = vpop.f32.mrf.mxu0
        %v9129 = vpop.f32.mrf.mxu0
        %v9130 = vpop.f32.mrf.mxu0
        %9131 = vdwg.mxu0
        %9132 = vmatprep.subr.bf16.mxu0 0
        %9133 = vmatpush1.bf16.msra.mxu0 %v8739
        %9134 = vmatprep.subr.bf16.mxu0 0
        %9135 = vmatpush1.bf16.msra.mxu0 %v8738
        %9136 = vmatprep.subr.bf16.mxu0 0
        %9137 = vmatpush1.bf16.msra.mxu0 %v8737
        %9138 = vmatprep.subr.bf16.mxu0 0
        %9139 = vmatpush1.bf16.msra.mxu0 %v8736
        %9140 = vmatprep.subr.bf16.mxu0 0
        %9141 = vmatpush1.bf16.msra.mxu0 %v8735
        %9142 = vmatprep.subr.bf16.mxu0 0
        %9143 = vmatpush1.bf16.msra.mxu0 %v8734
        %9144 = vmatprep.subr.bf16.mxu0 0
        %9145 = vmatpush1.bf16.msra.mxu0 %v8733
        %9146 = vmatprep.subr.bf16.mxu0 0
        %9147 = vmatpush1.bf16.msra.mxu0 %v8732
        %9148 = vmatprep.subr.bf16.mxu0 0
        %9149 = vmatpush2.bf16.msra.mxu0 %v8747
        %9150 = vmatprep.subr.bf16.mxu0 0
        %9151 = vmatpush2.bf16.msra.mxu0 %v8746
        %9152 = vmatprep.subr.bf16.mxu0 0
        %9153 = vmatpush2.bf16.msra.mxu0 %v8745
        %9154 = vmatprep.subr.bf16.mxu0 0
        %9155 = vmatpush2.bf16.msra.mxu0 %v8744
        %9156 = vmatprep.subr.bf16.mxu0 0
        %9157 = vmatpush2.bf16.msra.mxu0 %v8743
        %9158 = vmatprep.subr.bf16.mxu0 0
        %9159 = vmatpush2.bf16.msra.mxu0 %v8742
        %9160 = vmatprep.subr.bf16.mxu0 0
        %9161 = vmatpush2.bf16.msra.mxu0 %v8741
        %9162 = vmatprep.subr.bf16.mxu0 0
        %9163 = vmatpush2.bf16.msra.mxu0 %v8740
        %9164 = vmatprep.mubr.bf16.mxu0 %v7856
        %9165 = vmatmul.mubr.bf16.gmra.mxu0 %v7855
        %v9166 = vpop.f32.mrf.mxu0
        %v9167 = vadd.f32 %v9127, %v9166
        %v9168 = vpop.f32.mrf.mxu0
        %v9169 = vpop.f32.mrf.mxu0
        %v9170 = vpop.f32.mrf.mxu0
        %9171 = vdwg.mxu0
        %9172 = vmatprep.subr.bf16.mxu0 0
        %9173 = vmatpush1.bf16.msra.mxu0 %v8755
        %9174 = vmatprep.subr.bf16.mxu0 0
        %9175 = vmatpush1.bf16.msra.mxu0 %v8754
        %9176 = vmatprep.subr.bf16.mxu0 0
        %9177 = vmatpush1.bf16.msra.mxu0 %v8753
        %9178 = vmatprep.subr.bf16.mxu0 0
        %9179 = vmatpush1.bf16.msra.mxu0 %v8752
        %9180 = vmatprep.subr.bf16.mxu0 0
        %9181 = vmatpush1.bf16.msra.mxu0 %v8751
        %9182 = vmatprep.subr.bf16.mxu0 0
        %9183 = vmatpush1.bf16.msra.mxu0 %v8750
        %9184 = vmatprep.subr.bf16.mxu0 0
        %9185 = vmatpush1.bf16.msra.mxu0 %v8749
        %9186 = vmatprep.subr.bf16.mxu0 0
        %9187 = vmatpush1.bf16.msra.mxu0 %v8748
        %9188 = vmatprep.subr.bf16.mxu0 0
        %9189 = vmatpush2.bf16.msra.mxu0 %v8763
        %9190 = vmatprep.subr.bf16.mxu0 0
        %9191 = vmatpush2.bf16.msra.mxu0 %v8762
        %9192 = vmatprep.subr.bf16.mxu0 0
        %9193 = vmatpush2.bf16.msra.mxu0 %v8761
        %9194 = vmatprep.subr.bf16.mxu0 0
        %9195 = vmatpush2.bf16.msra.mxu0 %v8760
        %9196 = vmatprep.subr.bf16.mxu0 0
        %9197 = vmatpush2.bf16.msra.mxu0 %v8759
        %9198 = vmatprep.subr.bf16.mxu0 0
        %9199 = vmatpush2.bf16.msra.mxu0 %v8758
        %9200 = vmatprep.subr.bf16.mxu0 0
        %9201 = vmatpush2.bf16.msra.mxu0 %v8757
        %9202 = vmatprep.subr.bf16.mxu0 0
        %9203 = vmatpush2.bf16.msra.mxu0 %v8756
        %9204 = vmatprep.mubr.bf16.mxu0 %v7858
        %9205 = vmatmul.mubr.bf16.gmra.mxu0 %v7857
        %v9206 = vpop.f32.mrf.mxu0
        %v9207 = vadd.f32 %v9167, %v9206
        %v9208 = vpop.f32.mrf.mxu0
        %v9209 = vpop.f32.mrf.mxu0
        %v9210 = vpop.f32.mrf.mxu0
        %9211 = vdwg.mxu0
        %s9212 = scalar_lea.vmem %s24, 1
        %v9213 = vld [vmem:[%s9212] sm:$0x1]
        %s9214 = scalar_lea.vmem %s25, 1
        %v9215 = vld [vmem:[%s9214] sm:$0x1]
        %9216 = vadd.xlane.f32.xlu0 %v9207
        %v9217 = vpop.xlane.xlu0 %9216
        %v9218 = vmul.f32 %v9217, 0.03125
        %v9219 = vsub.f32 %v9207, %v9218
        %v9220 = vmul.f32 %v9219, %v1649
        %v9221 = vmul.f32 %v9220, %v9220
        %9222 = vadd.xlane.f32.xlu0 %v9221
        %v9223 = vpop.xlane.xlu0 %9222
        %v9224 = vmul.f32 %v9223, 0.032258064
        %v9225 = vrsqrt.pop %v9224
        %v9226 = vmul.f32 %v9224, %v9225
        %vm9227 = vcmp.eq.f32.partialorder %v9224, inf
        %v9228 = vsel %vm9227, %v9224, %v9226
        %vm9229 = vcmp.eq.f32.partialorder %v9224, 0.0
        %v9230 = vand.u32 %v9224, 2147483648
        %v9231 = vsel %vm9229, %v9230, %v9228
        %v9232 = vadd.f32 %v9231, 1e-06
        %v9233 = vrcp.pop %v9232
        %v9234 = vmul.f32 %v9220, %v9233
        %v9236 = vlaneseq
        %v9237 = vshrl.u32 %v9236, 7
        %v9238 = vsub.s32 0, %v9237
        %v9239 = vrot.slane %v9213, %v9238
        %v9241 = vmul.f32 %v9239, %v9234
        %v9243 = vlaneseq
        %v9244 = vshrl.u32 %v9243, 7
        %v9245 = vsub.s32 0, %v9244
        %v9246 = vrot.slane %v9215, %v9245
        %v9248 = vadd.f32 %v9241, %v9246
        %v9249 = vadd.f32 %v9207, %v9248
        %v9250 = vld [vmem:[%s26] sm:$0x1]
        %v9251 = vld [vmem:[%s27] sm:$0x1]
        %9252 = vadd.xlane.f32.xlu0 %v9249
        %v9253 = vpop.xlane.xlu0 %9252
        %v9254 = vmul.f32 %v9253, 0.03125
        %v9255 = vsub.f32 %v9249, %v9254
        %v9256 = vmul.f32 %v9255, %v1649
        %v9257 = vmul.f32 %v9256, %v9256
        %9258 = vadd.xlane.f32.xlu0 %v9257
        %v9259 = vpop.xlane.xlu0 %9258
        %v9260 = vmul.f32 %v9259, 0.032258064
        %v9261 = vrsqrt.pop %v9260
        %v9262 = vmul.f32 %v9260, %v9261
        %vm9263 = vcmp.eq.f32.partialorder %v9260, inf
        %v9264 = vsel %vm9263, %v9260, %v9262
        %vm9265 = vcmp.eq.f32.partialorder %v9260, 0.0
        %v9266 = vand.u32 %v9260, 2147483648
        %v9267 = vsel %vm9265, %v9266, %v9264
        %v9268 = vadd.f32 %v9267, 1e-06
        %v9269 = vrcp.pop %v9268
        %v9270 = vmul.f32 %v9256, %v9269
        %v9272 = vlaneseq
        %v9273 = vshrl.u32 %v9272, 7
        %v9274 = vsub.s32 0, %v9273
        %v9275 = vrot.slane %v9250, %v9274
        %v9277 = vmul.f32 %v9275, %v9270
        %v9279 = vlaneseq
        %v9280 = vshrl.u32 %v9279, 7
        %v9281 = vsub.s32 0, %v9280
        %v9282 = vrot.slane %v9251, %v9281
        %v9284 = vadd.f32 %v9277, %v9282
        %9285 = vst [vmem:[%s879] sm:$0xff] %v9284
        %s9286 = sand.u32 %s650, 1
        %s9287 = scalar_lea.sflag [#allocation4], %s9286
        %s9288 = sand.u32 %s650, 1
        %s9289 = smul.addr %s9288, 8
        %s9290 = scalar_lea.vmem [#allocation7], %s9289
        // Predicated region
        $region141: #{decoder_forward.1} parent=131 // pred_check
          %p9291 = pneg %p660
        $region142: #{decoder_forward.1} parent=131 // pred_check_branch
          %9293 = sbr.rel (%p9291) target = $region144
        $region143: #{decoder_forward.1} parent=131 // pred_region
          %s9295 = ssub.s32 128, 128
          %9296 = vsyncadd %s9287, %s9295
          %s9297 = smul.addr %s44, 128
          %s9298 = scalar_lea.hbm %s28, %s9297
          %s9300 = sshll.u32 %s9290, 4
          %s9301 = int_to_ptr.vmem [resolvable:$true] %s9300
          %9303 = dma.vmem_to_hbm [thread:$0]  %s9301, 128, %s9298, %s9287
        $region144: #{decoder_forward.1} parent=131 // pred_fallthru
          _
      $region132: #{decoder_forward.1} parent=5 // pred_fallthru
        _
      %p9304 = scmp.le.s32.totalorder 2, %s39
      // Predicated region
      $region145: #{decoder_forward.1} parent=5 // pred_check
        %p9305 = pneg %p9304
      $region146: #{decoder_forward.1} parent=5 // pred_check_branch
        %9307 = sbr.rel (%p9305) target = $region148
      $region147: #{decoder_forward.1} parent=5 // pred_region
        %s9308 = ssub.s32 %s39, 2
        // Predicated region
        $region149: #{decoder_forward.1} parent=147 // pred_check
          %p9309 = pneg %p666
        $region150: #{decoder_forward.1} parent=147 // pred_check_branch
          %9311 = sbr.rel (%p9309) target = $region152
        $region151: #{decoder_forward.1} parent=147 // pred_region
          %s9312 = sand.u32 %s651, 1
          %s9313 = scalar_lea.sflag [#allocation4], %s9312
          %s9314 = sand.u32 %s651, 1
          %s9315 = smul.addr %s9314, 8
          %s9316 = scalar_lea.vmem [#allocation7], %s9315
          %9317 = dma.done %s9313, 128
        $region152: #{decoder_forward.1} parent=147 // pred_fallthru
          _
      $region148: #{decoder_forward.1} parent=5 // pred_fallthru
        _
    $region6: #{decoder_forward.1} parent=1 // loop_footer
      %s43 = sadd.s32 1, %s39
    $region7: #{decoder_forward.1} parent=1 // loop_footer_branch
      %38 = sbr.rel target = $region3
    $region8: #{decoder_forward.1} parent=1 // loop_exit
      _
    %9318 = vsyncpa [#allocation3], 1
    %s9319 = scalar_lea.sflag [#allocation3], 1
    %9320 = vsyncpa %s9319, 1
    %9321 = vsyncpa [#allocation6], 1
    %9322 = vsyncpa [#allocation4], 1
    %s9323 = scalar_lea.sflag [#allocation4], 1
    %9324 = vsyncpa %s9323, 1

</llo_original>
